<compile_context>
chip_gen: v5e
topology: v5e:2x2
jax: 0.10.0
libtpu: 0.0.40
codegen_flags: <defaults>
</compile_context>

<pallas_src>
import numpy as np
import jax
import jax.numpy as jnp
from jax import lax
from jax.experimental import pallas as pl
from jax.experimental.pallas import tpu as pltpu

# ----------------------------- configuration -------------------------------
B = 2            # batch
C = 4            # in_features (>= 3 because of seq_mean[:, :, 0:3])
L = 168          # in_lens (= module_len * module_num, hard-coded in reference)
H = 32           # hidden_size
U = 64           # backbone_units
OUT_F = 3        # out_feature (3 so that `readout + seq_mean_out` broadcasts)
OUT_LENS = 24    # out_lens
PERIODS = [24, 12]
MODULE_LEN = 24
MODULE_NUM = 7

NBR = 2                      # two recurrence branches (encoder / x_pro)
KP = NBR * MODULE_NUM        # 14 live (branch, module) recurrence rows
KPAD = 16                    # padded to a sublane-aligned 16
BH = B * H                   # 64  columns of h     (batch-major, hidden-minor)
BU = B * U                   # 128 columns of z / xw
TR = MODULE_LEN * KPAD       # 384 rows of the per-step backbone-input table


# ------------------------- parameter initialization ------------------------
def init_params(key):
    keys = iter(jax.random.split(key, 128))

    def nrm(shape, scale=0.1):
        return scale * jax.random.normal(next(keys), shape, dtype=jnp.float32)

    p = {}
    # --- CfcCell (backbone Linear(C+H, U) + 4 heads Linear(U, H)) ---
    p['bb_Wt'] = nrm((C + H, U))          # transposed torch weight
    p['bb_b'] = nrm((1, U))
    for name in ('ff1', 'ff2', 'ta', 'tb'):
        p[name + '_Wt'] = nrm((U, H))
        p[name + '_b'] = nrm((1, H))

    # --- two Multi_period_predication modules: encoder and x_pro ---
    for mod in ('enc', 'pro'):
        per_period = []
        for P in PERIODS:
            seg = L // P
            ksz = 1 + 2 * (P // 2)
            per_period.append(dict(
                k=nrm((ksz,)),            # conv1d weight (1,1,ksz) flattened
                W1=nrm((seg, seg)), b1=nrm((seg,)),
                W2=nrm((P, P)), b2=nrm((P,)),
            ))
        p[mod] = dict(periods=per_period,
                      pw=jnp.ones((len(PERIODS),), jnp.float32))  # torch.ones init

    # --- Sequential_projection (Linear(2L, out_lens, bias=False)) and fc ---
    p['W_sp'] = nrm((OUT_LENS, 2 * L))
    p['fc_Wt'] = nrm((H, OUT_F))          # transposed torch fc weight
    p['fc_b'] = nrm((1, OUT_F))
    return p


# -------- fold Multi_period_predication into a single affine map -----------
def fold_multi_period(mp):
    """Return (G, c) with out_row = x_row @ G + c for rows of length L.

    conv1d (as a band matrix) + residual, then linear1∘linear2 as
    kron(W1.T, W2.T) (flat index = seg*P + p on input, seg'*P + p' on output)."""
    S = L
    G = jnp.zeros((S, S), jnp.float32)
    c = jnp.zeros((S,), jnp.float32)
    for w, pp, P in zip(mp['pw'], mp['periods'], PERIODS):
        seg = S // P
        pad = P // 2
        ksz = 1 + 2 * pad
        idx = jnp.arange(S)
        d = idx[:, None] - idx[None, :] + pad            # conv as band matrix
        valid = (d >= 0) & (d < ksz)
        M = jnp.where(valid, pp['k'][jnp.clip(d, 0, ksz - 1)], 0.0)
        A = jnp.eye(S, dtype=jnp.float32) + M            # conv1d + residual
        Lp = jnp.kron(pp['W1'].T, pp['W2'].T)            # linear1 ∘ linear2
        cp = jnp.kron(pp['b1'], jnp.sum(pp['W2'], axis=1)) + jnp.tile(pp['b2'], seg)
        G = G + w * (A @ Lp)
        c = c + w * cp
    return G, c.reshape(1, S)


def block_diag_rep(A, n):
    """block_diag(A, A, ..., A) with n copies (batch-block-diagonal weights)."""
    r, c = A.shape
    out = jnp.zeros((n * r, n * c), A.dtype)
    for i in range(n):
        out = out.at[i * r:(i + 1) * r, i * c:(i + 1) * c].set(A)
    return out


# ------------------- one-time folding of kernel operands --------------------
def prepare_params(p):
    """Fold raw module params into the fused-kernel operand set (runs once,
    outside the per-forward jit)."""
    G_enc, c_enc = fold_multi_period(p['enc'])
    G_pro, c_pro = fold_multi_period(p['pro'])
    # branch 0: x_php = xc @ G_enc + c_enc
    # branch 1: x_pro = x_php @ G_pro + c_pro
    G_br = [G_enc, G_enc @ G_pro]
    c_br = [c_enc, c_enc @ G_pro + c_pro]

    # Permute affine output columns from flat l = m*24 + t (per branch) into
    # (t, k)-major order with k = branch*7 + m, padded 14 -> 16, so the kernel's
    # affine result lands directly in per-step recurrence-row order.
    def perm(M):                                   # (rows, L) cols = m*24 + t
        r = M.shape[0]
        return M.reshape(r, MODULE_NUM, MODULE_LEN).transpose(0, 2, 1)  # (r,t,m)

    Gtk = jnp.stack([perm(G_br[0]), perm(G_br[1])], axis=2)   # (L, T, br, m)
    Gtk = Gtk.reshape(L, MODULE_LEN, KP)
    Gtk = jnp.pad(Gtk, ((0, 0), (0, 0), (0, KPAD - KP)))
    G_perm = Gtk.reshape(L, TR)                                # (168, 384)
    ctk = jnp.stack([perm(c_br[0]), perm(c_br[1])], axis=2).reshape(1, MODULE_LEN, KP)
    ctk = jnp.pad(ctk, ((0, 0), (0, 0), (0, KPAD - KP)))
    c_perm = ctk.reshape(1, TR)                                # (1, 384)

    gT = G_perm.T                                              # (384, 168)
    cT = c_perm.T                                              # (384, 1)

    Wx = p['bb_Wt'][:C]                                        # (C, U)
    Wh = p['bb_Wt'][C:]                                        # (H, U)

    w2 = block_diag_rep(Wx, B)                                 # (B*C, B*U) = (8, 128)
    bbb = jnp.tile(p['bb_b'], (1, B))                          # (1, 128)
    wh = block_diag_rep(Wh, B).astype(jnp.bfloat16)            # (64, 128)  bf16

    # fused head weights, columns ordered (head, batch, hidden): [ff1|ff2|ta|tb]
    whd = jnp.concatenate(
        [block_diag_rep(p[n + '_Wt'], B) for n in ('ff1', 'ff2', 'ta', 'tb')],
        axis=1).astype(jnp.bfloat16)                           # (128, 256) bf16
    bhd = jnp.concatenate(
        [jnp.tile(p[n + '_b'], (1, B)) for n in ('ff1', 'ff2', 'ta', 'tb')],
        axis=1)                                                # (1, 256)

    # per-row w_ts = exp(ts * (1 - 2*log(ts)))  — exactly the reference formula,
    # evaluated at the two constant timespans (1.0 encoder, 1/168 x_pro).
    def w_of(ts):
        return float(np.exp(ts * (1.0 - 2.0 * np.log(ts))))
    wts = np.ones((KPAD, 1), np.float32)
    wts[0:MODULE_NUM, 0] = w_of(1.0)             # encoder branch rows
    wts[MODULE_NUM:KP, 0] = w_of(1.0 / 168.0)    # x_pro branch rows

    # Sequential_projection weight as per-step (out_lens, KPAD) slices
    # (reference flat readout index = k*24 + t; pad columns are zero so the
    #  two padded recurrence rows never contribute).
    wsp = p['W_sp'].reshape(OUT_LENS, KP, MODULE_LEN)          # [o, k, t]
    wsp = jnp.transpose(wsp, (2, 0, 1))                        # [t, o, k]
    wsp = jnp.pad(wsp, ((0, 0), (0, 0), (0, KPAD - KP)))       # [t, o, 16]

    return dict(gT=gT, cT=cT, w2=w2, bbb=bbb, wh=wh, whd=whd, bhd=bhd,
                wts=jnp.asarray(wts), wsp=wsp,
                fc_Wt=p['fc_Wt'], fc_b=p['fc_b'])


# ------------------------------ Pallas kernel --------------------------------
# Single gridless kernel: mean/centering + dual Multi_period affine +
# backbone x-projection (prologue), 24 unrolled recurrence steps with an
# on-the-fly Sequential_projection accumulator, then fc + seq-mean residual.
def _cfc_fused_kernel(x_ref, gT_ref, cT_ref, w2_ref, bbb_ref,
                      wh_ref, whd_ref, bhd_ref, wts_ref, wsp_ref,
                      wfc_ref, bfc_ref, o_ref, xw_ref):
    # ---------- prologue ----------
    xT = x_ref[...]                                            # (L, B*C)
    mean = jnp.sum(xT, axis=0, keepdims=True) * (1.0 / L)      # (1, B*C) channel mean
    xc = xT - mean                                             # centered input
    aff = jnp.dot(gT_ref[...], xc,
                  preferred_element_type=jnp.float32) + cT_ref[...]   # (384, B*C)
    # backbone x-part for every (t, k) row and both batches:  (384, B*U)
    xw_ref[...] = (jnp.dot(aff, w2_ref[...],
                           preferred_element_type=jnp.float32) + bbb_ref[...])

    wh = wh_ref[...]                                           # (B*H, B*U)   bf16
    whd = whd_ref[...]                                         # (B*U, 4*B*H) bf16
    bhd = bhd_ref[...]                                         # (1, 4*B*H)
    wts = jnp.broadcast_to(wts_ref[...], (KPAD, BH))           # hoisted broadcast

    def step(t, carry):
        h_bf, s = carry                                        # (16,64) bf16, (24,64) f32
        idx = pl.multiple_of(t * KPAD, KPAD)
        xw_t = xw_ref[pl.ds(idx, KPAD), :]                     # (16, 128)
        z = xw_t + jnp.dot(h_bf, wh, preferred_element_type=jnp.float32)
        z = 1.7159 * jnp.tanh(0.666 * z)                       # LeCun backbone act.
        heads = jnp.dot(z.astype(jnp.bfloat16), whd,
                        preferred_element_type=jnp.float32) + bhd      # (16, 256)
        ff12 = jnp.tanh(heads[:, 0:2 * BH])                    # one tanh for ff1|ff2
        t_interp = jax.nn.sigmoid(heads[:, 2 * BH:3 * BH] * wts
                                  + heads[:, 3 * BH:4 * BH])
        ff1 = ff12[:, 0:BH]
        ff2 = ff12[:, BH:2 * BH]
        h_new = ff1 + t_interp * (ff2 - ff1)                   # gated update (f32)
        # on-the-fly Sequential_projection accumulation (off the h chain)
        s = s + jnp.dot(wsp_ref[t], h_new, preferred_element_type=jnp.float32)
        return h_new.astype(jnp.bfloat16), s

    _, s = lax.fori_loop(
        0, MODULE_LEN, step,
        (jnp.zeros((KPAD, BH), jnp.bfloat16),
         jnp.zeros((OUT_LENS, BH), jnp.float32)),
        unroll=True)

    # ---------- tail: fc + seq-mean residual ----------
    wfc = wfc_ref[...]
    bfc = bfc_ref[...]
    for b in range(B):                                         # static unrolled
        y = jnp.dot(s[:, b * H:(b + 1) * H], wfc,
                    preferred_element_type=jnp.float32) + bfc  # (24, 3)
        o_ref[b] = y + mean[:, b * C:b * C + OUT_F]


# ------------------------------ full forward --------------------------------
def cfc_forward(fp, x):
    # x: (B, 1, C, L) float32 -> (L, B*C) column layout expected by the kernel
    x_t = jnp.transpose(x[:, 0], (2, 0, 1)).reshape(L, B * C)
    return pl.pallas_call(
        _cfc_fused_kernel,
        out_shape=jax.ShapeDtypeStruct((B, OUT_LENS, OUT_F), jnp.float32),
        scratch_shapes=[pltpu.VMEM((TR, BU), jnp.float32)],
        compiler_params=pltpu.CompilerParams(vmem_limit_bytes=16 * 1024 * 1024),
    )(x_t, fp['gT'], fp['cT'], fp['w2'], fp['bbb'],
      fp['wh'], fp['whd'], fp['bhd'], fp['wts'], fp['wsp'],
      fp['fc_Wt'], fp['fc_b'])


if __name__ == "__main__":
    key = jax.random.PRNGKey(0)
    pkey, xkey = jax.random.split(key)
    params = init_params(pkey)
    fused_params = prepare_params(params)      # one-time folding (outside jit)
    x = jax.random.normal(xkey, (B, 1, C, L), dtype=jnp.float32)

    out = jax.jit(cfc_forward)(fused_params, x)
    jax.block_until_ready(out)
    assert out.shape == (B, OUT_LENS, OUT_F), out.shape
    print("KERNEL_OK")
</pallas_src>

<mosaic_0001>
module attributes {stable_mosaic.version = 11 : i64} {
  func.func @_cfc_fused_kernel(%arg0: memref<168x8xf32, #tpu.memory_space<vmem>>, %arg1: memref<384x168xf32, #tpu.memory_space<vmem>>, %arg2: memref<384x1xf32, #tpu.memory_space<vmem>>, %arg3: memref<8x128xf32, #tpu.memory_space<vmem>>, %arg4: memref<1x128xf32, #tpu.memory_space<vmem>>, %arg5: memref<64x128xbf16, #tpu.memory_space<vmem>>, %arg6: memref<128x256xbf16, #tpu.memory_space<vmem>>, %arg7: memref<1x256xf32, #tpu.memory_space<vmem>>, %arg8: memref<16x1xf32, #tpu.memory_space<vmem>>, %arg9: memref<24x24x16xf32, #tpu.memory_space<vmem>>, %arg10: memref<32x3xf32, #tpu.memory_space<vmem>>, %arg11: memref<1x3xf32, #tpu.memory_space<vmem>>, %arg12: memref<2x24x3xf32, #tpu.memory_space<vmem>>, %arg13: memref<384x128xf32, #tpu.memory_space<vmem>>) attributes {dimension_semantics = [], scalar_prefetch = 0 : i64, scratch_operands = 1 : i64, tpu.core_type = #tpu.core_type<tc>} {
    %c0 = arith.constant 0 : index
    %c0_0 = arith.constant 0 : index
    %0 = vector.load %arg0[%c0, %c0_0] : memref<168x8xf32, #tpu.memory_space<vmem>>, vector<168x8xf32>
    %cst = arith.constant dense<0.000000e+00> : vector<8xf32>
    %1 = vector.multi_reduction <add>, %0, %cst [0] : vector<168x8xf32> to vector<8xf32>
    %2 = vector.shape_cast %1 : vector<8xf32> to vector<1x8xf32>
    %cst_1 = arith.constant 0.00595238106 : f32
    %3 = vector.broadcast %cst_1 : f32 to vector<1x8xf32>
    %4 = arith.mulf %2, %3 : vector<1x8xf32>
    %5 = vector.broadcast %4 : vector<1x8xf32> to vector<168x8xf32>
    %6 = arith.subf %0, %5 : vector<168x8xf32>
    %c0_2 = arith.constant 0 : index
    %c0_3 = arith.constant 0 : index
    %7 = vector.load %arg1[%c0_2, %c0_3] : memref<384x168xf32, #tpu.memory_space<vmem>>, vector<384x168xf32>
    %cst_4 = arith.constant dense<0.000000e+00> : vector<384x8xf32>
    %8 = tpu.matmul %7, %6, %cst_4 {dimension_numbers = #tpu.dot_dimension_numbers<[1], [0], [0], [1], [0, 0, 1, 1], [], []>} : vector<384x168xf32>, vector<168x8xf32>, vector<384x8xf32> -> vector<384x8xf32>
    %c0_5 = arith.constant 0 : index
    %c0_6 = arith.constant 0 : index
    %9 = vector.load %arg2[%c0_5, %c0_6] : memref<384x1xf32, #tpu.memory_space<vmem>>, vector<384x1xf32>
    %10 = vector.broadcast %9 : vector<384x1xf32> to vector<384x8xf32>
    %11 = arith.addf %8, %10 : vector<384x8xf32>
    %c0_7 = arith.constant 0 : index
    %c0_8 = arith.constant 0 : index
    %12 = vector.load %arg3[%c0_7, %c0_8] : memref<8x128xf32, #tpu.memory_space<vmem>>, vector<8x128xf32>
    %cst_9 = arith.constant dense<0.000000e+00> : vector<384x128xf32>
    %13 = tpu.matmul %11, %12, %cst_9 {dimension_numbers = #tpu.dot_dimension_numbers<[1], [0], [0], [1], [0, 0, 1, 1], [], []>} : vector<384x8xf32>, vector<8x128xf32>, vector<384x128xf32> -> vector<384x128xf32>
    %c0_10 = arith.constant 0 : index
    %c0_11 = arith.constant 0 : index
    %14 = vector.load %arg4[%c0_10, %c0_11] : memref<1x128xf32, #tpu.memory_space<vmem>>, vector<1x128xf32>
    %15 = vector.broadcast %14 : vector<1x128xf32> to vector<384x128xf32>
    %16 = arith.addf %13, %15 : vector<384x128xf32>
    %c0_12 = arith.constant 0 : index
    %c0_13 = arith.constant 0 : index
    %17 = vector.load %arg13[%c0_12, %c0_13] : memref<384x128xf32, #tpu.memory_space<vmem>>, vector<384x128xf32>
    tpu.vector_store %arg13[%c0_12, %c0_13], %16 {strides = array<i32>} : memref<384x128xf32, #tpu.memory_space<vmem>>, vector<384x128xf32>,
    %c0_14 = arith.constant 0 : index
    %c0_15 = arith.constant 0 : index
    %18 = vector.load %arg5[%c0_14, %c0_15] : memref<64x128xbf16, #tpu.memory_space<vmem>>, vector<64x128xbf16>
    %c0_16 = arith.constant 0 : index
    %c0_17 = arith.constant 0 : index
    %19 = vector.load %arg6[%c0_16, %c0_17] : memref<128x256xbf16, #tpu.memory_space<vmem>>, vector<128x256xbf16>
    %c0_18 = arith.constant 0 : index
    %c0_19 = arith.constant 0 : index
    %20 = vector.load %arg7[%c0_18, %c0_19] : memref<1x256xf32, #tpu.memory_space<vmem>>, vector<1x256xf32>
    %c0_20 = arith.constant 0 : index
    %c0_21 = arith.constant 0 : index
    %21 = vector.load %arg8[%c0_20, %c0_21] : memref<16x1xf32, #tpu.memory_space<vmem>>, vector<16x1xf32>
    %22 = vector.shape_cast %21 : vector<16x1xf32> to vector<16x1xf32>
    %23 = vector.broadcast %22 : vector<16x1xf32> to vector<16x64xf32>
    %cst_22 = arith.constant 0.000000e+00 : bf16
    %24 = vector.broadcast %cst_22 : bf16 to vector<16x64xbf16>
    %cst_23 = arith.constant 0.000000e+00 : f32
    %25 = vector.broadcast %cst_23 : f32 to vector<24x64xf32>
    %c0_i32 = arith.constant 0 : i32
    %c16_i32 = arith.constant 16 : i32
    %26 = arith.muli %c0_i32, %c16_i32 : i32
    %27 = tpu.assume_multiple %26, 16 : i32
    %28 = arith.index_cast %27 : i32 to index
    %c0_24 = arith.constant 0 : index
    %29 = vector.load %arg13[%28, %c0_24] : memref<384x128xf32, #tpu.memory_space<vmem>>, vector<16x128xf32>
    %cst_25 = arith.constant dense<0.000000e+00> : vector<16x128xf32>
    %30 = tpu.matmul %24, %18, %cst_25 {dimension_numbers = #tpu.dot_dimension_numbers<[1], [0], [0], [1], [0, 0, 1, 1], [], []>} : vector<16x64xbf16>, vector<64x128xbf16>, vector<16x128xf32> -> vector<16x128xf32>
    %31 = arith.addf %29, %30 : vector<16x128xf32>
    %cst_26 = arith.constant 6.660000e-01 : f32
    %32 = vector.broadcast %cst_26 : f32 to vector<16x128xf32>
    %33 = arith.mulf %32, %31 : vector<16x128xf32>
    %34 = math.tanh %33 : vector<16x128xf32>
    %cst_27 = arith.constant 1.715900e+00 : f32
    %35 = vector.broadcast %cst_27 : f32 to vector<16x128xf32>
    %36 = arith.mulf %35, %34 : vector<16x128xf32>
    %37 = arith.truncf %36 : vector<16x128xf32> to vector<16x128xbf16>
    %cst_28 = arith.constant dense<0.000000e+00> : vector<16x256xf32>
    %38 = tpu.matmul %37, %19, %cst_28 {dimension_numbers = #tpu.dot_dimension_numbers<[1], [0], [0], [1], [0, 0, 1, 1], [], []>} : vector<16x128xbf16>, vector<128x256xbf16>, vector<16x256xf32> -> vector<16x256xf32>
    %39 = vector.broadcast %20 : vector<1x256xf32> to vector<16x256xf32>
    %40 = arith.addf %38, %39 : vector<16x256xf32>
    %41 = vector.extract_strided_slice %40 {offsets = [0, 0], sizes = [16, 128], strides = [1, 1]} : vector<16x256xf32> to vector<16x128xf32>
    %42 = math.tanh %41 : vector<16x128xf32>
    %43 = vector.extract_strided_slice %40 {offsets = [0, 128], sizes = [16, 64], strides = [1, 1]} : vector<16x256xf32> to vector<16x64xf32>
    %44 = arith.mulf %43, %23 : vector<16x64xf32>
    %45 = vector.extract_strided_slice %40 {offsets = [0, 192], sizes = [16, 64], strides = [1, 1]} : vector<16x256xf32> to vector<16x64xf32>
    %46 = arith.addf %44, %45 : vector<16x64xf32>
    %47 = arith.negf %46 : vector<16x64xf32>
    %48 = math.exp %47 : vector<16x64xf32>
    %cst_29 = arith.constant 1.000000e+00 : f32
    %49 = vector.broadcast %cst_29 : f32 to vector<16x64xf32>
    %50 = arith.addf %49, %48 : vector<16x64xf32>
    %51 = arith.divf %49, %50 : vector<16x64xf32>
    %52 = vector.extract_strided_slice %42 {offsets = [0, 0], sizes = [16, 64], strides = [1, 1]} : vector<16x128xf32> to vector<16x64xf32>
    %53 = vector.extract_strided_slice %42 {offsets = [0, 64], sizes = [16, 64], strides = [1, 1]} : vector<16x128xf32> to vector<16x64xf32>
    %54 = arith.subf %53, %52 : vector<16x64xf32>
    %55 = arith.mulf %51, %54 : vector<16x64xf32>
    %56 = arith.addf %52, %55 : vector<16x64xf32>
    %57 = arith.index_cast %c0_i32 : i32 to index
    %c0_30 = arith.constant 0 : index
    %c0_31 = arith.constant 0 : index
    %58 = vector.load %arg9[%57, %c0_30, %c0_31] : memref<24x24x16xf32, #tpu.memory_space<vmem>>, vector<1x24x16xf32>
    %59 = vector.shape_cast %58 : vector<1x24x16xf32> to vector<24x16xf32>
    %cst_32 = arith.constant dense<0.000000e+00> : vector<24x64xf32>
    %60 = tpu.matmul %59, %56, %cst_32 {dimension_numbers = #tpu.dot_dimension_numbers<[1], [0], [0], [1], [0, 0, 1, 1], [], []>} : vector<24x16xf32>, vector<16x64xf32>, vector<24x64xf32> -> vector<24x64xf32>
    %61 = arith.addf %25, %60 : vector<24x64xf32>
    %62 = arith.truncf %56 : vector<16x64xf32> to vector<16x64xbf16>
    %c1_i32 = arith.constant 1 : i32
    %c16_i32_33 = arith.constant 16 : i32
    %63 = arith.muli %c1_i32, %c16_i32_33 : i32
    %64 = tpu.assume_multiple %63, 16 : i32
    %65 = arith.index_cast %64 : i32 to index
    %c0_34 = arith.constant 0 : index
    %66 = vector.load %arg13[%65, %c0_34] : memref<384x128xf32, #tpu.memory_space<vmem>>, vector<16x128xf32>
    %cst_35 = arith.constant dense<0.000000e+00> : vector<16x128xf32>
    %67 = tpu.matmul %62, %18, %cst_35 {dimension_numbers = #tpu.dot_dimension_numbers<[1], [0], [0], [1], [0, 0, 1, 1], [], []>} : vector<16x64xbf16>, vector<64x128xbf16>, vector<16x128xf32> -> vector<16x128xf32>
    %68 = arith.addf %66, %67 : vector<16x128xf32>
    %cst_36 = arith.constant 6.660000e-01 : f32
    %69 = vector.broadcast %cst_36 : f32 to vector<16x128xf32>
    %70 = arith.mulf %69, %68 : vector<16x128xf32>
    %71 = math.tanh %70 : vector<16x128xf32>
    %cst_37 = arith.constant 1.715900e+00 : f32
    %72 = vector.broadcast %cst_37 : f32 to vector<16x128xf32>
    %73 = arith.mulf %72, %71 : vector<16x128xf32>
    %74 = arith.truncf %73 : vector<16x128xf32> to vector<16x128xbf16>
    %cst_38 = arith.constant dense<0.000000e+00> : vector<16x256xf32>
    %75 = tpu.matmul %74, %19, %cst_38 {dimension_numbers = #tpu.dot_dimension_numbers<[1], [0], [0], [1], [0, 0, 1, 1], [], []>} : vector<16x128xbf16>, vector<128x256xbf16>, vector<16x256xf32> -> vector<16x256xf32>
    %76 = vector.broadcast %20 : vector<1x256xf32> to vector<16x256xf32>
    %77 = arith.addf %75, %76 : vector<16x256xf32>
    %78 = vector.extract_strided_slice %77 {offsets = [0, 0], sizes = [16, 128], strides = [1, 1]} : vector<16x256xf32> to vector<16x128xf32>
    %79 = math.tanh %78 : vector<16x128xf32>
    %80 = vector.extract_strided_slice %77 {offsets = [0, 128], sizes = [16, 64], strides = [1, 1]} : vector<16x256xf32> to vector<16x64xf32>
    %81 = arith.mulf %80, %23 : vector<16x64xf32>
    %82 = vector.extract_strided_slice %77 {offsets = [0, 192], sizes = [16, 64], strides = [1, 1]} : vector<16x256xf32> to vector<16x64xf32>
    %83 = arith.addf %81, %82 : vector<16x64xf32>
    %84 = arith.negf %83 : vector<16x64xf32>
    %85 = math.exp %84 : vector<16x64xf32>
    %cst_39 = arith.constant 1.000000e+00 : f32
    %86 = vector.broadcast %cst_39 : f32 to vector<16x64xf32>
    %87 = arith.addf %86, %85 : vector<16x64xf32>
    %88 = arith.divf %86, %87 : vector<16x64xf32>
    %89 = vector.extract_strided_slice %79 {offsets = [0, 0], sizes = [16, 64], strides = [1, 1]} : vector<16x128xf32> to vector<16x64xf32>
    %90 = vector.extract_strided_slice %79 {offsets = [0, 64], sizes = [16, 64], strides = [1, 1]} : vector<16x128xf32> to vector<16x64xf32>
    %91 = arith.subf %90, %89 : vector<16x64xf32>
    %92 = arith.mulf %88, %91 : vector<16x64xf32>
    %93 = arith.addf %89, %92 : vector<16x64xf32>
    %94 = arith.index_cast %c1_i32 : i32 to index
    %c0_40 = arith.constant 0 : index
    %c0_41 = arith.constant 0 : index
    %95 = vector.load %arg9[%94, %c0_40, %c0_41] : memref<24x24x16xf32, #tpu.memory_space<vmem>>, vector<1x24x16xf32>
    %96 = vector.shape_cast %95 : vector<1x24x16xf32> to vector<24x16xf32>
    %cst_42 = arith.constant dense<0.000000e+00> : vector<24x64xf32>
    %97 = tpu.matmul %96, %93, %cst_42 {dimension_numbers = #tpu.dot_dimension_numbers<[1], [0], [0], [1], [0, 0, 1, 1], [], []>} : vector<24x16xf32>, vector<16x64xf32>, vector<24x64xf32> -> vector<24x64xf32>
    %98 = arith.addf %61, %97 : vector<24x64xf32>
    %99 = arith.truncf %93 : vector<16x64xf32> to vector<16x64xbf16>
    %c2_i32 = arith.constant 2 : i32
    %c16_i32_43 = arith.constant 16 : i32
    %100 = arith.muli %c2_i32, %c16_i32_43 : i32
    %101 = tpu.assume_multiple %100, 16 : i32
    %102 = arith.index_cast %101 : i32 to index
    %c0_44 = arith.constant 0 : index
    %103 = vector.load %arg13[%102, %c0_44] : memref<384x128xf32, #tpu.memory_space<vmem>>, vector<16x128xf32>
    %cst_45 = arith.constant dense<0.000000e+00> : vector<16x128xf32>
    %104 = tpu.matmul %99, %18, %cst_45 {dimension_numbers = #tpu.dot_dimension_numbers<[1], [0], [0], [1], [0, 0, 1, 1], [], []>} : vector<16x64xbf16>, vector<64x128xbf16>, vector<16x128xf32> -> vector<16x128xf32>
    %105 = arith.addf %103, %104 : vector<16x128xf32>
    %cst_46 = arith.constant 6.660000e-01 : f32
    %106 = vector.broadcast %cst_46 : f32 to vector<16x128xf32>
    %107 = arith.mulf %106, %105 : vector<16x128xf32>
    %108 = math.tanh %107 : vector<16x128xf32>
    %cst_47 = arith.constant 1.715900e+00 : f32
    %109 = vector.broadcast %cst_47 : f32 to vector<16x128xf32>
    %110 = arith.mulf %109, %108 : vector<16x128xf32>
    %111 = arith.truncf %110 : vector<16x128xf32> to vector<16x128xbf16>
    %cst_48 = arith.constant dense<0.000000e+00> : vector<16x256xf32>
    %112 = tpu.matmul %111, %19, %cst_48 {dimension_numbers = #tpu.dot_dimension_numbers<[1], [0], [0], [1], [0, 0, 1, 1], [], []>} : vector<16x128xbf16>, vector<128x256xbf16>, vector<16x256xf32> -> vector<16x256xf32>
    %113 = vector.broadcast %20 : vector<1x256xf32> to vector<16x256xf32>
    %114 = arith.addf %112, %113 : vector<16x256xf32>
    %115 = vector.extract_strided_slice %114 {offsets = [0, 0], sizes = [16, 128], strides = [1, 1]} : vector<16x256xf32> to vector<16x128xf32>
    %116 = math.tanh %115 : vector<16x128xf32>
    %117 = vector.extract_strided_slice %114 {offsets = [0, 128], sizes = [16, 64], strides = [1, 1]} : vector<16x256xf32> to vector<16x64xf32>
    %118 = arith.mulf %117, %23 : vector<16x64xf32>
    %119 = vector.extract_strided_slice %114 {offsets = [0, 192], sizes = [16, 64], strides = [1, 1]} : vector<16x256xf32> to vector<16x64xf32>
    %120 = arith.addf %118, %119 : vector<16x64xf32>
    %121 = arith.negf %120 : vector<16x64xf32>
    %122 = math.exp %121 : vector<16x64xf32>
    %cst_49 = arith.constant 1.000000e+00 : f32
    %123 = vector.broadcast %cst_49 : f32 to vector<16x64xf32>
    %124 = arith.addf %123, %122 : vector<16x64xf32>
    %125 = arith.divf %123, %124 : vector<16x64xf32>
    %126 = vector.extract_strided_slice %116 {offsets = [0, 0], sizes = [16, 64], strides = [1, 1]} : vector<16x128xf32> to vector<16x64xf32>
    %127 = vector.extract_strided_slice %116 {offsets = [0, 64], sizes = [16, 64], strides = [1, 1]} : vector<16x128xf32> to vector<16x64xf32>
    %128 = arith.subf %127, %126 : vector<16x64xf32>
    %129 = arith.mulf %125, %128 : vector<16x64xf32>
    %130 = arith.addf %126, %129 : vector<16x64xf32>
    %131 = arith.index_cast %c2_i32 : i32 to index
    %c0_50 = arith.constant 0 : index
    %c0_51 = arith.constant 0 : index
    %132 = vector.load %arg9[%131, %c0_50, %c0_51] : memref<24x24x16xf32, #tpu.memory_space<vmem>>, vector<1x24x16xf32>
    %133 = vector.shape_cast %132 : vector<1x24x16xf32> to vector<24x16xf32>
    %cst_52 = arith.constant dense<0.000000e+00> : vector<24x64xf32>
    %134 = tpu.matmul %133, %130, %cst_52 {dimension_numbers = #tpu.dot_dimension_numbers<[1], [0], [0], [1], [0, 0, 1, 1], [], []>} : vector<24x16xf32>, vector<16x64xf32>, vector<24x64xf32> -> vector<24x64xf32>
    %135 = arith.addf %98, %134 : vector<24x64xf32>
    %136 = arith.truncf %130 : vector<16x64xf32> to vector<16x64xbf16>
    %c3_i32 = arith.constant 3 : i32
    %c16_i32_53 = arith.constant 16 : i32
    %137 = arith.muli %c3_i32, %c16_i32_53 : i32
    %138 = tpu.assume_multiple %137, 16 : i32
    %139 = arith.index_cast %138 : i32 to index
    %c0_54 = arith.constant 0 : index
    %140 = vector.load %arg13[%139, %c0_54] : memref<384x128xf32, #tpu.memory_space<vmem>>, vector<16x128xf32>
    %cst_55 = arith.constant dense<0.000000e+00> : vector<16x128xf32>
    %141 = tpu.matmul %136, %18, %cst_55 {dimension_numbers = #tpu.dot_dimension_numbers<[1], [0], [0], [1], [0, 0, 1, 1], [], []>} : vector<16x64xbf16>, vector<64x128xbf16>, vector<16x128xf32> -> vector<16x128xf32>
    %142 = arith.addf %140, %141 : vector<16x128xf32>
    %cst_56 = arith.constant 6.660000e-01 : f32
    %143 = vector.broadcast %cst_56 : f32 to vector<16x128xf32>
    %144 = arith.mulf %143, %142 : vector<16x128xf32>
    %145 = math.tanh %144 : vector<16x128xf32>
    %cst_57 = arith.constant 1.715900e+00 : f32
    %146 = vector.broadcast %cst_57 : f32 to vector<16x128xf32>
    %147 = arith.mulf %146, %145 : vector<16x128xf32>
    %148 = arith.truncf %147 : vector<16x128xf32> to vector<16x128xbf16>
    %cst_58 = arith.constant dense<0.000000e+00> : vector<16x256xf32>
    %149 = tpu.matmul %148, %19, %cst_58 {dimension_numbers = #tpu.dot_dimension_numbers<[1], [0], [0], [1], [0, 0, 1, 1], [], []>} : vector<16x128xbf16>, vector<128x256xbf16>, vector<16x256xf32> -> vector<16x256xf32>
    %150 = vector.broadcast %20 : vector<1x256xf32> to vector<16x256xf32>
    %151 = arith.addf %149, %150 : vector<16x256xf32>
    %152 = vector.extract_strided_slice %151 {offsets = [0, 0], sizes = [16, 128], strides = [1, 1]} : vector<16x256xf32> to vector<16x128xf32>
    %153 = math.tanh %152 : vector<16x128xf32>
    %154 = vector.extract_strided_slice %151 {offsets = [0, 128], sizes = [16, 64], strides = [1, 1]} : vector<16x256xf32> to vector<16x64xf32>
    %155 = arith.mulf %154, %23 : vector<16x64xf32>
    %156 = vector.extract_strided_slice %151 {offsets = [0, 192], sizes = [16, 64], strides = [1, 1]} : vector<16x256xf32> to vector<16x64xf32>
    %157 = arith.addf %155, %156 : vector<16x64xf32>
    %158 = arith.negf %157 : vector<16x64xf32>
    %159 = math.exp %158 : vector<16x64xf32>
    %cst_59 = arith.constant 1.000000e+00 : f32
    %160 = vector.broadcast %cst_59 : f32 to vector<16x64xf32>
    %161 = arith.addf %160, %159 : vector<16x64xf32>
    %162 = arith.divf %160, %161 : vector<16x64xf32>
    %163 = vector.extract_strided_slice %153 {offsets = [0, 0], sizes = [16, 64], strides = [1, 1]} : vector<16x128xf32> to vector<16x64xf32>
    %164 = vector.extract_strided_slice %153 {offsets = [0, 64], sizes = [16, 64], strides = [1, 1]} : vector<16x128xf32> to vector<16x64xf32>
    %165 = arith.subf %164, %163 : vector<16x64xf32>
    %166 = arith.mulf %162, %165 : vector<16x64xf32>
    %167 = arith.addf %163, %166 : vector<16x64xf32>
    %168 = arith.index_cast %c3_i32 : i32 to index
    %c0_60 = arith.constant 0 : index
    %c0_61 = arith.constant 0 : index
    %169 = vector.load %arg9[%168, %c0_60, %c0_61] : memref<24x24x16xf32, #tpu.memory_space<vmem>>, vector<1x24x16xf32>
    %170 = vector.shape_cast %169 : vector<1x24x16xf32> to vector<24x16xf32>
    %cst_62 = arith.constant dense<0.000000e+00> : vector<24x64xf32>
    %171 = tpu.matmul %170, %167, %cst_62 {dimension_numbers = #tpu.dot_dimension_numbers<[1], [0], [0], [1], [0, 0, 1, 1], [], []>} : vector<24x16xf32>, vector<16x64xf32>, vector<24x64xf32> -> vector<24x64xf32>
    %172 = arith.addf %135, %171 : vector<24x64xf32>
    %173 = arith.truncf %167 : vector<16x64xf32> to vector<16x64xbf16>
    %c4_i32 = arith.constant 4 : i32
    %c16_i32_63 = arith.constant 16 : i32
    %174 = arith.muli %c4_i32, %c16_i32_63 : i32
    %175 = tpu.assume_multiple %174, 16 : i32
    %176 = arith.index_cast %175 : i32 to index
    %c0_64 = arith.constant 0 : index
    %177 = vector.load %arg13[%176, %c0_64] : memref<384x128xf32, #tpu.memory_space<vmem>>, vector<16x128xf32>
    %cst_65 = arith.constant dense<0.000000e+00> : vector<16x128xf32>
    %178 = tpu.matmul %173, %18, %cst_65 {dimension_numbers = #tpu.dot_dimension_numbers<[1], [0], [0], [1], [0, 0, 1, 1], [], []>} : vector<16x64xbf16>, vector<64x128xbf16>, vector<16x128xf32> -> vector<16x128xf32>
    %179 = arith.addf %177, %178 : vector<16x128xf32>
    %cst_66 = arith.constant 6.660000e-01 : f32
    %180 = vector.broadcast %cst_66 : f32 to vector<16x128xf32>
    %181 = arith.mulf %180, %179 : vector<16x128xf32>
    %182 = math.tanh %181 : vector<16x128xf32>
    %cst_67 = arith.constant 1.715900e+00 : f32
    %183 = vector.broadcast %cst_67 : f32 to vector<16x128xf32>
    %184 = arith.mulf %183, %182 : vector<16x128xf32>
    %185 = arith.truncf %184 : vector<16x128xf32> to vector<16x128xbf16>
    %cst_68 = arith.constant dense<0.000000e+00> : vector<16x256xf32>
    %186 = tpu.matmul %185, %19, %cst_68 {dimension_numbers = #tpu.dot_dimension_numbers<[1], [0], [0], [1], [0, 0, 1, 1], [], []>} : vector<16x128xbf16>, vector<128x256xbf16>, vector<16x256xf32> -> vector<16x256xf32>
    %187 = vector.broadcast %20 : vector<1x256xf32> to vector<16x256xf32>
    %188 = arith.addf %186, %187 : vector<16x256xf32>
    %189 = vector.extract_strided_slice %188 {offsets = [0, 0], sizes = [16, 128], strides = [1, 1]} : vector<16x256xf32> to vector<16x128xf32>
    %190 = math.tanh %189 : vector<16x128xf32>
    %191 = vector.extract_strided_slice %188 {offsets = [0, 128], sizes = [16, 64], strides = [1, 1]} : vector<16x256xf32> to vector<16x64xf32>
    %192 = arith.mulf %191, %23 : vector<16x64xf32>
    %193 = vector.extract_strided_slice %188 {offsets = [0, 192], sizes = [16, 64], strides = [1, 1]} : vector<16x256xf32> to vector<16x64xf32>
    %194 = arith.addf %192, %193 : vector<16x64xf32>
    %195 = arith.negf %194 : vector<16x64xf32>
    %196 = math.exp %195 : vector<16x64xf32>
    %cst_69 = arith.constant 1.000000e+00 : f32
    %197 = vector.broadcast %cst_69 : f32 to vector<16x64xf32>
    %198 = arith.addf %197, %196 : vector<16x64xf32>
    %199 = arith.divf %197, %198 : vector<16x64xf32>
    %200 = vector.extract_strided_slice %190 {offsets = [0, 0], sizes = [16, 64], strides = [1, 1]} : vector<16x128xf32> to vector<16x64xf32>
    %201 = vector.extract_strided_slice %190 {offsets = [0, 64], sizes = [16, 64], strides = [1, 1]} : vector<16x128xf32> to vector<16x64xf32>
    %202 = arith.subf %201, %200 : vector<16x64xf32>
    %203 = arith.mulf %199, %202 : vector<16x64xf32>
    %204 = arith.addf %200, %203 : vector<16x64xf32>
    %205 = arith.index_cast %c4_i32 : i32 to index
    %c0_70 = arith.constant 0 : index
    %c0_71 = arith.constant 0 : index
    %206 = vector.load %arg9[%205, %c0_70, %c0_71] : memref<24x24x16xf32, #tpu.memory_space<vmem>>, vector<1x24x16xf32>
    %207 = vector.shape_cast %206 : vector<1x24x16xf32> to vector<24x16xf32>
    %cst_72 = arith.constant dense<0.000000e+00> : vector<24x64xf32>
    %208 = tpu.matmul %207, %204, %cst_72 {dimension_numbers = #tpu.dot_dimension_numbers<[1], [0], [0], [1], [0, 0, 1, 1], [], []>} : vector<24x16xf32>, vector<16x64xf32>, vector<24x64xf32> -> vector<24x64xf32>
    %209 = arith.addf %172, %208 : vector<24x64xf32>
    %210 = arith.truncf %204 : vector<16x64xf32> to vector<16x64xbf16>
    %c5_i32 = arith.constant 5 : i32
    %c16_i32_73 = arith.constant 16 : i32
    %211 = arith.muli %c5_i32, %c16_i32_73 : i32
    %212 = tpu.assume_multiple %211, 16 : i32
    %213 = arith.index_cast %212 : i32 to index
    %c0_74 = arith.constant 0 : index
    %214 = vector.load %arg13[%213, %c0_74] : memref<384x128xf32, #tpu.memory_space<vmem>>, vector<16x128xf32>
    %cst_75 = arith.constant dense<0.000000e+00> : vector<16x128xf32>
    %215 = tpu.matmul %210, %18, %cst_75 {dimension_numbers = #tpu.dot_dimension_numbers<[1], [0], [0], [1], [0, 0, 1, 1], [], []>} : vector<16x64xbf16>, vector<64x128xbf16>, vector<16x128xf32> -> vector<16x128xf32>
    %216 = arith.addf %214, %215 : vector<16x128xf32>
    %cst_76 = arith.constant 6.660000e-01 : f32
    %217 = vector.broadcast %cst_76 : f32 to vector<16x128xf32>
    %218 = arith.mulf %217, %216 : vector<16x128xf32>
    %219 = math.tanh %218 : vector<16x128xf32>
    %cst_77 = arith.constant 1.715900e+00 : f32
    %220 = vector.broadcast %cst_77 : f32 to vector<16x128xf32>
    %221 = arith.mulf %220, %219 : vector<16x128xf32>
    %222 = arith.truncf %221 : vector<16x128xf32> to vector<16x128xbf16>
    %cst_78 = arith.constant dense<0.000000e+00> : vector<16x256xf32>
    %223 = tpu.matmul %222, %19, %cst_78 {dimension_numbers = #tpu.dot_dimension_numbers<[1], [0], [0], [1], [0, 0, 1, 1], [], []>} : vector<16x128xbf16>, vector<128x256xbf16>, vector<16x256xf32> -> vector<16x256xf32>
    %224 = vector.broadcast %20 : vector<1x256xf32> to vector<16x256xf32>
    %225 = arith.addf %223, %224 : vector<16x256xf32>
    %226 = vector.extract_strided_slice %225 {offsets = [0, 0], sizes = [16, 128], strides = [1, 1]} : vector<16x256xf32> to vector<16x128xf32>
    %227 = math.tanh %226 : vector<16x128xf32>
    %228 = vector.extract_strided_slice %225 {offsets = [0, 128], sizes = [16, 64], strides = [1, 1]} : vector<16x256xf32> to vector<16x64xf32>
    %229 = arith.mulf %228, %23 : vector<16x64xf32>
    %230 = vector.extract_strided_slice %225 {offsets = [0, 192], sizes = [16, 64], strides = [1, 1]} : vector<16x256xf32> to vector<16x64xf32>
    %231 = arith.addf %229, %230 : vector<16x64xf32>
    %232 = arith.negf %231 : vector<16x64xf32>
    %233 = math.exp %232 : vector<16x64xf32>
    %cst_79 = arith.constant 1.000000e+00 : f32
    %234 = vector.broadcast %cst_79 : f32 to vector<16x64xf32>
    %235 = arith.addf %234, %233 : vector<16x64xf32>
    %236 = arith.divf %234, %235 : vector<16x64xf32>
    %237 = vector.extract_strided_slice %227 {offsets = [0, 0], sizes = [16, 64], strides = [1, 1]} : vector<16x128xf32> to vector<16x64xf32>
    %238 = vector.extract_strided_slice %227 {offsets = [0, 64], sizes = [16, 64], strides = [1, 1]} : vector<16x128xf32> to vector<16x64xf32>
    %239 = arith.subf %238, %237 : vector<16x64xf32>
    %240 = arith.mulf %236, %239 : vector<16x64xf32>
    %241 = arith.addf %237, %240 : vector<16x64xf32>
    %242 = arith.index_cast %c5_i32 : i32 to index
    %c0_80 = arith.constant 0 : index
    %c0_81 = arith.constant 0 : index
    %243 = vector.load %arg9[%242, %c0_80, %c0_81] : memref<24x24x16xf32, #tpu.memory_space<vmem>>, vector<1x24x16xf32>
    %244 = vector.shape_cast %243 : vector<1x24x16xf32> to vector<24x16xf32>
    %cst_82 = arith.constant dense<0.000000e+00> : vector<24x64xf32>
    %245 = tpu.matmul %244, %241, %cst_82 {dimension_numbers = #tpu.dot_dimension_numbers<[1], [0], [0], [1], [0, 0, 1, 1], [], []>} : vector<24x16xf32>, vector<16x64xf32>, vector<24x64xf32> -> vector<24x64xf32>
    %246 = arith.addf %209, %245 : vector<24x64xf32>
    %247 = arith.truncf %241 : vector<16x64xf32> to vector<16x64xbf16>
    %c6_i32 = arith.constant 6 : i32
    %c16_i32_83 = arith.constant 16 : i32
    %248 = arith.muli %c6_i32, %c16_i32_83 : i32
    %249 = tpu.assume_multiple %248, 16 : i32
    %250 = arith.index_cast %249 : i32 to index
    %c0_84 = arith.constant 0 : index
    %251 = vector.load %arg13[%250, %c0_84] : memref<384x128xf32, #tpu.memory_space<vmem>>, vector<16x128xf32>
    %cst_85 = arith.constant dense<0.000000e+00> : vector<16x128xf32>
    %252 = tpu.matmul %247, %18, %cst_85 {dimension_numbers = #tpu.dot_dimension_numbers<[1], [0], [0], [1], [0, 0, 1, 1], [], []>} : vector<16x64xbf16>, vector<64x128xbf16>, vector<16x128xf32> -> vector<16x128xf32>
    %253 = arith.addf %251, %252 : vector<16x128xf32>
    %cst_86 = arith.constant 6.660000e-01 : f32
    %254 = vector.broadcast %cst_86 : f32 to vector<16x128xf32>
    %255 = arith.mulf %254, %253 : vector<16x128xf32>
    %256 = math.tanh %255 : vector<16x128xf32>
    %cst_87 = arith.constant 1.715900e+00 : f32
    %257 = vector.broadcast %cst_87 : f32 to vector<16x128xf32>
    %258 = arith.mulf %257, %256 : vector<16x128xf32>
    %259 = arith.truncf %258 : vector<16x128xf32> to vector<16x128xbf16>
    %cst_88 = arith.constant dense<0.000000e+00> : vector<16x256xf32>
    %260 = tpu.matmul %259, %19, %cst_88 {dimension_numbers = #tpu.dot_dimension_numbers<[1], [0], [0], [1], [0, 0, 1, 1], [], []>} : vector<16x128xbf16>, vector<128x256xbf16>, vector<16x256xf32> -> vector<16x256xf32>
    %261 = vector.broadcast %20 : vector<1x256xf32> to vector<16x256xf32>
    %262 = arith.addf %260, %261 : vector<16x256xf32>
    %263 = vector.extract_strided_slice %262 {offsets = [0, 0], sizes = [16, 128], strides = [1, 1]} : vector<16x256xf32> to vector<16x128xf32>
    %264 = math.tanh %263 : vector<16x128xf32>
    %265 = vector.extract_strided_slice %262 {offsets = [0, 128], sizes = [16, 64], strides = [1, 1]} : vector<16x256xf32> to vector<16x64xf32>
    %266 = arith.mulf %265, %23 : vector<16x64xf32>
    %267 = vector.extract_strided_slice %262 {offsets = [0, 192], sizes = [16, 64], strides = [1, 1]} : vector<16x256xf32> to vector<16x64xf32>
    %268 = arith.addf %266, %267 : vector<16x64xf32>
    %269 = arith.negf %268 : vector<16x64xf32>
    %270 = math.exp %269 : vector<16x64xf32>
    %cst_89 = arith.constant 1.000000e+00 : f32
    %271 = vector.broadcast %cst_89 : f32 to vector<16x64xf32>
    %272 = arith.addf %271, %270 : vector<16x64xf32>
    %273 = arith.divf %271, %272 : vector<16x64xf32>
    %274 = vector.extract_strided_slice %264 {offsets = [0, 0], sizes = [16, 64], strides = [1, 1]} : vector<16x128xf32> to vector<16x64xf32>
    %275 = vector.extract_strided_slice %264 {offsets = [0, 64], sizes = [16, 64], strides = [1, 1]} : vector<16x128xf32> to vector<16x64xf32>
    %276 = arith.subf %275, %274 : vector<16x64xf32>
    %277 = arith.mulf %273, %276 : vector<16x64xf32>
    %278 = arith.addf %274, %277 : vector<16x64xf32>
    %279 = arith.index_cast %c6_i32 : i32 to index
    %c0_90 = arith.constant 0 : index
    %c0_91 = arith.constant 0 : index
    %280 = vector.load %arg9[%279, %c0_90, %c0_91] : memref<24x24x16xf32, #tpu.memory_space<vmem>>, vector<1x24x16xf32>
    %281 = vector.shape_cast %280 : vector<1x24x16xf32> to vector<24x16xf32>
    %cst_92 = arith.constant dense<0.000000e+00> : vector<24x64xf32>
    %282 = tpu.matmul %281, %278, %cst_92 {dimension_numbers = #tpu.dot_dimension_numbers<[1], [0], [0], [1], [0, 0, 1, 1], [], []>} : vector<24x16xf32>, vector<16x64xf32>, vector<24x64xf32> -> vector<24x64xf32>
    %283 = arith.addf %246, %282 : vector<24x64xf32>
    %284 = arith.truncf %278 : vector<16x64xf32> to vector<16x64xbf16>
    %c7_i32 = arith.constant 7 : i32
    %c16_i32_93 = arith.constant 16 : i32
    %285 = arith.muli %c7_i32, %c16_i32_93 : i32
    %286 = tpu.assume_multiple %285, 16 : i32
    %287 = arith.index_cast %286 : i32 to index
    %c0_94 = arith.constant 0 : index
    %288 = vector.load %arg13[%287, %c0_94] : memref<384x128xf32, #tpu.memory_space<vmem>>, vector<16x128xf32>
    %cst_95 = arith.constant dense<0.000000e+00> : vector<16x128xf32>
    %289 = tpu.matmul %284, %18, %cst_95 {dimension_numbers = #tpu.dot_dimension_numbers<[1], [0], [0], [1], [0, 0, 1, 1], [], []>} : vector<16x64xbf16>, vector<64x128xbf16>, vector<16x128xf32> -> vector<16x128xf32>
    %290 = arith.addf %288, %289 : vector<16x128xf32>
    %cst_96 = arith.constant 6.660000e-01 : f32
    %291 = vector.broadcast %cst_96 : f32 to vector<16x128xf32>
    %292 = arith.mulf %291, %290 : vector<16x128xf32>
    %293 = math.tanh %292 : vector<16x128xf32>
    %cst_97 = arith.constant 1.715900e+00 : f32
    %294 = vector.broadcast %cst_97 : f32 to vector<16x128xf32>
    %295 = arith.mulf %294, %293 : vector<16x128xf32>
    %296 = arith.truncf %295 : vector<16x128xf32> to vector<16x128xbf16>
    %cst_98 = arith.constant dense<0.000000e+00> : vector<16x256xf32>
    %297 = tpu.matmul %296, %19, %cst_98 {dimension_numbers = #tpu.dot_dimension_numbers<[1], [0], [0], [1], [0, 0, 1, 1], [], []>} : vector<16x128xbf16>, vector<128x256xbf16>, vector<16x256xf32> -> vector<16x256xf32>
    %298 = vector.broadcast %20 : vector<1x256xf32> to vector<16x256xf32>
    %299 = arith.addf %297, %298 : vector<16x256xf32>
    %300 = vector.extract_strided_slice %299 {offsets = [0, 0], sizes = [16, 128], strides = [1, 1]} : vector<16x256xf32> to vector<16x128xf32>
    %301 = math.tanh %300 : vector<16x128xf32>
    %302 = vector.extract_strided_slice %299 {offsets = [0, 128], sizes = [16, 64], strides = [1, 1]} : vector<16x256xf32> to vector<16x64xf32>
    %303 = arith.mulf %302, %23 : vector<16x64xf32>
    %304 = vector.extract_strided_slice %299 {offsets = [0, 192], sizes = [16, 64], strides = [1, 1]} : vector<16x256xf32> to vector<16x64xf32>
    %305 = arith.addf %303, %304 : vector<16x64xf32>
    %306 = arith.negf %305 : vector<16x64xf32>
    %307 = math.exp %306 : vector<16x64xf32>
    %cst_99 = arith.constant 1.000000e+00 : f32
    %308 = vector.broadcast %cst_99 : f32 to vector<16x64xf32>
    %309 = arith.addf %308, %307 : vector<16x64xf32>
    %310 = arith.divf %308, %309 : vector<16x64xf32>
    %311 = vector.extract_strided_slice %301 {offsets = [0, 0], sizes = [16, 64], strides = [1, 1]} : vector<16x128xf32> to vector<16x64xf32>
    %312 = vector.extract_strided_slice %301 {offsets = [0, 64], sizes = [16, 64], strides = [1, 1]} : vector<16x128xf32> to vector<16x64xf32>
    %313 = arith.subf %312, %311 : vector<16x64xf32>
    %314 = arith.mulf %310, %313 : vector<16x64xf32>
    %315 = arith.addf %311, %314 : vector<16x64xf32>
    %316 = arith.index_cast %c7_i32 : i32 to index
    %c0_100 = arith.constant 0 : index
    %c0_101 = arith.constant 0 : index
    %317 = vector.load %arg9[%316, %c0_100, %c0_101] : memref<24x24x16xf32, #tpu.memory_space<vmem>>, vector<1x24x16xf32>
    %318 = vector.shape_cast %317 : vector<1x24x16xf32> to vector<24x16xf32>
    %cst_102 = arith.constant dense<0.000000e+00> : vector<24x64xf32>
    %319 = tpu.matmul %318, %315, %cst_102 {dimension_numbers = #tpu.dot_dimension_numbers<[1], [0], [0], [1], [0, 0, 1, 1], [], []>} : vector<24x16xf32>, vector<16x64xf32>, vector<24x64xf32> -> vector<24x64xf32>
    %320 = arith.addf %283, %319 : vector<24x64xf32>
    %321 = arith.truncf %315 : vector<16x64xf32> to vector<16x64xbf16>
    %c8_i32 = arith.constant 8 : i32
    %c16_i32_103 = arith.constant 16 : i32
    %322 = arith.muli %c8_i32, %c16_i32_103 : i32
    %323 = tpu.assume_multiple %322, 16 : i32
    %324 = arith.index_cast %323 : i32 to index
    %c0_104 = arith.constant 0 : index
    %325 = vector.load %arg13[%324, %c0_104] : memref<384x128xf32, #tpu.memory_space<vmem>>, vector<16x128xf32>
    %cst_105 = arith.constant dense<0.000000e+00> : vector<16x128xf32>
    %326 = tpu.matmul %321, %18, %cst_105 {dimension_numbers = #tpu.dot_dimension_numbers<[1], [0], [0], [1], [0, 0, 1, 1], [], []>} : vector<16x64xbf16>, vector<64x128xbf16>, vector<16x128xf32> -> vector<16x128xf32>
    %327 = arith.addf %325, %326 : vector<16x128xf32>
    %cst_106 = arith.constant 6.660000e-01 : f32
    %328 = vector.broadcast %cst_106 : f32 to vector<16x128xf32>
    %329 = arith.mulf %328, %327 : vector<16x128xf32>
    %330 = math.tanh %329 : vector<16x128xf32>
    %cst_107 = arith.constant 1.715900e+00 : f32
    %331 = vector.broadcast %cst_107 : f32 to vector<16x128xf32>
    %332 = arith.mulf %331, %330 : vector<16x128xf32>
    %333 = arith.truncf %332 : vector<16x128xf32> to vector<16x128xbf16>
    %cst_108 = arith.constant dense<0.000000e+00> : vector<16x256xf32>
    %334 = tpu.matmul %333, %19, %cst_108 {dimension_numbers = #tpu.dot_dimension_numbers<[1], [0], [0], [1], [0, 0, 1, 1], [], []>} : vector<16x128xbf16>, vector<128x256xbf16>, vector<16x256xf32> -> vector<16x256xf32>
    %335 = vector.broadcast %20 : vector<1x256xf32> to vector<16x256xf32>
    %336 = arith.addf %334, %335 : vector<16x256xf32>
    %337 = vector.extract_strided_slice %336 {offsets = [0, 0], sizes = [16, 128], strides = [1, 1]} : vector<16x256xf32> to vector<16x128xf32>
    %338 = math.tanh %337 : vector<16x128xf32>
    %339 = vector.extract_strided_slice %336 {offsets = [0, 128], sizes = [16, 64], strides = [1, 1]} : vector<16x256xf32> to vector<16x64xf32>
    %340 = arith.mulf %339, %23 : vector<16x64xf32>
    %341 = vector.extract_strided_slice %336 {offsets = [0, 192], sizes = [16, 64], strides = [1, 1]} : vector<16x256xf32> to vector<16x64xf32>
    %342 = arith.addf %340, %341 : vector<16x64xf32>
    %343 = arith.negf %342 : vector<16x64xf32>
    %344 = math.exp %343 : vector<16x64xf32>
    %cst_109 = arith.constant 1.000000e+00 : f32
    %345 = vector.broadcast %cst_109 : f32 to vector<16x64xf32>
    %346 = arith.addf %345, %344 : vector<16x64xf32>
    %347 = arith.divf %345, %346 : vector<16x64xf32>
    %348 = vector.extract_strided_slice %338 {offsets = [0, 0], sizes = [16, 64], strides = [1, 1]} : vector<16x128xf32> to vector<16x64xf32>
    %349 = vector.extract_strided_slice %338 {offsets = [0, 64], sizes = [16, 64], strides = [1, 1]} : vector<16x128xf32> to vector<16x64xf32>
    %350 = arith.subf %349, %348 : vector<16x64xf32>
    %351 = arith.mulf %347, %350 : vector<16x64xf32>
    %352 = arith.addf %348, %351 : vector<16x64xf32>
    %353 = arith.index_cast %c8_i32 : i32 to index
    %c0_110 = arith.constant 0 : index
    %c0_111 = arith.constant 0 : index
    %354 = vector.load %arg9[%353, %c0_110, %c0_111] : memref<24x24x16xf32, #tpu.memory_space<vmem>>, vector<1x24x16xf32>
    %355 = vector.shape_cast %354 : vector<1x24x16xf32> to vector<24x16xf32>
    %cst_112 = arith.constant dense<0.000000e+00> : vector<24x64xf32>
    %356 = tpu.matmul %355, %352, %cst_112 {dimension_numbers = #tpu.dot_dimension_numbers<[1], [0], [0], [1], [0, 0, 1, 1], [], []>} : vector<24x16xf32>, vector<16x64xf32>, vector<24x64xf32> -> vector<24x64xf32>
    %357 = arith.addf %320, %356 : vector<24x64xf32>
    %358 = arith.truncf %352 : vector<16x64xf32> to vector<16x64xbf16>
    %c9_i32 = arith.constant 9 : i32
    %c16_i32_113 = arith.constant 16 : i32
    %359 = arith.muli %c9_i32, %c16_i32_113 : i32
    %360 = tpu.assume_multiple %359, 16 : i32
    %361 = arith.index_cast %360 : i32 to index
    %c0_114 = arith.constant 0 : index
    %362 = vector.load %arg13[%361, %c0_114] : memref<384x128xf32, #tpu.memory_space<vmem>>, vector<16x128xf32>
    %cst_115 = arith.constant dense<0.000000e+00> : vector<16x128xf32>
    %363 = tpu.matmul %358, %18, %cst_115 {dimension_numbers = #tpu.dot_dimension_numbers<[1], [0], [0], [1], [0, 0, 1, 1], [], []>} : vector<16x64xbf16>, vector<64x128xbf16>, vector<16x128xf32> -> vector<16x128xf32>
    %364 = arith.addf %362, %363 : vector<16x128xf32>
    %cst_116 = arith.constant 6.660000e-01 : f32
    %365 = vector.broadcast %cst_116 : f32 to vector<16x128xf32>
    %366 = arith.mulf %365, %364 : vector<16x128xf32>
    %367 = math.tanh %366 : vector<16x128xf32>
    %cst_117 = arith.constant 1.715900e+00 : f32
    %368 = vector.broadcast %cst_117 : f32 to vector<16x128xf32>
    %369 = arith.mulf %368, %367 : vector<16x128xf32>
    %370 = arith.truncf %369 : vector<16x128xf32> to vector<16x128xbf16>
    %cst_118 = arith.constant dense<0.000000e+00> : vector<16x256xf32>
    %371 = tpu.matmul %370, %19, %cst_118 {dimension_numbers = #tpu.dot_dimension_numbers<[1], [0], [0], [1], [0, 0, 1, 1], [], []>} : vector<16x128xbf16>, vector<128x256xbf16>, vector<16x256xf32> -> vector<16x256xf32>
    %372 = vector.broadcast %20 : vector<1x256xf32> to vector<16x256xf32>
    %373 = arith.addf %371, %372 : vector<16x256xf32>
    %374 = vector.extract_strided_slice %373 {offsets = [0, 0], sizes = [16, 128], strides = [1, 1]} : vector<16x256xf32> to vector<16x128xf32>
    %375 = math.tanh %374 : vector<16x128xf32>
    %376 = vector.extract_strided_slice %373 {offsets = [0, 128], sizes = [16, 64], strides = [1, 1]} : vector<16x256xf32> to vector<16x64xf32>
    %377 = arith.mulf %376, %23 : vector<16x64xf32>
    %378 = vector.extract_strided_slice %373 {offsets = [0, 192], sizes = [16, 64], strides = [1, 1]} : vector<16x256xf32> to vector<16x64xf32>
    %379 = arith.addf %377, %378 : vector<16x64xf32>
    %380 = arith.negf %379 : vector<16x64xf32>
    %381 = math.exp %380 : vector<16x64xf32>
    %cst_119 = arith.constant 1.000000e+00 : f32
    %382 = vector.broadcast %cst_119 : f32 to vector<16x64xf32>
    %383 = arith.addf %382, %381 : vector<16x64xf32>
    %384 = arith.divf %382, %383 : vector<16x64xf32>
    %385 = vector.extract_strided_slice %375 {offsets = [0, 0], sizes = [16, 64], strides = [1, 1]} : vector<16x128xf32> to vector<16x64xf32>
    %386 = vector.extract_strided_slice %375 {offsets = [0, 64], sizes = [16, 64], strides = [1, 1]} : vector<16x128xf32> to vector<16x64xf32>
    %387 = arith.subf %386, %385 : vector<16x64xf32>
    %388 = arith.mulf %384, %387 : vector<16x64xf32>
    %389 = arith.addf %385, %388 : vector<16x64xf32>
    %390 = arith.index_cast %c9_i32 : i32 to index
    %c0_120 = arith.constant 0 : index
    %c0_121 = arith.constant 0 : index
    %391 = vector.load %arg9[%390, %c0_120, %c0_121] : memref<24x24x16xf32, #tpu.memory_space<vmem>>, vector<1x24x16xf32>
    %392 = vector.shape_cast %391 : vector<1x24x16xf32> to vector<24x16xf32>
    %cst_122 = arith.constant dense<0.000000e+00> : vector<24x64xf32>
    %393 = tpu.matmul %392, %389, %cst_122 {dimension_numbers = #tpu.dot_dimension_numbers<[1], [0], [0], [1], [0, 0, 1, 1], [], []>} : vector<24x16xf32>, vector<16x64xf32>, vector<24x64xf32> -> vector<24x64xf32>
    %394 = arith.addf %357, %393 : vector<24x64xf32>
    %395 = arith.truncf %389 : vector<16x64xf32> to vector<16x64xbf16>
    %c10_i32 = arith.constant 10 : i32
    %c16_i32_123 = arith.constant 16 : i32
    %396 = arith.muli %c10_i32, %c16_i32_123 : i32
    %397 = tpu.assume_multiple %396, 16 : i32
    %398 = arith.index_cast %397 : i32 to index
    %c0_124 = arith.constant 0 : index
    %399 = vector.load %arg13[%398, %c0_124] : memref<384x128xf32, #tpu.memory_space<vmem>>, vector<16x128xf32>
    %cst_125 = arith.constant dense<0.000000e+00> : vector<16x128xf32>
    %400 = tpu.matmul %395, %18, %cst_125 {dimension_numbers = #tpu.dot_dimension_numbers<[1], [0], [0], [1], [0, 0, 1, 1], [], []>} : vector<16x64xbf16>, vector<64x128xbf16>, vector<16x128xf32> -> vector<16x128xf32>
    %401 = arith.addf %399, %400 : vector<16x128xf32>
    %cst_126 = arith.constant 6.660000e-01 : f32
    %402 = vector.broadcast %cst_126 : f32 to vector<16x128xf32>
    %403 = arith.mulf %402, %401 : vector<16x128xf32>
    %404 = math.tanh %403 : vector<16x128xf32>
    %cst_127 = arith.constant 1.715900e+00 : f32
    %405 = vector.broadcast %cst_127 : f32 to vector<16x128xf32>
    %406 = arith.mulf %405, %404 : vector<16x128xf32>
    %407 = arith.truncf %406 : vector<16x128xf32> to vector<16x128xbf16>
    %cst_128 = arith.constant dense<0.000000e+00> : vector<16x256xf32>
    %408 = tpu.matmul %407, %19, %cst_128 {dimension_numbers = #tpu.dot_dimension_numbers<[1], [0], [0], [1], [0, 0, 1, 1], [], []>} : vector<16x128xbf16>, vector<128x256xbf16>, vector<16x256xf32> -> vector<16x256xf32>
    %409 = vector.broadcast %20 : vector<1x256xf32> to vector<16x256xf32>
    %410 = arith.addf %408, %409 : vector<16x256xf32>
    %411 = vector.extract_strided_slice %410 {offsets = [0, 0], sizes = [16, 128], strides = [1, 1]} : vector<16x256xf32> to vector<16x128xf32>
    %412 = math.tanh %411 : vector<16x128xf32>
    %413 = vector.extract_strided_slice %410 {offsets = [0, 128], sizes = [16, 64], strides = [1, 1]} : vector<16x256xf32> to vector<16x64xf32>
    %414 = arith.mulf %413, %23 : vector<16x64xf32>
    %415 = vector.extract_strided_slice %410 {offsets = [0, 192], sizes = [16, 64], strides = [1, 1]} : vector<16x256xf32> to vector<16x64xf32>
    %416 = arith.addf %414, %415 : vector<16x64xf32>
    %417 = arith.negf %416 : vector<16x64xf32>
    %418 = math.exp %417 : vector<16x64xf32>
    %cst_129 = arith.constant 1.000000e+00 : f32
    %419 = vector.broadcast %cst_129 : f32 to vector<16x64xf32>
    %420 = arith.addf %419, %418 : vector<16x64xf32>
    %421 = arith.divf %419, %420 : vector<16x64xf32>
    %422 = vector.extract_strided_slice %412 {offsets = [0, 0], sizes = [16, 64], strides = [1, 1]} : vector<16x128xf32> to vector<16x64xf32>
    %423 = vector.extract_strided_slice %412 {offsets = [0, 64], sizes = [16, 64], strides = [1, 1]} : vector<16x128xf32> to vector<16x64xf32>
    %424 = arith.subf %423, %422 : vector<16x64xf32>
    %425 = arith.mulf %421, %424 : vector<16x64xf32>
    %426 = arith.addf %422, %425 : vector<16x64xf32>
    %427 = arith.index_cast %c10_i32 : i32 to index
    %c0_130 = arith.constant 0 : index
    %c0_131 = arith.constant 0 : index
    %428 = vector.load %arg9[%427, %c0_130, %c0_131] : memref<24x24x16xf32, #tpu.memory_space<vmem>>, vector<1x24x16xf32>
    %429 = vector.shape_cast %428 : vector<1x24x16xf32> to vector<24x16xf32>
    %cst_132 = arith.constant dense<0.000000e+00> : vector<24x64xf32>
    %430 = tpu.matmul %429, %426, %cst_132 {dimension_numbers = #tpu.dot_dimension_numbers<[1], [0], [0], [1], [0, 0, 1, 1], [], []>} : vector<24x16xf32>, vector<16x64xf32>, vector<24x64xf32> -> vector<24x64xf32>
    %431 = arith.addf %394, %430 : vector<24x64xf32>
    %432 = arith.truncf %426 : vector<16x64xf32> to vector<16x64xbf16>
    %c11_i32 = arith.constant 11 : i32
    %c16_i32_133 = arith.constant 16 : i32
    %433 = arith.muli %c11_i32, %c16_i32_133 : i32
    %434 = tpu.assume_multiple %433, 16 : i32
    %435 = arith.index_cast %434 : i32 to index
    %c0_134 = arith.constant 0 : index
    %436 = vector.load %arg13[%435, %c0_134] : memref<384x128xf32, #tpu.memory_space<vmem>>, vector<16x128xf32>
    %cst_135 = arith.constant dense<0.000000e+00> : vector<16x128xf32>
    %437 = tpu.matmul %432, %18, %cst_135 {dimension_numbers = #tpu.dot_dimension_numbers<[1], [0], [0], [1], [0, 0, 1, 1], [], []>} : vector<16x64xbf16>, vector<64x128xbf16>, vector<16x128xf32> -> vector<16x128xf32>
    %438 = arith.addf %436, %437 : vector<16x128xf32>
    %cst_136 = arith.constant 6.660000e-01 : f32
    %439 = vector.broadcast %cst_136 : f32 to vector<16x128xf32>
    %440 = arith.mulf %439, %438 : vector<16x128xf32>
    %441 = math.tanh %440 : vector<16x128xf32>
    %cst_137 = arith.constant 1.715900e+00 : f32
    %442 = vector.broadcast %cst_137 : f32 to vector<16x128xf32>
    %443 = arith.mulf %442, %441 : vector<16x128xf32>
    %444 = arith.truncf %443 : vector<16x128xf32> to vector<16x128xbf16>
    %cst_138 = arith.constant dense<0.000000e+00> : vector<16x256xf32>
    %445 = tpu.matmul %444, %19, %cst_138 {dimension_numbers = #tpu.dot_dimension_numbers<[1], [0], [0], [1], [0, 0, 1, 1], [], []>} : vector<16x128xbf16>, vector<128x256xbf16>, vector<16x256xf32> -> vector<16x256xf32>
    %446 = vector.broadcast %20 : vector<1x256xf32> to vector<16x256xf32>
    %447 = arith.addf %445, %446 : vector<16x256xf32>
    %448 = vector.extract_strided_slice %447 {offsets = [0, 0], sizes = [16, 128], strides = [1, 1]} : vector<16x256xf32> to vector<16x128xf32>
    %449 = math.tanh %448 : vector<16x128xf32>
    %450 = vector.extract_strided_slice %447 {offsets = [0, 128], sizes = [16, 64], strides = [1, 1]} : vector<16x256xf32> to vector<16x64xf32>
    %451 = arith.mulf %450, %23 : vector<16x64xf32>
    %452 = vector.extract_strided_slice %447 {offsets = [0, 192], sizes = [16, 64], strides = [1, 1]} : vector<16x256xf32> to vector<16x64xf32>
    %453 = arith.addf %451, %452 : vector<16x64xf32>
    %454 = arith.negf %453 : vector<16x64xf32>
    %455 = math.exp %454 : vector<16x64xf32>
    %cst_139 = arith.constant 1.000000e+00 : f32
    %456 = vector.broadcast %cst_139 : f32 to vector<16x64xf32>
    %457 = arith.addf %456, %455 : vector<16x64xf32>
    %458 = arith.divf %456, %457 : vector<16x64xf32>
    %459 = vector.extract_strided_slice %449 {offsets = [0, 0], sizes = [16, 64], strides = [1, 1]} : vector<16x128xf32> to vector<16x64xf32>
    %460 = vector.extract_strided_slice %449 {offsets = [0, 64], sizes = [16, 64], strides = [1, 1]} : vector<16x128xf32> to vector<16x64xf32>
    %461 = arith.subf %460, %459 : vector<16x64xf32>
    %462 = arith.mulf %458, %461 : vector<16x64xf32>
    %463 = arith.addf %459, %462 : vector<16x64xf32>
    %464 = arith.index_cast %c11_i32 : i32 to index
    %c0_140 = arith.constant 0 : index
    %c0_141 = arith.constant 0 : index
    %465 = vector.load %arg9[%464, %c0_140, %c0_141] : memref<24x24x16xf32, #tpu.memory_space<vmem>>, vector<1x24x16xf32>
    %466 = vector.shape_cast %465 : vector<1x24x16xf32> to vector<24x16xf32>
    %cst_142 = arith.constant dense<0.000000e+00> : vector<24x64xf32>
    %467 = tpu.matmul %466, %463, %cst_142 {dimension_numbers = #tpu.dot_dimension_numbers<[1], [0], [0], [1], [0, 0, 1, 1], [], []>} : vector<24x16xf32>, vector<16x64xf32>, vector<24x64xf32> -> vector<24x64xf32>
    %468 = arith.addf %431, %467 : vector<24x64xf32>
    %469 = arith.truncf %463 : vector<16x64xf32> to vector<16x64xbf16>
    %c12_i32 = arith.constant 12 : i32
    %c16_i32_143 = arith.constant 16 : i32
    %470 = arith.muli %c12_i32, %c16_i32_143 : i32
    %471 = tpu.assume_multiple %470, 16 : i32
    %472 = arith.index_cast %471 : i32 to index
    %c0_144 = arith.constant 0 : index
    %473 = vector.load %arg13[%472, %c0_144] : memref<384x128xf32, #tpu.memory_space<vmem>>, vector<16x128xf32>
    %cst_145 = arith.constant dense<0.000000e+00> : vector<16x128xf32>
    %474 = tpu.matmul %469, %18, %cst_145 {dimension_numbers = #tpu.dot_dimension_numbers<[1], [0], [0], [1], [0, 0, 1, 1], [], []>} : vector<16x64xbf16>, vector<64x128xbf16>, vector<16x128xf32> -> vector<16x128xf32>
    %475 = arith.addf %473, %474 : vector<16x128xf32>
    %cst_146 = arith.constant 6.660000e-01 : f32
    %476 = vector.broadcast %cst_146 : f32 to vector<16x128xf32>
    %477 = arith.mulf %476, %475 : vector<16x128xf32>
    %478 = math.tanh %477 : vector<16x128xf32>
    %cst_147 = arith.constant 1.715900e+00 : f32
    %479 = vector.broadcast %cst_147 : f32 to vector<16x128xf32>
    %480 = arith.mulf %479, %478 : vector<16x128xf32>
    %481 = arith.truncf %480 : vector<16x128xf32> to vector<16x128xbf16>
    %cst_148 = arith.constant dense<0.000000e+00> : vector<16x256xf32>
    %482 = tpu.matmul %481, %19, %cst_148 {dimension_numbers = #tpu.dot_dimension_numbers<[1], [0], [0], [1], [0, 0, 1, 1], [], []>} : vector<16x128xbf16>, vector<128x256xbf16>, vector<16x256xf32> -> vector<16x256xf32>
    %483 = vector.broadcast %20 : vector<1x256xf32> to vector<16x256xf32>
    %484 = arith.addf %482, %483 : vector<16x256xf32>
    %485 = vector.extract_strided_slice %484 {offsets = [0, 0], sizes = [16, 128], strides = [1, 1]} : vector<16x256xf32> to vector<16x128xf32>
    %486 = math.tanh %485 : vector<16x128xf32>
    %487 = vector.extract_strided_slice %484 {offsets = [0, 128], sizes = [16, 64], strides = [1, 1]} : vector<16x256xf32> to vector<16x64xf32>
    %488 = arith.mulf %487, %23 : vector<16x64xf32>
    %489 = vector.extract_strided_slice %484 {offsets = [0, 192], sizes = [16, 64], strides = [1, 1]} : vector<16x256xf32> to vector<16x64xf32>
    %490 = arith.addf %488, %489 : vector<16x64xf32>
    %491 = arith.negf %490 : vector<16x64xf32>
    %492 = math.exp %491 : vector<16x64xf32>
    %cst_149 = arith.constant 1.000000e+00 : f32
    %493 = vector.broadcast %cst_149 : f32 to vector<16x64xf32>
    %494 = arith.addf %493, %492 : vector<16x64xf32>
    %495 = arith.divf %493, %494 : vector<16x64xf32>
    %496 = vector.extract_strided_slice %486 {offsets = [0, 0], sizes = [16, 64], strides = [1, 1]} : vector<16x128xf32> to vector<16x64xf32>
    %497 = vector.extract_strided_slice %486 {offsets = [0, 64], sizes = [16, 64], strides = [1, 1]} : vector<16x128xf32> to vector<16x64xf32>
    %498 = arith.subf %497, %496 : vector<16x64xf32>
    %499 = arith.mulf %495, %498 : vector<16x64xf32>
    %500 = arith.addf %496, %499 : vector<16x64xf32>
    %501 = arith.index_cast %c12_i32 : i32 to index
    %c0_150 = arith.constant 0 : index
    %c0_151 = arith.constant 0 : index
    %502 = vector.load %arg9[%501, %c0_150, %c0_151] : memref<24x24x16xf32, #tpu.memory_space<vmem>>, vector<1x24x16xf32>
    %503 = vector.shape_cast %502 : vector<1x24x16xf32> to vector<24x16xf32>
    %cst_152 = arith.constant dense<0.000000e+00> : vector<24x64xf32>
    %504 = tpu.matmul %503, %500, %cst_152 {dimension_numbers = #tpu.dot_dimension_numbers<[1], [0], [0], [1], [0, 0, 1, 1], [], []>} : vector<24x16xf32>, vector<16x64xf32>, vector<24x64xf32> -> vector<24x64xf32>
    %505 = arith.addf %468, %504 : vector<24x64xf32>
    %506 = arith.truncf %500 : vector<16x64xf32> to vector<16x64xbf16>
    %c13_i32 = arith.constant 13 : i32
    %c16_i32_153 = arith.constant 16 : i32
    %507 = arith.muli %c13_i32, %c16_i32_153 : i32
    %508 = tpu.assume_multiple %507, 16 : i32
    %509 = arith.index_cast %508 : i32 to index
    %c0_154 = arith.constant 0 : index
    %510 = vector.load %arg13[%509, %c0_154] : memref<384x128xf32, #tpu.memory_space<vmem>>, vector<16x128xf32>
    %cst_155 = arith.constant dense<0.000000e+00> : vector<16x128xf32>
    %511 = tpu.matmul %506, %18, %cst_155 {dimension_numbers = #tpu.dot_dimension_numbers<[1], [0], [0], [1], [0, 0, 1, 1], [], []>} : vector<16x64xbf16>, vector<64x128xbf16>, vector<16x128xf32> -> vector<16x128xf32>
    %512 = arith.addf %510, %511 : vector<16x128xf32>
    %cst_156 = arith.constant 6.660000e-01 : f32
    %513 = vector.broadcast %cst_156 : f32 to vector<16x128xf32>
    %514 = arith.mulf %513, %512 : vector<16x128xf32>
    %515 = math.tanh %514 : vector<16x128xf32>
    %cst_157 = arith.constant 1.715900e+00 : f32
    %516 = vector.broadcast %cst_157 : f32 to vector<16x128xf32>
    %517 = arith.mulf %516, %515 : vector<16x128xf32>
    %518 = arith.truncf %517 : vector<16x128xf32> to vector<16x128xbf16>
    %cst_158 = arith.constant dense<0.000000e+00> : vector<16x256xf32>
    %519 = tpu.matmul %518, %19, %cst_158 {dimension_numbers = #tpu.dot_dimension_numbers<[1], [0], [0], [1], [0, 0, 1, 1], [], []>} : vector<16x128xbf16>, vector<128x256xbf16>, vector<16x256xf32> -> vector<16x256xf32>
    %520 = vector.broadcast %20 : vector<1x256xf32> to vector<16x256xf32>
    %521 = arith.addf %519, %520 : vector<16x256xf32>
    %522 = vector.extract_strided_slice %521 {offsets = [0, 0], sizes = [16, 128], strides = [1, 1]} : vector<16x256xf32> to vector<16x128xf32>
    %523 = math.tanh %522 : vector<16x128xf32>
    %524 = vector.extract_strided_slice %521 {offsets = [0, 128], sizes = [16, 64], strides = [1, 1]} : vector<16x256xf32> to vector<16x64xf32>
    %525 = arith.mulf %524, %23 : vector<16x64xf32>
    %526 = vector.extract_strided_slice %521 {offsets = [0, 192], sizes = [16, 64], strides = [1, 1]} : vector<16x256xf32> to vector<16x64xf32>
    %527 = arith.addf %525, %526 : vector<16x64xf32>
    %528 = arith.negf %527 : vector<16x64xf32>
    %529 = math.exp %528 : vector<16x64xf32>
    %cst_159 = arith.constant 1.000000e+00 : f32
    %530 = vector.broadcast %cst_159 : f32 to vector<16x64xf32>
    %531 = arith.addf %530, %529 : vector<16x64xf32>
    %532 = arith.divf %530, %531 : vector<16x64xf32>
    %533 = vector.extract_strided_slice %523 {offsets = [0, 0], sizes = [16, 64], strides = [1, 1]} : vector<16x128xf32> to vector<16x64xf32>
    %534 = vector.extract_strided_slice %523 {offsets = [0, 64], sizes = [16, 64], strides = [1, 1]} : vector<16x128xf32> to vector<16x64xf32>
    %535 = arith.subf %534, %533 : vector<16x64xf32>
    %536 = arith.mulf %532, %535 : vector<16x64xf32>
    %537 = arith.addf %533, %536 : vector<16x64xf32>
    %538 = arith.index_cast %c13_i32 : i32 to index
    %c0_160 = arith.constant 0 : index
    %c0_161 = arith.constant 0 : index
    %539 = vector.load %arg9[%538, %c0_160, %c0_161] : memref<24x24x16xf32, #tpu.memory_space<vmem>>, vector<1x24x16xf32>
    %540 = vector.shape_cast %539 : vector<1x24x16xf32> to vector<24x16xf32>
    %cst_162 = arith.constant dense<0.000000e+00> : vector<24x64xf32>
    %541 = tpu.matmul %540, %537, %cst_162 {dimension_numbers = #tpu.dot_dimension_numbers<[1], [0], [0], [1], [0, 0, 1, 1], [], []>} : vector<24x16xf32>, vector<16x64xf32>, vector<24x64xf32> -> vector<24x64xf32>
    %542 = arith.addf %505, %541 : vector<24x64xf32>
    %543 = arith.truncf %537 : vector<16x64xf32> to vector<16x64xbf16>
    %c14_i32 = arith.constant 14 : i32
    %c16_i32_163 = arith.constant 16 : i32
    %544 = arith.muli %c14_i32, %c16_i32_163 : i32
    %545 = tpu.assume_multiple %544, 16 : i32
    %546 = arith.index_cast %545 : i32 to index
    %c0_164 = arith.constant 0 : index
    %547 = vector.load %arg13[%546, %c0_164] : memref<384x128xf32, #tpu.memory_space<vmem>>, vector<16x128xf32>
    %cst_165 = arith.constant dense<0.000000e+00> : vector<16x128xf32>
    %548 = tpu.matmul %543, %18, %cst_165 {dimension_numbers = #tpu.dot_dimension_numbers<[1], [0], [0], [1], [0, 0, 1, 1], [], []>} : vector<16x64xbf16>, vector<64x128xbf16>, vector<16x128xf32> -> vector<16x128xf32>
    %549 = arith.addf %547, %548 : vector<16x128xf32>
    %cst_166 = arith.constant 6.660000e-01 : f32
    %550 = vector.broadcast %cst_166 : f32 to vector<16x128xf32>
    %551 = arith.mulf %550, %549 : vector<16x128xf32>
    %552 = math.tanh %551 : vector<16x128xf32>
    %cst_167 = arith.constant 1.715900e+00 : f32
    %553 = vector.broadcast %cst_167 : f32 to vector<16x128xf32>
    %554 = arith.mulf %553, %552 : vector<16x128xf32>
    %555 = arith.truncf %554 : vector<16x128xf32> to vector<16x128xbf16>
    %cst_168 = arith.constant dense<0.000000e+00> : vector<16x256xf32>
    %556 = tpu.matmul %555, %19, %cst_168 {dimension_numbers = #tpu.dot_dimension_numbers<[1], [0], [0], [1], [0, 0, 1, 1], [], []>} : vector<16x128xbf16>, vector<128x256xbf16>, vector<16x256xf32> -> vector<16x256xf32>
    %557 = vector.broadcast %20 : vector<1x256xf32> to vector<16x256xf32>
    %558 = arith.addf %556, %557 : vector<16x256xf32>
    %559 = vector.extract_strided_slice %558 {offsets = [0, 0], sizes = [16, 128], strides = [1, 1]} : vector<16x256xf32> to vector<16x128xf32>
    %560 = math.tanh %559 : vector<16x128xf32>
    %561 = vector.extract_strided_slice %558 {offsets = [0, 128], sizes = [16, 64], strides = [1, 1]} : vector<16x256xf32> to vector<16x64xf32>
    %562 = arith.mulf %561, %23 : vector<16x64xf32>
    %563 = vector.extract_strided_slice %558 {offsets = [0, 192], sizes = [16, 64], strides = [1, 1]} : vector<16x256xf32> to vector<16x64xf32>
    %564 = arith.addf %562, %563 : vector<16x64xf32>
    %565 = arith.negf %564 : vector<16x64xf32>
    %566 = math.exp %565 : vector<16x64xf32>
    %cst_169 = arith.constant 1.000000e+00 : f32
    %567 = vector.broadcast %cst_169 : f32 to vector<16x64xf32>
    %568 = arith.addf %567, %566 : vector<16x64xf32>
    %569 = arith.divf %567, %568 : vector<16x64xf32>
    %570 = vector.extract_strided_slice %560 {offsets = [0, 0], sizes = [16, 64], strides = [1, 1]} : vector<16x128xf32> to vector<16x64xf32>
    %571 = vector.extract_strided_slice %560 {offsets = [0, 64], sizes = [16, 64], strides = [1, 1]} : vector<16x128xf32> to vector<16x64xf32>
    %572 = arith.subf %571, %570 : vector<16x64xf32>
    %573 = arith.mulf %569, %572 : vector<16x64xf32>
    %574 = arith.addf %570, %573 : vector<16x64xf32>
    %575 = arith.index_cast %c14_i32 : i32 to index
    %c0_170 = arith.constant 0 : index
    %c0_171 = arith.constant 0 : index
    %576 = vector.load %arg9[%575, %c0_170, %c0_171] : memref<24x24x16xf32, #tpu.memory_space<vmem>>, vector<1x24x16xf32>
    %577 = vector.shape_cast %576 : vector<1x24x16xf32> to vector<24x16xf32>
    %cst_172 = arith.constant dense<0.000000e+00> : vector<24x64xf32>
    %578 = tpu.matmul %577, %574, %cst_172 {dimension_numbers = #tpu.dot_dimension_numbers<[1], [0], [0], [1], [0, 0, 1, 1], [], []>} : vector<24x16xf32>, vector<16x64xf32>, vector<24x64xf32> -> vector<24x64xf32>
    %579 = arith.addf %542, %578 : vector<24x64xf32>
    %580 = arith.truncf %574 : vector<16x64xf32> to vector<16x64xbf16>
    %c15_i32 = arith.constant 15 : i32
    %c16_i32_173 = arith.constant 16 : i32
    %581 = arith.muli %c15_i32, %c16_i32_173 : i32
    %582 = tpu.assume_multiple %581, 16 : i32
    %583 = arith.index_cast %582 : i32 to index
    %c0_174 = arith.constant 0 : index
    %584 = vector.load %arg13[%583, %c0_174] : memref<384x128xf32, #tpu.memory_space<vmem>>, vector<16x128xf32>
    %cst_175 = arith.constant dense<0.000000e+00> : vector<16x128xf32>
    %585 = tpu.matmul %580, %18, %cst_175 {dimension_numbers = #tpu.dot_dimension_numbers<[1], [0], [0], [1], [0, 0, 1, 1], [], []>} : vector<16x64xbf16>, vector<64x128xbf16>, vector<16x128xf32> -> vector<16x128xf32>
    %586 = arith.addf %584, %585 : vector<16x128xf32>
    %cst_176 = arith.constant 6.660000e-01 : f32
    %587 = vector.broadcast %cst_176 : f32 to vector<16x128xf32>
    %588 = arith.mulf %587, %586 : vector<16x128xf32>
    %589 = math.tanh %588 : vector<16x128xf32>
    %cst_177 = arith.constant 1.715900e+00 : f32
    %590 = vector.broadcast %cst_177 : f32 to vector<16x128xf32>
    %591 = arith.mulf %590, %589 : vector<16x128xf32>
    %592 = arith.truncf %591 : vector<16x128xf32> to vector<16x128xbf16>
    %cst_178 = arith.constant dense<0.000000e+00> : vector<16x256xf32>
    %593 = tpu.matmul %592, %19, %cst_178 {dimension_numbers = #tpu.dot_dimension_numbers<[1], [0], [0], [1], [0, 0, 1, 1], [], []>} : vector<16x128xbf16>, vector<128x256xbf16>, vector<16x256xf32> -> vector<16x256xf32>
    %594 = vector.broadcast %20 : vector<1x256xf32> to vector<16x256xf32>
    %595 = arith.addf %593, %594 : vector<16x256xf32>
    %596 = vector.extract_strided_slice %595 {offsets = [0, 0], sizes = [16, 128], strides = [1, 1]} : vector<16x256xf32> to vector<16x128xf32>
    %597 = math.tanh %596 : vector<16x128xf32>
    %598 = vector.extract_strided_slice %595 {offsets = [0, 128], sizes = [16, 64], strides = [1, 1]} : vector<16x256xf32> to vector<16x64xf32>
    %599 = arith.mulf %598, %23 : vector<16x64xf32>
    %600 = vector.extract_strided_slice %595 {offsets = [0, 192], sizes = [16, 64], strides = [1, 1]} : vector<16x256xf32> to vector<16x64xf32>
    %601 = arith.addf %599, %600 : vector<16x64xf32>
    %602 = arith.negf %601 : vector<16x64xf32>
    %603 = math.exp %602 : vector<16x64xf32>
    %cst_179 = arith.constant 1.000000e+00 : f32
    %604 = vector.broadcast %cst_179 : f32 to vector<16x64xf32>
    %605 = arith.addf %604, %603 : vector<16x64xf32>
    %606 = arith.divf %604, %605 : vector<16x64xf32>
    %607 = vector.extract_strided_slice %597 {offsets = [0, 0], sizes = [16, 64], strides = [1, 1]} : vector<16x128xf32> to vector<16x64xf32>
    %608 = vector.extract_strided_slice %597 {offsets = [0, 64], sizes = [16, 64], strides = [1, 1]} : vector<16x128xf32> to vector<16x64xf32>
    %609 = arith.subf %608, %607 : vector<16x64xf32>
    %610 = arith.mulf %606, %609 : vector<16x64xf32>
    %611 = arith.addf %607, %610 : vector<16x64xf32>
    %612 = arith.index_cast %c15_i32 : i32 to index
    %c0_180 = arith.constant 0 : index
    %c0_181 = arith.constant 0 : index
    %613 = vector.load %arg9[%612, %c0_180, %c0_181] : memref<24x24x16xf32, #tpu.memory_space<vmem>>, vector<1x24x16xf32>
    %614 = vector.shape_cast %613 : vector<1x24x16xf32> to vector<24x16xf32>
    %cst_182 = arith.constant dense<0.000000e+00> : vector<24x64xf32>
    %615 = tpu.matmul %614, %611, %cst_182 {dimension_numbers = #tpu.dot_dimension_numbers<[1], [0], [0], [1], [0, 0, 1, 1], [], []>} : vector<24x16xf32>, vector<16x64xf32>, vector<24x64xf32> -> vector<24x64xf32>
    %616 = arith.addf %579, %615 : vector<24x64xf32>
    %617 = arith.truncf %611 : vector<16x64xf32> to vector<16x64xbf16>
    %c16_i32_183 = arith.constant 16 : i32
    %c16_i32_184 = arith.constant 16 : i32
    %618 = arith.muli %c16_i32_183, %c16_i32_184 : i32
    %619 = tpu.assume_multiple %618, 16 : i32
    %620 = arith.index_cast %619 : i32 to index
    %c0_185 = arith.constant 0 : index
    %621 = vector.load %arg13[%620, %c0_185] : memref<384x128xf32, #tpu.memory_space<vmem>>, vector<16x128xf32>
    %cst_186 = arith.constant dense<0.000000e+00> : vector<16x128xf32>
    %622 = tpu.matmul %617, %18, %cst_186 {dimension_numbers = #tpu.dot_dimension_numbers<[1], [0], [0], [1], [0, 0, 1, 1], [], []>} : vector<16x64xbf16>, vector<64x128xbf16>, vector<16x128xf32> -> vector<16x128xf32>
    %623 = arith.addf %621, %622 : vector<16x128xf32>
    %cst_187 = arith.constant 6.660000e-01 : f32
    %624 = vector.broadcast %cst_187 : f32 to vector<16x128xf32>
    %625 = arith.mulf %624, %623 : vector<16x128xf32>
    %626 = math.tanh %625 : vector<16x128xf32>
    %cst_188 = arith.constant 1.715900e+00 : f32
    %627 = vector.broadcast %cst_188 : f32 to vector<16x128xf32>
    %628 = arith.mulf %627, %626 : vector<16x128xf32>
    %629 = arith.truncf %628 : vector<16x128xf32> to vector<16x128xbf16>
    %cst_189 = arith.constant dense<0.000000e+00> : vector<16x256xf32>
    %630 = tpu.matmul %629, %19, %cst_189 {dimension_numbers = #tpu.dot_dimension_numbers<[1], [0], [0], [1], [0, 0, 1, 1], [], []>} : vector<16x128xbf16>, vector<128x256xbf16>, vector<16x256xf32> -> vector<16x256xf32>
    %631 = vector.broadcast %20 : vector<1x256xf32> to vector<16x256xf32>
    %632 = arith.addf %630, %631 : vector<16x256xf32>
    %633 = vector.extract_strided_slice %632 {offsets = [0, 0], sizes = [16, 128], strides = [1, 1]} : vector<16x256xf32> to vector<16x128xf32>
    %634 = math.tanh %633 : vector<16x128xf32>
    %635 = vector.extract_strided_slice %632 {offsets = [0, 128], sizes = [16, 64], strides = [1, 1]} : vector<16x256xf32> to vector<16x64xf32>
    %636 = arith.mulf %635, %23 : vector<16x64xf32>
    %637 = vector.extract_strided_slice %632 {offsets = [0, 192], sizes = [16, 64], strides = [1, 1]} : vector<16x256xf32> to vector<16x64xf32>
    %638 = arith.addf %636, %637 : vector<16x64xf32>
    %639 = arith.negf %638 : vector<16x64xf32>
    %640 = math.exp %639 : vector<16x64xf32>
    %cst_190 = arith.constant 1.000000e+00 : f32
    %641 = vector.broadcast %cst_190 : f32 to vector<16x64xf32>
    %642 = arith.addf %641, %640 : vector<16x64xf32>
    %643 = arith.divf %641, %642 : vector<16x64xf32>
    %644 = vector.extract_strided_slice %634 {offsets = [0, 0], sizes = [16, 64], strides = [1, 1]} : vector<16x128xf32> to vector<16x64xf32>
    %645 = vector.extract_strided_slice %634 {offsets = [0, 64], sizes = [16, 64], strides = [1, 1]} : vector<16x128xf32> to vector<16x64xf32>
    %646 = arith.subf %645, %644 : vector<16x64xf32>
    %647 = arith.mulf %643, %646 : vector<16x64xf32>
    %648 = arith.addf %644, %647 : vector<16x64xf32>
    %649 = arith.index_cast %c16_i32_183 : i32 to index
    %c0_191 = arith.constant 0 : index
    %c0_192 = arith.constant 0 : index
    %650 = vector.load %arg9[%649, %c0_191, %c0_192] : memref<24x24x16xf32, #tpu.memory_space<vmem>>, vector<1x24x16xf32>
    %651 = vector.shape_cast %650 : vector<1x24x16xf32> to vector<24x16xf32>
    %cst_193 = arith.constant dense<0.000000e+00> : vector<24x64xf32>
    %652 = tpu.matmul %651, %648, %cst_193 {dimension_numbers = #tpu.dot_dimension_numbers<[1], [0], [0], [1], [0, 0, 1, 1], [], []>} : vector<24x16xf32>, vector<16x64xf32>, vector<24x64xf32> -> vector<24x64xf32>
    %653 = arith.addf %616, %652 : vector<24x64xf32>
    %654 = arith.truncf %648 : vector<16x64xf32> to vector<16x64xbf16>
    %c17_i32 = arith.constant 17 : i32
    %c16_i32_194 = arith.constant 16 : i32
    %655 = arith.muli %c17_i32, %c16_i32_194 : i32
    %656 = tpu.assume_multiple %655, 16 : i32
    %657 = arith.index_cast %656 : i32 to index
    %c0_195 = arith.constant 0 : index
    %658 = vector.load %arg13[%657, %c0_195] : memref<384x128xf32, #tpu.memory_space<vmem>>, vector<16x128xf32>
    %cst_196 = arith.constant dense<0.000000e+00> : vector<16x128xf32>
    %659 = tpu.matmul %654, %18, %cst_196 {dimension_numbers = #tpu.dot_dimension_numbers<[1], [0], [0], [1], [0, 0, 1, 1], [], []>} : vector<16x64xbf16>, vector<64x128xbf16>, vector<16x128xf32> -> vector<16x128xf32>
    %660 = arith.addf %658, %659 : vector<16x128xf32>
    %cst_197 = arith.constant 6.660000e-01 : f32
    %661 = vector.broadcast %cst_197 : f32 to vector<16x128xf32>
    %662 = arith.mulf %661, %660 : vector<16x128xf32>
    %663 = math.tanh %662 : vector<16x128xf32>
    %cst_198 = arith.constant 1.715900e+00 : f32
    %664 = vector.broadcast %cst_198 : f32 to vector<16x128xf32>
    %665 = arith.mulf %664, %663 : vector<16x128xf32>
    %666 = arith.truncf %665 : vector<16x128xf32> to vector<16x128xbf16>
    %cst_199 = arith.constant dense<0.000000e+00> : vector<16x256xf32>
    %667 = tpu.matmul %666, %19, %cst_199 {dimension_numbers = #tpu.dot_dimension_numbers<[1], [0], [0], [1], [0, 0, 1, 1], [], []>} : vector<16x128xbf16>, vector<128x256xbf16>, vector<16x256xf32> -> vector<16x256xf32>
    %668 = vector.broadcast %20 : vector<1x256xf32> to vector<16x256xf32>
    %669 = arith.addf %667, %668 : vector<16x256xf32>
    %670 = vector.extract_strided_slice %669 {offsets = [0, 0], sizes = [16, 128], strides = [1, 1]} : vector<16x256xf32> to vector<16x128xf32>
    %671 = math.tanh %670 : vector<16x128xf32>
    %672 = vector.extract_strided_slice %669 {offsets = [0, 128], sizes = [16, 64], strides = [1, 1]} : vector<16x256xf32> to vector<16x64xf32>
    %673 = arith.mulf %672, %23 : vector<16x64xf32>
    %674 = vector.extract_strided_slice %669 {offsets = [0, 192], sizes = [16, 64], strides = [1, 1]} : vector<16x256xf32> to vector<16x64xf32>
    %675 = arith.addf %673, %674 : vector<16x64xf32>
    %676 = arith.negf %675 : vector<16x64xf32>
    %677 = math.exp %676 : vector<16x64xf32>
    %cst_200 = arith.constant 1.000000e+00 : f32
    %678 = vector.broadcast %cst_200 : f32 to vector<16x64xf32>
    %679 = arith.addf %678, %677 : vector<16x64xf32>
    %680 = arith.divf %678, %679 : vector<16x64xf32>
    %681 = vector.extract_strided_slice %671 {offsets = [0, 0], sizes = [16, 64], strides = [1, 1]} : vector<16x128xf32> to vector<16x64xf32>
    %682 = vector.extract_strided_slice %671 {offsets = [0, 64], sizes = [16, 64], strides = [1, 1]} : vector<16x128xf32> to vector<16x64xf32>
    %683 = arith.subf %682, %681 : vector<16x64xf32>
    %684 = arith.mulf %680, %683 : vector<16x64xf32>
    %685 = arith.addf %681, %684 : vector<16x64xf32>
    %686 = arith.index_cast %c17_i32 : i32 to index
    %c0_201 = arith.constant 0 : index
    %c0_202 = arith.constant 0 : index
    %687 = vector.load %arg9[%686, %c0_201, %c0_202] : memref<24x24x16xf32, #tpu.memory_space<vmem>>, vector<1x24x16xf32>
    %688 = vector.shape_cast %687 : vector<1x24x16xf32> to vector<24x16xf32>
    %cst_203 = arith.constant dense<0.000000e+00> : vector<24x64xf32>
    %689 = tpu.matmul %688, %685, %cst_203 {dimension_numbers = #tpu.dot_dimension_numbers<[1], [0], [0], [1], [0, 0, 1, 1], [], []>} : vector<24x16xf32>, vector<16x64xf32>, vector<24x64xf32> -> vector<24x64xf32>
    %690 = arith.addf %653, %689 : vector<24x64xf32>
    %691 = arith.truncf %685 : vector<16x64xf32> to vector<16x64xbf16>
    %c18_i32 = arith.constant 18 : i32
    %c16_i32_204 = arith.constant 16 : i32
    %692 = arith.muli %c18_i32, %c16_i32_204 : i32
    %693 = tpu.assume_multiple %692, 16 : i32
    %694 = arith.index_cast %693 : i32 to index
    %c0_205 = arith.constant 0 : index
    %695 = vector.load %arg13[%694, %c0_205] : memref<384x128xf32, #tpu.memory_space<vmem>>, vector<16x128xf32>
    %cst_206 = arith.constant dense<0.000000e+00> : vector<16x128xf32>
    %696 = tpu.matmul %691, %18, %cst_206 {dimension_numbers = #tpu.dot_dimension_numbers<[1], [0], [0], [1], [0, 0, 1, 1], [], []>} : vector<16x64xbf16>, vector<64x128xbf16>, vector<16x128xf32> -> vector<16x128xf32>
    %697 = arith.addf %695, %696 : vector<16x128xf32>
    %cst_207 = arith.constant 6.660000e-01 : f32
    %698 = vector.broadcast %cst_207 : f32 to vector<16x128xf32>
    %699 = arith.mulf %698, %697 : vector<16x128xf32>
    %700 = math.tanh %699 : vector<16x128xf32>
    %cst_208 = arith.constant 1.715900e+00 : f32
    %701 = vector.broadcast %cst_208 : f32 to vector<16x128xf32>
    %702 = arith.mulf %701, %700 : vector<16x128xf32>
    %703 = arith.truncf %702 : vector<16x128xf32> to vector<16x128xbf16>
    %cst_209 = arith.constant dense<0.000000e+00> : vector<16x256xf32>
    %704 = tpu.matmul %703, %19, %cst_209 {dimension_numbers = #tpu.dot_dimension_numbers<[1], [0], [0], [1], [0, 0, 1, 1], [], []>} : vector<16x128xbf16>, vector<128x256xbf16>, vector<16x256xf32> -> vector<16x256xf32>
    %705 = vector.broadcast %20 : vector<1x256xf32> to vector<16x256xf32>
    %706 = arith.addf %704, %705 : vector<16x256xf32>
    %707 = vector.extract_strided_slice %706 {offsets = [0, 0], sizes = [16, 128], strides = [1, 1]} : vector<16x256xf32> to vector<16x128xf32>
    %708 = math.tanh %707 : vector<16x128xf32>
    %709 = vector.extract_strided_slice %706 {offsets = [0, 128], sizes = [16, 64], strides = [1, 1]} : vector<16x256xf32> to vector<16x64xf32>
    %710 = arith.mulf %709, %23 : vector<16x64xf32>
    %711 = vector.extract_strided_slice %706 {offsets = [0, 192], sizes = [16, 64], strides = [1, 1]} : vector<16x256xf32> to vector<16x64xf32>
    %712 = arith.addf %710, %711 : vector<16x64xf32>
    %713 = arith.negf %712 : vector<16x64xf32>
    %714 = math.exp %713 : vector<16x64xf32>
    %cst_210 = arith.constant 1.000000e+00 : f32
    %715 = vector.broadcast %cst_210 : f32 to vector<16x64xf32>
    %716 = arith.addf %715, %714 : vector<16x64xf32>
    %717 = arith.divf %715, %716 : vector<16x64xf32>
    %718 = vector.extract_strided_slice %708 {offsets = [0, 0], sizes = [16, 64], strides = [1, 1]} : vector<16x128xf32> to vector<16x64xf32>
    %719 = vector.extract_strided_slice %708 {offsets = [0, 64], sizes = [16, 64], strides = [1, 1]} : vector<16x128xf32> to vector<16x64xf32>
    %720 = arith.subf %719, %718 : vector<16x64xf32>
    %721 = arith.mulf %717, %720 : vector<16x64xf32>
    %722 = arith.addf %718, %721 : vector<16x64xf32>
    %723 = arith.index_cast %c18_i32 : i32 to index
    %c0_211 = arith.constant 0 : index
    %c0_212 = arith.constant 0 : index
    %724 = vector.load %arg9[%723, %c0_211, %c0_212] : memref<24x24x16xf32, #tpu.memory_space<vmem>>, vector<1x24x16xf32>
    %725 = vector.shape_cast %724 : vector<1x24x16xf32> to vector<24x16xf32>
    %cst_213 = arith.constant dense<0.000000e+00> : vector<24x64xf32>
    %726 = tpu.matmul %725, %722, %cst_213 {dimension_numbers = #tpu.dot_dimension_numbers<[1], [0], [0], [1], [0, 0, 1, 1], [], []>} : vector<24x16xf32>, vector<16x64xf32>, vector<24x64xf32> -> vector<24x64xf32>
    %727 = arith.addf %690, %726 : vector<24x64xf32>
    %728 = arith.truncf %722 : vector<16x64xf32> to vector<16x64xbf16>
    %c19_i32 = arith.constant 19 : i32
    %c16_i32_214 = arith.constant 16 : i32
    %729 = arith.muli %c19_i32, %c16_i32_214 : i32
    %730 = tpu.assume_multiple %729, 16 : i32
    %731 = arith.index_cast %730 : i32 to index
    %c0_215 = arith.constant 0 : index
    %732 = vector.load %arg13[%731, %c0_215] : memref<384x128xf32, #tpu.memory_space<vmem>>, vector<16x128xf32>
    %cst_216 = arith.constant dense<0.000000e+00> : vector<16x128xf32>
    %733 = tpu.matmul %728, %18, %cst_216 {dimension_numbers = #tpu.dot_dimension_numbers<[1], [0], [0], [1], [0, 0, 1, 1], [], []>} : vector<16x64xbf16>, vector<64x128xbf16>, vector<16x128xf32> -> vector<16x128xf32>
    %734 = arith.addf %732, %733 : vector<16x128xf32>
    %cst_217 = arith.constant 6.660000e-01 : f32
    %735 = vector.broadcast %cst_217 : f32 to vector<16x128xf32>
    %736 = arith.mulf %735, %734 : vector<16x128xf32>
    %737 = math.tanh %736 : vector<16x128xf32>
    %cst_218 = arith.constant 1.715900e+00 : f32
    %738 = vector.broadcast %cst_218 : f32 to vector<16x128xf32>
    %739 = arith.mulf %738, %737 : vector<16x128xf32>
    %740 = arith.truncf %739 : vector<16x128xf32> to vector<16x128xbf16>
    %cst_219 = arith.constant dense<0.000000e+00> : vector<16x256xf32>
    %741 = tpu.matmul %740, %19, %cst_219 {dimension_numbers = #tpu.dot_dimension_numbers<[1], [0], [0], [1], [0, 0, 1, 1], [], []>} : vector<16x128xbf16>, vector<128x256xbf16>, vector<16x256xf32> -> vector<16x256xf32>
    %742 = vector.broadcast %20 : vector<1x256xf32> to vector<16x256xf32>
    %743 = arith.addf %741, %742 : vector<16x256xf32>
    %744 = vector.extract_strided_slice %743 {offsets = [0, 0], sizes = [16, 128], strides = [1, 1]} : vector<16x256xf32> to vector<16x128xf32>
    %745 = math.tanh %744 : vector<16x128xf32>
    %746 = vector.extract_strided_slice %743 {offsets = [0, 128], sizes = [16, 64], strides = [1, 1]} : vector<16x256xf32> to vector<16x64xf32>
    %747 = arith.mulf %746, %23 : vector<16x64xf32>
    %748 = vector.extract_strided_slice %743 {offsets = [0, 192], sizes = [16, 64], strides = [1, 1]} : vector<16x256xf32> to vector<16x64xf32>
    %749 = arith.addf %747, %748 : vector<16x64xf32>
    %750 = arith.negf %749 : vector<16x64xf32>
    %751 = math.exp %750 : vector<16x64xf32>
    %cst_220 = arith.constant 1.000000e+00 : f32
    %752 = vector.broadcast %cst_220 : f32 to vector<16x64xf32>
    %753 = arith.addf %752, %751 : vector<16x64xf32>
    %754 = arith.divf %752, %753 : vector<16x64xf32>
    %755 = vector.extract_strided_slice %745 {offsets = [0, 0], sizes = [16, 64], strides = [1, 1]} : vector<16x128xf32> to vector<16x64xf32>
    %756 = vector.extract_strided_slice %745 {offsets = [0, 64], sizes = [16, 64], strides = [1, 1]} : vector<16x128xf32> to vector<16x64xf32>
    %757 = arith.subf %756, %755 : vector<16x64xf32>
    %758 = arith.mulf %754, %757 : vector<16x64xf32>
    %759 = arith.addf %755, %758 : vector<16x64xf32>
    %760 = arith.index_cast %c19_i32 : i32 to index
    %c0_221 = arith.constant 0 : index
    %c0_222 = arith.constant 0 : index
    %761 = vector.load %arg9[%760, %c0_221, %c0_222] : memref<24x24x16xf32, #tpu.memory_space<vmem>>, vector<1x24x16xf32>
    %762 = vector.shape_cast %761 : vector<1x24x16xf32> to vector<24x16xf32>
    %cst_223 = arith.constant dense<0.000000e+00> : vector<24x64xf32>
    %763 = tpu.matmul %762, %759, %cst_223 {dimension_numbers = #tpu.dot_dimension_numbers<[1], [0], [0], [1], [0, 0, 1, 1], [], []>} : vector<24x16xf32>, vector<16x64xf32>, vector<24x64xf32> -> vector<24x64xf32>
    %764 = arith.addf %727, %763 : vector<24x64xf32>
    %765 = arith.truncf %759 : vector<16x64xf32> to vector<16x64xbf16>
    %c20_i32 = arith.constant 20 : i32
    %c16_i32_224 = arith.constant 16 : i32
    %766 = arith.muli %c20_i32, %c16_i32_224 : i32
    %767 = tpu.assume_multiple %766, 16 : i32
    %768 = arith.index_cast %767 : i32 to index
    %c0_225 = arith.constant 0 : index
    %769 = vector.load %arg13[%768, %c0_225] : memref<384x128xf32, #tpu.memory_space<vmem>>, vector<16x128xf32>
    %cst_226 = arith.constant dense<0.000000e+00> : vector<16x128xf32>
    %770 = tpu.matmul %765, %18, %cst_226 {dimension_numbers = #tpu.dot_dimension_numbers<[1], [0], [0], [1], [0, 0, 1, 1], [], []>} : vector<16x64xbf16>, vector<64x128xbf16>, vector<16x128xf32> -> vector<16x128xf32>
    %771 = arith.addf %769, %770 : vector<16x128xf32>
    %cst_227 = arith.constant 6.660000e-01 : f32
    %772 = vector.broadcast %cst_227 : f32 to vector<16x128xf32>
    %773 = arith.mulf %772, %771 : vector<16x128xf32>
    %774 = math.tanh %773 : vector<16x128xf32>
    %cst_228 = arith.constant 1.715900e+00 : f32
    %775 = vector.broadcast %cst_228 : f32 to vector<16x128xf32>
    %776 = arith.mulf %775, %774 : vector<16x128xf32>
    %777 = arith.truncf %776 : vector<16x128xf32> to vector<16x128xbf16>
    %cst_229 = arith.constant dense<0.000000e+00> : vector<16x256xf32>
    %778 = tpu.matmul %777, %19, %cst_229 {dimension_numbers = #tpu.dot_dimension_numbers<[1], [0], [0], [1], [0, 0, 1, 1], [], []>} : vector<16x128xbf16>, vector<128x256xbf16>, vector<16x256xf32> -> vector<16x256xf32>
    %779 = vector.broadcast %20 : vector<1x256xf32> to vector<16x256xf32>
    %780 = arith.addf %778, %779 : vector<16x256xf32>
    %781 = vector.extract_strided_slice %780 {offsets = [0, 0], sizes = [16, 128], strides = [1, 1]} : vector<16x256xf32> to vector<16x128xf32>
    %782 = math.tanh %781 : vector<16x128xf32>
    %783 = vector.extract_strided_slice %780 {offsets = [0, 128], sizes = [16, 64], strides = [1, 1]} : vector<16x256xf32> to vector<16x64xf32>
    %784 = arith.mulf %783, %23 : vector<16x64xf32>
    %785 = vector.extract_strided_slice %780 {offsets = [0, 192], sizes = [16, 64], strides = [1, 1]} : vector<16x256xf32> to vector<16x64xf32>
    %786 = arith.addf %784, %785 : vector<16x64xf32>
    %787 = arith.negf %786 : vector<16x64xf32>
    %788 = math.exp %787 : vector<16x64xf32>
    %cst_230 = arith.constant 1.000000e+00 : f32
    %789 = vector.broadcast %cst_230 : f32 to vector<16x64xf32>
    %790 = arith.addf %789, %788 : vector<16x64xf32>
    %791 = arith.divf %789, %790 : vector<16x64xf32>
    %792 = vector.extract_strided_slice %782 {offsets = [0, 0], sizes = [16, 64], strides = [1, 1]} : vector<16x128xf32> to vector<16x64xf32>
    %793 = vector.extract_strided_slice %782 {offsets = [0, 64], sizes = [16, 64], strides = [1, 1]} : vector<16x128xf32> to vector<16x64xf32>
    %794 = arith.subf %793, %792 : vector<16x64xf32>
    %795 = arith.mulf %791, %794 : vector<16x64xf32>
    %796 = arith.addf %792, %795 : vector<16x64xf32>
    %797 = arith.index_cast %c20_i32 : i32 to index
    %c0_231 = arith.constant 0 : index
    %c0_232 = arith.constant 0 : index
    %798 = vector.load %arg9[%797, %c0_231, %c0_232] : memref<24x24x16xf32, #tpu.memory_space<vmem>>, vector<1x24x16xf32>
    %799 = vector.shape_cast %798 : vector<1x24x16xf32> to vector<24x16xf32>
    %cst_233 = arith.constant dense<0.000000e+00> : vector<24x64xf32>
    %800 = tpu.matmul %799, %796, %cst_233 {dimension_numbers = #tpu.dot_dimension_numbers<[1], [0], [0], [1], [0, 0, 1, 1], [], []>} : vector<24x16xf32>, vector<16x64xf32>, vector<24x64xf32> -> vector<24x64xf32>
    %801 = arith.addf %764, %800 : vector<24x64xf32>
    %802 = arith.truncf %796 : vector<16x64xf32> to vector<16x64xbf16>
    %c21_i32 = arith.constant 21 : i32
    %c16_i32_234 = arith.constant 16 : i32
    %803 = arith.muli %c21_i32, %c16_i32_234 : i32
    %804 = tpu.assume_multiple %803, 16 : i32
    %805 = arith.index_cast %804 : i32 to index
    %c0_235 = arith.constant 0 : index
    %806 = vector.load %arg13[%805, %c0_235] : memref<384x128xf32, #tpu.memory_space<vmem>>, vector<16x128xf32>
    %cst_236 = arith.constant dense<0.000000e+00> : vector<16x128xf32>
    %807 = tpu.matmul %802, %18, %cst_236 {dimension_numbers = #tpu.dot_dimension_numbers<[1], [0], [0], [1], [0, 0, 1, 1], [], []>} : vector<16x64xbf16>, vector<64x128xbf16>, vector<16x128xf32> -> vector<16x128xf32>
    %808 = arith.addf %806, %807 : vector<16x128xf32>
    %cst_237 = arith.constant 6.660000e-01 : f32
    %809 = vector.broadcast %cst_237 : f32 to vector<16x128xf32>
    %810 = arith.mulf %809, %808 : vector<16x128xf32>
    %811 = math.tanh %810 : vector<16x128xf32>
    %cst_238 = arith.constant 1.715900e+00 : f32
    %812 = vector.broadcast %cst_238 : f32 to vector<16x128xf32>
    %813 = arith.mulf %812, %811 : vector<16x128xf32>
    %814 = arith.truncf %813 : vector<16x128xf32> to vector<16x128xbf16>
    %cst_239 = arith.constant dense<0.000000e+00> : vector<16x256xf32>
    %815 = tpu.matmul %814, %19, %cst_239 {dimension_numbers = #tpu.dot_dimension_numbers<[1], [0], [0], [1], [0, 0, 1, 1], [], []>} : vector<16x128xbf16>, vector<128x256xbf16>, vector<16x256xf32> -> vector<16x256xf32>
    %816 = vector.broadcast %20 : vector<1x256xf32> to vector<16x256xf32>
    %817 = arith.addf %815, %816 : vector<16x256xf32>
    %818 = vector.extract_strided_slice %817 {offsets = [0, 0], sizes = [16, 128], strides = [1, 1]} : vector<16x256xf32> to vector<16x128xf32>
    %819 = math.tanh %818 : vector<16x128xf32>
    %820 = vector.extract_strided_slice %817 {offsets = [0, 128], sizes = [16, 64], strides = [1, 1]} : vector<16x256xf32> to vector<16x64xf32>
    %821 = arith.mulf %820, %23 : vector<16x64xf32>
    %822 = vector.extract_strided_slice %817 {offsets = [0, 192], sizes = [16, 64], strides = [1, 1]} : vector<16x256xf32> to vector<16x64xf32>
    %823 = arith.addf %821, %822 : vector<16x64xf32>
    %824 = arith.negf %823 : vector<16x64xf32>
    %825 = math.exp %824 : vector<16x64xf32>
    %cst_240 = arith.constant 1.000000e+00 : f32
    %826 = vector.broadcast %cst_240 : f32 to vector<16x64xf32>
    %827 = arith.addf %826, %825 : vector<16x64xf32>
    %828 = arith.divf %826, %827 : vector<16x64xf32>
    %829 = vector.extract_strided_slice %819 {offsets = [0, 0], sizes = [16, 64], strides = [1, 1]} : vector<16x128xf32> to vector<16x64xf32>
    %830 = vector.extract_strided_slice %819 {offsets = [0, 64], sizes = [16, 64], strides = [1, 1]} : vector<16x128xf32> to vector<16x64xf32>
    %831 = arith.subf %830, %829 : vector<16x64xf32>
    %832 = arith.mulf %828, %831 : vector<16x64xf32>
    %833 = arith.addf %829, %832 : vector<16x64xf32>
    %834 = arith.index_cast %c21_i32 : i32 to index
    %c0_241 = arith.constant 0 : index
    %c0_242 = arith.constant 0 : index
    %835 = vector.load %arg9[%834, %c0_241, %c0_242] : memref<24x24x16xf32, #tpu.memory_space<vmem>>, vector<1x24x16xf32>
    %836 = vector.shape_cast %835 : vector<1x24x16xf32> to vector<24x16xf32>
    %cst_243 = arith.constant dense<0.000000e+00> : vector<24x64xf32>
    %837 = tpu.matmul %836, %833, %cst_243 {dimension_numbers = #tpu.dot_dimension_numbers<[1], [0], [0], [1], [0, 0, 1, 1], [], []>} : vector<24x16xf32>, vector<16x64xf32>, vector<24x64xf32> -> vector<24x64xf32>
    %838 = arith.addf %801, %837 : vector<24x64xf32>
    %839 = arith.truncf %833 : vector<16x64xf32> to vector<16x64xbf16>
    %c22_i32 = arith.constant 22 : i32
    %c16_i32_244 = arith.constant 16 : i32
    %840 = arith.muli %c22_i32, %c16_i32_244 : i32
    %841 = tpu.assume_multiple %840, 16 : i32
    %842 = arith.index_cast %841 : i32 to index
    %c0_245 = arith.constant 0 : index
    %843 = vector.load %arg13[%842, %c0_245] : memref<384x128xf32, #tpu.memory_space<vmem>>, vector<16x128xf32>
    %cst_246 = arith.constant dense<0.000000e+00> : vector<16x128xf32>
    %844 = tpu.matmul %839, %18, %cst_246 {dimension_numbers = #tpu.dot_dimension_numbers<[1], [0], [0], [1], [0, 0, 1, 1], [], []>} : vector<16x64xbf16>, vector<64x128xbf16>, vector<16x128xf32> -> vector<16x128xf32>
    %845 = arith.addf %843, %844 : vector<16x128xf32>
    %cst_247 = arith.constant 6.660000e-01 : f32
    %846 = vector.broadcast %cst_247 : f32 to vector<16x128xf32>
    %847 = arith.mulf %846, %845 : vector<16x128xf32>
    %848 = math.tanh %847 : vector<16x128xf32>
    %cst_248 = arith.constant 1.715900e+00 : f32
    %849 = vector.broadcast %cst_248 : f32 to vector<16x128xf32>
    %850 = arith.mulf %849, %848 : vector<16x128xf32>
    %851 = arith.truncf %850 : vector<16x128xf32> to vector<16x128xbf16>
    %cst_249 = arith.constant dense<0.000000e+00> : vector<16x256xf32>
    %852 = tpu.matmul %851, %19, %cst_249 {dimension_numbers = #tpu.dot_dimension_numbers<[1], [0], [0], [1], [0, 0, 1, 1], [], []>} : vector<16x128xbf16>, vector<128x256xbf16>, vector<16x256xf32> -> vector<16x256xf32>
    %853 = vector.broadcast %20 : vector<1x256xf32> to vector<16x256xf32>
    %854 = arith.addf %852, %853 : vector<16x256xf32>
    %855 = vector.extract_strided_slice %854 {offsets = [0, 0], sizes = [16, 128], strides = [1, 1]} : vector<16x256xf32> to vector<16x128xf32>
    %856 = math.tanh %855 : vector<16x128xf32>
    %857 = vector.extract_strided_slice %854 {offsets = [0, 128], sizes = [16, 64], strides = [1, 1]} : vector<16x256xf32> to vector<16x64xf32>
    %858 = arith.mulf %857, %23 : vector<16x64xf32>
    %859 = vector.extract_strided_slice %854 {offsets = [0, 192], sizes = [16, 64], strides = [1, 1]} : vector<16x256xf32> to vector<16x64xf32>
    %860 = arith.addf %858, %859 : vector<16x64xf32>
    %861 = arith.negf %860 : vector<16x64xf32>
    %862 = math.exp %861 : vector<16x64xf32>
    %cst_250 = arith.constant 1.000000e+00 : f32
    %863 = vector.broadcast %cst_250 : f32 to vector<16x64xf32>
    %864 = arith.addf %863, %862 : vector<16x64xf32>
    %865 = arith.divf %863, %864 : vector<16x64xf32>
    %866 = vector.extract_strided_slice %856 {offsets = [0, 0], sizes = [16, 64], strides = [1, 1]} : vector<16x128xf32> to vector<16x64xf32>
    %867 = vector.extract_strided_slice %856 {offsets = [0, 64], sizes = [16, 64], strides = [1, 1]} : vector<16x128xf32> to vector<16x64xf32>
    %868 = arith.subf %867, %866 : vector<16x64xf32>
    %869 = arith.mulf %865, %868 : vector<16x64xf32>
    %870 = arith.addf %866, %869 : vector<16x64xf32>
    %871 = arith.index_cast %c22_i32 : i32 to index
    %c0_251 = arith.constant 0 : index
    %c0_252 = arith.constant 0 : index
    %872 = vector.load %arg9[%871, %c0_251, %c0_252] : memref<24x24x16xf32, #tpu.memory_space<vmem>>, vector<1x24x16xf32>
    %873 = vector.shape_cast %872 : vector<1x24x16xf32> to vector<24x16xf32>
    %cst_253 = arith.constant dense<0.000000e+00> : vector<24x64xf32>
    %874 = tpu.matmul %873, %870, %cst_253 {dimension_numbers = #tpu.dot_dimension_numbers<[1], [0], [0], [1], [0, 0, 1, 1], [], []>} : vector<24x16xf32>, vector<16x64xf32>, vector<24x64xf32> -> vector<24x64xf32>
    %875 = arith.addf %838, %874 : vector<24x64xf32>
    %876 = arith.truncf %870 : vector<16x64xf32> to vector<16x64xbf16>
    %c23_i32 = arith.constant 23 : i32
    %c16_i32_254 = arith.constant 16 : i32
    %877 = arith.muli %c23_i32, %c16_i32_254 : i32
    %878 = tpu.assume_multiple %877, 16 : i32
    %879 = arith.index_cast %878 : i32 to index
    %c0_255 = arith.constant 0 : index
    %880 = vector.load %arg13[%879, %c0_255] : memref<384x128xf32, #tpu.memory_space<vmem>>, vector<16x128xf32>
    %cst_256 = arith.constant dense<0.000000e+00> : vector<16x128xf32>
    %881 = tpu.matmul %876, %18, %cst_256 {dimension_numbers = #tpu.dot_dimension_numbers<[1], [0], [0], [1], [0, 0, 1, 1], [], []>} : vector<16x64xbf16>, vector<64x128xbf16>, vector<16x128xf32> -> vector<16x128xf32>
    %882 = arith.addf %880, %881 : vector<16x128xf32>
    %cst_257 = arith.constant 6.660000e-01 : f32
    %883 = vector.broadcast %cst_257 : f32 to vector<16x128xf32>
    %884 = arith.mulf %883, %882 : vector<16x128xf32>
    %885 = math.tanh %884 : vector<16x128xf32>
    %cst_258 = arith.constant 1.715900e+00 : f32
    %886 = vector.broadcast %cst_258 : f32 to vector<16x128xf32>
    %887 = arith.mulf %886, %885 : vector<16x128xf32>
    %888 = arith.truncf %887 : vector<16x128xf32> to vector<16x128xbf16>
    %cst_259 = arith.constant dense<0.000000e+00> : vector<16x256xf32>
    %889 = tpu.matmul %888, %19, %cst_259 {dimension_numbers = #tpu.dot_dimension_numbers<[1], [0], [0], [1], [0, 0, 1, 1], [], []>} : vector<16x128xbf16>, vector<128x256xbf16>, vector<16x256xf32> -> vector<16x256xf32>
    %890 = vector.broadcast %20 : vector<1x256xf32> to vector<16x256xf32>
    %891 = arith.addf %889, %890 : vector<16x256xf32>
    %892 = vector.extract_strided_slice %891 {offsets = [0, 0], sizes = [16, 128], strides = [1, 1]} : vector<16x256xf32> to vector<16x128xf32>
    %893 = math.tanh %892 : vector<16x128xf32>
    %894 = vector.extract_strided_slice %891 {offsets = [0, 128], sizes = [16, 64], strides = [1, 1]} : vector<16x256xf32> to vector<16x64xf32>
    %895 = arith.mulf %894, %23 : vector<16x64xf32>
    %896 = vector.extract_strided_slice %891 {offsets = [0, 192], sizes = [16, 64], strides = [1, 1]} : vector<16x256xf32> to vector<16x64xf32>
    %897 = arith.addf %895, %896 : vector<16x64xf32>
    %898 = arith.negf %897 : vector<16x64xf32>
    %899 = math.exp %898 : vector<16x64xf32>
    %cst_260 = arith.constant 1.000000e+00 : f32
    %900 = vector.broadcast %cst_260 : f32 to vector<16x64xf32>
    %901 = arith.addf %900, %899 : vector<16x64xf32>
    %902 = arith.divf %900, %901 : vector<16x64xf32>
    %903 = vector.extract_strided_slice %893 {offsets = [0, 0], sizes = [16, 64], strides = [1, 1]} : vector<16x128xf32> to vector<16x64xf32>
    %904 = vector.extract_strided_slice %893 {offsets = [0, 64], sizes = [16, 64], strides = [1, 1]} : vector<16x128xf32> to vector<16x64xf32>
    %905 = arith.subf %904, %903 : vector<16x64xf32>
    %906 = arith.mulf %902, %905 : vector<16x64xf32>
    %907 = arith.addf %903, %906 : vector<16x64xf32>
    %908 = arith.index_cast %c23_i32 : i32 to index
    %c0_261 = arith.constant 0 : index
    %c0_262 = arith.constant 0 : index
    %909 = vector.load %arg9[%908, %c0_261, %c0_262] : memref<24x24x16xf32, #tpu.memory_space<vmem>>, vector<1x24x16xf32>
    %910 = vector.shape_cast %909 : vector<1x24x16xf32> to vector<24x16xf32>
    %cst_263 = arith.constant dense<0.000000e+00> : vector<24x64xf32>
    %911 = tpu.matmul %910, %907, %cst_263 {dimension_numbers = #tpu.dot_dimension_numbers<[1], [0], [0], [1], [0, 0, 1, 1], [], []>} : vector<24x16xf32>, vector<16x64xf32>, vector<24x64xf32> -> vector<24x64xf32>
    %912 = arith.addf %875, %911 : vector<24x64xf32>
    %913 = arith.truncf %907 : vector<16x64xf32> to vector<16x64xbf16>
    %c24_i32 = arith.constant 24 : i32
    %c0_264 = arith.constant 0 : index
    %c0_265 = arith.constant 0 : index
    %914 = vector.load %arg10[%c0_264, %c0_265] : memref<32x3xf32, #tpu.memory_space<vmem>>, vector<32x3xf32>
    %c0_266 = arith.constant 0 : index
    %c0_267 = arith.constant 0 : index
    %915 = vector.load %arg11[%c0_266, %c0_267] : memref<1x3xf32, #tpu.memory_space<vmem>>, vector<1x3xf32>
    %916 = vector.extract_strided_slice %912 {offsets = [0, 0], sizes = [24, 32], strides = [1, 1]} : vector<24x64xf32> to vector<24x32xf32>
    %cst_268 = arith.constant dense<0.000000e+00> : vector<24x3xf32>
    %917 = tpu.matmul %916, %914, %cst_268 {dimension_numbers = #tpu.dot_dimension_numbers<[1], [0], [0], [1], [0, 0, 1, 1], [], []>} : vector<24x32xf32>, vector<32x3xf32>, vector<24x3xf32> -> vector<24x3xf32>
    %918 = vector.broadcast %915 : vector<1x3xf32> to vector<24x3xf32>
    %919 = arith.addf %917, %918 : vector<24x3xf32>
    %920 = vector.extract_strided_slice %4 {offsets = [0, 0], sizes = [1, 3], strides = [1, 1]} : vector<1x8xf32> to vector<1x3xf32>
    %921 = vector.broadcast %920 : vector<1x3xf32> to vector<24x3xf32>
    %922 = arith.addf %919, %921 : vector<24x3xf32>
    %c0_269 = arith.constant 0 : index
    %c0_270 = arith.constant 0 : index
    %c0_271 = arith.constant 0 : index
    %923 = vector.load %arg12[%c0_269, %c0_270, %c0_271] : memref<2x24x3xf32, #tpu.memory_space<vmem>>, vector<1x24x3xf32>
    %924 = vector.shape_cast %923 : vector<1x24x3xf32> to vector<24x3xf32>
    %925 = vector.shape_cast %922 : vector<24x3xf32> to vector<1x24x3xf32>
    tpu.vector_store %arg12[%c0_269, %c0_270, %c0_271], %925 {strides = array<i32>} : memref<2x24x3xf32, #tpu.memory_space<vmem>>, vector<1x24x3xf32>,
    %926 = vector.extract_strided_slice %912 {offsets = [0, 32], sizes = [24, 32], strides = [1, 1]} : vector<24x64xf32> to vector<24x32xf32>
    %cst_272 = arith.constant dense<0.000000e+00> : vector<24x3xf32>
    %927 = tpu.matmul %926, %914, %cst_272 {dimension_numbers = #tpu.dot_dimension_numbers<[1], [0], [0], [1], [0, 0, 1, 1], [], []>} : vector<24x32xf32>, vector<32x3xf32>, vector<24x3xf32> -> vector<24x3xf32>
    %928 = vector.broadcast %915 : vector<1x3xf32> to vector<24x3xf32>
    %929 = arith.addf %927, %928 : vector<24x3xf32>
    %930 = vector.extract_strided_slice %4 {offsets = [0, 4], sizes = [1, 3], strides = [1, 1]} : vector<1x8xf32> to vector<1x3xf32>
    %931 = vector.broadcast %930 : vector<1x3xf32> to vector<24x3xf32>
    %932 = arith.addf %929, %931 : vector<24x3xf32>
    %c1 = arith.constant 1 : index
    %c0_273 = arith.constant 0 : index
    %c0_274 = arith.constant 0 : index
    %933 = vector.load %arg12[%c1, %c0_273, %c0_274] : memref<2x24x3xf32, #tpu.memory_space<vmem>>, vector<1x24x3xf32>
    %934 = vector.shape_cast %933 : vector<1x24x3xf32> to vector<24x3xf32>
    %935 = vector.shape_cast %932 : vector<24x3xf32> to vector<1x24x3xf32>
    tpu.vector_store %arg12[%c1, %c0_273, %c0_274], %935 {strides = array<i32>} : memref<2x24x3xf32, #tpu.memory_space<vmem>>, vector<1x24x3xf32>,
    return
  }
}

</mosaic_0001>

<llo_original>
// kernel: cfc_forward.1
$region0: #{cfc_forward.1}
  #allocation0 [shape = 'u32[]', space=smem, size = 0x4, offset = 0x4, fixed_abs, tag = 'smem constant byte address 0x4 - core index']
  #allocation1 [shape = 'u32[72,128]{1,0:T(1,128)}', space=vmem, size = 0x9000, scoped, tag = 'internal scratch']
  #allocation2 [shape = 'f32[384,128]{1,0:T(8,128)}', space=vmem, size = 0x30000, scoped, tag = 'scratch operand']
  %s0 = inlined_call_operand.vmem [shape: f32[168,8], index: 0, kind: input, shape index: {}]
  %s1 = inlined_call_operand.vmem [shape: f32[384,168], index: 1, kind: input, shape index: {}]
  %s2 = inlined_call_operand.vmem [shape: f32[384,1], index: 2, kind: input, shape index: {}]
  %s3 = inlined_call_operand.vmem [shape: f32[8,128], index: 3, kind: input, shape index: {}]
  %s4 = inlined_call_operand.vmem [shape: f32[1,128], index: 4, kind: input, shape index: {}]
  %s5 = inlined_call_operand.vmem [shape: bf16[64,128], index: 5, kind: input, shape index: {}]
  %s6 = inlined_call_operand.vmem [shape: bf16[128,256], index: 6, kind: input, shape index: {}]
  %s7 = inlined_call_operand.vmem [shape: f32[1,256], index: 7, kind: input, shape index: {}]
  %s8 = inlined_call_operand.vmem [shape: f32[16,1], index: 8, kind: input, shape index: {}]
  %s9 = inlined_call_operand.vmem [shape: f32[24,24,16], index: 9, kind: input, shape index: {}]
  %s10 = inlined_call_operand.vmem [shape: f32[32,3], index: 10, kind: input, shape index: {}]
  %s11 = inlined_call_operand.vmem [shape: f32[1,3], index: 11, kind: input, shape index: {}]
  %s12 = inlined_call_operand.vmem [shape: f32[2,24,3], index: 12, kind: output, shape index: {}]
  %s13 = sld [smem:[#allocation0]]
  $region58: #{cfc_forward.1} parent=0
    _
  %s15 = ssub.s32 1, %s13
  %s16 = scalar_select 0, %s15, %s13
  // Predicated region
  $region2: #{cfc_forward.1} parent=0 // pred_check
    _
  $region3: #{cfc_forward.1} parent=0 // pred_check_branch
    %18 = sbr.rel (0) target = $region5
  $region4: #{cfc_forward.1} parent=0 // pred_region
    _
  $region5: #{cfc_forward.1} parent=0 // pred_fallthru
    _
  // Predicated region
  $region6: #{cfc_forward.1} parent=0 // pred_check
    _
  $region7: #{cfc_forward.1} parent=0 // pred_check_branch
    %20 = sbr.rel (0) target = $region9
  $region8: #{cfc_forward.1} parent=0 // pred_region
    _
  $region9: #{cfc_forward.1} parent=0 // pred_fallthru
    _
  // Predicated region
  $region10: #{cfc_forward.1} parent=0 // pred_check
    _
  $region11: #{cfc_forward.1} parent=0 // pred_check_branch
    %22 = sbr.rel (0) target = $region13
  $region12: #{cfc_forward.1} parent=0 // pred_region
    _
  $region13: #{cfc_forward.1} parent=0 // pred_fallthru
    _
  // Predicated region
  $region14: #{cfc_forward.1} parent=0 // pred_check
    _
  $region15: #{cfc_forward.1} parent=0 // pred_check_branch
    %24 = sbr.rel (0) target = $region17
  $region16: #{cfc_forward.1} parent=0 // pred_region
    _
  $region17: #{cfc_forward.1} parent=0 // pred_fallthru
    _
  // Predicated region
  $region18: #{cfc_forward.1} parent=0 // pred_check
    _
  $region19: #{cfc_forward.1} parent=0 // pred_check_branch
    %26 = sbr.rel (0) target = $region21
  $region20: #{cfc_forward.1} parent=0 // pred_region
    _
  $region21: #{cfc_forward.1} parent=0 // pred_fallthru
    _
  // Predicated region
  $region22: #{cfc_forward.1} parent=0 // pred_check
    _
  $region23: #{cfc_forward.1} parent=0 // pred_check_branch
    %28 = sbr.rel (0) target = $region25
  $region24: #{cfc_forward.1} parent=0 // pred_region
    _
  $region25: #{cfc_forward.1} parent=0 // pred_fallthru
    _
  // Predicated region
  $region26: #{cfc_forward.1} parent=0 // pred_check
    _
  $region27: #{cfc_forward.1} parent=0 // pred_check_branch
    %30 = sbr.rel (0) target = $region29
  $region28: #{cfc_forward.1} parent=0 // pred_region
    _
  $region29: #{cfc_forward.1} parent=0 // pred_fallthru
    _
  // Predicated region
  $region30: #{cfc_forward.1} parent=0 // pred_check
    _
  $region31: #{cfc_forward.1} parent=0 // pred_check_branch
    %32 = sbr.rel (0) target = $region33
  $region32: #{cfc_forward.1} parent=0 // pred_region
    _
  $region33: #{cfc_forward.1} parent=0 // pred_fallthru
    _
  // Predicated region
  $region34: #{cfc_forward.1} parent=0 // pred_check
    _
  $region35: #{cfc_forward.1} parent=0 // pred_check_branch
    %34 = sbr.rel (0) target = $region37
  $region36: #{cfc_forward.1} parent=0 // pred_region
    _
  $region37: #{cfc_forward.1} parent=0 // pred_fallthru
    _
  // Predicated region
  $region38: #{cfc_forward.1} parent=0 // pred_check
    _
  $region39: #{cfc_forward.1} parent=0 // pred_check_branch
    %36 = sbr.rel (0) target = $region41
  $region40: #{cfc_forward.1} parent=0 // pred_region
    _
  $region41: #{cfc_forward.1} parent=0 // pred_fallthru
    _
  // Predicated region
  $region42: #{cfc_forward.1} parent=0 // pred_check
    _
  $region43: #{cfc_forward.1} parent=0 // pred_check_branch
    %38 = sbr.rel (0) target = $region45
  $region44: #{cfc_forward.1} parent=0 // pred_region
    _
  $region45: #{cfc_forward.1} parent=0 // pred_fallthru
    _
  // Predicated region
  $region46: #{cfc_forward.1} parent=0 // pred_check
    _
  $region47: #{cfc_forward.1} parent=0 // pred_check_branch
    %40 = sbr.rel (0) target = $region49
  $region48: #{cfc_forward.1} parent=0 // pred_region
    _
  $region49: #{cfc_forward.1} parent=0 // pred_fallthru
    _
  %v42 = vld [vmem:[%s0] sm:$0xff]
  %v43 = vld [vmem:[%s0 + $0x8] sm:$0xff]
  %v44 = vld [vmem:[%s0 + $0x10] sm:$0xff]
  %v45 = vld [vmem:[%s0 + $0x18] sm:$0xff]
  %v46 = vld [vmem:[%s0 + $0x20] sm:$0xff]
  %v47 = vld [vmem:[%s0 + $0x28] sm:$0xff]
  %v48 = vld [vmem:[%s0 + $0x30] sm:$0xff]
  %v49 = vld [vmem:[%s0 + $0x38] sm:$0xff]
  %v50 = vld [vmem:[%s0 + $0x40] sm:$0xff]
  %v51 = vld [vmem:[%s0 + $0x48] sm:$0xff]
  %v52 = vld [vmem:[%s0 + $0x50] sm:$0xff]
  %v53 = vld [vmem:[%s0 + $0x58] sm:$0xff]
  %v54 = vld [vmem:[%s0 + $0x60] sm:$0xff]
  %v55 = vld [vmem:[%s0 + $0x68] sm:$0xff]
  %v56 = vld [vmem:[%s0 + $0x70] sm:$0xff]
  %v57 = vld [vmem:[%s0 + $0x78] sm:$0xff]
  %v58 = vld [vmem:[%s0 + $0x80] sm:$0xff]
  %v59 = vld [vmem:[%s0 + $0x88] sm:$0xff]
  %v60 = vld [vmem:[%s0 + $0x90] sm:$0xff]
  %v61 = vld [vmem:[%s0 + $0x98] sm:$0xff]
  %v62 = vld [vmem:[%s0 + $0xa0] sm:$0xff]
  %vm63 = vcmask 64512
  %v64 = vsel %vm63, %v42, 0.0
  %v65 = vsel %vm63, %v43, 0.0
  %v66 = vadd.f32 %v64, %v65
  %v67 = vsel %vm63, %v44, 0.0
  %v68 = vadd.f32 %v66, %v67
  %v69 = vsel %vm63, %v45, 0.0
  %v70 = vadd.f32 %v68, %v69
  %v71 = vsel %vm63, %v46, 0.0
  %v72 = vadd.f32 %v70, %v71
  %v73 = vsel %vm63, %v47, 0.0
  %v74 = vadd.f32 %v72, %v73
  %v75 = vsel %vm63, %v48, 0.0
  %v76 = vadd.f32 %v74, %v75
  %v77 = vsel %vm63, %v49, 0.0
  %v78 = vadd.f32 %v76, %v77
  %v79 = vsel %vm63, %v50, 0.0
  %v80 = vadd.f32 %v78, %v79
  %v81 = vsel %vm63, %v51, 0.0
  %v82 = vadd.f32 %v80, %v81
  %v83 = vsel %vm63, %v52, 0.0
  %v84 = vadd.f32 %v82, %v83
  %v85 = vsel %vm63, %v53, 0.0
  %v86 = vadd.f32 %v84, %v85
  %v87 = vsel %vm63, %v54, 0.0
  %v88 = vadd.f32 %v86, %v87
  %v89 = vsel %vm63, %v55, 0.0
  %v90 = vadd.f32 %v88, %v89
  %v91 = vsel %vm63, %v56, 0.0
  %v92 = vadd.f32 %v90, %v91
  %v93 = vsel %vm63, %v57, 0.0
  %v94 = vadd.f32 %v92, %v93
  %v95 = vsel %vm63, %v58, 0.0
  %v96 = vadd.f32 %v94, %v95
  %v97 = vsel %vm63, %v59, 0.0
  %v98 = vadd.f32 %v96, %v97
  %v99 = vsel %vm63, %v60, 0.0
  %v100 = vadd.f32 %v98, %v99
  %v101 = vsel %vm63, %v61, 0.0
  %v102 = vadd.f32 %v100, %v101
  %v103 = vsel %vm63, %v62, 0.0
  %v104 = vadd.f32 %v102, %v103
  %v105 = vrot.slane %v104, 4
  %v106 = vadd.f32 %v104, %v105
  %v107 = vrot.slane %v106, 2
  %v108 = vadd.f32 %v106, %v107
  %v109 = vrot.slane %v108, 1
  %v110 = vadd.f32 %v108, %v109
  %v111 = vmul.f32 %v110, 0.005952381
  %v112 = vsub.f32 %v42, %v111
  %v113 = vsub.f32 %v43, %v111
  %v114 = vsub.f32 %v44, %v111
  %v115 = vsub.f32 %v45, %v111
  %v116 = vsub.f32 %v46, %v111
  %v117 = vsub.f32 %v47, %v111
  %v118 = vsub.f32 %v48, %v111
  %v119 = vsub.f32 %v49, %v111
  %v120 = vsub.f32 %v50, %v111
  %v121 = vsub.f32 %v51, %v111
  %v122 = vsub.f32 %v52, %v111
  %v123 = vsub.f32 %v53, %v111
  %v124 = vsub.f32 %v54, %v111
  %v125 = vsub.f32 %v55, %v111
  %v126 = vsub.f32 %v56, %v111
  %v127 = vsub.f32 %v57, %v111
  %v128 = vsub.f32 %v58, %v111
  %v129 = vsub.f32 %v59, %v111
  %v130 = vsub.f32 %v60, %v111
  %v131 = vsub.f32 %v61, %v111
  %v132 = vsub.f32 %v62, %v111
  %v133 = vld [vmem:[%s1] sm:$0xff]
  %v134 = vld [vmem:[%s1 + $0x8] sm:$0xff]
  %v135 = vld [vmem:[%s1 + $0x10] sm:$0xff]
  %v136 = vld [vmem:[%s1 + $0x18] sm:$0xff]
  %v137 = vld [vmem:[%s1 + $0x20] sm:$0xff]
  %v138 = vld [vmem:[%s1 + $0x28] sm:$0xff]
  %v139 = vld [vmem:[%s1 + $0x30] sm:$0xff]
  %v140 = vld [vmem:[%s1 + $0x38] sm:$0xff]
  %v141 = vld [vmem:[%s1 + $0x40] sm:$0xff]
  %v142 = vld [vmem:[%s1 + $0x48] sm:$0xff]
  %v143 = vld [vmem:[%s1 + $0x50] sm:$0xff]
  %v144 = vld [vmem:[%s1 + $0x58] sm:$0xff]
  %v145 = vld [vmem:[%s1 + $0x60] sm:$0xff]
  %v146 = vld [vmem:[%s1 + $0x68] sm:$0xff]
  %v147 = vld [vmem:[%s1 + $0x70] sm:$0xff]
  %v148 = vld [vmem:[%s1 + $0x78] sm:$0xff]
  %v149 = vld [vmem:[%s1 + $0x80] sm:$0xff]
  %v150 = vld [vmem:[%s1 + $0x88] sm:$0xff]
  %v151 = vld [vmem:[%s1 + $0x90] sm:$0xff]
  %v152 = vld [vmem:[%s1 + $0x98] sm:$0xff]
  %v153 = vld [vmem:[%s1 + $0xa0] sm:$0xff]
  %v154 = vld [vmem:[%s1 + $0xa8] sm:$0xff]
  %v155 = vld [vmem:[%s1 + $0xb0] sm:$0xff]
  %v156 = vld [vmem:[%s1 + $0xb8] sm:$0xff]
  %v157 = vld [vmem:[%s1 + $0xc0] sm:$0xff]
  %v158 = vld [vmem:[%s1 + $0xc8] sm:$0xff]
  %v159 = vld [vmem:[%s1 + $0xd0] sm:$0xff]
  %v160 = vld [vmem:[%s1 + $0xd8] sm:$0xff]
  %v161 = vld [vmem:[%s1 + $0xe0] sm:$0xff]
  %v162 = vld [vmem:[%s1 + $0xe8] sm:$0xff]
  %v163 = vld [vmem:[%s1 + $0xf0] sm:$0xff]
  %v164 = vld [vmem:[%s1 + $0xf8] sm:$0xff]
  %v165 = vld [vmem:[%s1 + $0x100] sm:$0xff]
  %v166 = vld [vmem:[%s1 + $0x108] sm:$0xff]
  %v167 = vld [vmem:[%s1 + $0x110] sm:$0xff]
  %v168 = vld [vmem:[%s1 + $0x118] sm:$0xff]
  %v169 = vld [vmem:[%s1 + $0x120] sm:$0xff]
  %v170 = vld [vmem:[%s1 + $0x128] sm:$0xff]
  %v171 = vld [vmem:[%s1 + $0x130] sm:$0xff]
  %v172 = vld [vmem:[%s1 + $0x138] sm:$0xff]
  %v173 = vld [vmem:[%s1 + $0x140] sm:$0xff]
  %v174 = vld [vmem:[%s1 + $0x148] sm:$0xff]
  %v175 = vld [vmem:[%s1 + $0x150] sm:$0xff]
  %v176 = vld [vmem:[%s1 + $0x158] sm:$0xff]
  %v177 = vld [vmem:[%s1 + $0x160] sm:$0xff]
  %v178 = vld [vmem:[%s1 + $0x168] sm:$0xff]
  %v179 = vld [vmem:[%s1 + $0x170] sm:$0xff]
  %v180 = vld [vmem:[%s1 + $0x178] sm:$0xff]
  %v181 = vld [vmem:[%s1 + $0x180] sm:$0xff]
  %v182 = vld [vmem:[%s1 + $0x188] sm:$0xff]
  %v183 = vld [vmem:[%s1 + $0x190] sm:$0xff]
  %v184 = vld [vmem:[%s1 + $0x198] sm:$0xff]
  %v185 = vld [vmem:[%s1 + $0x1a0] sm:$0xff]
  %v186 = vld [vmem:[%s1 + $0x1a8] sm:$0xff]
  %v187 = vld [vmem:[%s1 + $0x1b0] sm:$0xff]
  %v188 = vld [vmem:[%s1 + $0x1b8] sm:$0xff]
  %v189 = vld [vmem:[%s1 + $0x1c0] sm:$0xff]
  %v190 = vld [vmem:[%s1 + $0x1c8] sm:$0xff]
  %v191 = vld [vmem:[%s1 + $0x1d0] sm:$0xff]
  %v192 = vld [vmem:[%s1 + $0x1d8] sm:$0xff]
  %v193 = vld [vmem:[%s1 + $0x1e0] sm:$0xff]
  %v194 = vld [vmem:[%s1 + $0x1e8] sm:$0xff]
  %v195 = vld [vmem:[%s1 + $0x1f0] sm:$0xff]
  %v196 = vld [vmem:[%s1 + $0x1f8] sm:$0xff]
  %v197 = vld [vmem:[%s1 + $0x200] sm:$0xff]
  %v198 = vld [vmem:[%s1 + $0x208] sm:$0xff]
  %v199 = vld [vmem:[%s1 + $0x210] sm:$0xff]
  %v200 = vld [vmem:[%s1 + $0x218] sm:$0xff]
  %v201 = vld [vmem:[%s1 + $0x220] sm:$0xff]
  %v202 = vld [vmem:[%s1 + $0x228] sm:$0xff]
  %v203 = vld [vmem:[%s1 + $0x230] sm:$0xff]
  %v204 = vld [vmem:[%s1 + $0x238] sm:$0xff]
  %v205 = vld [vmem:[%s1 + $0x240] sm:$0xff]
  %v206 = vld [vmem:[%s1 + $0x248] sm:$0xff]
  %v207 = vld [vmem:[%s1 + $0x250] sm:$0xff]
  %v208 = vld [vmem:[%s1 + $0x258] sm:$0xff]
  %v209 = vld [vmem:[%s1 + $0x260] sm:$0xff]
  %v210 = vld [vmem:[%s1 + $0x268] sm:$0xff]
  %v211 = vld [vmem:[%s1 + $0x270] sm:$0xff]
  %v212 = vld [vmem:[%s1 + $0x278] sm:$0xff]
  %v213 = vld [vmem:[%s1 + $0x280] sm:$0xff]
  %v214 = vld [vmem:[%s1 + $0x288] sm:$0xff]
  %v215 = vld [vmem:[%s1 + $0x290] sm:$0xff]
  %v216 = vld [vmem:[%s1 + $0x298] sm:$0xff]
  %v217 = vld [vmem:[%s1 + $0x2a0] sm:$0xff]
  %v218 = vld [vmem:[%s1 + $0x2a8] sm:$0xff]
  %v219 = vld [vmem:[%s1 + $0x2b0] sm:$0xff]
  %v220 = vld [vmem:[%s1 + $0x2b8] sm:$0xff]
  %v221 = vld [vmem:[%s1 + $0x2c0] sm:$0xff]
  %v222 = vld [vmem:[%s1 + $0x2c8] sm:$0xff]
  %v223 = vld [vmem:[%s1 + $0x2d0] sm:$0xff]
  %v224 = vld [vmem:[%s1 + $0x2d8] sm:$0xff]
  %v225 = vld [vmem:[%s1 + $0x2e0] sm:$0xff]
  %v226 = vld [vmem:[%s1 + $0x2e8] sm:$0xff]
  %v227 = vld [vmem:[%s1 + $0x2f0] sm:$0xff]
  %v228 = vld [vmem:[%s1 + $0x2f8] sm:$0xff]
  %v229 = vld [vmem:[%s2] sm:$0xff]
  %v230 = vld [vmem:[%s2 + $0x8] sm:$0xff]
  %v231 = vld [vmem:[%s2 + $0x10] sm:$0xff]
  %v232 = vld [vmem:[%s2 + $0x18] sm:$0xff]
  %v233 = vld [vmem:[%s2 + $0x20] sm:$0xff]
  %v234 = vld [vmem:[%s2 + $0x28] sm:$0xff]
  %v235 = vld [vmem:[%s2 + $0x30] sm:$0xff]
  %v236 = vld [vmem:[%s2 + $0x38] sm:$0xff]
  %v237 = vld [vmem:[%s2 + $0x40] sm:$0xff]
  %v238 = vld [vmem:[%s2 + $0x48] sm:$0xff]
  %v239 = vld [vmem:[%s2 + $0x50] sm:$0xff]
  %v240 = vld [vmem:[%s2 + $0x58] sm:$0xff]
  %v241 = vld [vmem:[%s2 + $0x60] sm:$0xff]
  %v242 = vld [vmem:[%s2 + $0x68] sm:$0xff]
  %v243 = vld [vmem:[%s2 + $0x70] sm:$0xff]
  %v244 = vld [vmem:[%s2 + $0x78] sm:$0xff]
  %v245 = vld [vmem:[%s2 + $0x80] sm:$0xff]
  %v246 = vld [vmem:[%s2 + $0x88] sm:$0xff]
  %v247 = vld [vmem:[%s2 + $0x90] sm:$0xff]
  %v248 = vld [vmem:[%s2 + $0x98] sm:$0xff]
  %v249 = vld [vmem:[%s2 + $0xa0] sm:$0xff]
  %v250 = vld [vmem:[%s2 + $0xa8] sm:$0xff]
  %v251 = vld [vmem:[%s2 + $0xb0] sm:$0xff]
  %v252 = vld [vmem:[%s2 + $0xb8] sm:$0xff]
  %v253 = vld [vmem:[%s2 + $0xc0] sm:$0xff]
  %v254 = vld [vmem:[%s2 + $0xc8] sm:$0xff]
  %v255 = vld [vmem:[%s2 + $0xd0] sm:$0xff]
  %v256 = vld [vmem:[%s2 + $0xd8] sm:$0xff]
  %v257 = vld [vmem:[%s2 + $0xe0] sm:$0xff]
  %v258 = vld [vmem:[%s2 + $0xe8] sm:$0xff]
  %v259 = vld [vmem:[%s2 + $0xf0] sm:$0xff]
  %v260 = vld [vmem:[%s2 + $0xf8] sm:$0xff]
  %v261 = vld [vmem:[%s2 + $0x100] sm:$0xff]
  %v262 = vld [vmem:[%s2 + $0x108] sm:$0xff]
  %v263 = vld [vmem:[%s2 + $0x110] sm:$0xff]
  %v264 = vld [vmem:[%s2 + $0x118] sm:$0xff]
  %v265 = vld [vmem:[%s2 + $0x120] sm:$0xff]
  %v266 = vld [vmem:[%s2 + $0x128] sm:$0xff]
  %v267 = vld [vmem:[%s2 + $0x130] sm:$0xff]
  %v268 = vld [vmem:[%s2 + $0x138] sm:$0xff]
  %v269 = vld [vmem:[%s2 + $0x140] sm:$0xff]
  %v270 = vld [vmem:[%s2 + $0x148] sm:$0xff]
  %v271 = vld [vmem:[%s2 + $0x150] sm:$0xff]
  %v272 = vld [vmem:[%s2 + $0x158] sm:$0xff]
  %v273 = vld [vmem:[%s2 + $0x160] sm:$0xff]
  %v274 = vld [vmem:[%s2 + $0x168] sm:$0xff]
  %v275 = vld [vmem:[%s2 + $0x170] sm:$0xff]
  %v276 = vld [vmem:[%s2 + $0x178] sm:$0xff]
  %278 = vset.pattern.permute.xlu0 0
  %279 = vperm.xlu0 %278, %v229
  %v280 = vpop.permute.xlu0 %279
  %283 = vset.pattern.permute.xlu0 0
  %284 = vperm.xlu0 %283, %v230
  %v285 = vpop.permute.xlu0 %284
  %288 = vset.pattern.permute.xlu0 0
  %289 = vperm.xlu0 %288, %v231
  %v290 = vpop.permute.xlu0 %289
  %293 = vset.pattern.permute.xlu0 0
  %294 = vperm.xlu0 %293, %v232
  %v295 = vpop.permute.xlu0 %294
  %298 = vset.pattern.permute.xlu0 0
  %299 = vperm.xlu0 %298, %v233
  %v300 = vpop.permute.xlu0 %299
  %303 = vset.pattern.permute.xlu0 0
  %304 = vperm.xlu0 %303, %v234
  %v305 = vpop.permute.xlu0 %304
  %308 = vset.pattern.permute.xlu0 0
  %309 = vperm.xlu0 %308, %v235
  %v310 = vpop.permute.xlu0 %309
  %313 = vset.pattern.permute.xlu0 0
  %314 = vperm.xlu0 %313, %v236
  %v315 = vpop.permute.xlu0 %314
  %318 = vset.pattern.permute.xlu0 0
  %319 = vperm.xlu0 %318, %v237
  %v320 = vpop.permute.xlu0 %319
  %323 = vset.pattern.permute.xlu0 0
  %324 = vperm.xlu0 %323, %v238
  %v325 = vpop.permute.xlu0 %324
  %328 = vset.pattern.permute.xlu0 0
  %329 = vperm.xlu0 %328, %v239
  %v330 = vpop.permute.xlu0 %329
  %333 = vset.pattern.permute.xlu0 0
  %334 = vperm.xlu0 %333, %v240
  %v335 = vpop.permute.xlu0 %334
  %338 = vset.pattern.permute.xlu0 0
  %339 = vperm.xlu0 %338, %v241
  %v340 = vpop.permute.xlu0 %339
  %343 = vset.pattern.permute.xlu0 0
  %344 = vperm.xlu0 %343, %v242
  %v345 = vpop.permute.xlu0 %344
  %348 = vset.pattern.permute.xlu0 0
  %349 = vperm.xlu0 %348, %v243
  %v350 = vpop.permute.xlu0 %349
  %353 = vset.pattern.permute.xlu0 0
  %354 = vperm.xlu0 %353, %v244
  %v355 = vpop.permute.xlu0 %354
  %358 = vset.pattern.permute.xlu0 0
  %359 = vperm.xlu0 %358, %v245
  %v360 = vpop.permute.xlu0 %359
  %363 = vset.pattern.permute.xlu0 0
  %364 = vperm.xlu0 %363, %v246
  %v365 = vpop.permute.xlu0 %364
  %368 = vset.pattern.permute.xlu0 0
  %369 = vperm.xlu0 %368, %v247
  %v370 = vpop.permute.xlu0 %369
  %373 = vset.pattern.permute.xlu0 0
  %374 = vperm.xlu0 %373, %v248
  %v375 = vpop.permute.xlu0 %374
  %378 = vset.pattern.permute.xlu0 0
  %379 = vperm.xlu0 %378, %v249
  %v380 = vpop.permute.xlu0 %379
  %383 = vset.pattern.permute.xlu0 0
  %384 = vperm.xlu0 %383, %v250
  %v385 = vpop.permute.xlu0 %384
  %388 = vset.pattern.permute.xlu0 0
  %389 = vperm.xlu0 %388, %v251
  %v390 = vpop.permute.xlu0 %389
  %393 = vset.pattern.permute.xlu0 0
  %394 = vperm.xlu0 %393, %v252
  %v395 = vpop.permute.xlu0 %394
  %398 = vset.pattern.permute.xlu0 0
  %399 = vperm.xlu0 %398, %v253
  %v400 = vpop.permute.xlu0 %399
  %403 = vset.pattern.permute.xlu0 0
  %404 = vperm.xlu0 %403, %v254
  %v405 = vpop.permute.xlu0 %404
  %408 = vset.pattern.permute.xlu0 0
  %409 = vperm.xlu0 %408, %v255
  %v410 = vpop.permute.xlu0 %409
  %413 = vset.pattern.permute.xlu0 0
  %414 = vperm.xlu0 %413, %v256
  %v415 = vpop.permute.xlu0 %414
  %418 = vset.pattern.permute.xlu0 0
  %419 = vperm.xlu0 %418, %v257
  %v420 = vpop.permute.xlu0 %419
  %423 = vset.pattern.permute.xlu0 0
  %424 = vperm.xlu0 %423, %v258
  %v425 = vpop.permute.xlu0 %424
  %428 = vset.pattern.permute.xlu0 0
  %429 = vperm.xlu0 %428, %v259
  %v430 = vpop.permute.xlu0 %429
  %433 = vset.pattern.permute.xlu0 0
  %434 = vperm.xlu0 %433, %v260
  %v435 = vpop.permute.xlu0 %434
  %438 = vset.pattern.permute.xlu0 0
  %439 = vperm.xlu0 %438, %v261
  %v440 = vpop.permute.xlu0 %439
  %443 = vset.pattern.permute.xlu0 0
  %444 = vperm.xlu0 %443, %v262
  %v445 = vpop.permute.xlu0 %444
  %448 = vset.pattern.permute.xlu0 0
  %449 = vperm.xlu0 %448, %v263
  %v450 = vpop.permute.xlu0 %449
  %453 = vset.pattern.permute.xlu0 0
  %454 = vperm.xlu0 %453, %v264
  %v455 = vpop.permute.xlu0 %454
  %458 = vset.pattern.permute.xlu0 0
  %459 = vperm.xlu0 %458, %v265
  %v460 = vpop.permute.xlu0 %459
  %463 = vset.pattern.permute.xlu0 0
  %464 = vperm.xlu0 %463, %v266
  %v465 = vpop.permute.xlu0 %464
  %468 = vset.pattern.permute.xlu0 0
  %469 = vperm.xlu0 %468, %v267
  %v470 = vpop.permute.xlu0 %469
  %473 = vset.pattern.permute.xlu0 0
  %474 = vperm.xlu0 %473, %v268
  %v475 = vpop.permute.xlu0 %474
  %478 = vset.pattern.permute.xlu0 0
  %479 = vperm.xlu0 %478, %v269
  %v480 = vpop.permute.xlu0 %479
  %483 = vset.pattern.permute.xlu0 0
  %484 = vperm.xlu0 %483, %v270
  %v485 = vpop.permute.xlu0 %484
  %488 = vset.pattern.permute.xlu0 0
  %489 = vperm.xlu0 %488, %v271
  %v490 = vpop.permute.xlu0 %489
  %493 = vset.pattern.permute.xlu0 0
  %494 = vperm.xlu0 %493, %v272
  %v495 = vpop.permute.xlu0 %494
  %498 = vset.pattern.permute.xlu0 0
  %499 = vperm.xlu0 %498, %v273
  %v500 = vpop.permute.xlu0 %499
  %503 = vset.pattern.permute.xlu0 0
  %504 = vperm.xlu0 %503, %v274
  %v505 = vpop.permute.xlu0 %504
  %508 = vset.pattern.permute.xlu0 0
  %509 = vperm.xlu0 %508, %v275
  %v510 = vpop.permute.xlu0 %509
  %513 = vset.pattern.permute.xlu0 0
  %514 = vperm.xlu0 %513, %v276
  %v515 = vpop.permute.xlu0 %514
  %vm517 = vcmask 326656
  %v519 = vsel %vm517, %v134, 0
  %v522 = vsel %vm517, %v136, 0
  %v525 = vsel %vm517, %v138, 0
  %v528 = vsel %vm517, %v140, 0
  %v531 = vsel %vm517, %v142, 0
  %v534 = vsel %vm517, %v144, 0
  %v537 = vsel %vm517, %v146, 0
  %v540 = vsel %vm517, %v148, 0
  %v543 = vsel %vm517, %v150, 0
  %v546 = vsel %vm517, %v152, 0
  %v549 = vsel %vm517, %v154, 0
  %v552 = vsel %vm517, %v156, 0
  %v555 = vsel %vm517, %v158, 0
  %v558 = vsel %vm517, %v160, 0
  %v561 = vsel %vm517, %v162, 0
  %v564 = vsel %vm517, %v164, 0
  %v567 = vsel %vm517, %v166, 0
  %v570 = vsel %vm517, %v168, 0
  %v573 = vsel %vm517, %v170, 0
  %v576 = vsel %vm517, %v172, 0
  %v579 = vsel %vm517, %v174, 0
  %v582 = vsel %vm517, %v176, 0
  %v585 = vsel %vm517, %v178, 0
  %v588 = vsel %vm517, %v180, 0
  %v591 = vsel %vm517, %v182, 0
  %v594 = vsel %vm517, %v184, 0
  %v597 = vsel %vm517, %v186, 0
  %v600 = vsel %vm517, %v188, 0
  %v603 = vsel %vm517, %v190, 0
  %v606 = vsel %vm517, %v192, 0
  %v609 = vsel %vm517, %v194, 0
  %v612 = vsel %vm517, %v196, 0
  %v615 = vsel %vm517, %v198, 0
  %v618 = vsel %vm517, %v200, 0
  %v621 = vsel %vm517, %v202, 0
  %v624 = vsel %vm517, %v204, 0
  %v627 = vsel %vm517, %v206, 0
  %v630 = vsel %vm517, %v208, 0
  %v633 = vsel %vm517, %v210, 0
  %v636 = vsel %vm517, %v212, 0
  %v639 = vsel %vm517, %v214, 0
  %v642 = vsel %vm517, %v216, 0
  %v645 = vsel %vm517, %v218, 0
  %v648 = vsel %vm517, %v220, 0
  %v651 = vsel %vm517, %v222, 0
  %v654 = vsel %vm517, %v224, 0
  %v657 = vsel %vm517, %v226, 0
  %v660 = vsel %vm517, %v228, 0
  %662 = vmatpush.msra.mxu0 %v127
  %663 = vmatpush.msra.mxu0 %v126
  %664 = vmatpush.msra.mxu0 %v125
  %665 = vmatpush.msra.mxu0 %v124
  %666 = vmatpush.msra.mxu0 %v123
  %667 = vmatpush.msra.mxu0 %v122
  %668 = vmatpush.msra.mxu0 %v121
  %669 = vmatpush.msra.mxu0 %v120
  %670 = vmatpush.msra.mxu0 %v119
  %671 = vmatpush.msra.mxu0 %v118
  %672 = vmatpush.msra.mxu0 %v117
  %673 = vmatpush.msra.mxu0 %v116
  %674 = vmatpush.msra.mxu0 %v115
  %675 = vmatpush.msra.mxu0 %v114
  %676 = vmatpush.msra.mxu0 %v113
  %677 = vmatpush.msra.mxu0 %v112
  %678 = vmatmul.f32.gmra.mxu0 %v133
  %v679 = vpop.f32.mrf.mxu0
  %v680 = vadd.f32 %v280, %v679
  %681 = vmatmul.f32.gmra.mxu0 %v135
  %v682 = vpop.f32.mrf.mxu0
  %v683 = vadd.f32 %v285, %v682
  %684 = vmatmul.f32.gmra.mxu0 %v137
  %v685 = vpop.f32.mrf.mxu0
  %v686 = vadd.f32 %v290, %v685
  %687 = vmatmul.f32.gmra.mxu0 %v139
  %v688 = vpop.f32.mrf.mxu0
  %v689 = vadd.f32 %v295, %v688
  %690 = vmatmul.f32.gmra.mxu0 %v141
  %v691 = vpop.f32.mrf.mxu0
  %v692 = vadd.f32 %v300, %v691
  %693 = vmatmul.f32.gmra.mxu0 %v143
  %v694 = vpop.f32.mrf.mxu0
  %v695 = vadd.f32 %v305, %v694
  %696 = vmatmul.f32.gmra.mxu0 %v145
  %v697 = vpop.f32.mrf.mxu0
  %v698 = vadd.f32 %v310, %v697
  %699 = vmatmul.f32.gmra.mxu0 %v147
  %v700 = vpop.f32.mrf.mxu0
  %v701 = vadd.f32 %v315, %v700
  %702 = vmatmul.f32.gmra.mxu0 %v149
  %v703 = vpop.f32.mrf.mxu0
  %v704 = vadd.f32 %v320, %v703
  %705 = vmatmul.f32.gmra.mxu0 %v151
  %v706 = vpop.f32.mrf.mxu0
  %v707 = vadd.f32 %v325, %v706
  %708 = vmatmul.f32.gmra.mxu0 %v153
  %v709 = vpop.f32.mrf.mxu0
  %v710 = vadd.f32 %v330, %v709
  %711 = vmatmul.f32.gmra.mxu0 %v155
  %v712 = vpop.f32.mrf.mxu0
  %v713 = vadd.f32 %v335, %v712
  %714 = vmatmul.f32.gmra.mxu0 %v157
  %v715 = vpop.f32.mrf.mxu0
  %v716 = vadd.f32 %v340, %v715
  %717 = vmatmul.f32.gmra.mxu0 %v159
  %v718 = vpop.f32.mrf.mxu0
  %v719 = vadd.f32 %v345, %v718
  %720 = vmatmul.f32.gmra.mxu0 %v161
  %v721 = vpop.f32.mrf.mxu0
  %v722 = vadd.f32 %v350, %v721
  %723 = vmatmul.f32.gmra.mxu0 %v163
  %v724 = vpop.f32.mrf.mxu0
  %v725 = vadd.f32 %v355, %v724
  %726 = vmatmul.f32.gmra.mxu0 %v165
  %v727 = vpop.f32.mrf.mxu0
  %v728 = vadd.f32 %v360, %v727
  %729 = vmatmul.f32.gmra.mxu0 %v167
  %v730 = vpop.f32.mrf.mxu0
  %v731 = vadd.f32 %v365, %v730
  %732 = vmatmul.f32.gmra.mxu0 %v169
  %v733 = vpop.f32.mrf.mxu0
  %v734 = vadd.f32 %v370, %v733
  %735 = vmatmul.f32.gmra.mxu0 %v171
  %v736 = vpop.f32.mrf.mxu0
  %v737 = vadd.f32 %v375, %v736
  %738 = vmatmul.f32.gmra.mxu0 %v173
  %v739 = vpop.f32.mrf.mxu0
  %v740 = vadd.f32 %v380, %v739
  %741 = vmatmul.f32.gmra.mxu0 %v175
  %v742 = vpop.f32.mrf.mxu0
  %v743 = vadd.f32 %v385, %v742
  %744 = vmatmul.f32.gmra.mxu0 %v177
  %v745 = vpop.f32.mrf.mxu0
  %v746 = vadd.f32 %v390, %v745
  %747 = vmatmul.f32.gmra.mxu0 %v179
  %v748 = vpop.f32.mrf.mxu0
  %v749 = vadd.f32 %v395, %v748
  %750 = vmatmul.f32.gmra.mxu0 %v181
  %v751 = vpop.f32.mrf.mxu0
  %v752 = vadd.f32 %v400, %v751
  %753 = vmatmul.f32.gmra.mxu0 %v183
  %v754 = vpop.f32.mrf.mxu0
  %v755 = vadd.f32 %v405, %v754
  %756 = vmatmul.f32.gmra.mxu0 %v185
  %v757 = vpop.f32.mrf.mxu0
  %v758 = vadd.f32 %v410, %v757
  %759 = vmatmul.f32.gmra.mxu0 %v187
  %v760 = vpop.f32.mrf.mxu0
  %v761 = vadd.f32 %v415, %v760
  %762 = vmatmul.f32.gmra.mxu0 %v189
  %v763 = vpop.f32.mrf.mxu0
  %v764 = vadd.f32 %v420, %v763
  %765 = vmatmul.f32.gmra.mxu0 %v191
  %v766 = vpop.f32.mrf.mxu0
  %v767 = vadd.f32 %v425, %v766
  %768 = vmatmul.f32.gmra.mxu0 %v193
  %v769 = vpop.f32.mrf.mxu0
  %v770 = vadd.f32 %v430, %v769
  %771 = vmatmul.f32.gmra.mxu0 %v195
  %v772 = vpop.f32.mrf.mxu0
  %v773 = vadd.f32 %v435, %v772
  %774 = vmatmul.f32.gmra.mxu0 %v197
  %v775 = vpop.f32.mrf.mxu0
  %v776 = vadd.f32 %v440, %v775
  %777 = vmatmul.f32.gmra.mxu0 %v199
  %v778 = vpop.f32.mrf.mxu0
  %v779 = vadd.f32 %v445, %v778
  %780 = vmatmul.f32.gmra.mxu0 %v201
  %v781 = vpop.f32.mrf.mxu0
  %v782 = vadd.f32 %v450, %v781
  %783 = vmatmul.f32.gmra.mxu0 %v203
  %v784 = vpop.f32.mrf.mxu0
  %v785 = vadd.f32 %v455, %v784
  %786 = vmatmul.f32.gmra.mxu0 %v205
  %v787 = vpop.f32.mrf.mxu0
  %v788 = vadd.f32 %v460, %v787
  %789 = vmatmul.f32.gmra.mxu0 %v207
  %v790 = vpop.f32.mrf.mxu0
  %v791 = vadd.f32 %v465, %v790
  %792 = vmatmul.f32.gmra.mxu0 %v209
  %v793 = vpop.f32.mrf.mxu0
  %v794 = vadd.f32 %v470, %v793
  %795 = vmatmul.f32.gmra.mxu0 %v211
  %v796 = vpop.f32.mrf.mxu0
  %v797 = vadd.f32 %v475, %v796
  %798 = vmatmul.f32.gmra.mxu0 %v213
  %v799 = vpop.f32.mrf.mxu0
  %v800 = vadd.f32 %v480, %v799
  %801 = vmatmul.f32.gmra.mxu0 %v215
  %v802 = vpop.f32.mrf.mxu0
  %v803 = vadd.f32 %v485, %v802
  %804 = vmatmul.f32.gmra.mxu0 %v217
  %v805 = vpop.f32.mrf.mxu0
  %v806 = vadd.f32 %v490, %v805
  %807 = vmatmul.f32.gmra.mxu0 %v219
  %v808 = vpop.f32.mrf.mxu0
  %v809 = vadd.f32 %v495, %v808
  %810 = vmatmul.f32.gmra.mxu0 %v221
  %v811 = vpop.f32.mrf.mxu0
  %v812 = vadd.f32 %v500, %v811
  %813 = vmatmul.f32.gmra.mxu0 %v223
  %v814 = vpop.f32.mrf.mxu0
  %v815 = vadd.f32 %v505, %v814
  %816 = vmatmul.f32.gmra.mxu0 %v225
  %v817 = vpop.f32.mrf.mxu0
  %v818 = vadd.f32 %v510, %v817
  %819 = vmatmul.f32.gmra.mxu0 %v227
  %v820 = vpop.f32.mrf.mxu0
  %v821 = vadd.f32 %v515, %v820
  %822 = vdwg.mxu0
  %823 = vmatpush.msra.mxu0 0.0
  %824 = vmatpush.msra.mxu0 0.0
  %825 = vmatpush.msra.mxu0 0.0
  %826 = vmatpush.msra.mxu0 0.0
  %827 = vmatpush.msra.mxu0 0.0
  %828 = vmatpush.msra.mxu0 0.0
  %829 = vmatpush.msra.mxu0 0.0
  %830 = vmatpush.msra.mxu0 0.0
  %831 = vmatpush.msra.mxu0 0.0
  %832 = vmatpush.msra.mxu0 0.0
  %833 = vmatpush.msra.mxu0 0.0
  %834 = vmatpush.msra.mxu0 %v132
  %835 = vmatpush.msra.mxu0 %v131
  %836 = vmatpush.msra.mxu0 %v130
  %837 = vmatpush.msra.mxu0 %v129
  %838 = vmatpush.msra.mxu0 %v128
  %839 = vmatmul.f32.gmra.mxu0 %v519
  %v840 = vpop.f32.mrf.mxu0
  %v841 = vadd.f32 %v680, %v840
  %842 = vmatmul.f32.gmra.mxu0 %v522
  %v843 = vpop.f32.mrf.mxu0
  %v844 = vadd.f32 %v683, %v843
  %845 = vmatmul.f32.gmra.mxu0 %v525
  %v846 = vpop.f32.mrf.mxu0
  %v847 = vadd.f32 %v686, %v846
  %848 = vmatmul.f32.gmra.mxu0 %v528
  %v849 = vpop.f32.mrf.mxu0
  %v850 = vadd.f32 %v689, %v849
  %851 = vmatmul.f32.gmra.mxu0 %v531
  %v852 = vpop.f32.mrf.mxu0
  %v853 = vadd.f32 %v692, %v852
  %854 = vmatmul.f32.gmra.mxu0 %v534
  %v855 = vpop.f32.mrf.mxu0
  %v856 = vadd.f32 %v695, %v855
  %857 = vmatmul.f32.gmra.mxu0 %v537
  %v858 = vpop.f32.mrf.mxu0
  %v859 = vadd.f32 %v698, %v858
  %860 = vmatmul.f32.gmra.mxu0 %v540
  %v861 = vpop.f32.mrf.mxu0
  %v862 = vadd.f32 %v701, %v861
  %863 = vmatmul.f32.gmra.mxu0 %v543
  %v864 = vpop.f32.mrf.mxu0
  %v865 = vadd.f32 %v704, %v864
  %866 = vmatmul.f32.gmra.mxu0 %v546
  %v867 = vpop.f32.mrf.mxu0
  %v868 = vadd.f32 %v707, %v867
  %869 = vmatmul.f32.gmra.mxu0 %v549
  %v870 = vpop.f32.mrf.mxu0
  %v871 = vadd.f32 %v710, %v870
  %872 = vmatmul.f32.gmra.mxu0 %v552
  %v873 = vpop.f32.mrf.mxu0
  %v874 = vadd.f32 %v713, %v873
  %875 = vmatmul.f32.gmra.mxu0 %v555
  %v876 = vpop.f32.mrf.mxu0
  %v877 = vadd.f32 %v716, %v876
  %878 = vmatmul.f32.gmra.mxu0 %v558
  %v879 = vpop.f32.mrf.mxu0
  %v880 = vadd.f32 %v719, %v879
  %881 = vmatmul.f32.gmra.mxu0 %v561
  %v882 = vpop.f32.mrf.mxu0
  %v883 = vadd.f32 %v722, %v882
  %884 = vmatmul.f32.gmra.mxu0 %v564
  %v885 = vpop.f32.mrf.mxu0
  %v886 = vadd.f32 %v725, %v885
  %887 = vmatmul.f32.gmra.mxu0 %v567
  %v888 = vpop.f32.mrf.mxu0
  %v889 = vadd.f32 %v728, %v888
  %890 = vmatmul.f32.gmra.mxu0 %v570
  %v891 = vpop.f32.mrf.mxu0
  %v892 = vadd.f32 %v731, %v891
  %893 = vmatmul.f32.gmra.mxu0 %v573
  %v894 = vpop.f32.mrf.mxu0
  %v895 = vadd.f32 %v734, %v894
  %896 = vmatmul.f32.gmra.mxu0 %v576
  %v897 = vpop.f32.mrf.mxu0
  %v898 = vadd.f32 %v737, %v897
  %899 = vmatmul.f32.gmra.mxu0 %v579
  %v900 = vpop.f32.mrf.mxu0
  %v901 = vadd.f32 %v740, %v900
  %902 = vmatmul.f32.gmra.mxu0 %v582
  %v903 = vpop.f32.mrf.mxu0
  %v904 = vadd.f32 %v743, %v903
  %905 = vmatmul.f32.gmra.mxu0 %v585
  %v906 = vpop.f32.mrf.mxu0
  %v907 = vadd.f32 %v746, %v906
  %908 = vmatmul.f32.gmra.mxu0 %v588
  %v909 = vpop.f32.mrf.mxu0
  %v910 = vadd.f32 %v749, %v909
  %911 = vmatmul.f32.gmra.mxu0 %v591
  %v912 = vpop.f32.mrf.mxu0
  %v913 = vadd.f32 %v752, %v912
  %914 = vmatmul.f32.gmra.mxu0 %v594
  %v915 = vpop.f32.mrf.mxu0
  %v916 = vadd.f32 %v755, %v915
  %917 = vmatmul.f32.gmra.mxu0 %v597
  %v918 = vpop.f32.mrf.mxu0
  %v919 = vadd.f32 %v758, %v918
  %920 = vmatmul.f32.gmra.mxu0 %v600
  %v921 = vpop.f32.mrf.mxu0
  %v922 = vadd.f32 %v761, %v921
  %923 = vmatmul.f32.gmra.mxu0 %v603
  %v924 = vpop.f32.mrf.mxu0
  %v925 = vadd.f32 %v764, %v924
  %926 = vmatmul.f32.gmra.mxu0 %v606
  %v927 = vpop.f32.mrf.mxu0
  %v928 = vadd.f32 %v767, %v927
  %929 = vmatmul.f32.gmra.mxu0 %v609
  %v930 = vpop.f32.mrf.mxu0
  %v931 = vadd.f32 %v770, %v930
  %932 = vmatmul.f32.gmra.mxu0 %v612
  %v933 = vpop.f32.mrf.mxu0
  %v934 = vadd.f32 %v773, %v933
  %935 = vmatmul.f32.gmra.mxu0 %v615
  %v936 = vpop.f32.mrf.mxu0
  %v937 = vadd.f32 %v776, %v936
  %938 = vmatmul.f32.gmra.mxu0 %v618
  %v939 = vpop.f32.mrf.mxu0
  %v940 = vadd.f32 %v779, %v939
  %941 = vmatmul.f32.gmra.mxu0 %v621
  %v942 = vpop.f32.mrf.mxu0
  %v943 = vadd.f32 %v782, %v942
  %944 = vmatmul.f32.gmra.mxu0 %v624
  %v945 = vpop.f32.mrf.mxu0
  %v946 = vadd.f32 %v785, %v945
  %947 = vmatmul.f32.gmra.mxu0 %v627
  %v948 = vpop.f32.mrf.mxu0
  %v949 = vadd.f32 %v788, %v948
  %950 = vmatmul.f32.gmra.mxu0 %v630
  %v951 = vpop.f32.mrf.mxu0
  %v952 = vadd.f32 %v791, %v951
  %953 = vmatmul.f32.gmra.mxu0 %v633
  %v954 = vpop.f32.mrf.mxu0
  %v955 = vadd.f32 %v794, %v954
  %956 = vmatmul.f32.gmra.mxu0 %v636
  %v957 = vpop.f32.mrf.mxu0
  %v958 = vadd.f32 %v797, %v957
  %959 = vmatmul.f32.gmra.mxu0 %v639
  %v960 = vpop.f32.mrf.mxu0
  %v961 = vadd.f32 %v800, %v960
  %962 = vmatmul.f32.gmra.mxu0 %v642
  %v963 = vpop.f32.mrf.mxu0
  %v964 = vadd.f32 %v803, %v963
  %965 = vmatmul.f32.gmra.mxu0 %v645
  %v966 = vpop.f32.mrf.mxu0
  %v967 = vadd.f32 %v806, %v966
  %968 = vmatmul.f32.gmra.mxu0 %v648
  %v969 = vpop.f32.mrf.mxu0
  %v970 = vadd.f32 %v809, %v969
  %971 = vmatmul.f32.gmra.mxu0 %v651
  %v972 = vpop.f32.mrf.mxu0
  %v973 = vadd.f32 %v812, %v972
  %974 = vmatmul.f32.gmra.mxu0 %v654
  %v975 = vpop.f32.mrf.mxu0
  %v976 = vadd.f32 %v815, %v975
  %977 = vmatmul.f32.gmra.mxu0 %v657
  %v978 = vpop.f32.mrf.mxu0
  %v979 = vadd.f32 %v818, %v978
  %980 = vmatmul.f32.gmra.mxu0 %v660
  %v981 = vpop.f32.mrf.mxu0
  %v982 = vadd.f32 %v821, %v981
  %983 = vdwg.mxu0
  %v984 = vld [vmem:[%s3] sm:$0xff]
  %v985 = vld [vmem:[%s4] sm:$0x1]
  %v987 = vperm.slane %v985, 0
  %v990 = vsel %vm63, %v841, 0
  %v993 = vsel %vm63, %v844, 0
  %v996 = vsel %vm63, %v847, 0
  %v999 = vsel %vm63, %v850, 0
  %v1002 = vsel %vm63, %v853, 0
  %v1005 = vsel %vm63, %v856, 0
  %v1008 = vsel %vm63, %v859, 0
  %v1011 = vsel %vm63, %v862, 0
  %v1014 = vsel %vm63, %v865, 0
  %v1017 = vsel %vm63, %v868, 0
  %v1020 = vsel %vm63, %v871, 0
  %v1023 = vsel %vm63, %v874, 0
  %v1026 = vsel %vm63, %v877, 0
  %v1029 = vsel %vm63, %v880, 0
  %v1032 = vsel %vm63, %v883, 0
  %v1035 = vsel %vm63, %v886, 0
  %v1038 = vsel %vm63, %v889, 0
  %v1041 = vsel %vm63, %v892, 0
  %v1044 = vsel %vm63, %v895, 0
  %v1047 = vsel %vm63, %v898, 0
  %v1050 = vsel %vm63, %v901, 0
  %v1053 = vsel %vm63, %v904, 0
  %v1056 = vsel %vm63, %v907, 0
  %v1059 = vsel %vm63, %v910, 0
  %v1062 = vsel %vm63, %v913, 0
  %v1065 = vsel %vm63, %v916, 0
  %v1068 = vsel %vm63, %v919, 0
  %v1071 = vsel %vm63, %v922, 0
  %v1074 = vsel %vm63, %v925, 0
  %v1077 = vsel %vm63, %v928, 0
  %v1080 = vsel %vm63, %v931, 0
  %v1083 = vsel %vm63, %v934, 0
  %v1086 = vsel %vm63, %v937, 0
  %v1089 = vsel %vm63, %v940, 0
  %v1092 = vsel %vm63, %v943, 0
  %v1095 = vsel %vm63, %v946, 0
  %v1098 = vsel %vm63, %v949, 0
  %v1101 = vsel %vm63, %v952, 0
  %v1104 = vsel %vm63, %v955, 0
  %v1107 = vsel %vm63, %v958, 0
  %v1110 = vsel %vm63, %v961, 0
  %v1113 = vsel %vm63, %v964, 0
  %v1116 = vsel %vm63, %v967, 0
  %v1119 = vsel %vm63, %v970, 0
  %v1122 = vsel %vm63, %v973, 0
  %v1125 = vsel %vm63, %v976, 0
  %v1128 = vsel %vm63, %v979, 0
  %v1131 = vsel %vm63, %v982, 0
  %1133 = vmatpush.msra.mxu0 0.0
  %1134 = vmatpush.msra.mxu0 0.0
  %1135 = vmatpush.msra.mxu0 0.0
  %1136 = vmatpush.msra.mxu0 0.0
  %1137 = vmatpush.msra.mxu0 0.0
  %1138 = vmatpush.msra.mxu0 0.0
  %1139 = vmatpush.msra.mxu0 0.0
  %1140 = vmatpush.msra.mxu0 0.0
  %1141 = vmatpush.msra.mxu0 0.0
  %1142 = vmatpush.msra.mxu0 0.0
  %1143 = vmatpush.msra.mxu0 0.0
  %1144 = vmatpush.msra.mxu0 0.0
  %1145 = vmatpush.msra.mxu0 0.0
  %1146 = vmatpush.msra.mxu0 0.0
  %1147 = vmatpush.msra.mxu0 0.0
  %1148 = vmatpush.msra.mxu0 %v984
  %1149 = vmatmul.f32.gmra.mxu0 %v990
  %v1150 = vpop.f32.mrf.mxu0
  %v1151 = vadd.f32 %v987, %v1150
  %1152 = vmatmul.f32.gmra.mxu0 %v993
  %v1153 = vpop.f32.mrf.mxu0
  %v1154 = vadd.f32 %v987, %v1153
  %1155 = vmatmul.f32.gmra.mxu0 %v996
  %v1156 = vpop.f32.mrf.mxu0
  %v1157 = vadd.f32 %v987, %v1156
  %1158 = vmatmul.f32.gmra.mxu0 %v999
  %v1159 = vpop.f32.mrf.mxu0
  %v1160 = vadd.f32 %v987, %v1159
  %1161 = vmatmul.f32.gmra.mxu0 %v1002
  %v1162 = vpop.f32.mrf.mxu0
  %v1163 = vadd.f32 %v987, %v1162
  %1164 = vmatmul.f32.gmra.mxu0 %v1005
  %v1165 = vpop.f32.mrf.mxu0
  %v1166 = vadd.f32 %v987, %v1165
  %1167 = vmatmul.f32.gmra.mxu0 %v1008
  %v1168 = vpop.f32.mrf.mxu0
  %v1169 = vadd.f32 %v987, %v1168
  %1170 = vmatmul.f32.gmra.mxu0 %v1011
  %v1171 = vpop.f32.mrf.mxu0
  %v1172 = vadd.f32 %v987, %v1171
  %1173 = vmatmul.f32.gmra.mxu0 %v1014
  %v1174 = vpop.f32.mrf.mxu0
  %v1175 = vadd.f32 %v987, %v1174
  %1176 = vmatmul.f32.gmra.mxu0 %v1017
  %v1177 = vpop.f32.mrf.mxu0
  %v1178 = vadd.f32 %v987, %v1177
  %1179 = vmatmul.f32.gmra.mxu0 %v1020
  %v1180 = vpop.f32.mrf.mxu0
  %v1181 = vadd.f32 %v987, %v1180
  %1182 = vmatmul.f32.gmra.mxu0 %v1023
  %v1183 = vpop.f32.mrf.mxu0
  %v1184 = vadd.f32 %v987, %v1183
  %1185 = vmatmul.f32.gmra.mxu0 %v1026
  %v1186 = vpop.f32.mrf.mxu0
  %v1187 = vadd.f32 %v987, %v1186
  %1188 = vmatmul.f32.gmra.mxu0 %v1029
  %v1189 = vpop.f32.mrf.mxu0
  %v1190 = vadd.f32 %v987, %v1189
  %1191 = vmatmul.f32.gmra.mxu0 %v1032
  %v1192 = vpop.f32.mrf.mxu0
  %v1193 = vadd.f32 %v987, %v1192
  %1194 = vmatmul.f32.gmra.mxu0 %v1035
  %v1195 = vpop.f32.mrf.mxu0
  %v1196 = vadd.f32 %v987, %v1195
  %1197 = vmatmul.f32.gmra.mxu0 %v1038
  %v1198 = vpop.f32.mrf.mxu0
  %v1199 = vadd.f32 %v987, %v1198
  %1200 = vmatmul.f32.gmra.mxu0 %v1041
  %v1201 = vpop.f32.mrf.mxu0
  %v1202 = vadd.f32 %v987, %v1201
  %1203 = vmatmul.f32.gmra.mxu0 %v1044
  %v1204 = vpop.f32.mrf.mxu0
  %v1205 = vadd.f32 %v987, %v1204
  %1206 = vmatmul.f32.gmra.mxu0 %v1047
  %v1207 = vpop.f32.mrf.mxu0
  %v1208 = vadd.f32 %v987, %v1207
  %1209 = vmatmul.f32.gmra.mxu0 %v1050
  %v1210 = vpop.f32.mrf.mxu0
  %v1211 = vadd.f32 %v987, %v1210
  %1212 = vmatmul.f32.gmra.mxu0 %v1053
  %v1213 = vpop.f32.mrf.mxu0
  %v1214 = vadd.f32 %v987, %v1213
  %1215 = vmatmul.f32.gmra.mxu0 %v1056
  %v1216 = vpop.f32.mrf.mxu0
  %v1217 = vadd.f32 %v987, %v1216
  %1218 = vmatmul.f32.gmra.mxu0 %v1059
  %v1219 = vpop.f32.mrf.mxu0
  %v1220 = vadd.f32 %v987, %v1219
  %1221 = vmatmul.f32.gmra.mxu0 %v1062
  %v1222 = vpop.f32.mrf.mxu0
  %v1223 = vadd.f32 %v987, %v1222
  %1224 = vmatmul.f32.gmra.mxu0 %v1065
  %v1225 = vpop.f32.mrf.mxu0
  %v1226 = vadd.f32 %v987, %v1225
  %1227 = vmatmul.f32.gmra.mxu0 %v1068
  %v1228 = vpop.f32.mrf.mxu0
  %v1229 = vadd.f32 %v987, %v1228
  %1230 = vmatmul.f32.gmra.mxu0 %v1071
  %v1231 = vpop.f32.mrf.mxu0
  %v1232 = vadd.f32 %v987, %v1231
  %1233 = vmatmul.f32.gmra.mxu0 %v1074
  %v1234 = vpop.f32.mrf.mxu0
  %v1235 = vadd.f32 %v987, %v1234
  %1236 = vmatmul.f32.gmra.mxu0 %v1077
  %v1237 = vpop.f32.mrf.mxu0
  %v1238 = vadd.f32 %v987, %v1237
  %1239 = vmatmul.f32.gmra.mxu0 %v1080
  %v1240 = vpop.f32.mrf.mxu0
  %v1241 = vadd.f32 %v987, %v1240
  %1242 = vmatmul.f32.gmra.mxu0 %v1083
  %v1243 = vpop.f32.mrf.mxu0
  %v1244 = vadd.f32 %v987, %v1243
  %1245 = vmatmul.f32.gmra.mxu0 %v1086
  %v1246 = vpop.f32.mrf.mxu0
  %v1247 = vadd.f32 %v987, %v1246
  %1248 = vmatmul.f32.gmra.mxu0 %v1089
  %v1249 = vpop.f32.mrf.mxu0
  %v1250 = vadd.f32 %v987, %v1249
  %1251 = vmatmul.f32.gmra.mxu0 %v1092
  %v1252 = vpop.f32.mrf.mxu0
  %v1253 = vadd.f32 %v987, %v1252
  %1254 = vmatmul.f32.gmra.mxu0 %v1095
  %v1255 = vpop.f32.mrf.mxu0
  %v1256 = vadd.f32 %v987, %v1255
  %1257 = vmatmul.f32.gmra.mxu0 %v1098
  %v1258 = vpop.f32.mrf.mxu0
  %v1259 = vadd.f32 %v987, %v1258
  %1260 = vmatmul.f32.gmra.mxu0 %v1101
  %v1261 = vpop.f32.mrf.mxu0
  %v1262 = vadd.f32 %v987, %v1261
  %1263 = vmatmul.f32.gmra.mxu0 %v1104
  %v1264 = vpop.f32.mrf.mxu0
  %v1265 = vadd.f32 %v987, %v1264
  %1266 = vmatmul.f32.gmra.mxu0 %v1107
  %v1267 = vpop.f32.mrf.mxu0
  %v1268 = vadd.f32 %v987, %v1267
  %1269 = vmatmul.f32.gmra.mxu0 %v1110
  %v1270 = vpop.f32.mrf.mxu0
  %v1271 = vadd.f32 %v987, %v1270
  %1272 = vmatmul.f32.gmra.mxu0 %v1113
  %v1273 = vpop.f32.mrf.mxu0
  %v1274 = vadd.f32 %v987, %v1273
  %1275 = vmatmul.f32.gmra.mxu0 %v1116
  %v1276 = vpop.f32.mrf.mxu0
  %v1277 = vadd.f32 %v987, %v1276
  %1278 = vmatmul.f32.gmra.mxu0 %v1119
  %v1279 = vpop.f32.mrf.mxu0
  %v1280 = vadd.f32 %v987, %v1279
  %1281 = vmatmul.f32.gmra.mxu0 %v1122
  %v1282 = vpop.f32.mrf.mxu0
  %v1283 = vadd.f32 %v987, %v1282
  %1284 = vmatmul.f32.gmra.mxu0 %v1125
  %v1285 = vpop.f32.mrf.mxu0
  %v1286 = vadd.f32 %v987, %v1285
  %1287 = vmatmul.f32.gmra.mxu0 %v1128
  %v1288 = vpop.f32.mrf.mxu0
  %v1289 = vadd.f32 %v987, %v1288
  %1290 = vmatmul.f32.gmra.mxu0 %v1131
  %v1291 = vpop.f32.mrf.mxu0
  %v1292 = vadd.f32 %v987, %v1291
  %1293 = vdwg.mxu0
  %1294 = vst [vmem:[#allocation2] sm:$0xff] %v1151
  %1295 = vst [vmem:[#allocation2 + $0x8] sm:$0xff] %v1154
  %1296 = vst [vmem:[#allocation2 + $0x10] sm:$0xff] %v1157
  %1297 = vst [vmem:[#allocation2 + $0x18] sm:$0xff] %v1160
  %1298 = vst [vmem:[#allocation2 + $0x20] sm:$0xff] %v1163
  %1299 = vst [vmem:[#allocation2 + $0x28] sm:$0xff] %v1166
  %1300 = vst [vmem:[#allocation2 + $0x30] sm:$0xff] %v1169
  %1301 = vst [vmem:[#allocation2 + $0x38] sm:$0xff] %v1172
  %1302 = vst [vmem:[#allocation2 + $0x40] sm:$0xff] %v1175
  %1303 = vst [vmem:[#allocation2 + $0x48] sm:$0xff] %v1178
  %1304 = vst [vmem:[#allocation2 + $0x50] sm:$0xff] %v1181
  %1305 = vst [vmem:[#allocation2 + $0x58] sm:$0xff] %v1184
  %1306 = vst [vmem:[#allocation2 + $0x60] sm:$0xff] %v1187
  %1307 = vst [vmem:[#allocation2 + $0x68] sm:$0xff] %v1190
  %1308 = vst [vmem:[#allocation2 + $0x70] sm:$0xff] %v1193
  %1309 = vst [vmem:[#allocation2 + $0x78] sm:$0xff] %v1196
  %1310 = vst [vmem:[#allocation2 + $0x80] sm:$0xff] %v1199
  %1311 = vst [vmem:[#allocation2 + $0x88] sm:$0xff] %v1202
  %1312 = vst [vmem:[#allocation2 + $0x90] sm:$0xff] %v1205
  %1313 = vst [vmem:[#allocation2 + $0x98] sm:$0xff] %v1208
  %1314 = vst [vmem:[#allocation2 + $0xa0] sm:$0xff] %v1211
  %1315 = vst [vmem:[#allocation2 + $0xa8] sm:$0xff] %v1214
  %1316 = vst [vmem:[#allocation2 + $0xb0] sm:$0xff] %v1217
  %1317 = vst [vmem:[#allocation2 + $0xb8] sm:$0xff] %v1220
  %1318 = vst [vmem:[#allocation2 + $0xc0] sm:$0xff] %v1223
  %1319 = vst [vmem:[#allocation2 + $0xc8] sm:$0xff] %v1226
  %1320 = vst [vmem:[#allocation2 + $0xd0] sm:$0xff] %v1229
  %1321 = vst [vmem:[#allocation2 + $0xd8] sm:$0xff] %v1232
  %1322 = vst [vmem:[#allocation2 + $0xe0] sm:$0xff] %v1235
  %1323 = vst [vmem:[#allocation2 + $0xe8] sm:$0xff] %v1238
  %1324 = vst [vmem:[#allocation2 + $0xf0] sm:$0xff] %v1241
  %1325 = vst [vmem:[#allocation2 + $0xf8] sm:$0xff] %v1244
  %1326 = vst [vmem:[#allocation2 + $0x100] sm:$0xff] %v1247
  %1327 = vst [vmem:[#allocation2 + $0x108] sm:$0xff] %v1250
  %1328 = vst [vmem:[#allocation2 + $0x110] sm:$0xff] %v1253
  %1329 = vst [vmem:[#allocation2 + $0x118] sm:$0xff] %v1256
  %1330 = vst [vmem:[#allocation2 + $0x120] sm:$0xff] %v1259
  %1331 = vst [vmem:[#allocation2 + $0x128] sm:$0xff] %v1262
  %1332 = vst [vmem:[#allocation2 + $0x130] sm:$0xff] %v1265
  %1333 = vst [vmem:[#allocation2 + $0x138] sm:$0xff] %v1268
  %1334 = vst [vmem:[#allocation2 + $0x140] sm:$0xff] %v1271
  %1335 = vst [vmem:[#allocation2 + $0x148] sm:$0xff] %v1274
  %1336 = vst [vmem:[#allocation2 + $0x150] sm:$0xff] %v1277
  %1337 = vst [vmem:[#allocation2 + $0x158] sm:$0xff] %v1280
  %1338 = vst [vmem:[#allocation2 + $0x160] sm:$0xff] %v1283
  %1339 = vst [vmem:[#allocation2 + $0x168] sm:$0xff] %v1286
  %1340 = vst [vmem:[#allocation2 + $0x170] sm:$0xff] %v1289
  %1341 = vst [vmem:[#allocation2 + $0x178] sm:$0xff] %v1292
  %v1342 = vld [vmem:[%s5] sm:$0xf]
  %v1343 = vld [vmem:[%s5 + $0x4] sm:$0xf]
  %v1344 = vld [vmem:[%s5 + $0x8] sm:$0xf]
  %v1345 = vld [vmem:[%s5 + $0xc] sm:$0xf]
  %v1346 = vld [vmem:[%s5 + $0x10] sm:$0xf]
  %v1347 = vld [vmem:[%s5 + $0x14] sm:$0xf]
  %v1348 = vld [vmem:[%s5 + $0x18] sm:$0xf]
  %v1349 = vld [vmem:[%s5 + $0x1c] sm:$0xf]
  %v1350 = vld [vmem:[%s6] sm:$0xff]
  %v1351 = vld [vmem:[%s6 + $0x8] sm:$0xff]
  %v1352 = vld [vmem:[%s6 + $0x10] sm:$0xff]
  %v1353 = vld [vmem:[%s6 + $0x18] sm:$0xff]
  %v1354 = vld [vmem:[%s6 + $0x20] sm:$0xff]
  %v1355 = vld [vmem:[%s6 + $0x28] sm:$0xff]
  %v1356 = vld [vmem:[%s6 + $0x30] sm:$0xff]
  %v1357 = vld [vmem:[%s6 + $0x38] sm:$0xff]
  %v1358 = vld [vmem:[%s6 + $0x40] sm:$0xff]
  %v1359 = vld [vmem:[%s6 + $0x48] sm:$0xff]
  %v1360 = vld [vmem:[%s6 + $0x50] sm:$0xff]
  %v1361 = vld [vmem:[%s6 + $0x58] sm:$0xff]
  %v1362 = vld [vmem:[%s6 + $0x60] sm:$0xff]
  %v1363 = vld [vmem:[%s6 + $0x68] sm:$0xff]
  %v1364 = vld [vmem:[%s6 + $0x70] sm:$0xff]
  %v1365 = vld [vmem:[%s6 + $0x78] sm:$0xff]
  %v1366 = vld [vmem:[%s7] sm:$0x3]
  %v1367 = vld [vmem:[%s8] sm:$0xff]
  %v1368 = vld [vmem:[%s8 + $0x8] sm:$0xff]
  %1370 = vset.pattern.permute.xlu0 0
  %1371 = vperm.xlu0 %1370, %v1367
  %v1372 = vpop.permute.xlu0 %1371
  %1375 = vset.pattern.permute.xlu0 0
  %1376 = vperm.xlu0 %1375, %v1368
  %v1377 = vpop.permute.xlu0 %1376
  %v1379 = vld [vmem:[#allocation2] sm:$0xff]
  %v1380 = vld [vmem:[#allocation2 + $0x8] sm:$0xff]
  %v1389 = vunpack.c.l.b16 %v1342
  %v1390 = vunpack.c.l.b16 %v1343
  %v1391 = vunpack.c.l.b16 %v1344
  %v1392 = vunpack.c.l.b16 %v1345
  %v1393 = vunpack.c.l.b16 %v1346
  %v1394 = vunpack.c.l.b16 %v1347
  %v1395 = vunpack.c.l.b16 %v1348
  %v1396 = vunpack.c.l.b16 %v1349
  %v1397 = vpack.c.b16 %v1390, %v1389
  %v1398 = vpack.c.b16 %v1392, %v1391
  %v1399 = vpack.c.b16 %v1394, %v1393
  %v1400 = vpack.c.b16 %v1396, %v1395
  %vm1405 = vcmask 523264
  %v1407 = vsel %vm1405, 0, 0
  %1409 = vmatpush.bf16.msra.mxu0 0
  %1410 = vmatpush.bf16.msra.mxu0 0
  %1411 = vmatpush.bf16.msra.mxu0 0
  %1412 = vmatpush.bf16.msra.mxu0 0
  %1413 = vmatpush.bf16.msra.mxu0 %v1400
  %1414 = vmatpush.bf16.msra.mxu0 %v1399
  %1415 = vmatpush.bf16.msra.mxu0 %v1398
  %1416 = vmatpush.bf16.msra.mxu0 %v1397
  %1417 = vmatmul.bf16.gmra.mxu0 %v1407
  %v1418 = vpop.f32.mrf.mxu0
  %v1419 = vadd.f32 0.0, %v1418
  %v1420 = vpop.f32.mrf.mxu0
  %v1421 = vadd.f32 0.0, %v1420
  %1422 = vdwg.mxu0
  %v1423 = vadd.f32 %v1379, %v1419
  %v1424 = vadd.f32 %v1380, %v1421
  %v1425 = vmul.f32 %v1423, 0.666
  %v1426 = vmul.f32 %v1424, 0.666
  %v1427 = vtanh.pop %v1425
  %v1428 = vtanh.pop %v1426
  %v1429 = vmul.f32 %v1427, 1.7159
  %v1430 = vmul.f32 %v1428, 1.7159
  %v1431 = vpack.c.bf16 %v1430, %v1429
  %v1433 = vperm.slane %v1366, 0
  %v1434 = vperm.slane %v1366, 1
  %v1453 = vunpack.c.l.b16 %v1350
  %v1454 = vunpack.c.h.b16 %v1350
  %v1455 = vunpack.c.l.b16 %v1351
  %v1456 = vunpack.c.h.b16 %v1351
  %v1457 = vunpack.c.l.b16 %v1352
  %v1458 = vunpack.c.h.b16 %v1352
  %v1459 = vunpack.c.l.b16 %v1353
  %v1460 = vunpack.c.h.b16 %v1353
  %v1461 = vunpack.c.l.b16 %v1354
  %v1462 = vunpack.c.h.b16 %v1354
  %v1463 = vunpack.c.l.b16 %v1355
  %v1464 = vunpack.c.h.b16 %v1355
  %v1465 = vunpack.c.l.b16 %v1356
  %v1466 = vunpack.c.h.b16 %v1356
  %v1467 = vunpack.c.l.b16 %v1357
  %v1468 = vunpack.c.h.b16 %v1357
  %v1469 = vunpack.c.l.b16 %v1358
  %v1470 = vunpack.c.h.b16 %v1358
  %v1471 = vunpack.c.l.b16 %v1359
  %v1472 = vunpack.c.h.b16 %v1359
  %v1473 = vunpack.c.l.b16 %v1360
  %v1474 = vunpack.c.h.b16 %v1360
  %v1475 = vunpack.c.l.b16 %v1361
  %v1476 = vunpack.c.h.b16 %v1361
  %v1477 = vunpack.c.l.b16 %v1362
  %v1478 = vunpack.c.h.b16 %v1362
  %v1479 = vunpack.c.l.b16 %v1363
  %v1480 = vunpack.c.h.b16 %v1363
  %v1481 = vunpack.c.l.b16 %v1364
  %v1482 = vunpack.c.h.b16 %v1364
  %v1483 = vunpack.c.l.b16 %v1365
  %v1484 = vunpack.c.h.b16 %v1365
  %v1485 = vpack.c.b16 %v1455, %v1453
  %v1486 = vpack.c.b16 %v1456, %v1454
  %v1487 = vpack.c.b16 %v1459, %v1457
  %v1488 = vpack.c.b16 %v1460, %v1458
  %v1489 = vpack.c.b16 %v1463, %v1461
  %v1490 = vpack.c.b16 %v1464, %v1462
  %v1491 = vpack.c.b16 %v1467, %v1465
  %v1492 = vpack.c.b16 %v1468, %v1466
  %v1493 = vpack.c.b16 %v1471, %v1469
  %v1494 = vpack.c.b16 %v1472, %v1470
  %v1495 = vpack.c.b16 %v1475, %v1473
  %v1496 = vpack.c.b16 %v1476, %v1474
  %v1497 = vpack.c.b16 %v1479, %v1477
  %v1498 = vpack.c.b16 %v1480, %v1478
  %v1499 = vpack.c.b16 %v1483, %v1481
  %v1500 = vpack.c.b16 %v1484, %v1482
  %1517 = vmatpush.bf16.msra.mxu0 %v1499
  %1518 = vmatpush.bf16.msra.mxu0 %v1497
  %1519 = vmatpush.bf16.msra.mxu0 %v1495
  %1520 = vmatpush.bf16.msra.mxu0 %v1493
  %1521 = vmatpush.bf16.msra.mxu0 %v1491
  %1522 = vmatpush.bf16.msra.mxu0 %v1489
  %1523 = vmatpush.bf16.msra.mxu0 %v1487
  %1524 = vmatpush.bf16.msra.mxu0 %v1485
  %1525 = vmatmul.bf16.gmra.mxu0 %v1431
  %v1526 = vpop.f32.mrf.mxu0
  %v1527 = vadd.f32 %v1433, %v1526
  %v1528 = vpop.f32.mrf.mxu0
  %v1529 = vadd.f32 %v1433, %v1528
  %1530 = vdwg.mxu0
  %1531 = vmatpush.bf16.msra.mxu0 %v1500
  %1532 = vmatpush.bf16.msra.mxu0 %v1498
  %1533 = vmatpush.bf16.msra.mxu0 %v1496
  %1534 = vmatpush.bf16.msra.mxu0 %v1494
  %1535 = vmatpush.bf16.msra.mxu0 %v1492
  %1536 = vmatpush.bf16.msra.mxu0 %v1490
  %1537 = vmatpush.bf16.msra.mxu0 %v1488
  %1538 = vmatpush.bf16.msra.mxu0 %v1486
  %1539 = vmatmul.bf16.gmra.mxu0 %v1431
  %v1540 = vpop.f32.mrf.mxu0
  %v1541 = vadd.f32 %v1434, %v1540
  %v1542 = vpop.f32.mrf.mxu0
  %v1543 = vadd.f32 %v1434, %v1542
  %1544 = vdwg.mxu0
  %v1545 = vtanh.pop %v1527
  %v1546 = vtanh.pop %v1529
  %v1547 = vmul.f32 %v1541, %v1372
  %v1548 = vmul.f32 %v1543, %v1377
  %1551 = vrot.lane.b32.xlu0 %v1541, 64
  %v1552 = vpop.permute.xlu0 %1551
  %1553 = vrot.lane.b32.xlu0 %v1543, 64
  %v1554 = vpop.permute.xlu0 %1553
  %v1557 = vadd.f32 %v1547, %v1552
  %v1558 = vadd.f32 %v1548, %v1554
  %v1559 = vxor.u32 %v1557, 2147483648
  %v1560 = vxor.u32 %v1558, 2147483648
  %v1561 = vmul.f32 %v1559, 1.442695
  %v1562 = vpow.pop %v1561
  %v1563 = vmul.f32 %v1560, 1.442695
  %v1564 = vpow.pop %v1563
  %v1565 = vadd.f32 %v1562, 1.0
  %v1566 = vadd.f32 %v1564, 1.0
  %v1567 = vrcp.pop %v1565
  %v1568 = vmul.f32 %v1565, %v1567
  %v1569 = vsub.f32 1.0, %v1568
  %v1570 = vmul.f32 %v1567, %v1569
  %v1571 = vadd.f32 %v1567, %v1570
  %vm1572 = vweird.f32 %v1565
  %vm1573 = vweird.f32 %v1567
  %vm1574 = vmor %vm1572, %vm1573
  %v1575 = vsel %vm1574, %v1567, %v1571
  %v1576 = vand.u32 2147483647, %v1565
  %vm1577 = vcmp.eq.f32.partialorder %v1576, 8.507059e+37
  %v1578 = vand.u32 %v1565, 2147483648
  %v1579 = vor.u32 1.1754944e-38, %v1578
  %v1580 = vsel %vm1577, %v1579, %v1575
  %v1581 = vmul.f32 1.0, %v1580
  %v1582 = vrcp.pop %v1566
  %v1583 = vmul.f32 %v1566, %v1582
  %v1584 = vsub.f32 1.0, %v1583
  %v1585 = vmul.f32 %v1582, %v1584
  %v1586 = vadd.f32 %v1582, %v1585
  %vm1587 = vweird.f32 %v1566
  %vm1588 = vweird.f32 %v1582
  %vm1589 = vmor %vm1587, %vm1588
  %v1590 = vsel %vm1589, %v1582, %v1586
  %v1591 = vand.u32 2147483647, %v1566
  %vm1592 = vcmp.eq.f32.partialorder %v1591, 8.507059e+37
  %v1593 = vand.u32 %v1566, 2147483648
  %v1594 = vor.u32 1.1754944e-38, %v1593
  %v1595 = vsel %vm1592, %v1594, %v1590
  %v1596 = vmul.f32 1.0, %v1595
  %1599 = vrot.lane.b32.xlu0 %v1545, 64
  %v1600 = vpop.permute.xlu0 %1599
  %1601 = vrot.lane.b32.xlu0 %v1546, 64
  %v1602 = vpop.permute.xlu0 %1601
  %v1605 = vsub.f32 %v1545, %v1600
  %v1606 = vsub.f32 %v1546, %v1602
  %1609 = vrot.lane.b32.xlu0 %v1605, 64
  %v1610 = vpop.permute.xlu0 %1609
  %1611 = vrot.lane.b32.xlu0 %v1606, 64
  %v1612 = vpop.permute.xlu0 %1611
  %v1615 = vmul.f32 %v1581, %v1610
  %v1616 = vmul.f32 %v1596, %v1612
  %v1617 = vadd.f32 %v1545, %v1615
  %v1618 = vadd.f32 %v1546, %v1616
  %v1619 = vld [vmem:[%s9] sm:$0xff]
  %v1620 = vld [vmem:[%s9 + $0x8] sm:$0xff]
  %v1621 = vld [vmem:[%s9 + $0x10] sm:$0xff]
  %v1622 = vpack.c.bf16 %v1618, %v1617
  %s1623 = scalar_lea.vmem [#allocation2], 16
  %v1624 = vld [vmem:[%s1623] sm:$0xff]
  %v1625 = vld [vmem:[%s1623 + $0x8] sm:$0xff]
  %v1627 = vsel %vm1405, %v1622, 0
  %1629 = vmatpush.bf16.msra.mxu0 0
  %1630 = vmatpush.bf16.msra.mxu0 0
  %1631 = vmatpush.bf16.msra.mxu0 0
  %1632 = vmatpush.bf16.msra.mxu0 0
  %1633 = vmatpush.bf16.msra.mxu0 %v1400
  %1634 = vmatpush.bf16.msra.mxu0 %v1399
  %1635 = vmatpush.bf16.msra.mxu0 %v1398
  %1636 = vmatpush.bf16.msra.mxu0 %v1397
  %1637 = vmatmul.bf16.gmra.mxu0 %v1627
  %v1638 = vpop.f32.mrf.mxu0
  %v1639 = vadd.f32 0.0, %v1638
  %v1640 = vpop.f32.mrf.mxu0
  %v1641 = vadd.f32 0.0, %v1640
  %1642 = vdwg.mxu0
  %v1643 = vadd.f32 %v1624, %v1639
  %v1644 = vadd.f32 %v1625, %v1641
  %v1645 = vmul.f32 %v1643, 0.666
  %v1646 = vmul.f32 %v1644, 0.666
  %v1647 = vtanh.pop %v1645
  %v1648 = vtanh.pop %v1646
  %v1649 = vmul.f32 %v1647, 1.7159
  %v1650 = vmul.f32 %v1648, 1.7159
  %v1651 = vpack.c.bf16 %v1650, %v1649
  %1652 = vmatpush.bf16.msra.mxu0 %v1499
  %1653 = vmatpush.bf16.msra.mxu0 %v1497
  %1654 = vmatpush.bf16.msra.mxu0 %v1495
  %1655 = vmatpush.bf16.msra.mxu0 %v1493
  %1656 = vmatpush.bf16.msra.mxu0 %v1491
  %1657 = vmatpush.bf16.msra.mxu0 %v1489
  %1658 = vmatpush.bf16.msra.mxu0 %v1487
  %1659 = vmatpush.bf16.msra.mxu0 %v1485
  %1660 = vmatmul.bf16.gmra.mxu0 %v1651
  %v1661 = vpop.f32.mrf.mxu0
  %v1662 = vadd.f32 %v1433, %v1661
  %v1663 = vpop.f32.mrf.mxu0
  %v1664 = vadd.f32 %v1433, %v1663
  %1665 = vdwg.mxu0
  %1666 = vmatpush.bf16.msra.mxu0 %v1500
  %1667 = vmatpush.bf16.msra.mxu0 %v1498
  %1668 = vmatpush.bf16.msra.mxu0 %v1496
  %1669 = vmatpush.bf16.msra.mxu0 %v1494
  %1670 = vmatpush.bf16.msra.mxu0 %v1492
  %1671 = vmatpush.bf16.msra.mxu0 %v1490
  %1672 = vmatpush.bf16.msra.mxu0 %v1488
  %1673 = vmatpush.bf16.msra.mxu0 %v1486
  %1674 = vmatmul.bf16.gmra.mxu0 %v1651
  %v1675 = vpop.f32.mrf.mxu0
  %v1676 = vadd.f32 %v1434, %v1675
  %v1677 = vpop.f32.mrf.mxu0
  %v1678 = vadd.f32 %v1434, %v1677
  %1679 = vdwg.mxu0
  %v1680 = vtanh.pop %v1662
  %v1681 = vtanh.pop %v1664
  %v1682 = vmul.f32 %v1676, %v1372
  %v1683 = vmul.f32 %v1678, %v1377
  %1686 = vrot.lane.b32.xlu0 %v1676, 64
  %v1687 = vpop.permute.xlu0 %1686
  %1688 = vrot.lane.b32.xlu0 %v1678, 64
  %v1689 = vpop.permute.xlu0 %1688
  %v1692 = vadd.f32 %v1682, %v1687
  %v1693 = vadd.f32 %v1683, %v1689
  %v1694 = vxor.u32 %v1692, 2147483648
  %v1695 = vxor.u32 %v1693, 2147483648
  %v1696 = vmul.f32 %v1694, 1.442695
  %v1697 = vpow.pop %v1696
  %v1698 = vmul.f32 %v1695, 1.442695
  %v1699 = vpow.pop %v1698
  %v1700 = vadd.f32 %v1697, 1.0
  %v1701 = vadd.f32 %v1699, 1.0
  %v1702 = vrcp.pop %v1700
  %v1703 = vmul.f32 %v1700, %v1702
  %v1704 = vsub.f32 1.0, %v1703
  %v1705 = vmul.f32 %v1702, %v1704
  %v1706 = vadd.f32 %v1702, %v1705
  %vm1707 = vweird.f32 %v1700
  %vm1708 = vweird.f32 %v1702
  %vm1709 = vmor %vm1707, %vm1708
  %v1710 = vsel %vm1709, %v1702, %v1706
  %v1711 = vand.u32 2147483647, %v1700
  %vm1712 = vcmp.eq.f32.partialorder %v1711, 8.507059e+37
  %v1713 = vand.u32 %v1700, 2147483648
  %v1714 = vor.u32 1.1754944e-38, %v1713
  %v1715 = vsel %vm1712, %v1714, %v1710
  %v1716 = vmul.f32 1.0, %v1715
  %v1717 = vrcp.pop %v1701
  %v1718 = vmul.f32 %v1701, %v1717
  %v1719 = vsub.f32 1.0, %v1718
  %v1720 = vmul.f32 %v1717, %v1719
  %v1721 = vadd.f32 %v1717, %v1720
  %vm1722 = vweird.f32 %v1701
  %vm1723 = vweird.f32 %v1717
  %vm1724 = vmor %vm1722, %vm1723
  %v1725 = vsel %vm1724, %v1717, %v1721
  %v1726 = vand.u32 2147483647, %v1701
  %vm1727 = vcmp.eq.f32.partialorder %v1726, 8.507059e+37
  %v1728 = vand.u32 %v1701, 2147483648
  %v1729 = vor.u32 1.1754944e-38, %v1728
  %v1730 = vsel %vm1727, %v1729, %v1725
  %v1731 = vmul.f32 1.0, %v1730
  %1734 = vrot.lane.b32.xlu0 %v1680, 64
  %v1735 = vpop.permute.xlu0 %1734
  %1736 = vrot.lane.b32.xlu0 %v1681, 64
  %v1737 = vpop.permute.xlu0 %1736
  %v1740 = vsub.f32 %v1680, %v1735
  %v1741 = vsub.f32 %v1681, %v1737
  %1744 = vrot.lane.b32.xlu0 %v1740, 64
  %v1745 = vpop.permute.xlu0 %1744
  %1746 = vrot.lane.b32.xlu0 %v1741, 64
  %v1747 = vpop.permute.xlu0 %1746
  %v1750 = vmul.f32 %v1716, %v1745
  %v1751 = vmul.f32 %v1731, %v1747
  %v1752 = vadd.f32 %v1680, %v1750
  %v1753 = vadd.f32 %v1681, %v1751
  %s1754 = scalar_lea.vmem %s9, 24
  %v1755 = vld [vmem:[%s1754] sm:$0xff]
  %v1756 = vld [vmem:[%s1754 + $0x8] sm:$0xff]
  %v1757 = vld [vmem:[%s1754 + $0x10] sm:$0xff]
  %vm1758 = vcmask 130048
  %v1760 = vsel %vm1758, %v1755, 0
  %v1763 = vsel %vm1758, %v1756, 0
  %v1766 = vsel %vm1758, %v1757, 0
  %1768 = vmatpush.msra.mxu0 0.0
  %1769 = vmatpush.msra.mxu0 0.0
  %1770 = vmatpush.msra.mxu0 0.0
  %1771 = vmatpush.msra.mxu0 0.0
  %1772 = vmatpush.msra.mxu0 0.0
  %1773 = vmatpush.msra.mxu0 0.0
  %1774 = vmatpush.msra.mxu0 0.0
  %1775 = vmatpush.msra.mxu0 0.0
  %1776 = vmatpush.msra.mxu0 0.0
  %1777 = vmatpush.msra.mxu0 0.0
  %1778 = vmatpush.msra.mxu0 0.0
  %1779 = vmatpush.msra.mxu0 0.0
  %1780 = vmatpush.msra.mxu0 0.0
  %1781 = vmatpush.msra.mxu0 0.0
  %1782 = vmatpush.msra.mxu0 %v1753
  %1783 = vmatpush.msra.mxu0 %v1752
  %1784 = vmatmul.f32.gmra.mxu0 %v1760
  %v1785 = vpop.f32.mrf.mxu0
  %v1786 = vadd.f32 0.0, %v1785
  %1787 = vmatmul.f32.gmra.mxu0 %v1763
  %v1788 = vpop.f32.mrf.mxu0
  %v1789 = vadd.f32 0.0, %v1788
  %1790 = vmatmul.f32.gmra.mxu0 %v1766
  %v1791 = vpop.f32.mrf.mxu0
  %v1792 = vadd.f32 0.0, %v1791
  %1793 = vdwg.mxu0
  %v1795 = vsel %vm1758, %v1619, 0
  %v1798 = vsel %vm1758, %v1620, 0
  %v1801 = vsel %vm1758, %v1621, 0
  %1803 = vmatpush.msra.mxu0 0.0
  %1804 = vmatpush.msra.mxu0 0.0
  %1805 = vmatpush.msra.mxu0 0.0
  %1806 = vmatpush.msra.mxu0 0.0
  %1807 = vmatpush.msra.mxu0 0.0
  %1808 = vmatpush.msra.mxu0 0.0
  %1809 = vmatpush.msra.mxu0 0.0
  %1810 = vmatpush.msra.mxu0 0.0
  %1811 = vmatpush.msra.mxu0 0.0
  %1812 = vmatpush.msra.mxu0 0.0
  %1813 = vmatpush.msra.mxu0 0.0
  %1814 = vmatpush.msra.mxu0 0.0
  %1815 = vmatpush.msra.mxu0 0.0
  %1816 = vmatpush.msra.mxu0 0.0
  %1817 = vmatpush.msra.mxu0 %v1618
  %1818 = vmatpush.msra.mxu0 %v1617
  %1819 = vmatmul.f32.gmra.mxu0 %v1795
  %v1820 = vpop.f32.mrf.mxu0
  %v1821 = vadd.f32 %v1786, %v1820
  %1822 = vmatmul.f32.gmra.mxu0 %v1798
  %v1823 = vpop.f32.mrf.mxu0
  %v1824 = vadd.f32 %v1789, %v1823
  %1825 = vmatmul.f32.gmra.mxu0 %v1801
  %v1826 = vpop.f32.mrf.mxu0
  %v1827 = vadd.f32 %v1792, %v1826
  %1828 = vdwg.mxu0
  %v1829 = vpack.c.bf16 %v1753, %v1752
  %s1830 = scalar_lea.vmem [#allocation2], 32
  %v1831 = vld [vmem:[%s1830] sm:$0xff]
  %v1832 = vld [vmem:[%s1830 + $0x8] sm:$0xff]
  %v1834 = vsel %vm1405, %v1829, 0
  %1836 = vmatpush.bf16.msra.mxu0 0
  %1837 = vmatpush.bf16.msra.mxu0 0
  %1838 = vmatpush.bf16.msra.mxu0 0
  %1839 = vmatpush.bf16.msra.mxu0 0
  %1840 = vmatpush.bf16.msra.mxu0 %v1400
  %1841 = vmatpush.bf16.msra.mxu0 %v1399
  %1842 = vmatpush.bf16.msra.mxu0 %v1398
  %1843 = vmatpush.bf16.msra.mxu0 %v1397
  %1844 = vmatmul.bf16.gmra.mxu0 %v1834
  %v1845 = vpop.f32.mrf.mxu0
  %v1846 = vadd.f32 0.0, %v1845
  %v1847 = vpop.f32.mrf.mxu0
  %v1848 = vadd.f32 0.0, %v1847
  %1849 = vdwg.mxu0
  %v1850 = vadd.f32 %v1831, %v1846
  %v1851 = vadd.f32 %v1832, %v1848
  %v1852 = vmul.f32 %v1850, 0.666
  %v1853 = vmul.f32 %v1851, 0.666
  %v1854 = vtanh.pop %v1852
  %v1855 = vtanh.pop %v1853
  %v1856 = vmul.f32 %v1854, 1.7159
  %v1857 = vmul.f32 %v1855, 1.7159
  %v1858 = vpack.c.bf16 %v1857, %v1856
  %1859 = vmatpush.bf16.msra.mxu0 %v1499
  %1860 = vmatpush.bf16.msra.mxu0 %v1497
  %1861 = vmatpush.bf16.msra.mxu0 %v1495
  %1862 = vmatpush.bf16.msra.mxu0 %v1493
  %1863 = vmatpush.bf16.msra.mxu0 %v1491
  %1864 = vmatpush.bf16.msra.mxu0 %v1489
  %1865 = vmatpush.bf16.msra.mxu0 %v1487
  %1866 = vmatpush.bf16.msra.mxu0 %v1485
  %1867 = vmatmul.bf16.gmra.mxu0 %v1858
  %v1868 = vpop.f32.mrf.mxu0
  %v1869 = vadd.f32 %v1433, %v1868
  %v1870 = vpop.f32.mrf.mxu0
  %v1871 = vadd.f32 %v1433, %v1870
  %1872 = vdwg.mxu0
  %1873 = vmatpush.bf16.msra.mxu0 %v1500
  %1874 = vmatpush.bf16.msra.mxu0 %v1498
  %1875 = vmatpush.bf16.msra.mxu0 %v1496
  %1876 = vmatpush.bf16.msra.mxu0 %v1494
  %1877 = vmatpush.bf16.msra.mxu0 %v1492
  %1878 = vmatpush.bf16.msra.mxu0 %v1490
  %1879 = vmatpush.bf16.msra.mxu0 %v1488
  %1880 = vmatpush.bf16.msra.mxu0 %v1486
  %1881 = vmatmul.bf16.gmra.mxu0 %v1858
  %v1882 = vpop.f32.mrf.mxu0
  %v1883 = vadd.f32 %v1434, %v1882
  %v1884 = vpop.f32.mrf.mxu0
  %v1885 = vadd.f32 %v1434, %v1884
  %1886 = vdwg.mxu0
  %v1887 = vtanh.pop %v1869
  %v1888 = vtanh.pop %v1871
  %v1889 = vmul.f32 %v1883, %v1372
  %v1890 = vmul.f32 %v1885, %v1377
  %1893 = vrot.lane.b32.xlu0 %v1883, 64
  %v1894 = vpop.permute.xlu0 %1893
  %1895 = vrot.lane.b32.xlu0 %v1885, 64
  %v1896 = vpop.permute.xlu0 %1895
  %v1899 = vadd.f32 %v1889, %v1894
  %v1900 = vadd.f32 %v1890, %v1896
  %v1901 = vxor.u32 %v1899, 2147483648
  %v1902 = vxor.u32 %v1900, 2147483648
  %v1903 = vmul.f32 %v1901, 1.442695
  %v1904 = vpow.pop %v1903
  %v1905 = vmul.f32 %v1902, 1.442695
  %v1906 = vpow.pop %v1905
  %v1907 = vadd.f32 %v1904, 1.0
  %v1908 = vadd.f32 %v1906, 1.0
  %v1909 = vrcp.pop %v1907
  %v1910 = vmul.f32 %v1907, %v1909
  %v1911 = vsub.f32 1.0, %v1910
  %v1912 = vmul.f32 %v1909, %v1911
  %v1913 = vadd.f32 %v1909, %v1912
  %vm1914 = vweird.f32 %v1907
  %vm1915 = vweird.f32 %v1909
  %vm1916 = vmor %vm1914, %vm1915
  %v1917 = vsel %vm1916, %v1909, %v1913
  %v1918 = vand.u32 2147483647, %v1907
  %vm1919 = vcmp.eq.f32.partialorder %v1918, 8.507059e+37
  %v1920 = vand.u32 %v1907, 2147483648
  %v1921 = vor.u32 1.1754944e-38, %v1920
  %v1922 = vsel %vm1919, %v1921, %v1917
  %v1923 = vmul.f32 1.0, %v1922
  %v1924 = vrcp.pop %v1908
  %v1925 = vmul.f32 %v1908, %v1924
  %v1926 = vsub.f32 1.0, %v1925
  %v1927 = vmul.f32 %v1924, %v1926
  %v1928 = vadd.f32 %v1924, %v1927
  %vm1929 = vweird.f32 %v1908
  %vm1930 = vweird.f32 %v1924
  %vm1931 = vmor %vm1929, %vm1930
  %v1932 = vsel %vm1931, %v1924, %v1928
  %v1933 = vand.u32 2147483647, %v1908
  %vm1934 = vcmp.eq.f32.partialorder %v1933, 8.507059e+37
  %v1935 = vand.u32 %v1908, 2147483648
  %v1936 = vor.u32 1.1754944e-38, %v1935
  %v1937 = vsel %vm1934, %v1936, %v1932
  %v1938 = vmul.f32 1.0, %v1937
  %1941 = vrot.lane.b32.xlu0 %v1887, 64
  %v1942 = vpop.permute.xlu0 %1941
  %1943 = vrot.lane.b32.xlu0 %v1888, 64
  %v1944 = vpop.permute.xlu0 %1943
  %v1947 = vsub.f32 %v1887, %v1942
  %v1948 = vsub.f32 %v1888, %v1944
  %1951 = vrot.lane.b32.xlu0 %v1947, 64
  %v1952 = vpop.permute.xlu0 %1951
  %1953 = vrot.lane.b32.xlu0 %v1948, 64
  %v1954 = vpop.permute.xlu0 %1953
  %v1957 = vmul.f32 %v1923, %v1952
  %v1958 = vmul.f32 %v1938, %v1954
  %v1959 = vadd.f32 %v1887, %v1957
  %v1960 = vadd.f32 %v1888, %v1958
  %s1961 = scalar_lea.vmem %s9, 48
  %v1962 = vld [vmem:[%s1961] sm:$0xff]
  %v1963 = vld [vmem:[%s1961 + $0x8] sm:$0xff]
  %v1964 = vld [vmem:[%s1961 + $0x10] sm:$0xff]
  %v1966 = vsel %vm1758, %v1962, 0
  %v1969 = vsel %vm1758, %v1963, 0
  %v1972 = vsel %vm1758, %v1964, 0
  %1974 = vmatpush.msra.mxu0 0.0
  %1975 = vmatpush.msra.mxu0 0.0
  %1976 = vmatpush.msra.mxu0 0.0
  %1977 = vmatpush.msra.mxu0 0.0
  %1978 = vmatpush.msra.mxu0 0.0
  %1979 = vmatpush.msra.mxu0 0.0
  %1980 = vmatpush.msra.mxu0 0.0
  %1981 = vmatpush.msra.mxu0 0.0
  %1982 = vmatpush.msra.mxu0 0.0
  %1983 = vmatpush.msra.mxu0 0.0
  %1984 = vmatpush.msra.mxu0 0.0
  %1985 = vmatpush.msra.mxu0 0.0
  %1986 = vmatpush.msra.mxu0 0.0
  %1987 = vmatpush.msra.mxu0 0.0
  %1988 = vmatpush.msra.mxu0 %v1960
  %1989 = vmatpush.msra.mxu0 %v1959
  %1990 = vmatmul.f32.gmra.mxu0 %v1966
  %v1991 = vpop.f32.mrf.mxu0
  %v1992 = vadd.f32 0.0, %v1991
  %1993 = vmatmul.f32.gmra.mxu0 %v1969
  %v1994 = vpop.f32.mrf.mxu0
  %v1995 = vadd.f32 0.0, %v1994
  %1996 = vmatmul.f32.gmra.mxu0 %v1972
  %v1997 = vpop.f32.mrf.mxu0
  %v1998 = vadd.f32 0.0, %v1997
  %1999 = vdwg.mxu0
  %v2000 = vadd.f32 %v1821, %v1992
  %v2001 = vadd.f32 %v1824, %v1995
  %v2002 = vadd.f32 %v1827, %v1998
  %v2003 = vpack.c.bf16 %v1960, %v1959
  %s2004 = scalar_lea.vmem [#allocation2], 48
  %v2005 = vld [vmem:[%s2004] sm:$0xff]
  %v2006 = vld [vmem:[%s2004 + $0x8] sm:$0xff]
  %v2008 = vsel %vm1405, %v2003, 0
  %2010 = vmatpush.bf16.msra.mxu0 0
  %2011 = vmatpush.bf16.msra.mxu0 0
  %2012 = vmatpush.bf16.msra.mxu0 0
  %2013 = vmatpush.bf16.msra.mxu0 0
  %2014 = vmatpush.bf16.msra.mxu0 %v1400
  %2015 = vmatpush.bf16.msra.mxu0 %v1399
  %2016 = vmatpush.bf16.msra.mxu0 %v1398
  %2017 = vmatpush.bf16.msra.mxu0 %v1397
  %2018 = vmatmul.bf16.gmra.mxu0 %v2008
  %v2019 = vpop.f32.mrf.mxu0
  %v2020 = vadd.f32 0.0, %v2019
  %v2021 = vpop.f32.mrf.mxu0
  %v2022 = vadd.f32 0.0, %v2021
  %2023 = vdwg.mxu0
  %v2024 = vadd.f32 %v2005, %v2020
  %v2025 = vadd.f32 %v2006, %v2022
  %v2026 = vmul.f32 %v2024, 0.666
  %v2027 = vmul.f32 %v2025, 0.666
  %v2028 = vtanh.pop %v2026
  %v2029 = vtanh.pop %v2027
  %v2030 = vmul.f32 %v2028, 1.7159
  %v2031 = vmul.f32 %v2029, 1.7159
  %v2032 = vpack.c.bf16 %v2031, %v2030
  %2033 = vmatpush.bf16.msra.mxu0 %v1499
  %2034 = vmatpush.bf16.msra.mxu0 %v1497
  %2035 = vmatpush.bf16.msra.mxu0 %v1495
  %2036 = vmatpush.bf16.msra.mxu0 %v1493
  %2037 = vmatpush.bf16.msra.mxu0 %v1491
  %2038 = vmatpush.bf16.msra.mxu0 %v1489
  %2039 = vmatpush.bf16.msra.mxu0 %v1487
  %2040 = vmatpush.bf16.msra.mxu0 %v1485
  %2041 = vmatmul.bf16.gmra.mxu0 %v2032
  %v2042 = vpop.f32.mrf.mxu0
  %v2043 = vadd.f32 %v1433, %v2042
  %v2044 = vpop.f32.mrf.mxu0
  %v2045 = vadd.f32 %v1433, %v2044
  %2046 = vdwg.mxu0
  %2047 = vmatpush.bf16.msra.mxu0 %v1500
  %2048 = vmatpush.bf16.msra.mxu0 %v1498
  %2049 = vmatpush.bf16.msra.mxu0 %v1496
  %2050 = vmatpush.bf16.msra.mxu0 %v1494
  %2051 = vmatpush.bf16.msra.mxu0 %v1492
  %2052 = vmatpush.bf16.msra.mxu0 %v1490
  %2053 = vmatpush.bf16.msra.mxu0 %v1488
  %2054 = vmatpush.bf16.msra.mxu0 %v1486
  %2055 = vmatmul.bf16.gmra.mxu0 %v2032
  %v2056 = vpop.f32.mrf.mxu0
  %v2057 = vadd.f32 %v1434, %v2056
  %v2058 = vpop.f32.mrf.mxu0
  %v2059 = vadd.f32 %v1434, %v2058
  %2060 = vdwg.mxu0
  %v2061 = vtanh.pop %v2043
  %v2062 = vtanh.pop %v2045
  %v2063 = vmul.f32 %v2057, %v1372
  %v2064 = vmul.f32 %v2059, %v1377
  %2067 = vrot.lane.b32.xlu0 %v2057, 64
  %v2068 = vpop.permute.xlu0 %2067
  %2069 = vrot.lane.b32.xlu0 %v2059, 64
  %v2070 = vpop.permute.xlu0 %2069
  %v2073 = vadd.f32 %v2063, %v2068
  %v2074 = vadd.f32 %v2064, %v2070
  %v2075 = vxor.u32 %v2073, 2147483648
  %v2076 = vxor.u32 %v2074, 2147483648
  %v2077 = vmul.f32 %v2075, 1.442695
  %v2078 = vpow.pop %v2077
  %v2079 = vmul.f32 %v2076, 1.442695
  %v2080 = vpow.pop %v2079
  %v2081 = vadd.f32 %v2078, 1.0
  %v2082 = vadd.f32 %v2080, 1.0
  %v2083 = vrcp.pop %v2081
  %v2084 = vmul.f32 %v2081, %v2083
  %v2085 = vsub.f32 1.0, %v2084
  %v2086 = vmul.f32 %v2083, %v2085
  %v2087 = vadd.f32 %v2083, %v2086
  %vm2088 = vweird.f32 %v2081
  %vm2089 = vweird.f32 %v2083
  %vm2090 = vmor %vm2088, %vm2089
  %v2091 = vsel %vm2090, %v2083, %v2087
  %v2092 = vand.u32 2147483647, %v2081
  %vm2093 = vcmp.eq.f32.partialorder %v2092, 8.507059e+37
  %v2094 = vand.u32 %v2081, 2147483648
  %v2095 = vor.u32 1.1754944e-38, %v2094
  %v2096 = vsel %vm2093, %v2095, %v2091
  %v2097 = vmul.f32 1.0, %v2096
  %v2098 = vrcp.pop %v2082
  %v2099 = vmul.f32 %v2082, %v2098
  %v2100 = vsub.f32 1.0, %v2099
  %v2101 = vmul.f32 %v2098, %v2100
  %v2102 = vadd.f32 %v2098, %v2101
  %vm2103 = vweird.f32 %v2082
  %vm2104 = vweird.f32 %v2098
  %vm2105 = vmor %vm2103, %vm2104
  %v2106 = vsel %vm2105, %v2098, %v2102
  %v2107 = vand.u32 2147483647, %v2082
  %vm2108 = vcmp.eq.f32.partialorder %v2107, 8.507059e+37
  %v2109 = vand.u32 %v2082, 2147483648
  %v2110 = vor.u32 1.1754944e-38, %v2109
  %v2111 = vsel %vm2108, %v2110, %v2106
  %v2112 = vmul.f32 1.0, %v2111
  %2115 = vrot.lane.b32.xlu0 %v2061, 64
  %v2116 = vpop.permute.xlu0 %2115
  %2117 = vrot.lane.b32.xlu0 %v2062, 64
  %v2118 = vpop.permute.xlu0 %2117
  %v2121 = vsub.f32 %v2061, %v2116
  %v2122 = vsub.f32 %v2062, %v2118
  %2125 = vrot.lane.b32.xlu0 %v2121, 64
  %v2126 = vpop.permute.xlu0 %2125
  %2127 = vrot.lane.b32.xlu0 %v2122, 64
  %v2128 = vpop.permute.xlu0 %2127
  %v2131 = vmul.f32 %v2097, %v2126
  %v2132 = vmul.f32 %v2112, %v2128
  %v2133 = vadd.f32 %v2061, %v2131
  %v2134 = vadd.f32 %v2062, %v2132
  %s2135 = scalar_lea.vmem %s9, 72
  %v2136 = vld [vmem:[%s2135] sm:$0xff]
  %v2137 = vld [vmem:[%s2135 + $0x8] sm:$0xff]
  %v2138 = vld [vmem:[%s2135 + $0x10] sm:$0xff]
  %v2140 = vsel %vm1758, %v2136, 0
  %v2143 = vsel %vm1758, %v2137, 0
  %v2146 = vsel %vm1758, %v2138, 0
  %2148 = vmatpush.msra.mxu0 0.0
  %2149 = vmatpush.msra.mxu0 0.0
  %2150 = vmatpush.msra.mxu0 0.0
  %2151 = vmatpush.msra.mxu0 0.0
  %2152 = vmatpush.msra.mxu0 0.0
  %2153 = vmatpush.msra.mxu0 0.0
  %2154 = vmatpush.msra.mxu0 0.0
  %2155 = vmatpush.msra.mxu0 0.0
  %2156 = vmatpush.msra.mxu0 0.0
  %2157 = vmatpush.msra.mxu0 0.0
  %2158 = vmatpush.msra.mxu0 0.0
  %2159 = vmatpush.msra.mxu0 0.0
  %2160 = vmatpush.msra.mxu0 0.0
  %2161 = vmatpush.msra.mxu0 0.0
  %2162 = vmatpush.msra.mxu0 %v2134
  %2163 = vmatpush.msra.mxu0 %v2133
  %2164 = vmatmul.f32.gmra.mxu0 %v2140
  %v2165 = vpop.f32.mrf.mxu0
  %v2166 = vadd.f32 0.0, %v2165
  %2167 = vmatmul.f32.gmra.mxu0 %v2143
  %v2168 = vpop.f32.mrf.mxu0
  %v2169 = vadd.f32 0.0, %v2168
  %2170 = vmatmul.f32.gmra.mxu0 %v2146
  %v2171 = vpop.f32.mrf.mxu0
  %v2172 = vadd.f32 0.0, %v2171
  %2173 = vdwg.mxu0
  %v2174 = vadd.f32 %v2000, %v2166
  %v2175 = vadd.f32 %v2001, %v2169
  %v2176 = vadd.f32 %v2002, %v2172
  %v2177 = vpack.c.bf16 %v2134, %v2133
  %s2178 = scalar_lea.vmem [#allocation2], 64
  %v2179 = vld [vmem:[%s2178] sm:$0xff]
  %v2180 = vld [vmem:[%s2178 + $0x8] sm:$0xff]
  %v2182 = vsel %vm1405, %v2177, 0
  %2184 = vmatpush.bf16.msra.mxu0 0
  %2185 = vmatpush.bf16.msra.mxu0 0
  %2186 = vmatpush.bf16.msra.mxu0 0
  %2187 = vmatpush.bf16.msra.mxu0 0
  %2188 = vmatpush.bf16.msra.mxu0 %v1400
  %2189 = vmatpush.bf16.msra.mxu0 %v1399
  %2190 = vmatpush.bf16.msra.mxu0 %v1398
  %2191 = vmatpush.bf16.msra.mxu0 %v1397
  %2192 = vmatmul.bf16.gmra.mxu0 %v2182
  %v2193 = vpop.f32.mrf.mxu0
  %v2194 = vadd.f32 0.0, %v2193
  %v2195 = vpop.f32.mrf.mxu0
  %v2196 = vadd.f32 0.0, %v2195
  %2197 = vdwg.mxu0
  %v2198 = vadd.f32 %v2179, %v2194
  %v2199 = vadd.f32 %v2180, %v2196
  %v2200 = vmul.f32 %v2198, 0.666
  %v2201 = vmul.f32 %v2199, 0.666
  %v2202 = vtanh.pop %v2200
  %v2203 = vtanh.pop %v2201
  %v2204 = vmul.f32 %v2202, 1.7159
  %v2205 = vmul.f32 %v2203, 1.7159
  %v2206 = vpack.c.bf16 %v2205, %v2204
  %2207 = vmatpush.bf16.msra.mxu0 %v1499
  %2208 = vmatpush.bf16.msra.mxu0 %v1497
  %2209 = vmatpush.bf16.msra.mxu0 %v1495
  %2210 = vmatpush.bf16.msra.mxu0 %v1493
  %2211 = vmatpush.bf16.msra.mxu0 %v1491
  %2212 = vmatpush.bf16.msra.mxu0 %v1489
  %2213 = vmatpush.bf16.msra.mxu0 %v1487
  %2214 = vmatpush.bf16.msra.mxu0 %v1485
  %2215 = vmatmul.bf16.gmra.mxu0 %v2206
  %v2216 = vpop.f32.mrf.mxu0
  %v2217 = vadd.f32 %v1433, %v2216
  %v2218 = vpop.f32.mrf.mxu0
  %v2219 = vadd.f32 %v1433, %v2218
  %2220 = vdwg.mxu0
  %2221 = vmatpush.bf16.msra.mxu0 %v1500
  %2222 = vmatpush.bf16.msra.mxu0 %v1498
  %2223 = vmatpush.bf16.msra.mxu0 %v1496
  %2224 = vmatpush.bf16.msra.mxu0 %v1494
  %2225 = vmatpush.bf16.msra.mxu0 %v1492
  %2226 = vmatpush.bf16.msra.mxu0 %v1490
  %2227 = vmatpush.bf16.msra.mxu0 %v1488
  %2228 = vmatpush.bf16.msra.mxu0 %v1486
  %2229 = vmatmul.bf16.gmra.mxu0 %v2206
  %v2230 = vpop.f32.mrf.mxu0
  %v2231 = vadd.f32 %v1434, %v2230
  %v2232 = vpop.f32.mrf.mxu0
  %v2233 = vadd.f32 %v1434, %v2232
  %2234 = vdwg.mxu0
  %v2235 = vtanh.pop %v2217
  %v2236 = vtanh.pop %v2219
  %v2237 = vmul.f32 %v2231, %v1372
  %v2238 = vmul.f32 %v2233, %v1377
  %2241 = vrot.lane.b32.xlu0 %v2231, 64
  %v2242 = vpop.permute.xlu0 %2241
  %2243 = vrot.lane.b32.xlu0 %v2233, 64
  %v2244 = vpop.permute.xlu0 %2243
  %v2247 = vadd.f32 %v2237, %v2242
  %v2248 = vadd.f32 %v2238, %v2244
  %v2249 = vxor.u32 %v2247, 2147483648
  %v2250 = vxor.u32 %v2248, 2147483648
  %v2251 = vmul.f32 %v2249, 1.442695
  %v2252 = vpow.pop %v2251
  %v2253 = vmul.f32 %v2250, 1.442695
  %v2254 = vpow.pop %v2253
  %v2255 = vadd.f32 %v2252, 1.0
  %v2256 = vadd.f32 %v2254, 1.0
  %v2257 = vrcp.pop %v2255
  %v2258 = vmul.f32 %v2255, %v2257
  %v2259 = vsub.f32 1.0, %v2258
  %v2260 = vmul.f32 %v2257, %v2259
  %v2261 = vadd.f32 %v2257, %v2260
  %vm2262 = vweird.f32 %v2255
  %vm2263 = vweird.f32 %v2257
  %vm2264 = vmor %vm2262, %vm2263
  %v2265 = vsel %vm2264, %v2257, %v2261
  %v2266 = vand.u32 2147483647, %v2255
  %vm2267 = vcmp.eq.f32.partialorder %v2266, 8.507059e+37
  %v2268 = vand.u32 %v2255, 2147483648
  %v2269 = vor.u32 1.1754944e-38, %v2268
  %v2270 = vsel %vm2267, %v2269, %v2265
  %v2271 = vmul.f32 1.0, %v2270
  %v2272 = vrcp.pop %v2256
  %v2273 = vmul.f32 %v2256, %v2272
  %v2274 = vsub.f32 1.0, %v2273
  %v2275 = vmul.f32 %v2272, %v2274
  %v2276 = vadd.f32 %v2272, %v2275
  %vm2277 = vweird.f32 %v2256
  %vm2278 = vweird.f32 %v2272
  %vm2279 = vmor %vm2277, %vm2278
  %v2280 = vsel %vm2279, %v2272, %v2276
  %v2281 = vand.u32 2147483647, %v2256
  %vm2282 = vcmp.eq.f32.partialorder %v2281, 8.507059e+37
  %v2283 = vand.u32 %v2256, 2147483648
  %v2284 = vor.u32 1.1754944e-38, %v2283
  %v2285 = vsel %vm2282, %v2284, %v2280
  %v2286 = vmul.f32 1.0, %v2285
  %2289 = vrot.lane.b32.xlu0 %v2235, 64
  %v2290 = vpop.permute.xlu0 %2289
  %2291 = vrot.lane.b32.xlu0 %v2236, 64
  %v2292 = vpop.permute.xlu0 %2291
  %v2295 = vsub.f32 %v2235, %v2290
  %v2296 = vsub.f32 %v2236, %v2292
  %2299 = vrot.lane.b32.xlu0 %v2295, 64
  %v2300 = vpop.permute.xlu0 %2299
  %2301 = vrot.lane.b32.xlu0 %v2296, 64
  %v2302 = vpop.permute.xlu0 %2301
  %v2305 = vmul.f32 %v2271, %v2300
  %v2306 = vmul.f32 %v2286, %v2302
  %v2307 = vadd.f32 %v2235, %v2305
  %v2308 = vadd.f32 %v2236, %v2306
  %s2309 = scalar_lea.vmem %s9, 96
  %v2310 = vld [vmem:[%s2309] sm:$0xff]
  %v2311 = vld [vmem:[%s2309 + $0x8] sm:$0xff]
  %v2312 = vld [vmem:[%s2309 + $0x10] sm:$0xff]
  %v2314 = vsel %vm1758, %v2310, 0
  %v2317 = vsel %vm1758, %v2311, 0
  %v2320 = vsel %vm1758, %v2312, 0
  %2322 = vmatpush.msra.mxu0 0.0
  %2323 = vmatpush.msra.mxu0 0.0
  %2324 = vmatpush.msra.mxu0 0.0
  %2325 = vmatpush.msra.mxu0 0.0
  %2326 = vmatpush.msra.mxu0 0.0
  %2327 = vmatpush.msra.mxu0 0.0
  %2328 = vmatpush.msra.mxu0 0.0
  %2329 = vmatpush.msra.mxu0 0.0
  %2330 = vmatpush.msra.mxu0 0.0
  %2331 = vmatpush.msra.mxu0 0.0
  %2332 = vmatpush.msra.mxu0 0.0
  %2333 = vmatpush.msra.mxu0 0.0
  %2334 = vmatpush.msra.mxu0 0.0
  %2335 = vmatpush.msra.mxu0 0.0
  %2336 = vmatpush.msra.mxu0 %v2308
  %2337 = vmatpush.msra.mxu0 %v2307
  %2338 = vmatmul.f32.gmra.mxu0 %v2314
  %v2339 = vpop.f32.mrf.mxu0
  %v2340 = vadd.f32 0.0, %v2339
  %2341 = vmatmul.f32.gmra.mxu0 %v2317
  %v2342 = vpop.f32.mrf.mxu0
  %v2343 = vadd.f32 0.0, %v2342
  %2344 = vmatmul.f32.gmra.mxu0 %v2320
  %v2345 = vpop.f32.mrf.mxu0
  %v2346 = vadd.f32 0.0, %v2345
  %2347 = vdwg.mxu0
  %v2348 = vadd.f32 %v2174, %v2340
  %v2349 = vadd.f32 %v2175, %v2343
  %v2350 = vadd.f32 %v2176, %v2346
  %v2351 = vpack.c.bf16 %v2308, %v2307
  %s2352 = scalar_lea.vmem [#allocation2], 80
  %v2353 = vld [vmem:[%s2352] sm:$0xff]
  %v2354 = vld [vmem:[%s2352 + $0x8] sm:$0xff]
  %v2356 = vsel %vm1405, %v2351, 0
  %2358 = vmatpush.bf16.msra.mxu0 0
  %2359 = vmatpush.bf16.msra.mxu0 0
  %2360 = vmatpush.bf16.msra.mxu0 0
  %2361 = vmatpush.bf16.msra.mxu0 0
  %2362 = vmatpush.bf16.msra.mxu0 %v1400
  %2363 = vmatpush.bf16.msra.mxu0 %v1399
  %2364 = vmatpush.bf16.msra.mxu0 %v1398
  %2365 = vmatpush.bf16.msra.mxu0 %v1397
  %2366 = vmatmul.bf16.gmra.mxu0 %v2356
  %v2367 = vpop.f32.mrf.mxu0
  %v2368 = vadd.f32 0.0, %v2367
  %v2369 = vpop.f32.mrf.mxu0
  %v2370 = vadd.f32 0.0, %v2369
  %2371 = vdwg.mxu0
  %v2372 = vadd.f32 %v2353, %v2368
  %v2373 = vadd.f32 %v2354, %v2370
  %v2374 = vmul.f32 %v2372, 0.666
  %v2375 = vmul.f32 %v2373, 0.666
  %v2376 = vtanh.pop %v2374
  %v2377 = vtanh.pop %v2375
  %v2378 = vmul.f32 %v2376, 1.7159
  %v2379 = vmul.f32 %v2377, 1.7159
  %v2380 = vpack.c.bf16 %v2379, %v2378
  %2381 = vmatpush.bf16.msra.mxu0 %v1499
  %2382 = vmatpush.bf16.msra.mxu0 %v1497
  %2383 = vmatpush.bf16.msra.mxu0 %v1495
  %2384 = vmatpush.bf16.msra.mxu0 %v1493
  %2385 = vmatpush.bf16.msra.mxu0 %v1491
  %2386 = vmatpush.bf16.msra.mxu0 %v1489
  %2387 = vmatpush.bf16.msra.mxu0 %v1487
  %2388 = vmatpush.bf16.msra.mxu0 %v1485
  %2389 = vmatmul.bf16.gmra.mxu0 %v2380
  %v2390 = vpop.f32.mrf.mxu0
  %v2391 = vadd.f32 %v1433, %v2390
  %v2392 = vpop.f32.mrf.mxu0
  %v2393 = vadd.f32 %v1433, %v2392
  %2394 = vdwg.mxu0
  %2395 = vmatpush.bf16.msra.mxu0 %v1500
  %2396 = vmatpush.bf16.msra.mxu0 %v1498
  %2397 = vmatpush.bf16.msra.mxu0 %v1496
  %2398 = vmatpush.bf16.msra.mxu0 %v1494
  %2399 = vmatpush.bf16.msra.mxu0 %v1492
  %2400 = vmatpush.bf16.msra.mxu0 %v1490
  %2401 = vmatpush.bf16.msra.mxu0 %v1488
  %2402 = vmatpush.bf16.msra.mxu0 %v1486
  %2403 = vmatmul.bf16.gmra.mxu0 %v2380
  %v2404 = vpop.f32.mrf.mxu0
  %v2405 = vadd.f32 %v1434, %v2404
  %v2406 = vpop.f32.mrf.mxu0
  %v2407 = vadd.f32 %v1434, %v2406
  %2408 = vdwg.mxu0
  %v2409 = vtanh.pop %v2391
  %v2410 = vtanh.pop %v2393
  %v2411 = vmul.f32 %v2405, %v1372
  %v2412 = vmul.f32 %v2407, %v1377
  %2415 = vrot.lane.b32.xlu0 %v2405, 64
  %v2416 = vpop.permute.xlu0 %2415
  %2417 = vrot.lane.b32.xlu0 %v2407, 64
  %v2418 = vpop.permute.xlu0 %2417
  %v2421 = vadd.f32 %v2411, %v2416
  %v2422 = vadd.f32 %v2412, %v2418
  %v2423 = vxor.u32 %v2421, 2147483648
  %v2424 = vxor.u32 %v2422, 2147483648
  %v2425 = vmul.f32 %v2423, 1.442695
  %v2426 = vpow.pop %v2425
  %v2427 = vmul.f32 %v2424, 1.442695
  %v2428 = vpow.pop %v2427
  %v2429 = vadd.f32 %v2426, 1.0
  %v2430 = vadd.f32 %v2428, 1.0
  %v2431 = vrcp.pop %v2429
  %v2432 = vmul.f32 %v2429, %v2431
  %v2433 = vsub.f32 1.0, %v2432
  %v2434 = vmul.f32 %v2431, %v2433
  %v2435 = vadd.f32 %v2431, %v2434
  %vm2436 = vweird.f32 %v2429
  %vm2437 = vweird.f32 %v2431
  %vm2438 = vmor %vm2436, %vm2437
  %v2439 = vsel %vm2438, %v2431, %v2435
  %v2440 = vand.u32 2147483647, %v2429
  %vm2441 = vcmp.eq.f32.partialorder %v2440, 8.507059e+37
  %v2442 = vand.u32 %v2429, 2147483648
  %v2443 = vor.u32 1.1754944e-38, %v2442
  %v2444 = vsel %vm2441, %v2443, %v2439
  %v2445 = vmul.f32 1.0, %v2444
  %v2446 = vrcp.pop %v2430
  %v2447 = vmul.f32 %v2430, %v2446
  %v2448 = vsub.f32 1.0, %v2447
  %v2449 = vmul.f32 %v2446, %v2448
  %v2450 = vadd.f32 %v2446, %v2449
  %vm2451 = vweird.f32 %v2430
  %vm2452 = vweird.f32 %v2446
  %vm2453 = vmor %vm2451, %vm2452
  %v2454 = vsel %vm2453, %v2446, %v2450
  %v2455 = vand.u32 2147483647, %v2430
  %vm2456 = vcmp.eq.f32.partialorder %v2455, 8.507059e+37
  %v2457 = vand.u32 %v2430, 2147483648
  %v2458 = vor.u32 1.1754944e-38, %v2457
  %v2459 = vsel %vm2456, %v2458, %v2454
  %v2460 = vmul.f32 1.0, %v2459
  %2463 = vrot.lane.b32.xlu0 %v2409, 64
  %v2464 = vpop.permute.xlu0 %2463
  %2465 = vrot.lane.b32.xlu0 %v2410, 64
  %v2466 = vpop.permute.xlu0 %2465
  %v2469 = vsub.f32 %v2409, %v2464
  %v2470 = vsub.f32 %v2410, %v2466
  %2473 = vrot.lane.b32.xlu0 %v2469, 64
  %v2474 = vpop.permute.xlu0 %2473
  %2475 = vrot.lane.b32.xlu0 %v2470, 64
  %v2476 = vpop.permute.xlu0 %2475
  %v2479 = vmul.f32 %v2445, %v2474
  %v2480 = vmul.f32 %v2460, %v2476
  %v2481 = vadd.f32 %v2409, %v2479
  %v2482 = vadd.f32 %v2410, %v2480
  %s2483 = scalar_lea.vmem %s9, 120
  %v2484 = vld [vmem:[%s2483] sm:$0xff]
  %v2485 = vld [vmem:[%s2483 + $0x8] sm:$0xff]
  %v2486 = vld [vmem:[%s2483 + $0x10] sm:$0xff]
  %v2488 = vsel %vm1758, %v2484, 0
  %v2491 = vsel %vm1758, %v2485, 0
  %v2494 = vsel %vm1758, %v2486, 0
  %2496 = vmatpush.msra.mxu0 0.0
  %2497 = vmatpush.msra.mxu0 0.0
  %2498 = vmatpush.msra.mxu0 0.0
  %2499 = vmatpush.msra.mxu0 0.0
  %2500 = vmatpush.msra.mxu0 0.0
  %2501 = vmatpush.msra.mxu0 0.0
  %2502 = vmatpush.msra.mxu0 0.0
  %2503 = vmatpush.msra.mxu0 0.0
  %2504 = vmatpush.msra.mxu0 0.0
  %2505 = vmatpush.msra.mxu0 0.0
  %2506 = vmatpush.msra.mxu0 0.0
  %2507 = vmatpush.msra.mxu0 0.0
  %2508 = vmatpush.msra.mxu0 0.0
  %2509 = vmatpush.msra.mxu0 0.0
  %2510 = vmatpush.msra.mxu0 %v2482
  %2511 = vmatpush.msra.mxu0 %v2481
  %2512 = vmatmul.f32.gmra.mxu0 %v2488
  %v2513 = vpop.f32.mrf.mxu0
  %v2514 = vadd.f32 0.0, %v2513
  %2515 = vmatmul.f32.gmra.mxu0 %v2491
  %v2516 = vpop.f32.mrf.mxu0
  %v2517 = vadd.f32 0.0, %v2516
  %2518 = vmatmul.f32.gmra.mxu0 %v2494
  %v2519 = vpop.f32.mrf.mxu0
  %v2520 = vadd.f32 0.0, %v2519
  %2521 = vdwg.mxu0
  %v2522 = vadd.f32 %v2348, %v2514
  %v2523 = vadd.f32 %v2349, %v2517
  %v2524 = vadd.f32 %v2350, %v2520
  %v2525 = vpack.c.bf16 %v2482, %v2481
  %s2526 = scalar_lea.vmem [#allocation2], 96
  %v2527 = vld [vmem:[%s2526] sm:$0xff]
  %v2528 = vld [vmem:[%s2526 + $0x8] sm:$0xff]
  %v2530 = vsel %vm1405, %v2525, 0
  %2532 = vmatpush.bf16.msra.mxu0 0
  %2533 = vmatpush.bf16.msra.mxu0 0
  %2534 = vmatpush.bf16.msra.mxu0 0
  %2535 = vmatpush.bf16.msra.mxu0 0
  %2536 = vmatpush.bf16.msra.mxu0 %v1400
  %2537 = vmatpush.bf16.msra.mxu0 %v1399
  %2538 = vmatpush.bf16.msra.mxu0 %v1398
  %2539 = vmatpush.bf16.msra.mxu0 %v1397
  %2540 = vmatmul.bf16.gmra.mxu0 %v2530
  %v2541 = vpop.f32.mrf.mxu0
  %v2542 = vadd.f32 0.0, %v2541
  %v2543 = vpop.f32.mrf.mxu0
  %v2544 = vadd.f32 0.0, %v2543
  %2545 = vdwg.mxu0
  %v2546 = vadd.f32 %v2527, %v2542
  %v2547 = vadd.f32 %v2528, %v2544
  %v2548 = vmul.f32 %v2546, 0.666
  %v2549 = vmul.f32 %v2547, 0.666
  %v2550 = vtanh.pop %v2548
  %v2551 = vtanh.pop %v2549
  %v2552 = vmul.f32 %v2550, 1.7159
  %v2553 = vmul.f32 %v2551, 1.7159
  %v2554 = vpack.c.bf16 %v2553, %v2552
  %2555 = vmatpush.bf16.msra.mxu0 %v1499
  %2556 = vmatpush.bf16.msra.mxu0 %v1497
  %2557 = vmatpush.bf16.msra.mxu0 %v1495
  %2558 = vmatpush.bf16.msra.mxu0 %v1493
  %2559 = vmatpush.bf16.msra.mxu0 %v1491
  %2560 = vmatpush.bf16.msra.mxu0 %v1489
  %2561 = vmatpush.bf16.msra.mxu0 %v1487
  %2562 = vmatpush.bf16.msra.mxu0 %v1485
  %2563 = vmatmul.bf16.gmra.mxu0 %v2554
  %v2564 = vpop.f32.mrf.mxu0
  %v2565 = vadd.f32 %v1433, %v2564
  %v2566 = vpop.f32.mrf.mxu0
  %v2567 = vadd.f32 %v1433, %v2566
  %2568 = vdwg.mxu0
  %2569 = vmatpush.bf16.msra.mxu0 %v1500
  %2570 = vmatpush.bf16.msra.mxu0 %v1498
  %2571 = vmatpush.bf16.msra.mxu0 %v1496
  %2572 = vmatpush.bf16.msra.mxu0 %v1494
  %2573 = vmatpush.bf16.msra.mxu0 %v1492
  %2574 = vmatpush.bf16.msra.mxu0 %v1490
  %2575 = vmatpush.bf16.msra.mxu0 %v1488
  %2576 = vmatpush.bf16.msra.mxu0 %v1486
  %2577 = vmatmul.bf16.gmra.mxu0 %v2554
  %v2578 = vpop.f32.mrf.mxu0
  %v2579 = vadd.f32 %v1434, %v2578
  %v2580 = vpop.f32.mrf.mxu0
  %v2581 = vadd.f32 %v1434, %v2580
  %2582 = vdwg.mxu0
  %v2583 = vtanh.pop %v2565
  %v2584 = vtanh.pop %v2567
  %v2585 = vmul.f32 %v2579, %v1372
  %v2586 = vmul.f32 %v2581, %v1377
  %2589 = vrot.lane.b32.xlu0 %v2579, 64
  %v2590 = vpop.permute.xlu0 %2589
  %2591 = vrot.lane.b32.xlu0 %v2581, 64
  %v2592 = vpop.permute.xlu0 %2591
  %v2595 = vadd.f32 %v2585, %v2590
  %v2596 = vadd.f32 %v2586, %v2592
  %v2597 = vxor.u32 %v2595, 2147483648
  %v2598 = vxor.u32 %v2596, 2147483648
  %v2599 = vmul.f32 %v2597, 1.442695
  %v2600 = vpow.pop %v2599
  %v2601 = vmul.f32 %v2598, 1.442695
  %v2602 = vpow.pop %v2601
  %v2603 = vadd.f32 %v2600, 1.0
  %v2604 = vadd.f32 %v2602, 1.0
  %v2605 = vrcp.pop %v2603
  %v2606 = vmul.f32 %v2603, %v2605
  %v2607 = vsub.f32 1.0, %v2606
  %v2608 = vmul.f32 %v2605, %v2607
  %v2609 = vadd.f32 %v2605, %v2608
  %vm2610 = vweird.f32 %v2603
  %vm2611 = vweird.f32 %v2605
  %vm2612 = vmor %vm2610, %vm2611
  %v2613 = vsel %vm2612, %v2605, %v2609
  %v2614 = vand.u32 2147483647, %v2603
  %vm2615 = vcmp.eq.f32.partialorder %v2614, 8.507059e+37
  %v2616 = vand.u32 %v2603, 2147483648
  %v2617 = vor.u32 1.1754944e-38, %v2616
  %v2618 = vsel %vm2615, %v2617, %v2613
  %v2619 = vmul.f32 1.0, %v2618
  %v2620 = vrcp.pop %v2604
  %v2621 = vmul.f32 %v2604, %v2620
  %v2622 = vsub.f32 1.0, %v2621
  %v2623 = vmul.f32 %v2620, %v2622
  %v2624 = vadd.f32 %v2620, %v2623
  %vm2625 = vweird.f32 %v2604
  %vm2626 = vweird.f32 %v2620
  %vm2627 = vmor %vm2625, %vm2626
  %v2628 = vsel %vm2627, %v2620, %v2624
  %v2629 = vand.u32 2147483647, %v2604
  %vm2630 = vcmp.eq.f32.partialorder %v2629, 8.507059e+37
  %v2631 = vand.u32 %v2604, 2147483648
  %v2632 = vor.u32 1.1754944e-38, %v2631
  %v2633 = vsel %vm2630, %v2632, %v2628
  %v2634 = vmul.f32 1.0, %v2633
  %2637 = vrot.lane.b32.xlu0 %v2583, 64
  %v2638 = vpop.permute.xlu0 %2637
  %2639 = vrot.lane.b32.xlu0 %v2584, 64
  %v2640 = vpop.permute.xlu0 %2639
  %v2643 = vsub.f32 %v2583, %v2638
  %v2644 = vsub.f32 %v2584, %v2640
  %2647 = vrot.lane.b32.xlu0 %v2643, 64
  %v2648 = vpop.permute.xlu0 %2647
  %2649 = vrot.lane.b32.xlu0 %v2644, 64
  %v2650 = vpop.permute.xlu0 %2649
  %v2653 = vmul.f32 %v2619, %v2648
  %v2654 = vmul.f32 %v2634, %v2650
  %v2655 = vadd.f32 %v2583, %v2653
  %v2656 = vadd.f32 %v2584, %v2654
  %s2657 = scalar_lea.vmem %s9, 144
  %v2658 = vld [vmem:[%s2657] sm:$0xff]
  %v2659 = vld [vmem:[%s2657 + $0x8] sm:$0xff]
  %v2660 = vld [vmem:[%s2657 + $0x10] sm:$0xff]
  %v2662 = vsel %vm1758, %v2658, 0
  %v2665 = vsel %vm1758, %v2659, 0
  %v2668 = vsel %vm1758, %v2660, 0
  %2670 = vmatpush.msra.mxu0 0.0
  %2671 = vmatpush.msra.mxu0 0.0
  %2672 = vmatpush.msra.mxu0 0.0
  %2673 = vmatpush.msra.mxu0 0.0
  %2674 = vmatpush.msra.mxu0 0.0
  %2675 = vmatpush.msra.mxu0 0.0
  %2676 = vmatpush.msra.mxu0 0.0
  %2677 = vmatpush.msra.mxu0 0.0
  %2678 = vmatpush.msra.mxu0 0.0
  %2679 = vmatpush.msra.mxu0 0.0
  %2680 = vmatpush.msra.mxu0 0.0
  %2681 = vmatpush.msra.mxu0 0.0
  %2682 = vmatpush.msra.mxu0 0.0
  %2683 = vmatpush.msra.mxu0 0.0
  %2684 = vmatpush.msra.mxu0 %v2656
  %2685 = vmatpush.msra.mxu0 %v2655
  %2686 = vmatmul.f32.gmra.mxu0 %v2662
  %v2687 = vpop.f32.mrf.mxu0
  %v2688 = vadd.f32 0.0, %v2687
  %2689 = vmatmul.f32.gmra.mxu0 %v2665
  %v2690 = vpop.f32.mrf.mxu0
  %v2691 = vadd.f32 0.0, %v2690
  %2692 = vmatmul.f32.gmra.mxu0 %v2668
  %v2693 = vpop.f32.mrf.mxu0
  %v2694 = vadd.f32 0.0, %v2693
  %2695 = vdwg.mxu0
  %v2696 = vadd.f32 %v2522, %v2688
  %v2697 = vadd.f32 %v2523, %v2691
  %v2698 = vadd.f32 %v2524, %v2694
  %v2699 = vpack.c.bf16 %v2656, %v2655
  %s2700 = scalar_lea.vmem [#allocation2], 112
  %v2701 = vld [vmem:[%s2700] sm:$0xff]
  %v2702 = vld [vmem:[%s2700 + $0x8] sm:$0xff]
  %v2704 = vsel %vm1405, %v2699, 0
  %2706 = vmatpush.bf16.msra.mxu0 0
  %2707 = vmatpush.bf16.msra.mxu0 0
  %2708 = vmatpush.bf16.msra.mxu0 0
  %2709 = vmatpush.bf16.msra.mxu0 0
  %2710 = vmatpush.bf16.msra.mxu0 %v1400
  %2711 = vmatpush.bf16.msra.mxu0 %v1399
  %2712 = vmatpush.bf16.msra.mxu0 %v1398
  %2713 = vmatpush.bf16.msra.mxu0 %v1397
  %2714 = vmatmul.bf16.gmra.mxu0 %v2704
  %v2715 = vpop.f32.mrf.mxu0
  %v2716 = vadd.f32 0.0, %v2715
  %v2717 = vpop.f32.mrf.mxu0
  %v2718 = vadd.f32 0.0, %v2717
  %2719 = vdwg.mxu0
  %v2720 = vadd.f32 %v2701, %v2716
  %v2721 = vadd.f32 %v2702, %v2718
  %v2722 = vmul.f32 %v2720, 0.666
  %v2723 = vmul.f32 %v2721, 0.666
  %v2724 = vtanh.pop %v2722
  %v2725 = vtanh.pop %v2723
  %v2726 = vmul.f32 %v2724, 1.7159
  %v2727 = vmul.f32 %v2725, 1.7159
  %v2728 = vpack.c.bf16 %v2727, %v2726
  %2729 = vmatpush.bf16.msra.mxu0 %v1499
  %2730 = vmatpush.bf16.msra.mxu0 %v1497
  %2731 = vmatpush.bf16.msra.mxu0 %v1495
  %2732 = vmatpush.bf16.msra.mxu0 %v1493
  %2733 = vmatpush.bf16.msra.mxu0 %v1491
  %2734 = vmatpush.bf16.msra.mxu0 %v1489
  %2735 = vmatpush.bf16.msra.mxu0 %v1487
  %2736 = vmatpush.bf16.msra.mxu0 %v1485
  %2737 = vmatmul.bf16.gmra.mxu0 %v2728
  %v2738 = vpop.f32.mrf.mxu0
  %v2739 = vadd.f32 %v1433, %v2738
  %v2740 = vpop.f32.mrf.mxu0
  %v2741 = vadd.f32 %v1433, %v2740
  %2742 = vdwg.mxu0
  %2743 = vmatpush.bf16.msra.mxu0 %v1500
  %2744 = vmatpush.bf16.msra.mxu0 %v1498
  %2745 = vmatpush.bf16.msra.mxu0 %v1496
  %2746 = vmatpush.bf16.msra.mxu0 %v1494
  %2747 = vmatpush.bf16.msra.mxu0 %v1492
  %2748 = vmatpush.bf16.msra.mxu0 %v1490
  %2749 = vmatpush.bf16.msra.mxu0 %v1488
  %2750 = vmatpush.bf16.msra.mxu0 %v1486
  %2751 = vmatmul.bf16.gmra.mxu0 %v2728
  %v2752 = vpop.f32.mrf.mxu0
  %v2753 = vadd.f32 %v1434, %v2752
  %v2754 = vpop.f32.mrf.mxu0
  %v2755 = vadd.f32 %v1434, %v2754
  %2756 = vdwg.mxu0
  %v2757 = vtanh.pop %v2739
  %v2758 = vtanh.pop %v2741
  %v2759 = vmul.f32 %v2753, %v1372
  %v2760 = vmul.f32 %v2755, %v1377
  %2763 = vrot.lane.b32.xlu0 %v2753, 64
  %v2764 = vpop.permute.xlu0 %2763
  %2765 = vrot.lane.b32.xlu0 %v2755, 64
  %v2766 = vpop.permute.xlu0 %2765
  %v2769 = vadd.f32 %v2759, %v2764
  %v2770 = vadd.f32 %v2760, %v2766
  %v2771 = vxor.u32 %v2769, 2147483648
  %v2772 = vxor.u32 %v2770, 2147483648
  %v2773 = vmul.f32 %v2771, 1.442695
  %v2774 = vpow.pop %v2773
  %v2775 = vmul.f32 %v2772, 1.442695
  %v2776 = vpow.pop %v2775
  %v2777 = vadd.f32 %v2774, 1.0
  %v2778 = vadd.f32 %v2776, 1.0
  %v2779 = vrcp.pop %v2777
  %v2780 = vmul.f32 %v2777, %v2779
  %v2781 = vsub.f32 1.0, %v2780
  %v2782 = vmul.f32 %v2779, %v2781
  %v2783 = vadd.f32 %v2779, %v2782
  %vm2784 = vweird.f32 %v2777
  %vm2785 = vweird.f32 %v2779
  %vm2786 = vmor %vm2784, %vm2785
  %v2787 = vsel %vm2786, %v2779, %v2783
  %v2788 = vand.u32 2147483647, %v2777
  %vm2789 = vcmp.eq.f32.partialorder %v2788, 8.507059e+37
  %v2790 = vand.u32 %v2777, 2147483648
  %v2791 = vor.u32 1.1754944e-38, %v2790
  %v2792 = vsel %vm2789, %v2791, %v2787
  %v2793 = vmul.f32 1.0, %v2792
  %v2794 = vrcp.pop %v2778
  %v2795 = vmul.f32 %v2778, %v2794
  %v2796 = vsub.f32 1.0, %v2795
  %v2797 = vmul.f32 %v2794, %v2796
  %v2798 = vadd.f32 %v2794, %v2797
  %vm2799 = vweird.f32 %v2778
  %vm2800 = vweird.f32 %v2794
  %vm2801 = vmor %vm2799, %vm2800
  %v2802 = vsel %vm2801, %v2794, %v2798
  %v2803 = vand.u32 2147483647, %v2778
  %vm2804 = vcmp.eq.f32.partialorder %v2803, 8.507059e+37
  %v2805 = vand.u32 %v2778, 2147483648
  %v2806 = vor.u32 1.1754944e-38, %v2805
  %v2807 = vsel %vm2804, %v2806, %v2802
  %v2808 = vmul.f32 1.0, %v2807
  %2811 = vrot.lane.b32.xlu0 %v2757, 64
  %v2812 = vpop.permute.xlu0 %2811
  %2813 = vrot.lane.b32.xlu0 %v2758, 64
  %v2814 = vpop.permute.xlu0 %2813
  %v2817 = vsub.f32 %v2757, %v2812
  %v2818 = vsub.f32 %v2758, %v2814
  %2821 = vrot.lane.b32.xlu0 %v2817, 64
  %v2822 = vpop.permute.xlu0 %2821
  %2823 = vrot.lane.b32.xlu0 %v2818, 64
  %v2824 = vpop.permute.xlu0 %2823
  %v2827 = vmul.f32 %v2793, %v2822
  %v2828 = vmul.f32 %v2808, %v2824
  %v2829 = vadd.f32 %v2757, %v2827
  %v2830 = vadd.f32 %v2758, %v2828
  %s2831 = scalar_lea.vmem %s9, 168
  %v2832 = vld [vmem:[%s2831] sm:$0xff]
  %v2833 = vld [vmem:[%s2831 + $0x8] sm:$0xff]
  %v2834 = vld [vmem:[%s2831 + $0x10] sm:$0xff]
  %v2836 = vsel %vm1758, %v2832, 0
  %v2839 = vsel %vm1758, %v2833, 0
  %v2842 = vsel %vm1758, %v2834, 0
  %2844 = vmatpush.msra.mxu0 0.0
  %2845 = vmatpush.msra.mxu0 0.0
  %2846 = vmatpush.msra.mxu0 0.0
  %2847 = vmatpush.msra.mxu0 0.0
  %2848 = vmatpush.msra.mxu0 0.0
  %2849 = vmatpush.msra.mxu0 0.0
  %2850 = vmatpush.msra.mxu0 0.0
  %2851 = vmatpush.msra.mxu0 0.0
  %2852 = vmatpush.msra.mxu0 0.0
  %2853 = vmatpush.msra.mxu0 0.0
  %2854 = vmatpush.msra.mxu0 0.0
  %2855 = vmatpush.msra.mxu0 0.0
  %2856 = vmatpush.msra.mxu0 0.0
  %2857 = vmatpush.msra.mxu0 0.0
  %2858 = vmatpush.msra.mxu0 %v2830
  %2859 = vmatpush.msra.mxu0 %v2829
  %2860 = vmatmul.f32.gmra.mxu0 %v2836
  %v2861 = vpop.f32.mrf.mxu0
  %v2862 = vadd.f32 0.0, %v2861
  %2863 = vmatmul.f32.gmra.mxu0 %v2839
  %v2864 = vpop.f32.mrf.mxu0
  %v2865 = vadd.f32 0.0, %v2864
  %2866 = vmatmul.f32.gmra.mxu0 %v2842
  %v2867 = vpop.f32.mrf.mxu0
  %v2868 = vadd.f32 0.0, %v2867
  %2869 = vdwg.mxu0
  %v2870 = vadd.f32 %v2696, %v2862
  %v2871 = vadd.f32 %v2697, %v2865
  %v2872 = vadd.f32 %v2698, %v2868
  %v2873 = vpack.c.bf16 %v2830, %v2829
  %s2874 = scalar_lea.vmem [#allocation2], 128
  %v2875 = vld [vmem:[%s2874] sm:$0xff]
  %v2876 = vld [vmem:[%s2874 + $0x8] sm:$0xff]
  %v2878 = vsel %vm1405, %v2873, 0
  %2880 = vmatpush.bf16.msra.mxu0 0
  %2881 = vmatpush.bf16.msra.mxu0 0
  %2882 = vmatpush.bf16.msra.mxu0 0
  %2883 = vmatpush.bf16.msra.mxu0 0
  %2884 = vmatpush.bf16.msra.mxu0 %v1400
  %2885 = vmatpush.bf16.msra.mxu0 %v1399
  %2886 = vmatpush.bf16.msra.mxu0 %v1398
  %2887 = vmatpush.bf16.msra.mxu0 %v1397
  %2888 = vmatmul.bf16.gmra.mxu0 %v2878
  %v2889 = vpop.f32.mrf.mxu0
  %v2890 = vadd.f32 0.0, %v2889
  %v2891 = vpop.f32.mrf.mxu0
  %v2892 = vadd.f32 0.0, %v2891
  %2893 = vdwg.mxu0
  %v2894 = vadd.f32 %v2875, %v2890
  %v2895 = vadd.f32 %v2876, %v2892
  %v2896 = vmul.f32 %v2894, 0.666
  %v2897 = vmul.f32 %v2895, 0.666
  %v2898 = vtanh.pop %v2896
  %v2899 = vtanh.pop %v2897
  %v2900 = vmul.f32 %v2898, 1.7159
  %v2901 = vmul.f32 %v2899, 1.7159
  %v2902 = vpack.c.bf16 %v2901, %v2900
  %2903 = vmatpush.bf16.msra.mxu0 %v1499
  %2904 = vmatpush.bf16.msra.mxu0 %v1497
  %2905 = vmatpush.bf16.msra.mxu0 %v1495
  %2906 = vmatpush.bf16.msra.mxu0 %v1493
  %2907 = vmatpush.bf16.msra.mxu0 %v1491
  %2908 = vmatpush.bf16.msra.mxu0 %v1489
  %2909 = vmatpush.bf16.msra.mxu0 %v1487
  %2910 = vmatpush.bf16.msra.mxu0 %v1485
  %2911 = vmatmul.bf16.gmra.mxu0 %v2902
  %v2912 = vpop.f32.mrf.mxu0
  %v2913 = vadd.f32 %v1433, %v2912
  %v2914 = vpop.f32.mrf.mxu0
  %v2915 = vadd.f32 %v1433, %v2914
  %2916 = vdwg.mxu0
  %2917 = vmatpush.bf16.msra.mxu0 %v1500
  %2918 = vmatpush.bf16.msra.mxu0 %v1498
  %2919 = vmatpush.bf16.msra.mxu0 %v1496
  %2920 = vmatpush.bf16.msra.mxu0 %v1494
  %2921 = vmatpush.bf16.msra.mxu0 %v1492
  %2922 = vmatpush.bf16.msra.mxu0 %v1490
  %2923 = vmatpush.bf16.msra.mxu0 %v1488
  %2924 = vmatpush.bf16.msra.mxu0 %v1486
  %2925 = vmatmul.bf16.gmra.mxu0 %v2902
  %v2926 = vpop.f32.mrf.mxu0
  %v2927 = vadd.f32 %v1434, %v2926
  %v2928 = vpop.f32.mrf.mxu0
  %v2929 = vadd.f32 %v1434, %v2928
  %2930 = vdwg.mxu0
  %v2931 = vtanh.pop %v2913
  %v2932 = vtanh.pop %v2915
  %v2933 = vmul.f32 %v2927, %v1372
  %v2934 = vmul.f32 %v2929, %v1377
  %2937 = vrot.lane.b32.xlu0 %v2927, 64
  %v2938 = vpop.permute.xlu0 %2937
  %2939 = vrot.lane.b32.xlu0 %v2929, 64
  %v2940 = vpop.permute.xlu0 %2939
  %v2943 = vadd.f32 %v2933, %v2938
  %v2944 = vadd.f32 %v2934, %v2940
  %v2945 = vxor.u32 %v2943, 2147483648
  %v2946 = vxor.u32 %v2944, 2147483648
  %v2947 = vmul.f32 %v2945, 1.442695
  %v2948 = vpow.pop %v2947
  %v2949 = vmul.f32 %v2946, 1.442695
  %v2950 = vpow.pop %v2949
  %v2951 = vadd.f32 %v2948, 1.0
  %v2952 = vadd.f32 %v2950, 1.0
  %v2953 = vrcp.pop %v2951
  %v2954 = vmul.f32 %v2951, %v2953
  %v2955 = vsub.f32 1.0, %v2954
  %v2956 = vmul.f32 %v2953, %v2955
  %v2957 = vadd.f32 %v2953, %v2956
  %vm2958 = vweird.f32 %v2951
  %vm2959 = vweird.f32 %v2953
  %vm2960 = vmor %vm2958, %vm2959
  %v2961 = vsel %vm2960, %v2953, %v2957
  %v2962 = vand.u32 2147483647, %v2951
  %vm2963 = vcmp.eq.f32.partialorder %v2962, 8.507059e+37
  %v2964 = vand.u32 %v2951, 2147483648
  %v2965 = vor.u32 1.1754944e-38, %v2964
  %v2966 = vsel %vm2963, %v2965, %v2961
  %v2967 = vmul.f32 1.0, %v2966
  %v2968 = vrcp.pop %v2952
  %v2969 = vmul.f32 %v2952, %v2968
  %v2970 = vsub.f32 1.0, %v2969
  %v2971 = vmul.f32 %v2968, %v2970
  %v2972 = vadd.f32 %v2968, %v2971
  %vm2973 = vweird.f32 %v2952
  %vm2974 = vweird.f32 %v2968
  %vm2975 = vmor %vm2973, %vm2974
  %v2976 = vsel %vm2975, %v2968, %v2972
  %v2977 = vand.u32 2147483647, %v2952
  %vm2978 = vcmp.eq.f32.partialorder %v2977, 8.507059e+37
  %v2979 = vand.u32 %v2952, 2147483648
  %v2980 = vor.u32 1.1754944e-38, %v2979
  %v2981 = vsel %vm2978, %v2980, %v2976
  %v2982 = vmul.f32 1.0, %v2981
  %2985 = vrot.lane.b32.xlu0 %v2931, 64
  %v2986 = vpop.permute.xlu0 %2985
  %2987 = vrot.lane.b32.xlu0 %v2932, 64
  %v2988 = vpop.permute.xlu0 %2987
  %v2991 = vsub.f32 %v2931, %v2986
  %v2992 = vsub.f32 %v2932, %v2988
  %2995 = vrot.lane.b32.xlu0 %v2991, 64
  %v2996 = vpop.permute.xlu0 %2995
  %2997 = vrot.lane.b32.xlu0 %v2992, 64
  %v2998 = vpop.permute.xlu0 %2997
  %v3001 = vmul.f32 %v2967, %v2996
  %v3002 = vmul.f32 %v2982, %v2998
  %v3003 = vadd.f32 %v2931, %v3001
  %v3004 = vadd.f32 %v2932, %v3002
  %s3005 = scalar_lea.vmem %s9, 192
  %v3006 = vld [vmem:[%s3005] sm:$0xff]
  %v3007 = vld [vmem:[%s3005 + $0x8] sm:$0xff]
  %v3008 = vld [vmem:[%s3005 + $0x10] sm:$0xff]
  %v3010 = vsel %vm1758, %v3006, 0
  %v3013 = vsel %vm1758, %v3007, 0
  %v3016 = vsel %vm1758, %v3008, 0
  %3018 = vmatpush.msra.mxu0 0.0
  %3019 = vmatpush.msra.mxu0 0.0
  %3020 = vmatpush.msra.mxu0 0.0
  %3021 = vmatpush.msra.mxu0 0.0
  %3022 = vmatpush.msra.mxu0 0.0
  %3023 = vmatpush.msra.mxu0 0.0
  %3024 = vmatpush.msra.mxu0 0.0
  %3025 = vmatpush.msra.mxu0 0.0
  %3026 = vmatpush.msra.mxu0 0.0
  %3027 = vmatpush.msra.mxu0 0.0
  %3028 = vmatpush.msra.mxu0 0.0
  %3029 = vmatpush.msra.mxu0 0.0
  %3030 = vmatpush.msra.mxu0 0.0
  %3031 = vmatpush.msra.mxu0 0.0
  %3032 = vmatpush.msra.mxu0 %v3004
  %3033 = vmatpush.msra.mxu0 %v3003
  %3034 = vmatmul.f32.gmra.mxu0 %v3010
  %v3035 = vpop.f32.mrf.mxu0
  %v3036 = vadd.f32 0.0, %v3035
  %3037 = vmatmul.f32.gmra.mxu0 %v3013
  %v3038 = vpop.f32.mrf.mxu0
  %v3039 = vadd.f32 0.0, %v3038
  %3040 = vmatmul.f32.gmra.mxu0 %v3016
  %v3041 = vpop.f32.mrf.mxu0
  %v3042 = vadd.f32 0.0, %v3041
  %3043 = vdwg.mxu0
  %v3044 = vadd.f32 %v2870, %v3036
  %v3045 = vadd.f32 %v2871, %v3039
  %v3046 = vadd.f32 %v2872, %v3042
  %v3047 = vpack.c.bf16 %v3004, %v3003
  %s3048 = scalar_lea.vmem [#allocation2], 144
  %v3049 = vld [vmem:[%s3048] sm:$0xff]
  %v3050 = vld [vmem:[%s3048 + $0x8] sm:$0xff]
  %v3052 = vsel %vm1405, %v3047, 0
  %3054 = vmatpush.bf16.msra.mxu0 0
  %3055 = vmatpush.bf16.msra.mxu0 0
  %3056 = vmatpush.bf16.msra.mxu0 0
  %3057 = vmatpush.bf16.msra.mxu0 0
  %3058 = vmatpush.bf16.msra.mxu0 %v1400
  %3059 = vmatpush.bf16.msra.mxu0 %v1399
  %3060 = vmatpush.bf16.msra.mxu0 %v1398
  %3061 = vmatpush.bf16.msra.mxu0 %v1397
  %3062 = vmatmul.bf16.gmra.mxu0 %v3052
  %v3063 = vpop.f32.mrf.mxu0
  %v3064 = vadd.f32 0.0, %v3063
  %v3065 = vpop.f32.mrf.mxu0
  %v3066 = vadd.f32 0.0, %v3065
  %3067 = vdwg.mxu0
  %v3068 = vadd.f32 %v3049, %v3064
  %v3069 = vadd.f32 %v3050, %v3066
  %v3070 = vmul.f32 %v3068, 0.666
  %v3071 = vmul.f32 %v3069, 0.666
  %v3072 = vtanh.pop %v3070
  %v3073 = vtanh.pop %v3071
  %v3074 = vmul.f32 %v3072, 1.7159
  %v3075 = vmul.f32 %v3073, 1.7159
  %v3076 = vpack.c.bf16 %v3075, %v3074
  %3077 = vmatpush.bf16.msra.mxu0 %v1499
  %3078 = vmatpush.bf16.msra.mxu0 %v1497
  %3079 = vmatpush.bf16.msra.mxu0 %v1495
  %3080 = vmatpush.bf16.msra.mxu0 %v1493
  %3081 = vmatpush.bf16.msra.mxu0 %v1491
  %3082 = vmatpush.bf16.msra.mxu0 %v1489
  %3083 = vmatpush.bf16.msra.mxu0 %v1487
  %3084 = vmatpush.bf16.msra.mxu0 %v1485
  %3085 = vmatmul.bf16.gmra.mxu0 %v3076
  %v3086 = vpop.f32.mrf.mxu0
  %v3087 = vadd.f32 %v1433, %v3086
  %v3088 = vpop.f32.mrf.mxu0
  %v3089 = vadd.f32 %v1433, %v3088
  %3090 = vdwg.mxu0
  %3091 = vmatpush.bf16.msra.mxu0 %v1500
  %3092 = vmatpush.bf16.msra.mxu0 %v1498
  %3093 = vmatpush.bf16.msra.mxu0 %v1496
  %3094 = vmatpush.bf16.msra.mxu0 %v1494
  %3095 = vmatpush.bf16.msra.mxu0 %v1492
  %3096 = vmatpush.bf16.msra.mxu0 %v1490
  %3097 = vmatpush.bf16.msra.mxu0 %v1488
  %3098 = vmatpush.bf16.msra.mxu0 %v1486
  %3099 = vmatmul.bf16.gmra.mxu0 %v3076
  %v3100 = vpop.f32.mrf.mxu0
  %v3101 = vadd.f32 %v1434, %v3100
  %v3102 = vpop.f32.mrf.mxu0
  %v3103 = vadd.f32 %v1434, %v3102
  %3104 = vdwg.mxu0
  %v3105 = vtanh.pop %v3087
  %v3106 = vtanh.pop %v3089
  %v3107 = vmul.f32 %v3101, %v1372
  %v3108 = vmul.f32 %v3103, %v1377
  %3111 = vrot.lane.b32.xlu0 %v3101, 64
  %v3112 = vpop.permute.xlu0 %3111
  %3113 = vrot.lane.b32.xlu0 %v3103, 64
  %v3114 = vpop.permute.xlu0 %3113
  %v3117 = vadd.f32 %v3107, %v3112
  %v3118 = vadd.f32 %v3108, %v3114
  %v3119 = vxor.u32 %v3117, 2147483648
  %v3120 = vxor.u32 %v3118, 2147483648
  %v3121 = vmul.f32 %v3119, 1.442695
  %v3122 = vpow.pop %v3121
  %v3123 = vmul.f32 %v3120, 1.442695
  %v3124 = vpow.pop %v3123
  %v3125 = vadd.f32 %v3122, 1.0
  %v3126 = vadd.f32 %v3124, 1.0
  %v3127 = vrcp.pop %v3125
  %v3128 = vmul.f32 %v3125, %v3127
  %v3129 = vsub.f32 1.0, %v3128
  %v3130 = vmul.f32 %v3127, %v3129
  %v3131 = vadd.f32 %v3127, %v3130
  %vm3132 = vweird.f32 %v3125
  %vm3133 = vweird.f32 %v3127
  %vm3134 = vmor %vm3132, %vm3133
  %v3135 = vsel %vm3134, %v3127, %v3131
  %v3136 = vand.u32 2147483647, %v3125
  %vm3137 = vcmp.eq.f32.partialorder %v3136, 8.507059e+37
  %v3138 = vand.u32 %v3125, 2147483648
  %v3139 = vor.u32 1.1754944e-38, %v3138
  %v3140 = vsel %vm3137, %v3139, %v3135
  %v3141 = vmul.f32 1.0, %v3140
  %v3142 = vrcp.pop %v3126
  %v3143 = vmul.f32 %v3126, %v3142
  %v3144 = vsub.f32 1.0, %v3143
  %v3145 = vmul.f32 %v3142, %v3144
  %v3146 = vadd.f32 %v3142, %v3145
  %vm3147 = vweird.f32 %v3126
  %vm3148 = vweird.f32 %v3142
  %vm3149 = vmor %vm3147, %vm3148
  %v3150 = vsel %vm3149, %v3142, %v3146
  %v3151 = vand.u32 2147483647, %v3126
  %vm3152 = vcmp.eq.f32.partialorder %v3151, 8.507059e+37
  %v3153 = vand.u32 %v3126, 2147483648
  %v3154 = vor.u32 1.1754944e-38, %v3153
  %v3155 = vsel %vm3152, %v3154, %v3150
  %v3156 = vmul.f32 1.0, %v3155
  %3159 = vrot.lane.b32.xlu0 %v3105, 64
  %v3160 = vpop.permute.xlu0 %3159
  %3161 = vrot.lane.b32.xlu0 %v3106, 64
  %v3162 = vpop.permute.xlu0 %3161
  %v3165 = vsub.f32 %v3105, %v3160
  %v3166 = vsub.f32 %v3106, %v3162
  %3169 = vrot.lane.b32.xlu0 %v3165, 64
  %v3170 = vpop.permute.xlu0 %3169
  %3171 = vrot.lane.b32.xlu0 %v3166, 64
  %v3172 = vpop.permute.xlu0 %3171
  %v3175 = vmul.f32 %v3141, %v3170
  %v3176 = vmul.f32 %v3156, %v3172
  %v3177 = vadd.f32 %v3105, %v3175
  %v3178 = vadd.f32 %v3106, %v3176
  %s3179 = scalar_lea.vmem %s9, 216
  %v3180 = vld [vmem:[%s3179] sm:$0xff]
  %v3181 = vld [vmem:[%s3179 + $0x8] sm:$0xff]
  %v3182 = vld [vmem:[%s3179 + $0x10] sm:$0xff]
  %v3184 = vsel %vm1758, %v3180, 0
  %v3187 = vsel %vm1758, %v3181, 0
  %v3190 = vsel %vm1758, %v3182, 0
  %3192 = vmatpush.msra.mxu0 0.0
  %3193 = vmatpush.msra.mxu0 0.0
  %3194 = vmatpush.msra.mxu0 0.0
  %3195 = vmatpush.msra.mxu0 0.0
  %3196 = vmatpush.msra.mxu0 0.0
  %3197 = vmatpush.msra.mxu0 0.0
  %3198 = vmatpush.msra.mxu0 0.0
  %3199 = vmatpush.msra.mxu0 0.0
  %3200 = vmatpush.msra.mxu0 0.0
  %3201 = vmatpush.msra.mxu0 0.0
  %3202 = vmatpush.msra.mxu0 0.0
  %3203 = vmatpush.msra.mxu0 0.0
  %3204 = vmatpush.msra.mxu0 0.0
  %3205 = vmatpush.msra.mxu0 0.0
  %3206 = vmatpush.msra.mxu0 %v3178
  %3207 = vmatpush.msra.mxu0 %v3177
  %3208 = vmatmul.f32.gmra.mxu0 %v3184
  %v3209 = vpop.f32.mrf.mxu0
  %v3210 = vadd.f32 0.0, %v3209
  %3211 = vmatmul.f32.gmra.mxu0 %v3187
  %v3212 = vpop.f32.mrf.mxu0
  %v3213 = vadd.f32 0.0, %v3212
  %3214 = vmatmul.f32.gmra.mxu0 %v3190
  %v3215 = vpop.f32.mrf.mxu0
  %v3216 = vadd.f32 0.0, %v3215
  %3217 = vdwg.mxu0
  %v3218 = vadd.f32 %v3044, %v3210
  %v3219 = vadd.f32 %v3045, %v3213
  %v3220 = vadd.f32 %v3046, %v3216
  %v3221 = vpack.c.bf16 %v3178, %v3177
  %s3222 = scalar_lea.vmem [#allocation2], 160
  %v3223 = vld [vmem:[%s3222] sm:$0xff]
  %v3224 = vld [vmem:[%s3222 + $0x8] sm:$0xff]
  %v3226 = vsel %vm1405, %v3221, 0
  %3228 = vmatpush.bf16.msra.mxu0 0
  %3229 = vmatpush.bf16.msra.mxu0 0
  %3230 = vmatpush.bf16.msra.mxu0 0
  %3231 = vmatpush.bf16.msra.mxu0 0
  %3232 = vmatpush.bf16.msra.mxu0 %v1400
  %3233 = vmatpush.bf16.msra.mxu0 %v1399
  %3234 = vmatpush.bf16.msra.mxu0 %v1398
  %3235 = vmatpush.bf16.msra.mxu0 %v1397
  %3236 = vmatmul.bf16.gmra.mxu0 %v3226
  %v3237 = vpop.f32.mrf.mxu0
  %v3238 = vadd.f32 0.0, %v3237
  %v3239 = vpop.f32.mrf.mxu0
  %v3240 = vadd.f32 0.0, %v3239
  %3241 = vdwg.mxu0
  %v3242 = vadd.f32 %v3223, %v3238
  %v3243 = vadd.f32 %v3224, %v3240
  %v3244 = vmul.f32 %v3242, 0.666
  %v3245 = vmul.f32 %v3243, 0.666
  %v3246 = vtanh.pop %v3244
  %v3247 = vtanh.pop %v3245
  %v3248 = vmul.f32 %v3246, 1.7159
  %v3249 = vmul.f32 %v3247, 1.7159
  %v3250 = vpack.c.bf16 %v3249, %v3248
  %3251 = vmatpush.bf16.msra.mxu0 %v1499
  %3252 = vmatpush.bf16.msra.mxu0 %v1497
  %3253 = vmatpush.bf16.msra.mxu0 %v1495
  %3254 = vmatpush.bf16.msra.mxu0 %v1493
  %3255 = vmatpush.bf16.msra.mxu0 %v1491
  %3256 = vmatpush.bf16.msra.mxu0 %v1489
  %3257 = vmatpush.bf16.msra.mxu0 %v1487
  %3258 = vmatpush.bf16.msra.mxu0 %v1485
  %3259 = vmatmul.bf16.gmra.mxu0 %v3250
  %v3260 = vpop.f32.mrf.mxu0
  %v3261 = vadd.f32 %v1433, %v3260
  %v3262 = vpop.f32.mrf.mxu0
  %v3263 = vadd.f32 %v1433, %v3262
  %3264 = vdwg.mxu0
  %3265 = vmatpush.bf16.msra.mxu0 %v1500
  %3266 = vmatpush.bf16.msra.mxu0 %v1498
  %3267 = vmatpush.bf16.msra.mxu0 %v1496
  %3268 = vmatpush.bf16.msra.mxu0 %v1494
  %3269 = vmatpush.bf16.msra.mxu0 %v1492
  %3270 = vmatpush.bf16.msra.mxu0 %v1490
  %3271 = vmatpush.bf16.msra.mxu0 %v1488
  %3272 = vmatpush.bf16.msra.mxu0 %v1486
  %3273 = vmatmul.bf16.gmra.mxu0 %v3250
  %v3274 = vpop.f32.mrf.mxu0
  %v3275 = vadd.f32 %v1434, %v3274
  %v3276 = vpop.f32.mrf.mxu0
  %v3277 = vadd.f32 %v1434, %v3276
  %3278 = vdwg.mxu0
  %v3279 = vtanh.pop %v3261
  %v3280 = vtanh.pop %v3263
  %v3281 = vmul.f32 %v3275, %v1372
  %v3282 = vmul.f32 %v3277, %v1377
  %3285 = vrot.lane.b32.xlu0 %v3275, 64
  %v3286 = vpop.permute.xlu0 %3285
  %3287 = vrot.lane.b32.xlu0 %v3277, 64
  %v3288 = vpop.permute.xlu0 %3287
  %v3291 = vadd.f32 %v3281, %v3286
  %v3292 = vadd.f32 %v3282, %v3288
  %v3293 = vxor.u32 %v3291, 2147483648
  %v3294 = vxor.u32 %v3292, 2147483648
  %v3295 = vmul.f32 %v3293, 1.442695
  %v3296 = vpow.pop %v3295
  %v3297 = vmul.f32 %v3294, 1.442695
  %v3298 = vpow.pop %v3297
  %v3299 = vadd.f32 %v3296, 1.0
  %v3300 = vadd.f32 %v3298, 1.0
  %v3301 = vrcp.pop %v3299
  %v3302 = vmul.f32 %v3299, %v3301
  %v3303 = vsub.f32 1.0, %v3302
  %v3304 = vmul.f32 %v3301, %v3303
  %v3305 = vadd.f32 %v3301, %v3304
  %vm3306 = vweird.f32 %v3299
  %vm3307 = vweird.f32 %v3301
  %vm3308 = vmor %vm3306, %vm3307
  %v3309 = vsel %vm3308, %v3301, %v3305
  %v3310 = vand.u32 2147483647, %v3299
  %vm3311 = vcmp.eq.f32.partialorder %v3310, 8.507059e+37
  %v3312 = vand.u32 %v3299, 2147483648
  %v3313 = vor.u32 1.1754944e-38, %v3312
  %v3314 = vsel %vm3311, %v3313, %v3309
  %v3315 = vmul.f32 1.0, %v3314
  %v3316 = vrcp.pop %v3300
  %v3317 = vmul.f32 %v3300, %v3316
  %v3318 = vsub.f32 1.0, %v3317
  %v3319 = vmul.f32 %v3316, %v3318
  %v3320 = vadd.f32 %v3316, %v3319
  %vm3321 = vweird.f32 %v3300
  %vm3322 = vweird.f32 %v3316
  %vm3323 = vmor %vm3321, %vm3322
  %v3324 = vsel %vm3323, %v3316, %v3320
  %v3325 = vand.u32 2147483647, %v3300
  %vm3326 = vcmp.eq.f32.partialorder %v3325, 8.507059e+37
  %v3327 = vand.u32 %v3300, 2147483648
  %v3328 = vor.u32 1.1754944e-38, %v3327
  %v3329 = vsel %vm3326, %v3328, %v3324
  %v3330 = vmul.f32 1.0, %v3329
  %3333 = vrot.lane.b32.xlu0 %v3279, 64
  %v3334 = vpop.permute.xlu0 %3333
  %3335 = vrot.lane.b32.xlu0 %v3280, 64
  %v3336 = vpop.permute.xlu0 %3335
  %v3339 = vsub.f32 %v3279, %v3334
  %v3340 = vsub.f32 %v3280, %v3336
  %3343 = vrot.lane.b32.xlu0 %v3339, 64
  %v3344 = vpop.permute.xlu0 %3343
  %3345 = vrot.lane.b32.xlu0 %v3340, 64
  %v3346 = vpop.permute.xlu0 %3345
  %v3349 = vmul.f32 %v3315, %v3344
  %v3350 = vmul.f32 %v3330, %v3346
  %v3351 = vadd.f32 %v3279, %v3349
  %v3352 = vadd.f32 %v3280, %v3350
  %s3353 = scalar_lea.vmem %s9, 240
  %v3354 = vld [vmem:[%s3353] sm:$0xff]
  %v3355 = vld [vmem:[%s3353 + $0x8] sm:$0xff]
  %v3356 = vld [vmem:[%s3353 + $0x10] sm:$0xff]
  %v3358 = vsel %vm1758, %v3354, 0
  %v3361 = vsel %vm1758, %v3355, 0
  %v3364 = vsel %vm1758, %v3356, 0
  %3366 = vmatpush.msra.mxu0 0.0
  %3367 = vmatpush.msra.mxu0 0.0
  %3368 = vmatpush.msra.mxu0 0.0
  %3369 = vmatpush.msra.mxu0 0.0
  %3370 = vmatpush.msra.mxu0 0.0
  %3371 = vmatpush.msra.mxu0 0.0
  %3372 = vmatpush.msra.mxu0 0.0
  %3373 = vmatpush.msra.mxu0 0.0
  %3374 = vmatpush.msra.mxu0 0.0
  %3375 = vmatpush.msra.mxu0 0.0
  %3376 = vmatpush.msra.mxu0 0.0
  %3377 = vmatpush.msra.mxu0 0.0
  %3378 = vmatpush.msra.mxu0 0.0
  %3379 = vmatpush.msra.mxu0 0.0
  %3380 = vmatpush.msra.mxu0 %v3352
  %3381 = vmatpush.msra.mxu0 %v3351
  %3382 = vmatmul.f32.gmra.mxu0 %v3358
  %v3383 = vpop.f32.mrf.mxu0
  %v3384 = vadd.f32 0.0, %v3383
  %3385 = vmatmul.f32.gmra.mxu0 %v3361
  %v3386 = vpop.f32.mrf.mxu0
  %v3387 = vadd.f32 0.0, %v3386
  %3388 = vmatmul.f32.gmra.mxu0 %v3364
  %v3389 = vpop.f32.mrf.mxu0
  %v3390 = vadd.f32 0.0, %v3389
  %3391 = vdwg.mxu0
  %v3392 = vadd.f32 %v3218, %v3384
  %v3393 = vadd.f32 %v3219, %v3387
  %v3394 = vadd.f32 %v3220, %v3390
  %v3395 = vpack.c.bf16 %v3352, %v3351
  %s3396 = scalar_lea.vmem [#allocation2], 176
  %v3397 = vld [vmem:[%s3396] sm:$0xff]
  %v3398 = vld [vmem:[%s3396 + $0x8] sm:$0xff]
  %v3400 = vsel %vm1405, %v3395, 0
  %3402 = vmatpush.bf16.msra.mxu0 0
  %3403 = vmatpush.bf16.msra.mxu0 0
  %3404 = vmatpush.bf16.msra.mxu0 0
  %3405 = vmatpush.bf16.msra.mxu0 0
  %3406 = vmatpush.bf16.msra.mxu0 %v1400
  %3407 = vmatpush.bf16.msra.mxu0 %v1399
  %3408 = vmatpush.bf16.msra.mxu0 %v1398
  %3409 = vmatpush.bf16.msra.mxu0 %v1397
  %3410 = vmatmul.bf16.gmra.mxu0 %v3400
  %v3411 = vpop.f32.mrf.mxu0
  %v3412 = vadd.f32 0.0, %v3411
  %v3413 = vpop.f32.mrf.mxu0
  %v3414 = vadd.f32 0.0, %v3413
  %3415 = vdwg.mxu0
  %v3416 = vadd.f32 %v3397, %v3412
  %v3417 = vadd.f32 %v3398, %v3414
  %v3418 = vmul.f32 %v3416, 0.666
  %v3419 = vmul.f32 %v3417, 0.666
  %v3420 = vtanh.pop %v3418
  %v3421 = vtanh.pop %v3419
  %v3422 = vmul.f32 %v3420, 1.7159
  %v3423 = vmul.f32 %v3421, 1.7159
  %v3424 = vpack.c.bf16 %v3423, %v3422
  %3425 = vmatpush.bf16.msra.mxu0 %v1499
  %3426 = vmatpush.bf16.msra.mxu0 %v1497
  %3427 = vmatpush.bf16.msra.mxu0 %v1495
  %3428 = vmatpush.bf16.msra.mxu0 %v1493
  %3429 = vmatpush.bf16.msra.mxu0 %v1491
  %3430 = vmatpush.bf16.msra.mxu0 %v1489
  %3431 = vmatpush.bf16.msra.mxu0 %v1487
  %3432 = vmatpush.bf16.msra.mxu0 %v1485
  %3433 = vmatmul.bf16.gmra.mxu0 %v3424
  %v3434 = vpop.f32.mrf.mxu0
  %v3435 = vadd.f32 %v1433, %v3434
  %v3436 = vpop.f32.mrf.mxu0
  %v3437 = vadd.f32 %v1433, %v3436
  %3438 = vdwg.mxu0
  %3439 = vmatpush.bf16.msra.mxu0 %v1500
  %3440 = vmatpush.bf16.msra.mxu0 %v1498
  %3441 = vmatpush.bf16.msra.mxu0 %v1496
  %3442 = vmatpush.bf16.msra.mxu0 %v1494
  %3443 = vmatpush.bf16.msra.mxu0 %v1492
  %3444 = vmatpush.bf16.msra.mxu0 %v1490
  %3445 = vmatpush.bf16.msra.mxu0 %v1488
  %3446 = vmatpush.bf16.msra.mxu0 %v1486
  %3447 = vmatmul.bf16.gmra.mxu0 %v3424
  %v3448 = vpop.f32.mrf.mxu0
  %v3449 = vadd.f32 %v1434, %v3448
  %v3450 = vpop.f32.mrf.mxu0
  %v3451 = vadd.f32 %v1434, %v3450
  %3452 = vdwg.mxu0
  %v3453 = vtanh.pop %v3435
  %v3454 = vtanh.pop %v3437
  %v3455 = vmul.f32 %v3449, %v1372
  %v3456 = vmul.f32 %v3451, %v1377
  %3459 = vrot.lane.b32.xlu0 %v3449, 64
  %v3460 = vpop.permute.xlu0 %3459
  %3461 = vrot.lane.b32.xlu0 %v3451, 64
  %v3462 = vpop.permute.xlu0 %3461
  %v3465 = vadd.f32 %v3455, %v3460
  %v3466 = vadd.f32 %v3456, %v3462
  %v3467 = vxor.u32 %v3465, 2147483648
  %v3468 = vxor.u32 %v3466, 2147483648
  %v3469 = vmul.f32 %v3467, 1.442695
  %v3470 = vpow.pop %v3469
  %v3471 = vmul.f32 %v3468, 1.442695
  %v3472 = vpow.pop %v3471
  %v3473 = vadd.f32 %v3470, 1.0
  %v3474 = vadd.f32 %v3472, 1.0
  %v3475 = vrcp.pop %v3473
  %v3476 = vmul.f32 %v3473, %v3475
  %v3477 = vsub.f32 1.0, %v3476
  %v3478 = vmul.f32 %v3475, %v3477
  %v3479 = vadd.f32 %v3475, %v3478
  %vm3480 = vweird.f32 %v3473
  %vm3481 = vweird.f32 %v3475
  %vm3482 = vmor %vm3480, %vm3481
  %v3483 = vsel %vm3482, %v3475, %v3479
  %v3484 = vand.u32 2147483647, %v3473
  %vm3485 = vcmp.eq.f32.partialorder %v3484, 8.507059e+37
  %v3486 = vand.u32 %v3473, 2147483648
  %v3487 = vor.u32 1.1754944e-38, %v3486
  %v3488 = vsel %vm3485, %v3487, %v3483
  %v3489 = vmul.f32 1.0, %v3488
  %v3490 = vrcp.pop %v3474
  %v3491 = vmul.f32 %v3474, %v3490
  %v3492 = vsub.f32 1.0, %v3491
  %v3493 = vmul.f32 %v3490, %v3492
  %v3494 = vadd.f32 %v3490, %v3493
  %vm3495 = vweird.f32 %v3474
  %vm3496 = vweird.f32 %v3490
  %vm3497 = vmor %vm3495, %vm3496
  %v3498 = vsel %vm3497, %v3490, %v3494
  %v3499 = vand.u32 2147483647, %v3474
  %vm3500 = vcmp.eq.f32.partialorder %v3499, 8.507059e+37
  %v3501 = vand.u32 %v3474, 2147483648
  %v3502 = vor.u32 1.1754944e-38, %v3501
  %v3503 = vsel %vm3500, %v3502, %v3498
  %v3504 = vmul.f32 1.0, %v3503
  %3507 = vrot.lane.b32.xlu0 %v3453, 64
  %v3508 = vpop.permute.xlu0 %3507
  %3509 = vrot.lane.b32.xlu0 %v3454, 64
  %v3510 = vpop.permute.xlu0 %3509
  %v3513 = vsub.f32 %v3453, %v3508
  %v3514 = vsub.f32 %v3454, %v3510
  %3517 = vrot.lane.b32.xlu0 %v3513, 64
  %v3518 = vpop.permute.xlu0 %3517
  %3519 = vrot.lane.b32.xlu0 %v3514, 64
  %v3520 = vpop.permute.xlu0 %3519
  %v3523 = vmul.f32 %v3489, %v3518
  %v3524 = vmul.f32 %v3504, %v3520
  %v3525 = vadd.f32 %v3453, %v3523
  %v3526 = vadd.f32 %v3454, %v3524
  %s3527 = scalar_lea.vmem %s9, 264
  %v3528 = vld [vmem:[%s3527] sm:$0xff]
  %v3529 = vld [vmem:[%s3527 + $0x8] sm:$0xff]
  %v3530 = vld [vmem:[%s3527 + $0x10] sm:$0xff]
  %v3532 = vsel %vm1758, %v3528, 0
  %v3535 = vsel %vm1758, %v3529, 0
  %v3538 = vsel %vm1758, %v3530, 0
  %3540 = vmatpush.msra.mxu0 0.0
  %3541 = vmatpush.msra.mxu0 0.0
  %3542 = vmatpush.msra.mxu0 0.0
  %3543 = vmatpush.msra.mxu0 0.0
  %3544 = vmatpush.msra.mxu0 0.0
  %3545 = vmatpush.msra.mxu0 0.0
  %3546 = vmatpush.msra.mxu0 0.0
  %3547 = vmatpush.msra.mxu0 0.0
  %3548 = vmatpush.msra.mxu0 0.0
  %3549 = vmatpush.msra.mxu0 0.0
  %3550 = vmatpush.msra.mxu0 0.0
  %3551 = vmatpush.msra.mxu0 0.0
  %3552 = vmatpush.msra.mxu0 0.0
  %3553 = vmatpush.msra.mxu0 0.0
  %3554 = vmatpush.msra.mxu0 %v3526
  %3555 = vmatpush.msra.mxu0 %v3525
  %3556 = vmatmul.f32.gmra.mxu0 %v3532
  %v3557 = vpop.f32.mrf.mxu0
  %v3558 = vadd.f32 0.0, %v3557
  %3559 = vmatmul.f32.gmra.mxu0 %v3535
  %v3560 = vpop.f32.mrf.mxu0
  %v3561 = vadd.f32 0.0, %v3560
  %3562 = vmatmul.f32.gmra.mxu0 %v3538
  %v3563 = vpop.f32.mrf.mxu0
  %v3564 = vadd.f32 0.0, %v3563
  %3565 = vdwg.mxu0
  %v3566 = vadd.f32 %v3392, %v3558
  %v3567 = vadd.f32 %v3393, %v3561
  %v3568 = vadd.f32 %v3394, %v3564
  %v3569 = vpack.c.bf16 %v3526, %v3525
  %s3570 = scalar_lea.vmem [#allocation2], 192
  %v3571 = vld [vmem:[%s3570] sm:$0xff]
  %v3572 = vld [vmem:[%s3570 + $0x8] sm:$0xff]
  %v3574 = vsel %vm1405, %v3569, 0
  %3576 = vmatpush.bf16.msra.mxu0 0
  %3577 = vmatpush.bf16.msra.mxu0 0
  %3578 = vmatpush.bf16.msra.mxu0 0
  %3579 = vmatpush.bf16.msra.mxu0 0
  %3580 = vmatpush.bf16.msra.mxu0 %v1400
  %3581 = vmatpush.bf16.msra.mxu0 %v1399
  %3582 = vmatpush.bf16.msra.mxu0 %v1398
  %3583 = vmatpush.bf16.msra.mxu0 %v1397
  %3584 = vmatmul.bf16.gmra.mxu0 %v3574
  %v3585 = vpop.f32.mrf.mxu0
  %v3586 = vadd.f32 0.0, %v3585
  %v3587 = vpop.f32.mrf.mxu0
  %v3588 = vadd.f32 0.0, %v3587
  %3589 = vdwg.mxu0
  %v3590 = vadd.f32 %v3571, %v3586
  %v3591 = vadd.f32 %v3572, %v3588
  %v3592 = vmul.f32 %v3590, 0.666
  %v3593 = vmul.f32 %v3591, 0.666
  %v3594 = vtanh.pop %v3592
  %v3595 = vtanh.pop %v3593
  %v3596 = vmul.f32 %v3594, 1.7159
  %v3597 = vmul.f32 %v3595, 1.7159
  %v3598 = vpack.c.bf16 %v3597, %v3596
  %3599 = vmatpush.bf16.msra.mxu0 %v1499
  %3600 = vmatpush.bf16.msra.mxu0 %v1497
  %3601 = vmatpush.bf16.msra.mxu0 %v1495
  %3602 = vmatpush.bf16.msra.mxu0 %v1493
  %3603 = vmatpush.bf16.msra.mxu0 %v1491
  %3604 = vmatpush.bf16.msra.mxu0 %v1489
  %3605 = vmatpush.bf16.msra.mxu0 %v1487
  %3606 = vmatpush.bf16.msra.mxu0 %v1485
  %3607 = vmatmul.bf16.gmra.mxu0 %v3598
  %v3608 = vpop.f32.mrf.mxu0
  %v3609 = vadd.f32 %v1433, %v3608
  %v3610 = vpop.f32.mrf.mxu0
  %v3611 = vadd.f32 %v1433, %v3610
  %3612 = vdwg.mxu0
  %3613 = vmatpush.bf16.msra.mxu0 %v1500
  %3614 = vmatpush.bf16.msra.mxu0 %v1498
  %3615 = vmatpush.bf16.msra.mxu0 %v1496
  %3616 = vmatpush.bf16.msra.mxu0 %v1494
  %3617 = vmatpush.bf16.msra.mxu0 %v1492
  %3618 = vmatpush.bf16.msra.mxu0 %v1490
  %3619 = vmatpush.bf16.msra.mxu0 %v1488
  %3620 = vmatpush.bf16.msra.mxu0 %v1486
  %3621 = vmatmul.bf16.gmra.mxu0 %v3598
  %v3622 = vpop.f32.mrf.mxu0
  %v3623 = vadd.f32 %v1434, %v3622
  %v3624 = vpop.f32.mrf.mxu0
  %v3625 = vadd.f32 %v1434, %v3624
  %3626 = vdwg.mxu0
  %v3627 = vtanh.pop %v3609
  %v3628 = vtanh.pop %v3611
  %v3629 = vmul.f32 %v3623, %v1372
  %v3630 = vmul.f32 %v3625, %v1377
  %3633 = vrot.lane.b32.xlu0 %v3623, 64
  %v3634 = vpop.permute.xlu0 %3633
  %3635 = vrot.lane.b32.xlu0 %v3625, 64
  %v3636 = vpop.permute.xlu0 %3635
  %v3639 = vadd.f32 %v3629, %v3634
  %v3640 = vadd.f32 %v3630, %v3636
  %v3641 = vxor.u32 %v3639, 2147483648
  %v3642 = vxor.u32 %v3640, 2147483648
  %v3643 = vmul.f32 %v3641, 1.442695
  %v3644 = vpow.pop %v3643
  %v3645 = vmul.f32 %v3642, 1.442695
  %v3646 = vpow.pop %v3645
  %v3647 = vadd.f32 %v3644, 1.0
  %v3648 = vadd.f32 %v3646, 1.0
  %v3649 = vrcp.pop %v3647
  %v3650 = vmul.f32 %v3647, %v3649
  %v3651 = vsub.f32 1.0, %v3650
  %v3652 = vmul.f32 %v3649, %v3651
  %v3653 = vadd.f32 %v3649, %v3652
  %vm3654 = vweird.f32 %v3647
  %vm3655 = vweird.f32 %v3649
  %vm3656 = vmor %vm3654, %vm3655
  %v3657 = vsel %vm3656, %v3649, %v3653
  %v3658 = vand.u32 2147483647, %v3647
  %vm3659 = vcmp.eq.f32.partialorder %v3658, 8.507059e+37
  %v3660 = vand.u32 %v3647, 2147483648
  %v3661 = vor.u32 1.1754944e-38, %v3660
  %v3662 = vsel %vm3659, %v3661, %v3657
  %v3663 = vmul.f32 1.0, %v3662
  %v3664 = vrcp.pop %v3648
  %v3665 = vmul.f32 %v3648, %v3664
  %v3666 = vsub.f32 1.0, %v3665
  %v3667 = vmul.f32 %v3664, %v3666
  %v3668 = vadd.f32 %v3664, %v3667
  %vm3669 = vweird.f32 %v3648
  %vm3670 = vweird.f32 %v3664
  %vm3671 = vmor %vm3669, %vm3670
  %v3672 = vsel %vm3671, %v3664, %v3668
  %v3673 = vand.u32 2147483647, %v3648
  %vm3674 = vcmp.eq.f32.partialorder %v3673, 8.507059e+37
  %v3675 = vand.u32 %v3648, 2147483648
  %v3676 = vor.u32 1.1754944e-38, %v3675
  %v3677 = vsel %vm3674, %v3676, %v3672
  %v3678 = vmul.f32 1.0, %v3677
  %3681 = vrot.lane.b32.xlu0 %v3627, 64
  %v3682 = vpop.permute.xlu0 %3681
  %3683 = vrot.lane.b32.xlu0 %v3628, 64
  %v3684 = vpop.permute.xlu0 %3683
  %v3687 = vsub.f32 %v3627, %v3682
  %v3688 = vsub.f32 %v3628, %v3684
  %3691 = vrot.lane.b32.xlu0 %v3687, 64
  %v3692 = vpop.permute.xlu0 %3691
  %3693 = vrot.lane.b32.xlu0 %v3688, 64
  %v3694 = vpop.permute.xlu0 %3693
  %v3697 = vmul.f32 %v3663, %v3692
  %v3698 = vmul.f32 %v3678, %v3694
  %v3699 = vadd.f32 %v3627, %v3697
  %v3700 = vadd.f32 %v3628, %v3698
  %s3701 = scalar_lea.vmem %s9, 288
  %v3702 = vld [vmem:[%s3701] sm:$0xff]
  %v3703 = vld [vmem:[%s3701 + $0x8] sm:$0xff]
  %v3704 = vld [vmem:[%s3701 + $0x10] sm:$0xff]
  %v3706 = vsel %vm1758, %v3702, 0
  %v3709 = vsel %vm1758, %v3703, 0
  %v3712 = vsel %vm1758, %v3704, 0
  %3714 = vmatpush.msra.mxu0 0.0
  %3715 = vmatpush.msra.mxu0 0.0
  %3716 = vmatpush.msra.mxu0 0.0
  %3717 = vmatpush.msra.mxu0 0.0
  %3718 = vmatpush.msra.mxu0 0.0
  %3719 = vmatpush.msra.mxu0 0.0
  %3720 = vmatpush.msra.mxu0 0.0
  %3721 = vmatpush.msra.mxu0 0.0
  %3722 = vmatpush.msra.mxu0 0.0
  %3723 = vmatpush.msra.mxu0 0.0
  %3724 = vmatpush.msra.mxu0 0.0
  %3725 = vmatpush.msra.mxu0 0.0
  %3726 = vmatpush.msra.mxu0 0.0
  %3727 = vmatpush.msra.mxu0 0.0
  %3728 = vmatpush.msra.mxu0 %v3700
  %3729 = vmatpush.msra.mxu0 %v3699
  %3730 = vmatmul.f32.gmra.mxu0 %v3706
  %v3731 = vpop.f32.mrf.mxu0
  %v3732 = vadd.f32 0.0, %v3731
  %3733 = vmatmul.f32.gmra.mxu0 %v3709
  %v3734 = vpop.f32.mrf.mxu0
  %v3735 = vadd.f32 0.0, %v3734
  %3736 = vmatmul.f32.gmra.mxu0 %v3712
  %v3737 = vpop.f32.mrf.mxu0
  %v3738 = vadd.f32 0.0, %v3737
  %3739 = vdwg.mxu0
  %v3740 = vadd.f32 %v3566, %v3732
  %v3741 = vadd.f32 %v3567, %v3735
  %v3742 = vadd.f32 %v3568, %v3738
  %v3743 = vpack.c.bf16 %v3700, %v3699
  %s3744 = scalar_lea.vmem [#allocation2], 208
  %v3745 = vld [vmem:[%s3744] sm:$0xff]
  %v3746 = vld [vmem:[%s3744 + $0x8] sm:$0xff]
  %v3748 = vsel %vm1405, %v3743, 0
  %3750 = vmatpush.bf16.msra.mxu0 0
  %3751 = vmatpush.bf16.msra.mxu0 0
  %3752 = vmatpush.bf16.msra.mxu0 0
  %3753 = vmatpush.bf16.msra.mxu0 0
  %3754 = vmatpush.bf16.msra.mxu0 %v1400
  %3755 = vmatpush.bf16.msra.mxu0 %v1399
  %3756 = vmatpush.bf16.msra.mxu0 %v1398
  %3757 = vmatpush.bf16.msra.mxu0 %v1397
  %3758 = vmatmul.bf16.gmra.mxu0 %v3748
  %v3759 = vpop.f32.mrf.mxu0
  %v3760 = vadd.f32 0.0, %v3759
  %v3761 = vpop.f32.mrf.mxu0
  %v3762 = vadd.f32 0.0, %v3761
  %3763 = vdwg.mxu0
  %v3764 = vadd.f32 %v3745, %v3760
  %v3765 = vadd.f32 %v3746, %v3762
  %v3766 = vmul.f32 %v3764, 0.666
  %v3767 = vmul.f32 %v3765, 0.666
  %v3768 = vtanh.pop %v3766
  %v3769 = vtanh.pop %v3767
  %v3770 = vmul.f32 %v3768, 1.7159
  %v3771 = vmul.f32 %v3769, 1.7159
  %v3772 = vpack.c.bf16 %v3771, %v3770
  %3773 = vmatpush.bf16.msra.mxu0 %v1499
  %3774 = vmatpush.bf16.msra.mxu0 %v1497
  %3775 = vmatpush.bf16.msra.mxu0 %v1495
  %3776 = vmatpush.bf16.msra.mxu0 %v1493
  %3777 = vmatpush.bf16.msra.mxu0 %v1491
  %3778 = vmatpush.bf16.msra.mxu0 %v1489
  %3779 = vmatpush.bf16.msra.mxu0 %v1487
  %3780 = vmatpush.bf16.msra.mxu0 %v1485
  %3781 = vmatmul.bf16.gmra.mxu0 %v3772
  %v3782 = vpop.f32.mrf.mxu0
  %v3783 = vadd.f32 %v1433, %v3782
  %v3784 = vpop.f32.mrf.mxu0
  %v3785 = vadd.f32 %v1433, %v3784
  %3786 = vdwg.mxu0
  %3787 = vmatpush.bf16.msra.mxu0 %v1500
  %3788 = vmatpush.bf16.msra.mxu0 %v1498
  %3789 = vmatpush.bf16.msra.mxu0 %v1496
  %3790 = vmatpush.bf16.msra.mxu0 %v1494
  %3791 = vmatpush.bf16.msra.mxu0 %v1492
  %3792 = vmatpush.bf16.msra.mxu0 %v1490
  %3793 = vmatpush.bf16.msra.mxu0 %v1488
  %3794 = vmatpush.bf16.msra.mxu0 %v1486
  %3795 = vmatmul.bf16.gmra.mxu0 %v3772
  %v3796 = vpop.f32.mrf.mxu0
  %v3797 = vadd.f32 %v1434, %v3796
  %v3798 = vpop.f32.mrf.mxu0
  %v3799 = vadd.f32 %v1434, %v3798
  %3800 = vdwg.mxu0
  %v3801 = vtanh.pop %v3783
  %v3802 = vtanh.pop %v3785
  %v3803 = vmul.f32 %v3797, %v1372
  %v3804 = vmul.f32 %v3799, %v1377
  %3807 = vrot.lane.b32.xlu0 %v3797, 64
  %v3808 = vpop.permute.xlu0 %3807
  %3809 = vrot.lane.b32.xlu0 %v3799, 64
  %v3810 = vpop.permute.xlu0 %3809
  %v3813 = vadd.f32 %v3803, %v3808
  %v3814 = vadd.f32 %v3804, %v3810
  %v3815 = vxor.u32 %v3813, 2147483648
  %v3816 = vxor.u32 %v3814, 2147483648
  %v3817 = vmul.f32 %v3815, 1.442695
  %v3818 = vpow.pop %v3817
  %v3819 = vmul.f32 %v3816, 1.442695
  %v3820 = vpow.pop %v3819
  %v3821 = vadd.f32 %v3818, 1.0
  %v3822 = vadd.f32 %v3820, 1.0
  %v3823 = vrcp.pop %v3821
  %v3824 = vmul.f32 %v3821, %v3823
  %v3825 = vsub.f32 1.0, %v3824
  %v3826 = vmul.f32 %v3823, %v3825
  %v3827 = vadd.f32 %v3823, %v3826
  %vm3828 = vweird.f32 %v3821
  %vm3829 = vweird.f32 %v3823
  %vm3830 = vmor %vm3828, %vm3829
  %v3831 = vsel %vm3830, %v3823, %v3827
  %v3832 = vand.u32 2147483647, %v3821
  %vm3833 = vcmp.eq.f32.partialorder %v3832, 8.507059e+37
  %v3834 = vand.u32 %v3821, 2147483648
  %v3835 = vor.u32 1.1754944e-38, %v3834
  %v3836 = vsel %vm3833, %v3835, %v3831
  %v3837 = vmul.f32 1.0, %v3836
  %v3838 = vrcp.pop %v3822
  %v3839 = vmul.f32 %v3822, %v3838
  %v3840 = vsub.f32 1.0, %v3839
  %v3841 = vmul.f32 %v3838, %v3840
  %v3842 = vadd.f32 %v3838, %v3841
  %vm3843 = vweird.f32 %v3822
  %vm3844 = vweird.f32 %v3838
  %vm3845 = vmor %vm3843, %vm3844
  %v3846 = vsel %vm3845, %v3838, %v3842
  %v3847 = vand.u32 2147483647, %v3822
  %vm3848 = vcmp.eq.f32.partialorder %v3847, 8.507059e+37
  %v3849 = vand.u32 %v3822, 2147483648
  %v3850 = vor.u32 1.1754944e-38, %v3849
  %v3851 = vsel %vm3848, %v3850, %v3846
  %v3852 = vmul.f32 1.0, %v3851
  %3855 = vrot.lane.b32.xlu0 %v3801, 64
  %v3856 = vpop.permute.xlu0 %3855
  %3857 = vrot.lane.b32.xlu0 %v3802, 64
  %v3858 = vpop.permute.xlu0 %3857
  %v3861 = vsub.f32 %v3801, %v3856
  %v3862 = vsub.f32 %v3802, %v3858
  %3865 = vrot.lane.b32.xlu0 %v3861, 64
  %v3866 = vpop.permute.xlu0 %3865
  %3867 = vrot.lane.b32.xlu0 %v3862, 64
  %v3868 = vpop.permute.xlu0 %3867
  %v3871 = vmul.f32 %v3837, %v3866
  %v3872 = vmul.f32 %v3852, %v3868
  %v3873 = vadd.f32 %v3801, %v3871
  %v3874 = vadd.f32 %v3802, %v3872
  %s3875 = scalar_lea.vmem %s9, 312
  %v3876 = vld [vmem:[%s3875] sm:$0xff]
  %v3877 = vld [vmem:[%s3875 + $0x8] sm:$0xff]
  %v3878 = vld [vmem:[%s3875 + $0x10] sm:$0xff]
  %v3880 = vsel %vm1758, %v3876, 0
  %v3883 = vsel %vm1758, %v3877, 0
  %v3886 = vsel %vm1758, %v3878, 0
  %3888 = vmatpush.msra.mxu0 0.0
  %3889 = vmatpush.msra.mxu0 0.0
  %3890 = vmatpush.msra.mxu0 0.0
  %3891 = vmatpush.msra.mxu0 0.0
  %3892 = vmatpush.msra.mxu0 0.0
  %3893 = vmatpush.msra.mxu0 0.0
  %3894 = vmatpush.msra.mxu0 0.0
  %3895 = vmatpush.msra.mxu0 0.0
  %3896 = vmatpush.msra.mxu0 0.0
  %3897 = vmatpush.msra.mxu0 0.0
  %3898 = vmatpush.msra.mxu0 0.0
  %3899 = vmatpush.msra.mxu0 0.0
  %3900 = vmatpush.msra.mxu0 0.0
  %3901 = vmatpush.msra.mxu0 0.0
  %3902 = vmatpush.msra.mxu0 %v3874
  %3903 = vmatpush.msra.mxu0 %v3873
  %3904 = vmatmul.f32.gmra.mxu0 %v3880
  %v3905 = vpop.f32.mrf.mxu0
  %v3906 = vadd.f32 0.0, %v3905
  %3907 = vmatmul.f32.gmra.mxu0 %v3883
  %v3908 = vpop.f32.mrf.mxu0
  %v3909 = vadd.f32 0.0, %v3908
  %3910 = vmatmul.f32.gmra.mxu0 %v3886
  %v3911 = vpop.f32.mrf.mxu0
  %v3912 = vadd.f32 0.0, %v3911
  %3913 = vdwg.mxu0
  %v3914 = vadd.f32 %v3740, %v3906
  %v3915 = vadd.f32 %v3741, %v3909
  %v3916 = vadd.f32 %v3742, %v3912
  %v3917 = vpack.c.bf16 %v3874, %v3873
  %s3918 = scalar_lea.vmem [#allocation2], 224
  %v3919 = vld [vmem:[%s3918] sm:$0xff]
  %v3920 = vld [vmem:[%s3918 + $0x8] sm:$0xff]
  %v3922 = vsel %vm1405, %v3917, 0
  %3924 = vmatpush.bf16.msra.mxu0 0
  %3925 = vmatpush.bf16.msra.mxu0 0
  %3926 = vmatpush.bf16.msra.mxu0 0
  %3927 = vmatpush.bf16.msra.mxu0 0
  %3928 = vmatpush.bf16.msra.mxu0 %v1400
  %3929 = vmatpush.bf16.msra.mxu0 %v1399
  %3930 = vmatpush.bf16.msra.mxu0 %v1398
  %3931 = vmatpush.bf16.msra.mxu0 %v1397
  %3932 = vmatmul.bf16.gmra.mxu0 %v3922
  %v3933 = vpop.f32.mrf.mxu0
  %v3934 = vadd.f32 0.0, %v3933
  %v3935 = vpop.f32.mrf.mxu0
  %v3936 = vadd.f32 0.0, %v3935
  %3937 = vdwg.mxu0
  %v3938 = vadd.f32 %v3919, %v3934
  %v3939 = vadd.f32 %v3920, %v3936
  %v3940 = vmul.f32 %v3938, 0.666
  %v3941 = vmul.f32 %v3939, 0.666
  %v3942 = vtanh.pop %v3940
  %v3943 = vtanh.pop %v3941
  %v3944 = vmul.f32 %v3942, 1.7159
  %v3945 = vmul.f32 %v3943, 1.7159
  %v3946 = vpack.c.bf16 %v3945, %v3944
  %3947 = vmatpush.bf16.msra.mxu0 %v1499
  %3948 = vmatpush.bf16.msra.mxu0 %v1497
  %3949 = vmatpush.bf16.msra.mxu0 %v1495
  %3950 = vmatpush.bf16.msra.mxu0 %v1493
  %3951 = vmatpush.bf16.msra.mxu0 %v1491
  %3952 = vmatpush.bf16.msra.mxu0 %v1489
  %3953 = vmatpush.bf16.msra.mxu0 %v1487
  %3954 = vmatpush.bf16.msra.mxu0 %v1485
  %3955 = vmatmul.bf16.gmra.mxu0 %v3946
  %v3956 = vpop.f32.mrf.mxu0
  %v3957 = vadd.f32 %v1433, %v3956
  %v3958 = vpop.f32.mrf.mxu0
  %v3959 = vadd.f32 %v1433, %v3958
  %3960 = vdwg.mxu0
  %3961 = vmatpush.bf16.msra.mxu0 %v1500
  %3962 = vmatpush.bf16.msra.mxu0 %v1498
  %3963 = vmatpush.bf16.msra.mxu0 %v1496
  %3964 = vmatpush.bf16.msra.mxu0 %v1494
  %3965 = vmatpush.bf16.msra.mxu0 %v1492
  %3966 = vmatpush.bf16.msra.mxu0 %v1490
  %3967 = vmatpush.bf16.msra.mxu0 %v1488
  %3968 = vmatpush.bf16.msra.mxu0 %v1486
  %3969 = vmatmul.bf16.gmra.mxu0 %v3946
  %v3970 = vpop.f32.mrf.mxu0
  %v3971 = vadd.f32 %v1434, %v3970
  %v3972 = vpop.f32.mrf.mxu0
  %v3973 = vadd.f32 %v1434, %v3972
  %3974 = vdwg.mxu0
  %v3975 = vtanh.pop %v3957
  %v3976 = vtanh.pop %v3959
  %v3977 = vmul.f32 %v3971, %v1372
  %v3978 = vmul.f32 %v3973, %v1377
  %3981 = vrot.lane.b32.xlu0 %v3971, 64
  %v3982 = vpop.permute.xlu0 %3981
  %3983 = vrot.lane.b32.xlu0 %v3973, 64
  %v3984 = vpop.permute.xlu0 %3983
  %v3987 = vadd.f32 %v3977, %v3982
  %v3988 = vadd.f32 %v3978, %v3984
  %v3989 = vxor.u32 %v3987, 2147483648
  %v3990 = vxor.u32 %v3988, 2147483648
  %v3991 = vmul.f32 %v3989, 1.442695
  %v3992 = vpow.pop %v3991
  %v3993 = vmul.f32 %v3990, 1.442695
  %v3994 = vpow.pop %v3993
  %v3995 = vadd.f32 %v3992, 1.0
  %v3996 = vadd.f32 %v3994, 1.0
  %v3997 = vrcp.pop %v3995
  %v3998 = vmul.f32 %v3995, %v3997
  %v3999 = vsub.f32 1.0, %v3998
  %v4000 = vmul.f32 %v3997, %v3999
  %v4001 = vadd.f32 %v3997, %v4000
  %vm4002 = vweird.f32 %v3995
  %vm4003 = vweird.f32 %v3997
  %vm4004 = vmor %vm4002, %vm4003
  %v4005 = vsel %vm4004, %v3997, %v4001
  %v4006 = vand.u32 2147483647, %v3995
  %vm4007 = vcmp.eq.f32.partialorder %v4006, 8.507059e+37
  %v4008 = vand.u32 %v3995, 2147483648
  %v4009 = vor.u32 1.1754944e-38, %v4008
  %v4010 = vsel %vm4007, %v4009, %v4005
  %v4011 = vmul.f32 1.0, %v4010
  %v4012 = vrcp.pop %v3996
  %v4013 = vmul.f32 %v3996, %v4012
  %v4014 = vsub.f32 1.0, %v4013
  %v4015 = vmul.f32 %v4012, %v4014
  %v4016 = vadd.f32 %v4012, %v4015
  %vm4017 = vweird.f32 %v3996
  %vm4018 = vweird.f32 %v4012
  %vm4019 = vmor %vm4017, %vm4018
  %v4020 = vsel %vm4019, %v4012, %v4016
  %v4021 = vand.u32 2147483647, %v3996
  %vm4022 = vcmp.eq.f32.partialorder %v4021, 8.507059e+37
  %v4023 = vand.u32 %v3996, 2147483648
  %v4024 = vor.u32 1.1754944e-38, %v4023
  %v4025 = vsel %vm4022, %v4024, %v4020
  %v4026 = vmul.f32 1.0, %v4025
  %4029 = vrot.lane.b32.xlu0 %v3975, 64
  %v4030 = vpop.permute.xlu0 %4029
  %4031 = vrot.lane.b32.xlu0 %v3976, 64
  %v4032 = vpop.permute.xlu0 %4031
  %v4035 = vsub.f32 %v3975, %v4030
  %v4036 = vsub.f32 %v3976, %v4032
  %4039 = vrot.lane.b32.xlu0 %v4035, 64
  %v4040 = vpop.permute.xlu0 %4039
  %4041 = vrot.lane.b32.xlu0 %v4036, 64
  %v4042 = vpop.permute.xlu0 %4041
  %v4045 = vmul.f32 %v4011, %v4040
  %v4046 = vmul.f32 %v4026, %v4042
  %v4047 = vadd.f32 %v3975, %v4045
  %v4048 = vadd.f32 %v3976, %v4046
  %s4049 = scalar_lea.vmem %s9, 336
  %v4050 = vld [vmem:[%s4049] sm:$0xff]
  %v4051 = vld [vmem:[%s4049 + $0x8] sm:$0xff]
  %v4052 = vld [vmem:[%s4049 + $0x10] sm:$0xff]
  %v4054 = vsel %vm1758, %v4050, 0
  %v4057 = vsel %vm1758, %v4051, 0
  %v4060 = vsel %vm1758, %v4052, 0
  %4062 = vmatpush.msra.mxu0 0.0
  %4063 = vmatpush.msra.mxu0 0.0
  %4064 = vmatpush.msra.mxu0 0.0
  %4065 = vmatpush.msra.mxu0 0.0
  %4066 = vmatpush.msra.mxu0 0.0
  %4067 = vmatpush.msra.mxu0 0.0
  %4068 = vmatpush.msra.mxu0 0.0
  %4069 = vmatpush.msra.mxu0 0.0
  %4070 = vmatpush.msra.mxu0 0.0
  %4071 = vmatpush.msra.mxu0 0.0
  %4072 = vmatpush.msra.mxu0 0.0
  %4073 = vmatpush.msra.mxu0 0.0
  %4074 = vmatpush.msra.mxu0 0.0
  %4075 = vmatpush.msra.mxu0 0.0
  %4076 = vmatpush.msra.mxu0 %v4048
  %4077 = vmatpush.msra.mxu0 %v4047
  %4078 = vmatmul.f32.gmra.mxu0 %v4054
  %v4079 = vpop.f32.mrf.mxu0
  %v4080 = vadd.f32 0.0, %v4079
  %4081 = vmatmul.f32.gmra.mxu0 %v4057
  %v4082 = vpop.f32.mrf.mxu0
  %v4083 = vadd.f32 0.0, %v4082
  %4084 = vmatmul.f32.gmra.mxu0 %v4060
  %v4085 = vpop.f32.mrf.mxu0
  %v4086 = vadd.f32 0.0, %v4085
  %4087 = vdwg.mxu0
  %v4088 = vadd.f32 %v3914, %v4080
  %v4089 = vadd.f32 %v3915, %v4083
  %v4090 = vadd.f32 %v3916, %v4086
  %v4091 = vpack.c.bf16 %v4048, %v4047
  %s4092 = scalar_lea.vmem [#allocation2], 240
  %v4093 = vld [vmem:[%s4092] sm:$0xff]
  %v4094 = vld [vmem:[%s4092 + $0x8] sm:$0xff]
  %v4096 = vsel %vm1405, %v4091, 0
  %4098 = vmatpush.bf16.msra.mxu0 0
  %4099 = vmatpush.bf16.msra.mxu0 0
  %4100 = vmatpush.bf16.msra.mxu0 0
  %4101 = vmatpush.bf16.msra.mxu0 0
  %4102 = vmatpush.bf16.msra.mxu0 %v1400
  %4103 = vmatpush.bf16.msra.mxu0 %v1399
  %4104 = vmatpush.bf16.msra.mxu0 %v1398
  %4105 = vmatpush.bf16.msra.mxu0 %v1397
  %4106 = vmatmul.bf16.gmra.mxu0 %v4096
  %v4107 = vpop.f32.mrf.mxu0
  %v4108 = vadd.f32 0.0, %v4107
  %v4109 = vpop.f32.mrf.mxu0
  %v4110 = vadd.f32 0.0, %v4109
  %4111 = vdwg.mxu0
  %v4112 = vadd.f32 %v4093, %v4108
  %v4113 = vadd.f32 %v4094, %v4110
  %v4114 = vmul.f32 %v4112, 0.666
  %v4115 = vmul.f32 %v4113, 0.666
  %v4116 = vtanh.pop %v4114
  %v4117 = vtanh.pop %v4115
  %v4118 = vmul.f32 %v4116, 1.7159
  %v4119 = vmul.f32 %v4117, 1.7159
  %v4120 = vpack.c.bf16 %v4119, %v4118
  %4121 = vmatpush.bf16.msra.mxu0 %v1499
  %4122 = vmatpush.bf16.msra.mxu0 %v1497
  %4123 = vmatpush.bf16.msra.mxu0 %v1495
  %4124 = vmatpush.bf16.msra.mxu0 %v1493
  %4125 = vmatpush.bf16.msra.mxu0 %v1491
  %4126 = vmatpush.bf16.msra.mxu0 %v1489
  %4127 = vmatpush.bf16.msra.mxu0 %v1487
  %4128 = vmatpush.bf16.msra.mxu0 %v1485
  %4129 = vmatmul.bf16.gmra.mxu0 %v4120
  %v4130 = vpop.f32.mrf.mxu0
  %v4131 = vadd.f32 %v1433, %v4130
  %v4132 = vpop.f32.mrf.mxu0
  %v4133 = vadd.f32 %v1433, %v4132
  %4134 = vdwg.mxu0
  %4135 = vmatpush.bf16.msra.mxu0 %v1500
  %4136 = vmatpush.bf16.msra.mxu0 %v1498
  %4137 = vmatpush.bf16.msra.mxu0 %v1496
  %4138 = vmatpush.bf16.msra.mxu0 %v1494
  %4139 = vmatpush.bf16.msra.mxu0 %v1492
  %4140 = vmatpush.bf16.msra.mxu0 %v1490
  %4141 = vmatpush.bf16.msra.mxu0 %v1488
  %4142 = vmatpush.bf16.msra.mxu0 %v1486
  %4143 = vmatmul.bf16.gmra.mxu0 %v4120
  %v4144 = vpop.f32.mrf.mxu0
  %v4145 = vadd.f32 %v1434, %v4144
  %v4146 = vpop.f32.mrf.mxu0
  %v4147 = vadd.f32 %v1434, %v4146
  %4148 = vdwg.mxu0
  %v4149 = vtanh.pop %v4131
  %v4150 = vtanh.pop %v4133
  %v4151 = vmul.f32 %v4145, %v1372
  %v4152 = vmul.f32 %v4147, %v1377
  %4155 = vrot.lane.b32.xlu0 %v4145, 64
  %v4156 = vpop.permute.xlu0 %4155
  %4157 = vrot.lane.b32.xlu0 %v4147, 64
  %v4158 = vpop.permute.xlu0 %4157
  %v4161 = vadd.f32 %v4151, %v4156
  %v4162 = vadd.f32 %v4152, %v4158
  %v4163 = vxor.u32 %v4161, 2147483648
  %v4164 = vxor.u32 %v4162, 2147483648
  %v4165 = vmul.f32 %v4163, 1.442695
  %v4166 = vpow.pop %v4165
  %v4167 = vmul.f32 %v4164, 1.442695
  %v4168 = vpow.pop %v4167
  %v4169 = vadd.f32 %v4166, 1.0
  %v4170 = vadd.f32 %v4168, 1.0
  %v4171 = vrcp.pop %v4169
  %v4172 = vmul.f32 %v4169, %v4171
  %v4173 = vsub.f32 1.0, %v4172
  %v4174 = vmul.f32 %v4171, %v4173
  %v4175 = vadd.f32 %v4171, %v4174
  %vm4176 = vweird.f32 %v4169
  %vm4177 = vweird.f32 %v4171
  %vm4178 = vmor %vm4176, %vm4177
  %v4179 = vsel %vm4178, %v4171, %v4175
  %v4180 = vand.u32 2147483647, %v4169
  %vm4181 = vcmp.eq.f32.partialorder %v4180, 8.507059e+37
  %v4182 = vand.u32 %v4169, 2147483648
  %v4183 = vor.u32 1.1754944e-38, %v4182
  %v4184 = vsel %vm4181, %v4183, %v4179
  %v4185 = vmul.f32 1.0, %v4184
  %v4186 = vrcp.pop %v4170
  %v4187 = vmul.f32 %v4170, %v4186
  %v4188 = vsub.f32 1.0, %v4187
  %v4189 = vmul.f32 %v4186, %v4188
  %v4190 = vadd.f32 %v4186, %v4189
  %vm4191 = vweird.f32 %v4170
  %vm4192 = vweird.f32 %v4186
  %vm4193 = vmor %vm4191, %vm4192
  %v4194 = vsel %vm4193, %v4186, %v4190
  %v4195 = vand.u32 2147483647, %v4170
  %vm4196 = vcmp.eq.f32.partialorder %v4195, 8.507059e+37
  %v4197 = vand.u32 %v4170, 2147483648
  %v4198 = vor.u32 1.1754944e-38, %v4197
  %v4199 = vsel %vm4196, %v4198, %v4194
  %v4200 = vmul.f32 1.0, %v4199
  %4203 = vrot.lane.b32.xlu0 %v4149, 64
  %v4204 = vpop.permute.xlu0 %4203
  %4205 = vrot.lane.b32.xlu0 %v4150, 64
  %v4206 = vpop.permute.xlu0 %4205
  %v4209 = vsub.f32 %v4149, %v4204
  %v4210 = vsub.f32 %v4150, %v4206
  %4213 = vrot.lane.b32.xlu0 %v4209, 64
  %v4214 = vpop.permute.xlu0 %4213
  %4215 = vrot.lane.b32.xlu0 %v4210, 64
  %v4216 = vpop.permute.xlu0 %4215
  %v4219 = vmul.f32 %v4185, %v4214
  %v4220 = vmul.f32 %v4200, %v4216
  %v4221 = vadd.f32 %v4149, %v4219
  %v4222 = vadd.f32 %v4150, %v4220
  %s4223 = scalar_lea.vmem %s9, 360
  %v4224 = vld [vmem:[%s4223] sm:$0xff]
  %v4225 = vld [vmem:[%s4223 + $0x8] sm:$0xff]
  %v4226 = vld [vmem:[%s4223 + $0x10] sm:$0xff]
  %v4228 = vsel %vm1758, %v4224, 0
  %v4231 = vsel %vm1758, %v4225, 0
  %v4234 = vsel %vm1758, %v4226, 0
  %4236 = vmatpush.msra.mxu0 0.0
  %4237 = vmatpush.msra.mxu0 0.0
  %4238 = vmatpush.msra.mxu0 0.0
  %4239 = vmatpush.msra.mxu0 0.0
  %4240 = vmatpush.msra.mxu0 0.0
  %4241 = vmatpush.msra.mxu0 0.0
  %4242 = vmatpush.msra.mxu0 0.0
  %4243 = vmatpush.msra.mxu0 0.0
  %4244 = vmatpush.msra.mxu0 0.0
  %4245 = vmatpush.msra.mxu0 0.0
  %4246 = vmatpush.msra.mxu0 0.0
  %4247 = vmatpush.msra.mxu0 0.0
  %4248 = vmatpush.msra.mxu0 0.0
  %4249 = vmatpush.msra.mxu0 0.0
  %4250 = vmatpush.msra.mxu0 %v4222
  %4251 = vmatpush.msra.mxu0 %v4221
  %4252 = vmatmul.f32.gmra.mxu0 %v4228
  %v4253 = vpop.f32.mrf.mxu0
  %v4254 = vadd.f32 0.0, %v4253
  %4255 = vmatmul.f32.gmra.mxu0 %v4231
  %v4256 = vpop.f32.mrf.mxu0
  %v4257 = vadd.f32 0.0, %v4256
  %4258 = vmatmul.f32.gmra.mxu0 %v4234
  %v4259 = vpop.f32.mrf.mxu0
  %v4260 = vadd.f32 0.0, %v4259
  %4261 = vdwg.mxu0
  %v4262 = vadd.f32 %v4088, %v4254
  %v4263 = vadd.f32 %v4089, %v4257
  %v4264 = vadd.f32 %v4090, %v4260
  %v4265 = vpack.c.bf16 %v4222, %v4221
  %s4266 = scalar_lea.vmem [#allocation2], 256
  %v4267 = vld [vmem:[%s4266] sm:$0xff]
  %v4268 = vld [vmem:[%s4266 + $0x8] sm:$0xff]
  %v4270 = vsel %vm1405, %v4265, 0
  %4272 = vmatpush.bf16.msra.mxu0 0
  %4273 = vmatpush.bf16.msra.mxu0 0
  %4274 = vmatpush.bf16.msra.mxu0 0
  %4275 = vmatpush.bf16.msra.mxu0 0
  %4276 = vmatpush.bf16.msra.mxu0 %v1400
  %4277 = vmatpush.bf16.msra.mxu0 %v1399
  %4278 = vmatpush.bf16.msra.mxu0 %v1398
  %4279 = vmatpush.bf16.msra.mxu0 %v1397
  %4280 = vmatmul.bf16.gmra.mxu0 %v4270
  %v4281 = vpop.f32.mrf.mxu0
  %v4282 = vadd.f32 0.0, %v4281
  %v4283 = vpop.f32.mrf.mxu0
  %v4284 = vadd.f32 0.0, %v4283
  %4285 = vdwg.mxu0
  %v4286 = vadd.f32 %v4267, %v4282
  %v4287 = vadd.f32 %v4268, %v4284
  %v4288 = vmul.f32 %v4286, 0.666
  %v4289 = vmul.f32 %v4287, 0.666
  %v4290 = vtanh.pop %v4288
  %v4291 = vtanh.pop %v4289
  %v4292 = vmul.f32 %v4290, 1.7159
  %v4293 = vmul.f32 %v4291, 1.7159
  %v4294 = vpack.c.bf16 %v4293, %v4292
  %4295 = vmatpush.bf16.msra.mxu0 %v1499
  %4296 = vmatpush.bf16.msra.mxu0 %v1497
  %4297 = vmatpush.bf16.msra.mxu0 %v1495
  %4298 = vmatpush.bf16.msra.mxu0 %v1493
  %4299 = vmatpush.bf16.msra.mxu0 %v1491
  %4300 = vmatpush.bf16.msra.mxu0 %v1489
  %4301 = vmatpush.bf16.msra.mxu0 %v1487
  %4302 = vmatpush.bf16.msra.mxu0 %v1485
  %4303 = vmatmul.bf16.gmra.mxu0 %v4294
  %v4304 = vpop.f32.mrf.mxu0
  %v4305 = vadd.f32 %v1433, %v4304
  %v4306 = vpop.f32.mrf.mxu0
  %v4307 = vadd.f32 %v1433, %v4306
  %4308 = vdwg.mxu0
  %4309 = vmatpush.bf16.msra.mxu0 %v1500
  %4310 = vmatpush.bf16.msra.mxu0 %v1498
  %4311 = vmatpush.bf16.msra.mxu0 %v1496
  %4312 = vmatpush.bf16.msra.mxu0 %v1494
  %4313 = vmatpush.bf16.msra.mxu0 %v1492
  %4314 = vmatpush.bf16.msra.mxu0 %v1490
  %4315 = vmatpush.bf16.msra.mxu0 %v1488
  %4316 = vmatpush.bf16.msra.mxu0 %v1486
  %4317 = vmatmul.bf16.gmra.mxu0 %v4294
  %v4318 = vpop.f32.mrf.mxu0
  %v4319 = vadd.f32 %v1434, %v4318
  %v4320 = vpop.f32.mrf.mxu0
  %v4321 = vadd.f32 %v1434, %v4320
  %4322 = vdwg.mxu0
  %v4323 = vtanh.pop %v4305
  %v4324 = vtanh.pop %v4307
  %v4325 = vmul.f32 %v4319, %v1372
  %v4326 = vmul.f32 %v4321, %v1377
  %4329 = vrot.lane.b32.xlu0 %v4319, 64
  %v4330 = vpop.permute.xlu0 %4329
  %4331 = vrot.lane.b32.xlu0 %v4321, 64
  %v4332 = vpop.permute.xlu0 %4331
  %v4335 = vadd.f32 %v4325, %v4330
  %v4336 = vadd.f32 %v4326, %v4332
  %v4337 = vxor.u32 %v4335, 2147483648
  %v4338 = vxor.u32 %v4336, 2147483648
  %v4339 = vmul.f32 %v4337, 1.442695
  %v4340 = vpow.pop %v4339
  %v4341 = vmul.f32 %v4338, 1.442695
  %v4342 = vpow.pop %v4341
  %v4343 = vadd.f32 %v4340, 1.0
  %v4344 = vadd.f32 %v4342, 1.0
  %v4345 = vrcp.pop %v4343
  %v4346 = vmul.f32 %v4343, %v4345
  %v4347 = vsub.f32 1.0, %v4346
  %v4348 = vmul.f32 %v4345, %v4347
  %v4349 = vadd.f32 %v4345, %v4348
  %vm4350 = vweird.f32 %v4343
  %vm4351 = vweird.f32 %v4345
  %vm4352 = vmor %vm4350, %vm4351
  %v4353 = vsel %vm4352, %v4345, %v4349
  %v4354 = vand.u32 2147483647, %v4343
  %vm4355 = vcmp.eq.f32.partialorder %v4354, 8.507059e+37
  %v4356 = vand.u32 %v4343, 2147483648
  %v4357 = vor.u32 1.1754944e-38, %v4356
  %v4358 = vsel %vm4355, %v4357, %v4353
  %v4359 = vmul.f32 1.0, %v4358
  %v4360 = vrcp.pop %v4344
  %v4361 = vmul.f32 %v4344, %v4360
  %v4362 = vsub.f32 1.0, %v4361
  %v4363 = vmul.f32 %v4360, %v4362
  %v4364 = vadd.f32 %v4360, %v4363
  %vm4365 = vweird.f32 %v4344
  %vm4366 = vweird.f32 %v4360
  %vm4367 = vmor %vm4365, %vm4366
  %v4368 = vsel %vm4367, %v4360, %v4364
  %v4369 = vand.u32 2147483647, %v4344
  %vm4370 = vcmp.eq.f32.partialorder %v4369, 8.507059e+37
  %v4371 = vand.u32 %v4344, 2147483648
  %v4372 = vor.u32 1.1754944e-38, %v4371
  %v4373 = vsel %vm4370, %v4372, %v4368
  %v4374 = vmul.f32 1.0, %v4373
  %4377 = vrot.lane.b32.xlu0 %v4323, 64
  %v4378 = vpop.permute.xlu0 %4377
  %4379 = vrot.lane.b32.xlu0 %v4324, 64
  %v4380 = vpop.permute.xlu0 %4379
  %v4383 = vsub.f32 %v4323, %v4378
  %v4384 = vsub.f32 %v4324, %v4380
  %4387 = vrot.lane.b32.xlu0 %v4383, 64
  %v4388 = vpop.permute.xlu0 %4387
  %4389 = vrot.lane.b32.xlu0 %v4384, 64
  %v4390 = vpop.permute.xlu0 %4389
  %v4393 = vmul.f32 %v4359, %v4388
  %v4394 = vmul.f32 %v4374, %v4390
  %v4395 = vadd.f32 %v4323, %v4393
  %v4396 = vadd.f32 %v4324, %v4394
  %s4397 = scalar_lea.vmem %s9, 384
  %v4398 = vld [vmem:[%s4397] sm:$0xff]
  %v4399 = vld [vmem:[%s4397 + $0x8] sm:$0xff]
  %v4400 = vld [vmem:[%s4397 + $0x10] sm:$0xff]
  %v4402 = vsel %vm1758, %v4398, 0
  %v4405 = vsel %vm1758, %v4399, 0
  %v4408 = vsel %vm1758, %v4400, 0
  %4410 = vmatpush.msra.mxu0 0.0
  %4411 = vmatpush.msra.mxu0 0.0
  %4412 = vmatpush.msra.mxu0 0.0
  %4413 = vmatpush.msra.mxu0 0.0
  %4414 = vmatpush.msra.mxu0 0.0
  %4415 = vmatpush.msra.mxu0 0.0
  %4416 = vmatpush.msra.mxu0 0.0
  %4417 = vmatpush.msra.mxu0 0.0
  %4418 = vmatpush.msra.mxu0 0.0
  %4419 = vmatpush.msra.mxu0 0.0
  %4420 = vmatpush.msra.mxu0 0.0
  %4421 = vmatpush.msra.mxu0 0.0
  %4422 = vmatpush.msra.mxu0 0.0
  %4423 = vmatpush.msra.mxu0 0.0
  %4424 = vmatpush.msra.mxu0 %v4396
  %4425 = vmatpush.msra.mxu0 %v4395
  %4426 = vmatmul.f32.gmra.mxu0 %v4402
  %v4427 = vpop.f32.mrf.mxu0
  %v4428 = vadd.f32 0.0, %v4427
  %4429 = vmatmul.f32.gmra.mxu0 %v4405
  %v4430 = vpop.f32.mrf.mxu0
  %v4431 = vadd.f32 0.0, %v4430
  %4432 = vmatmul.f32.gmra.mxu0 %v4408
  %v4433 = vpop.f32.mrf.mxu0
  %v4434 = vadd.f32 0.0, %v4433
  %4435 = vdwg.mxu0
  %v4436 = vadd.f32 %v4262, %v4428
  %v4437 = vadd.f32 %v4263, %v4431
  %v4438 = vadd.f32 %v4264, %v4434
  %v4439 = vpack.c.bf16 %v4396, %v4395
  %s4440 = scalar_lea.vmem [#allocation2], 272
  %v4441 = vld [vmem:[%s4440] sm:$0xff]
  %v4442 = vld [vmem:[%s4440 + $0x8] sm:$0xff]
  %v4444 = vsel %vm1405, %v4439, 0
  %4446 = vmatpush.bf16.msra.mxu0 0
  %4447 = vmatpush.bf16.msra.mxu0 0
  %4448 = vmatpush.bf16.msra.mxu0 0
  %4449 = vmatpush.bf16.msra.mxu0 0
  %4450 = vmatpush.bf16.msra.mxu0 %v1400
  %4451 = vmatpush.bf16.msra.mxu0 %v1399
  %4452 = vmatpush.bf16.msra.mxu0 %v1398
  %4453 = vmatpush.bf16.msra.mxu0 %v1397
  %4454 = vmatmul.bf16.gmra.mxu0 %v4444
  %v4455 = vpop.f32.mrf.mxu0
  %v4456 = vadd.f32 0.0, %v4455
  %v4457 = vpop.f32.mrf.mxu0
  %v4458 = vadd.f32 0.0, %v4457
  %4459 = vdwg.mxu0
  %v4460 = vadd.f32 %v4441, %v4456
  %v4461 = vadd.f32 %v4442, %v4458
  %v4462 = vmul.f32 %v4460, 0.666
  %v4463 = vmul.f32 %v4461, 0.666
  %v4464 = vtanh.pop %v4462
  %v4465 = vtanh.pop %v4463
  %v4466 = vmul.f32 %v4464, 1.7159
  %v4467 = vmul.f32 %v4465, 1.7159
  %v4468 = vpack.c.bf16 %v4467, %v4466
  %4469 = vmatpush.bf16.msra.mxu0 %v1499
  %4470 = vmatpush.bf16.msra.mxu0 %v1497
  %4471 = vmatpush.bf16.msra.mxu0 %v1495
  %4472 = vmatpush.bf16.msra.mxu0 %v1493
  %4473 = vmatpush.bf16.msra.mxu0 %v1491
  %4474 = vmatpush.bf16.msra.mxu0 %v1489
  %4475 = vmatpush.bf16.msra.mxu0 %v1487
  %4476 = vmatpush.bf16.msra.mxu0 %v1485
  %4477 = vmatmul.bf16.gmra.mxu0 %v4468
  %v4478 = vpop.f32.mrf.mxu0
  %v4479 = vadd.f32 %v1433, %v4478
  %v4480 = vpop.f32.mrf.mxu0
  %v4481 = vadd.f32 %v1433, %v4480
  %4482 = vdwg.mxu0
  %4483 = vmatpush.bf16.msra.mxu0 %v1500
  %4484 = vmatpush.bf16.msra.mxu0 %v1498
  %4485 = vmatpush.bf16.msra.mxu0 %v1496
  %4486 = vmatpush.bf16.msra.mxu0 %v1494
  %4487 = vmatpush.bf16.msra.mxu0 %v1492
  %4488 = vmatpush.bf16.msra.mxu0 %v1490
  %4489 = vmatpush.bf16.msra.mxu0 %v1488
  %4490 = vmatpush.bf16.msra.mxu0 %v1486
  %4491 = vmatmul.bf16.gmra.mxu0 %v4468
  %v4492 = vpop.f32.mrf.mxu0
  %v4493 = vadd.f32 %v1434, %v4492
  %v4494 = vpop.f32.mrf.mxu0
  %v4495 = vadd.f32 %v1434, %v4494
  %4496 = vdwg.mxu0
  %v4497 = vtanh.pop %v4479
  %v4498 = vtanh.pop %v4481
  %v4499 = vmul.f32 %v4493, %v1372
  %v4500 = vmul.f32 %v4495, %v1377
  %4503 = vrot.lane.b32.xlu0 %v4493, 64
  %v4504 = vpop.permute.xlu0 %4503
  %4505 = vrot.lane.b32.xlu0 %v4495, 64
  %v4506 = vpop.permute.xlu0 %4505
  %v4509 = vadd.f32 %v4499, %v4504
  %v4510 = vadd.f32 %v4500, %v4506
  %v4511 = vxor.u32 %v4509, 2147483648
  %v4512 = vxor.u32 %v4510, 2147483648
  %v4513 = vmul.f32 %v4511, 1.442695
  %v4514 = vpow.pop %v4513
  %v4515 = vmul.f32 %v4512, 1.442695
  %v4516 = vpow.pop %v4515
  %v4517 = vadd.f32 %v4514, 1.0
  %v4518 = vadd.f32 %v4516, 1.0
  %v4519 = vrcp.pop %v4517
  %v4520 = vmul.f32 %v4517, %v4519
  %v4521 = vsub.f32 1.0, %v4520
  %v4522 = vmul.f32 %v4519, %v4521
  %v4523 = vadd.f32 %v4519, %v4522
  %vm4524 = vweird.f32 %v4517
  %vm4525 = vweird.f32 %v4519
  %vm4526 = vmor %vm4524, %vm4525
  %v4527 = vsel %vm4526, %v4519, %v4523
  %v4528 = vand.u32 2147483647, %v4517
  %vm4529 = vcmp.eq.f32.partialorder %v4528, 8.507059e+37
  %v4530 = vand.u32 %v4517, 2147483648
  %v4531 = vor.u32 1.1754944e-38, %v4530
  %v4532 = vsel %vm4529, %v4531, %v4527
  %v4533 = vmul.f32 1.0, %v4532
  %v4534 = vrcp.pop %v4518
  %v4535 = vmul.f32 %v4518, %v4534
  %v4536 = vsub.f32 1.0, %v4535
  %v4537 = vmul.f32 %v4534, %v4536
  %v4538 = vadd.f32 %v4534, %v4537
  %vm4539 = vweird.f32 %v4518
  %vm4540 = vweird.f32 %v4534
  %vm4541 = vmor %vm4539, %vm4540
  %v4542 = vsel %vm4541, %v4534, %v4538
  %v4543 = vand.u32 2147483647, %v4518
  %vm4544 = vcmp.eq.f32.partialorder %v4543, 8.507059e+37
  %v4545 = vand.u32 %v4518, 2147483648
  %v4546 = vor.u32 1.1754944e-38, %v4545
  %v4547 = vsel %vm4544, %v4546, %v4542
  %v4548 = vmul.f32 1.0, %v4547
  %4551 = vrot.lane.b32.xlu0 %v4497, 64
  %v4552 = vpop.permute.xlu0 %4551
  %4553 = vrot.lane.b32.xlu0 %v4498, 64
  %v4554 = vpop.permute.xlu0 %4553
  %v4557 = vsub.f32 %v4497, %v4552
  %v4558 = vsub.f32 %v4498, %v4554
  %4561 = vrot.lane.b32.xlu0 %v4557, 64
  %v4562 = vpop.permute.xlu0 %4561
  %4563 = vrot.lane.b32.xlu0 %v4558, 64
  %v4564 = vpop.permute.xlu0 %4563
  %v4567 = vmul.f32 %v4533, %v4562
  %v4568 = vmul.f32 %v4548, %v4564
  %v4569 = vadd.f32 %v4497, %v4567
  %v4570 = vadd.f32 %v4498, %v4568
  %s4571 = scalar_lea.vmem %s9, 408
  %v4572 = vld [vmem:[%s4571] sm:$0xff]
  %v4573 = vld [vmem:[%s4571 + $0x8] sm:$0xff]
  %v4574 = vld [vmem:[%s4571 + $0x10] sm:$0xff]
  %v4576 = vsel %vm1758, %v4572, 0
  %v4579 = vsel %vm1758, %v4573, 0
  %v4582 = vsel %vm1758, %v4574, 0
  %4584 = vmatpush.msra.mxu0 0.0
  %4585 = vmatpush.msra.mxu0 0.0
  %4586 = vmatpush.msra.mxu0 0.0
  %4587 = vmatpush.msra.mxu0 0.0
  %4588 = vmatpush.msra.mxu0 0.0
  %4589 = vmatpush.msra.mxu0 0.0
  %4590 = vmatpush.msra.mxu0 0.0
  %4591 = vmatpush.msra.mxu0 0.0
  %4592 = vmatpush.msra.mxu0 0.0
  %4593 = vmatpush.msra.mxu0 0.0
  %4594 = vmatpush.msra.mxu0 0.0
  %4595 = vmatpush.msra.mxu0 0.0
  %4596 = vmatpush.msra.mxu0 0.0
  %4597 = vmatpush.msra.mxu0 0.0
  %4598 = vmatpush.msra.mxu0 %v4570
  %4599 = vmatpush.msra.mxu0 %v4569
  %4600 = vmatmul.f32.gmra.mxu0 %v4576
  %v4601 = vpop.f32.mrf.mxu0
  %v4602 = vadd.f32 0.0, %v4601
  %4603 = vmatmul.f32.gmra.mxu0 %v4579
  %v4604 = vpop.f32.mrf.mxu0
  %v4605 = vadd.f32 0.0, %v4604
  %4606 = vmatmul.f32.gmra.mxu0 %v4582
  %v4607 = vpop.f32.mrf.mxu0
  %v4608 = vadd.f32 0.0, %v4607
  %4609 = vdwg.mxu0
  %v4610 = vadd.f32 %v4436, %v4602
  %v4611 = vadd.f32 %v4437, %v4605
  %v4612 = vadd.f32 %v4438, %v4608
  %v4613 = vpack.c.bf16 %v4570, %v4569
  %s4614 = scalar_lea.vmem [#allocation2], 288
  %v4615 = vld [vmem:[%s4614] sm:$0xff]
  %v4616 = vld [vmem:[%s4614 + $0x8] sm:$0xff]
  %v4618 = vsel %vm1405, %v4613, 0
  %4620 = vmatpush.bf16.msra.mxu0 0
  %4621 = vmatpush.bf16.msra.mxu0 0
  %4622 = vmatpush.bf16.msra.mxu0 0
  %4623 = vmatpush.bf16.msra.mxu0 0
  %4624 = vmatpush.bf16.msra.mxu0 %v1400
  %4625 = vmatpush.bf16.msra.mxu0 %v1399
  %4626 = vmatpush.bf16.msra.mxu0 %v1398
  %4627 = vmatpush.bf16.msra.mxu0 %v1397
  %4628 = vmatmul.bf16.gmra.mxu0 %v4618
  %v4629 = vpop.f32.mrf.mxu0
  %v4630 = vadd.f32 0.0, %v4629
  %v4631 = vpop.f32.mrf.mxu0
  %v4632 = vadd.f32 0.0, %v4631
  %4633 = vdwg.mxu0
  %v4634 = vadd.f32 %v4615, %v4630
  %v4635 = vadd.f32 %v4616, %v4632
  %v4636 = vmul.f32 %v4634, 0.666
  %v4637 = vmul.f32 %v4635, 0.666
  %v4638 = vtanh.pop %v4636
  %v4639 = vtanh.pop %v4637
  %v4640 = vmul.f32 %v4638, 1.7159
  %v4641 = vmul.f32 %v4639, 1.7159
  %v4642 = vpack.c.bf16 %v4641, %v4640
  %4643 = vmatpush.bf16.msra.mxu0 %v1499
  %4644 = vmatpush.bf16.msra.mxu0 %v1497
  %4645 = vmatpush.bf16.msra.mxu0 %v1495
  %4646 = vmatpush.bf16.msra.mxu0 %v1493
  %4647 = vmatpush.bf16.msra.mxu0 %v1491
  %4648 = vmatpush.bf16.msra.mxu0 %v1489
  %4649 = vmatpush.bf16.msra.mxu0 %v1487
  %4650 = vmatpush.bf16.msra.mxu0 %v1485
  %4651 = vmatmul.bf16.gmra.mxu0 %v4642
  %v4652 = vpop.f32.mrf.mxu0
  %v4653 = vadd.f32 %v1433, %v4652
  %v4654 = vpop.f32.mrf.mxu0
  %v4655 = vadd.f32 %v1433, %v4654
  %4656 = vdwg.mxu0
  %4657 = vmatpush.bf16.msra.mxu0 %v1500
  %4658 = vmatpush.bf16.msra.mxu0 %v1498
  %4659 = vmatpush.bf16.msra.mxu0 %v1496
  %4660 = vmatpush.bf16.msra.mxu0 %v1494
  %4661 = vmatpush.bf16.msra.mxu0 %v1492
  %4662 = vmatpush.bf16.msra.mxu0 %v1490
  %4663 = vmatpush.bf16.msra.mxu0 %v1488
  %4664 = vmatpush.bf16.msra.mxu0 %v1486
  %4665 = vmatmul.bf16.gmra.mxu0 %v4642
  %v4666 = vpop.f32.mrf.mxu0
  %v4667 = vadd.f32 %v1434, %v4666
  %v4668 = vpop.f32.mrf.mxu0
  %v4669 = vadd.f32 %v1434, %v4668
  %4670 = vdwg.mxu0
  %v4671 = vtanh.pop %v4653
  %v4672 = vtanh.pop %v4655
  %v4673 = vmul.f32 %v4667, %v1372
  %v4674 = vmul.f32 %v4669, %v1377
  %4677 = vrot.lane.b32.xlu0 %v4667, 64
  %v4678 = vpop.permute.xlu0 %4677
  %4679 = vrot.lane.b32.xlu0 %v4669, 64
  %v4680 = vpop.permute.xlu0 %4679
  %v4683 = vadd.f32 %v4673, %v4678
  %v4684 = vadd.f32 %v4674, %v4680
  %v4685 = vxor.u32 %v4683, 2147483648
  %v4686 = vxor.u32 %v4684, 2147483648
  %v4687 = vmul.f32 %v4685, 1.442695
  %v4688 = vpow.pop %v4687
  %v4689 = vmul.f32 %v4686, 1.442695
  %v4690 = vpow.pop %v4689
  %v4691 = vadd.f32 %v4688, 1.0
  %v4692 = vadd.f32 %v4690, 1.0
  %v4693 = vrcp.pop %v4691
  %v4694 = vmul.f32 %v4691, %v4693
  %v4695 = vsub.f32 1.0, %v4694
  %v4696 = vmul.f32 %v4693, %v4695
  %v4697 = vadd.f32 %v4693, %v4696
  %vm4698 = vweird.f32 %v4691
  %vm4699 = vweird.f32 %v4693
  %vm4700 = vmor %vm4698, %vm4699
  %v4701 = vsel %vm4700, %v4693, %v4697
  %v4702 = vand.u32 2147483647, %v4691
  %vm4703 = vcmp.eq.f32.partialorder %v4702, 8.507059e+37
  %v4704 = vand.u32 %v4691, 2147483648
  %v4705 = vor.u32 1.1754944e-38, %v4704
  %v4706 = vsel %vm4703, %v4705, %v4701
  %v4707 = vmul.f32 1.0, %v4706
  %v4708 = vrcp.pop %v4692
  %v4709 = vmul.f32 %v4692, %v4708
  %v4710 = vsub.f32 1.0, %v4709
  %v4711 = vmul.f32 %v4708, %v4710
  %v4712 = vadd.f32 %v4708, %v4711
  %vm4713 = vweird.f32 %v4692
  %vm4714 = vweird.f32 %v4708
  %vm4715 = vmor %vm4713, %vm4714
  %v4716 = vsel %vm4715, %v4708, %v4712
  %v4717 = vand.u32 2147483647, %v4692
  %vm4718 = vcmp.eq.f32.partialorder %v4717, 8.507059e+37
  %v4719 = vand.u32 %v4692, 2147483648
  %v4720 = vor.u32 1.1754944e-38, %v4719
  %v4721 = vsel %vm4718, %v4720, %v4716
  %v4722 = vmul.f32 1.0, %v4721
  %4725 = vrot.lane.b32.xlu0 %v4671, 64
  %v4726 = vpop.permute.xlu0 %4725
  %4727 = vrot.lane.b32.xlu0 %v4672, 64
  %v4728 = vpop.permute.xlu0 %4727
  %v4731 = vsub.f32 %v4671, %v4726
  %v4732 = vsub.f32 %v4672, %v4728
  %4735 = vrot.lane.b32.xlu0 %v4731, 64
  %v4736 = vpop.permute.xlu0 %4735
  %4737 = vrot.lane.b32.xlu0 %v4732, 64
  %v4738 = vpop.permute.xlu0 %4737
  %v4741 = vmul.f32 %v4707, %v4736
  %v4742 = vmul.f32 %v4722, %v4738
  %v4743 = vadd.f32 %v4671, %v4741
  %v4744 = vadd.f32 %v4672, %v4742
  %s4745 = scalar_lea.vmem %s9, 432
  %v4746 = vld [vmem:[%s4745] sm:$0xff]
  %v4747 = vld [vmem:[%s4745 + $0x8] sm:$0xff]
  %v4748 = vld [vmem:[%s4745 + $0x10] sm:$0xff]
  %v4750 = vsel %vm1758, %v4746, 0
  %v4753 = vsel %vm1758, %v4747, 0
  %v4756 = vsel %vm1758, %v4748, 0
  %4758 = vmatpush.msra.mxu0 0.0
  %4759 = vmatpush.msra.mxu0 0.0
  %4760 = vmatpush.msra.mxu0 0.0
  %4761 = vmatpush.msra.mxu0 0.0
  %4762 = vmatpush.msra.mxu0 0.0
  %4763 = vmatpush.msra.mxu0 0.0
  %4764 = vmatpush.msra.mxu0 0.0
  %4765 = vmatpush.msra.mxu0 0.0
  %4766 = vmatpush.msra.mxu0 0.0
  %4767 = vmatpush.msra.mxu0 0.0
  %4768 = vmatpush.msra.mxu0 0.0
  %4769 = vmatpush.msra.mxu0 0.0
  %4770 = vmatpush.msra.mxu0 0.0
  %4771 = vmatpush.msra.mxu0 0.0
  %4772 = vmatpush.msra.mxu0 %v4744
  %4773 = vmatpush.msra.mxu0 %v4743
  %4774 = vmatmul.f32.gmra.mxu0 %v4750
  %v4775 = vpop.f32.mrf.mxu0
  %v4776 = vadd.f32 0.0, %v4775
  %4777 = vmatmul.f32.gmra.mxu0 %v4753
  %v4778 = vpop.f32.mrf.mxu0
  %v4779 = vadd.f32 0.0, %v4778
  %4780 = vmatmul.f32.gmra.mxu0 %v4756
  %v4781 = vpop.f32.mrf.mxu0
  %v4782 = vadd.f32 0.0, %v4781
  %4783 = vdwg.mxu0
  %v4784 = vadd.f32 %v4610, %v4776
  %v4785 = vadd.f32 %v4611, %v4779
  %v4786 = vadd.f32 %v4612, %v4782
  %v4787 = vpack.c.bf16 %v4744, %v4743
  %s4788 = scalar_lea.vmem [#allocation2], 304
  %v4789 = vld [vmem:[%s4788] sm:$0xff]
  %v4790 = vld [vmem:[%s4788 + $0x8] sm:$0xff]
  %v4792 = vsel %vm1405, %v4787, 0
  %4794 = vmatpush.bf16.msra.mxu0 0
  %4795 = vmatpush.bf16.msra.mxu0 0
  %4796 = vmatpush.bf16.msra.mxu0 0
  %4797 = vmatpush.bf16.msra.mxu0 0
  %4798 = vmatpush.bf16.msra.mxu0 %v1400
  %4799 = vmatpush.bf16.msra.mxu0 %v1399
  %4800 = vmatpush.bf16.msra.mxu0 %v1398
  %4801 = vmatpush.bf16.msra.mxu0 %v1397
  %4802 = vmatmul.bf16.gmra.mxu0 %v4792
  %v4803 = vpop.f32.mrf.mxu0
  %v4804 = vadd.f32 0.0, %v4803
  %v4805 = vpop.f32.mrf.mxu0
  %v4806 = vadd.f32 0.0, %v4805
  %4807 = vdwg.mxu0
  %v4808 = vadd.f32 %v4789, %v4804
  %v4809 = vadd.f32 %v4790, %v4806
  %v4810 = vmul.f32 %v4808, 0.666
  %v4811 = vmul.f32 %v4809, 0.666
  %v4812 = vtanh.pop %v4810
  %v4813 = vtanh.pop %v4811
  %v4814 = vmul.f32 %v4812, 1.7159
  %v4815 = vmul.f32 %v4813, 1.7159
  %v4816 = vpack.c.bf16 %v4815, %v4814
  %4817 = vmatpush.bf16.msra.mxu0 %v1499
  %4818 = vmatpush.bf16.msra.mxu0 %v1497
  %4819 = vmatpush.bf16.msra.mxu0 %v1495
  %4820 = vmatpush.bf16.msra.mxu0 %v1493
  %4821 = vmatpush.bf16.msra.mxu0 %v1491
  %4822 = vmatpush.bf16.msra.mxu0 %v1489
  %4823 = vmatpush.bf16.msra.mxu0 %v1487
  %4824 = vmatpush.bf16.msra.mxu0 %v1485
  %4825 = vmatmul.bf16.gmra.mxu0 %v4816
  %v4826 = vpop.f32.mrf.mxu0
  %v4827 = vadd.f32 %v1433, %v4826
  %v4828 = vpop.f32.mrf.mxu0
  %v4829 = vadd.f32 %v1433, %v4828
  %4830 = vdwg.mxu0
  %4831 = vmatpush.bf16.msra.mxu0 %v1500
  %4832 = vmatpush.bf16.msra.mxu0 %v1498
  %4833 = vmatpush.bf16.msra.mxu0 %v1496
  %4834 = vmatpush.bf16.msra.mxu0 %v1494
  %4835 = vmatpush.bf16.msra.mxu0 %v1492
  %4836 = vmatpush.bf16.msra.mxu0 %v1490
  %4837 = vmatpush.bf16.msra.mxu0 %v1488
  %4838 = vmatpush.bf16.msra.mxu0 %v1486
  %4839 = vmatmul.bf16.gmra.mxu0 %v4816
  %v4840 = vpop.f32.mrf.mxu0
  %v4841 = vadd.f32 %v1434, %v4840
  %v4842 = vpop.f32.mrf.mxu0
  %v4843 = vadd.f32 %v1434, %v4842
  %4844 = vdwg.mxu0
  %v4845 = vtanh.pop %v4827
  %v4846 = vtanh.pop %v4829
  %v4847 = vmul.f32 %v4841, %v1372
  %v4848 = vmul.f32 %v4843, %v1377
  %4851 = vrot.lane.b32.xlu0 %v4841, 64
  %v4852 = vpop.permute.xlu0 %4851
  %4853 = vrot.lane.b32.xlu0 %v4843, 64
  %v4854 = vpop.permute.xlu0 %4853
  %v4857 = vadd.f32 %v4847, %v4852
  %v4858 = vadd.f32 %v4848, %v4854
  %v4859 = vxor.u32 %v4857, 2147483648
  %v4860 = vxor.u32 %v4858, 2147483648
  %v4861 = vmul.f32 %v4859, 1.442695
  %v4862 = vpow.pop %v4861
  %v4863 = vmul.f32 %v4860, 1.442695
  %v4864 = vpow.pop %v4863
  %v4865 = vadd.f32 %v4862, 1.0
  %v4866 = vadd.f32 %v4864, 1.0
  %v4867 = vrcp.pop %v4865
  %v4868 = vmul.f32 %v4865, %v4867
  %v4869 = vsub.f32 1.0, %v4868
  %v4870 = vmul.f32 %v4867, %v4869
  %v4871 = vadd.f32 %v4867, %v4870
  %vm4872 = vweird.f32 %v4865
  %vm4873 = vweird.f32 %v4867
  %vm4874 = vmor %vm4872, %vm4873
  %v4875 = vsel %vm4874, %v4867, %v4871
  %v4876 = vand.u32 2147483647, %v4865
  %vm4877 = vcmp.eq.f32.partialorder %v4876, 8.507059e+37
  %v4878 = vand.u32 %v4865, 2147483648
  %v4879 = vor.u32 1.1754944e-38, %v4878
  %v4880 = vsel %vm4877, %v4879, %v4875
  %v4881 = vmul.f32 1.0, %v4880
  %v4882 = vrcp.pop %v4866
  %v4883 = vmul.f32 %v4866, %v4882
  %v4884 = vsub.f32 1.0, %v4883
  %v4885 = vmul.f32 %v4882, %v4884
  %v4886 = vadd.f32 %v4882, %v4885
  %vm4887 = vweird.f32 %v4866
  %vm4888 = vweird.f32 %v4882
  %vm4889 = vmor %vm4887, %vm4888
  %v4890 = vsel %vm4889, %v4882, %v4886
  %v4891 = vand.u32 2147483647, %v4866
  %vm4892 = vcmp.eq.f32.partialorder %v4891, 8.507059e+37
  %v4893 = vand.u32 %v4866, 2147483648
  %v4894 = vor.u32 1.1754944e-38, %v4893
  %v4895 = vsel %vm4892, %v4894, %v4890
  %v4896 = vmul.f32 1.0, %v4895
  %4899 = vrot.lane.b32.xlu0 %v4845, 64
  %v4900 = vpop.permute.xlu0 %4899
  %4901 = vrot.lane.b32.xlu0 %v4846, 64
  %v4902 = vpop.permute.xlu0 %4901
  %v4905 = vsub.f32 %v4845, %v4900
  %v4906 = vsub.f32 %v4846, %v4902
  %4909 = vrot.lane.b32.xlu0 %v4905, 64
  %v4910 = vpop.permute.xlu0 %4909
  %4911 = vrot.lane.b32.xlu0 %v4906, 64
  %v4912 = vpop.permute.xlu0 %4911
  %v4915 = vmul.f32 %v4881, %v4910
  %v4916 = vmul.f32 %v4896, %v4912
  %v4917 = vadd.f32 %v4845, %v4915
  %v4918 = vadd.f32 %v4846, %v4916
  %s4919 = scalar_lea.vmem %s9, 456
  %v4920 = vld [vmem:[%s4919] sm:$0xff]
  %v4921 = vld [vmem:[%s4919 + $0x8] sm:$0xff]
  %v4922 = vld [vmem:[%s4919 + $0x10] sm:$0xff]
  %v4924 = vsel %vm1758, %v4920, 0
  %v4927 = vsel %vm1758, %v4921, 0
  %v4930 = vsel %vm1758, %v4922, 0
  %4932 = vmatpush.msra.mxu0 0.0
  %4933 = vmatpush.msra.mxu0 0.0
  %4934 = vmatpush.msra.mxu0 0.0
  %4935 = vmatpush.msra.mxu0 0.0
  %4936 = vmatpush.msra.mxu0 0.0
  %4937 = vmatpush.msra.mxu0 0.0
  %4938 = vmatpush.msra.mxu0 0.0
  %4939 = vmatpush.msra.mxu0 0.0
  %4940 = vmatpush.msra.mxu0 0.0
  %4941 = vmatpush.msra.mxu0 0.0
  %4942 = vmatpush.msra.mxu0 0.0
  %4943 = vmatpush.msra.mxu0 0.0
  %4944 = vmatpush.msra.mxu0 0.0
  %4945 = vmatpush.msra.mxu0 0.0
  %4946 = vmatpush.msra.mxu0 %v4918
  %4947 = vmatpush.msra.mxu0 %v4917
  %4948 = vmatmul.f32.gmra.mxu0 %v4924
  %v4949 = vpop.f32.mrf.mxu0
  %v4950 = vadd.f32 0.0, %v4949
  %4951 = vmatmul.f32.gmra.mxu0 %v4927
  %v4952 = vpop.f32.mrf.mxu0
  %v4953 = vadd.f32 0.0, %v4952
  %4954 = vmatmul.f32.gmra.mxu0 %v4930
  %v4955 = vpop.f32.mrf.mxu0
  %v4956 = vadd.f32 0.0, %v4955
  %4957 = vdwg.mxu0
  %v4958 = vadd.f32 %v4784, %v4950
  %v4959 = vadd.f32 %v4785, %v4953
  %v4960 = vadd.f32 %v4786, %v4956
  %v4961 = vpack.c.bf16 %v4918, %v4917
  %s4962 = scalar_lea.vmem [#allocation2], 320
  %v4963 = vld [vmem:[%s4962] sm:$0xff]
  %v4964 = vld [vmem:[%s4962 + $0x8] sm:$0xff]
  %v4966 = vsel %vm1405, %v4961, 0
  %4968 = vmatpush.bf16.msra.mxu0 0
  %4969 = vmatpush.bf16.msra.mxu0 0
  %4970 = vmatpush.bf16.msra.mxu0 0
  %4971 = vmatpush.bf16.msra.mxu0 0
  %4972 = vmatpush.bf16.msra.mxu0 %v1400
  %4973 = vmatpush.bf16.msra.mxu0 %v1399
  %4974 = vmatpush.bf16.msra.mxu0 %v1398
  %4975 = vmatpush.bf16.msra.mxu0 %v1397
  %4976 = vmatmul.bf16.gmra.mxu0 %v4966
  %v4977 = vpop.f32.mrf.mxu0
  %v4978 = vadd.f32 0.0, %v4977
  %v4979 = vpop.f32.mrf.mxu0
  %v4980 = vadd.f32 0.0, %v4979
  %4981 = vdwg.mxu0
  %v4982 = vadd.f32 %v4963, %v4978
  %v4983 = vadd.f32 %v4964, %v4980
  %v4984 = vmul.f32 %v4982, 0.666
  %v4985 = vmul.f32 %v4983, 0.666
  %v4986 = vtanh.pop %v4984
  %v4987 = vtanh.pop %v4985
  %v4988 = vmul.f32 %v4986, 1.7159
  %v4989 = vmul.f32 %v4987, 1.7159
  %v4990 = vpack.c.bf16 %v4989, %v4988
  %4991 = vmatpush.bf16.msra.mxu0 %v1499
  %4992 = vmatpush.bf16.msra.mxu0 %v1497
  %4993 = vmatpush.bf16.msra.mxu0 %v1495
  %4994 = vmatpush.bf16.msra.mxu0 %v1493
  %4995 = vmatpush.bf16.msra.mxu0 %v1491
  %4996 = vmatpush.bf16.msra.mxu0 %v1489
  %4997 = vmatpush.bf16.msra.mxu0 %v1487
  %4998 = vmatpush.bf16.msra.mxu0 %v1485
  %4999 = vmatmul.bf16.gmra.mxu0 %v4990
  %v5000 = vpop.f32.mrf.mxu0
  %v5001 = vadd.f32 %v1433, %v5000
  %v5002 = vpop.f32.mrf.mxu0
  %v5003 = vadd.f32 %v1433, %v5002
  %5004 = vdwg.mxu0
  %5005 = vmatpush.bf16.msra.mxu0 %v1500
  %5006 = vmatpush.bf16.msra.mxu0 %v1498
  %5007 = vmatpush.bf16.msra.mxu0 %v1496
  %5008 = vmatpush.bf16.msra.mxu0 %v1494
  %5009 = vmatpush.bf16.msra.mxu0 %v1492
  %5010 = vmatpush.bf16.msra.mxu0 %v1490
  %5011 = vmatpush.bf16.msra.mxu0 %v1488
  %5012 = vmatpush.bf16.msra.mxu0 %v1486
  %5013 = vmatmul.bf16.gmra.mxu0 %v4990
  %v5014 = vpop.f32.mrf.mxu0
  %v5015 = vadd.f32 %v1434, %v5014
  %v5016 = vpop.f32.mrf.mxu0
  %v5017 = vadd.f32 %v1434, %v5016
  %5018 = vdwg.mxu0
  %v5019 = vtanh.pop %v5001
  %v5020 = vtanh.pop %v5003
  %v5021 = vmul.f32 %v5015, %v1372
  %v5022 = vmul.f32 %v5017, %v1377
  %5025 = vrot.lane.b32.xlu0 %v5015, 64
  %v5026 = vpop.permute.xlu0 %5025
  %5027 = vrot.lane.b32.xlu0 %v5017, 64
  %v5028 = vpop.permute.xlu0 %5027
  %v5031 = vadd.f32 %v5021, %v5026
  %v5032 = vadd.f32 %v5022, %v5028
  %v5033 = vxor.u32 %v5031, 2147483648
  %v5034 = vxor.u32 %v5032, 2147483648
  %v5035 = vmul.f32 %v5033, 1.442695
  %v5036 = vpow.pop %v5035
  %v5037 = vmul.f32 %v5034, 1.442695
  %v5038 = vpow.pop %v5037
  %v5039 = vadd.f32 %v5036, 1.0
  %v5040 = vadd.f32 %v5038, 1.0
  %v5041 = vrcp.pop %v5039
  %v5042 = vmul.f32 %v5039, %v5041
  %v5043 = vsub.f32 1.0, %v5042
  %v5044 = vmul.f32 %v5041, %v5043
  %v5045 = vadd.f32 %v5041, %v5044
  %vm5046 = vweird.f32 %v5039
  %vm5047 = vweird.f32 %v5041
  %vm5048 = vmor %vm5046, %vm5047
  %v5049 = vsel %vm5048, %v5041, %v5045
  %v5050 = vand.u32 2147483647, %v5039
  %vm5051 = vcmp.eq.f32.partialorder %v5050, 8.507059e+37
  %v5052 = vand.u32 %v5039, 2147483648
  %v5053 = vor.u32 1.1754944e-38, %v5052
  %v5054 = vsel %vm5051, %v5053, %v5049
  %v5055 = vmul.f32 1.0, %v5054
  %v5056 = vrcp.pop %v5040
  %v5057 = vmul.f32 %v5040, %v5056
  %v5058 = vsub.f32 1.0, %v5057
  %v5059 = vmul.f32 %v5056, %v5058
  %v5060 = vadd.f32 %v5056, %v5059
  %vm5061 = vweird.f32 %v5040
  %vm5062 = vweird.f32 %v5056
  %vm5063 = vmor %vm5061, %vm5062
  %v5064 = vsel %vm5063, %v5056, %v5060
  %v5065 = vand.u32 2147483647, %v5040
  %vm5066 = vcmp.eq.f32.partialorder %v5065, 8.507059e+37
  %v5067 = vand.u32 %v5040, 2147483648
  %v5068 = vor.u32 1.1754944e-38, %v5067
  %v5069 = vsel %vm5066, %v5068, %v5064
  %v5070 = vmul.f32 1.0, %v5069
  %5073 = vrot.lane.b32.xlu0 %v5019, 64
  %v5074 = vpop.permute.xlu0 %5073
  %5075 = vrot.lane.b32.xlu0 %v5020, 64
  %v5076 = vpop.permute.xlu0 %5075
  %v5079 = vsub.f32 %v5019, %v5074
  %v5080 = vsub.f32 %v5020, %v5076
  %5083 = vrot.lane.b32.xlu0 %v5079, 64
  %v5084 = vpop.permute.xlu0 %5083
  %5085 = vrot.lane.b32.xlu0 %v5080, 64
  %v5086 = vpop.permute.xlu0 %5085
  %v5089 = vmul.f32 %v5055, %v5084
  %v5090 = vmul.f32 %v5070, %v5086
  %v5091 = vadd.f32 %v5019, %v5089
  %v5092 = vadd.f32 %v5020, %v5090
  %s5093 = scalar_lea.vmem %s9, 480
  %v5094 = vld [vmem:[%s5093] sm:$0xff]
  %v5095 = vld [vmem:[%s5093 + $0x8] sm:$0xff]
  %v5096 = vld [vmem:[%s5093 + $0x10] sm:$0xff]
  %v5098 = vsel %vm1758, %v5094, 0
  %v5101 = vsel %vm1758, %v5095, 0
  %v5104 = vsel %vm1758, %v5096, 0
  %5106 = vmatpush.msra.mxu0 0.0
  %5107 = vmatpush.msra.mxu0 0.0
  %5108 = vmatpush.msra.mxu0 0.0
  %5109 = vmatpush.msra.mxu0 0.0
  %5110 = vmatpush.msra.mxu0 0.0
  %5111 = vmatpush.msra.mxu0 0.0
  %5112 = vmatpush.msra.mxu0 0.0
  %5113 = vmatpush.msra.mxu0 0.0
  %5114 = vmatpush.msra.mxu0 0.0
  %5115 = vmatpush.msra.mxu0 0.0
  %5116 = vmatpush.msra.mxu0 0.0
  %5117 = vmatpush.msra.mxu0 0.0
  %5118 = vmatpush.msra.mxu0 0.0
  %5119 = vmatpush.msra.mxu0 0.0
  %5120 = vmatpush.msra.mxu0 %v5092
  %5121 = vmatpush.msra.mxu0 %v5091
  %5122 = vmatmul.f32.gmra.mxu0 %v5098
  %v5123 = vpop.f32.mrf.mxu0
  %v5124 = vadd.f32 0.0, %v5123
  %5125 = vmatmul.f32.gmra.mxu0 %v5101
  %v5126 = vpop.f32.mrf.mxu0
  %v5127 = vadd.f32 0.0, %v5126
  %5128 = vmatmul.f32.gmra.mxu0 %v5104
  %v5129 = vpop.f32.mrf.mxu0
  %v5130 = vadd.f32 0.0, %v5129
  %5131 = vdwg.mxu0
  %v5132 = vadd.f32 %v4958, %v5124
  %v5133 = vadd.f32 %v4959, %v5127
  %v5134 = vadd.f32 %v4960, %v5130
  %v5135 = vpack.c.bf16 %v5092, %v5091
  %s5136 = scalar_lea.vmem [#allocation2], 336
  %v5137 = vld [vmem:[%s5136] sm:$0xff]
  %v5138 = vld [vmem:[%s5136 + $0x8] sm:$0xff]
  %v5140 = vsel %vm1405, %v5135, 0
  %5142 = vmatpush.bf16.msra.mxu0 0
  %5143 = vmatpush.bf16.msra.mxu0 0
  %5144 = vmatpush.bf16.msra.mxu0 0
  %5145 = vmatpush.bf16.msra.mxu0 0
  %5146 = vmatpush.bf16.msra.mxu0 %v1400
  %5147 = vmatpush.bf16.msra.mxu0 %v1399
  %5148 = vmatpush.bf16.msra.mxu0 %v1398
  %5149 = vmatpush.bf16.msra.mxu0 %v1397
  %5150 = vmatmul.bf16.gmra.mxu0 %v5140
  %v5151 = vpop.f32.mrf.mxu0
  %v5152 = vadd.f32 0.0, %v5151
  %v5153 = vpop.f32.mrf.mxu0
  %v5154 = vadd.f32 0.0, %v5153
  %5155 = vdwg.mxu0
  %v5156 = vadd.f32 %v5137, %v5152
  %v5157 = vadd.f32 %v5138, %v5154
  %v5158 = vmul.f32 %v5156, 0.666
  %v5159 = vmul.f32 %v5157, 0.666
  %v5160 = vtanh.pop %v5158
  %v5161 = vtanh.pop %v5159
  %v5162 = vmul.f32 %v5160, 1.7159
  %v5163 = vmul.f32 %v5161, 1.7159
  %v5164 = vpack.c.bf16 %v5163, %v5162
  %5165 = vmatpush.bf16.msra.mxu0 %v1499
  %5166 = vmatpush.bf16.msra.mxu0 %v1497
  %5167 = vmatpush.bf16.msra.mxu0 %v1495
  %5168 = vmatpush.bf16.msra.mxu0 %v1493
  %5169 = vmatpush.bf16.msra.mxu0 %v1491
  %5170 = vmatpush.bf16.msra.mxu0 %v1489
  %5171 = vmatpush.bf16.msra.mxu0 %v1487
  %5172 = vmatpush.bf16.msra.mxu0 %v1485
  %5173 = vmatmul.bf16.gmra.mxu0 %v5164
  %v5174 = vpop.f32.mrf.mxu0
  %v5175 = vadd.f32 %v1433, %v5174
  %v5176 = vpop.f32.mrf.mxu0
  %v5177 = vadd.f32 %v1433, %v5176
  %5178 = vdwg.mxu0
  %5179 = vmatpush.bf16.msra.mxu0 %v1500
  %5180 = vmatpush.bf16.msra.mxu0 %v1498
  %5181 = vmatpush.bf16.msra.mxu0 %v1496
  %5182 = vmatpush.bf16.msra.mxu0 %v1494
  %5183 = vmatpush.bf16.msra.mxu0 %v1492
  %5184 = vmatpush.bf16.msra.mxu0 %v1490
  %5185 = vmatpush.bf16.msra.mxu0 %v1488
  %5186 = vmatpush.bf16.msra.mxu0 %v1486
  %5187 = vmatmul.bf16.gmra.mxu0 %v5164
  %v5188 = vpop.f32.mrf.mxu0
  %v5189 = vadd.f32 %v1434, %v5188
  %v5190 = vpop.f32.mrf.mxu0
  %v5191 = vadd.f32 %v1434, %v5190
  %5192 = vdwg.mxu0
  %v5193 = vtanh.pop %v5175
  %v5194 = vtanh.pop %v5177
  %v5195 = vmul.f32 %v5189, %v1372
  %v5196 = vmul.f32 %v5191, %v1377
  %5199 = vrot.lane.b32.xlu0 %v5189, 64
  %v5200 = vpop.permute.xlu0 %5199
  %5201 = vrot.lane.b32.xlu0 %v5191, 64
  %v5202 = vpop.permute.xlu0 %5201
  %v5205 = vadd.f32 %v5195, %v5200
  %v5206 = vadd.f32 %v5196, %v5202
  %v5207 = vxor.u32 %v5205, 2147483648
  %v5208 = vxor.u32 %v5206, 2147483648
  %v5209 = vmul.f32 %v5207, 1.442695
  %v5210 = vpow.pop %v5209
  %v5211 = vmul.f32 %v5208, 1.442695
  %v5212 = vpow.pop %v5211
  %v5213 = vadd.f32 %v5210, 1.0
  %v5214 = vadd.f32 %v5212, 1.0
  %v5215 = vrcp.pop %v5213
  %v5216 = vmul.f32 %v5213, %v5215
  %v5217 = vsub.f32 1.0, %v5216
  %v5218 = vmul.f32 %v5215, %v5217
  %v5219 = vadd.f32 %v5215, %v5218
  %vm5220 = vweird.f32 %v5213
  %vm5221 = vweird.f32 %v5215
  %vm5222 = vmor %vm5220, %vm5221
  %v5223 = vsel %vm5222, %v5215, %v5219
  %v5224 = vand.u32 2147483647, %v5213
  %vm5225 = vcmp.eq.f32.partialorder %v5224, 8.507059e+37
  %v5226 = vand.u32 %v5213, 2147483648
  %v5227 = vor.u32 1.1754944e-38, %v5226
  %v5228 = vsel %vm5225, %v5227, %v5223
  %v5229 = vmul.f32 1.0, %v5228
  %v5230 = vrcp.pop %v5214
  %v5231 = vmul.f32 %v5214, %v5230
  %v5232 = vsub.f32 1.0, %v5231
  %v5233 = vmul.f32 %v5230, %v5232
  %v5234 = vadd.f32 %v5230, %v5233
  %vm5235 = vweird.f32 %v5214
  %vm5236 = vweird.f32 %v5230
  %vm5237 = vmor %vm5235, %vm5236
  %v5238 = vsel %vm5237, %v5230, %v5234
  %v5239 = vand.u32 2147483647, %v5214
  %vm5240 = vcmp.eq.f32.partialorder %v5239, 8.507059e+37
  %v5241 = vand.u32 %v5214, 2147483648
  %v5242 = vor.u32 1.1754944e-38, %v5241
  %v5243 = vsel %vm5240, %v5242, %v5238
  %v5244 = vmul.f32 1.0, %v5243
  %5247 = vrot.lane.b32.xlu0 %v5193, 64
  %v5248 = vpop.permute.xlu0 %5247
  %5249 = vrot.lane.b32.xlu0 %v5194, 64
  %v5250 = vpop.permute.xlu0 %5249
  %v5253 = vsub.f32 %v5193, %v5248
  %v5254 = vsub.f32 %v5194, %v5250
  %5257 = vrot.lane.b32.xlu0 %v5253, 64
  %v5258 = vpop.permute.xlu0 %5257
  %5259 = vrot.lane.b32.xlu0 %v5254, 64
  %v5260 = vpop.permute.xlu0 %5259
  %v5263 = vmul.f32 %v5229, %v5258
  %v5264 = vmul.f32 %v5244, %v5260
  %v5265 = vadd.f32 %v5193, %v5263
  %v5266 = vadd.f32 %v5194, %v5264
  %s5267 = scalar_lea.vmem %s9, 504
  %v5268 = vld [vmem:[%s5267] sm:$0xff]
  %v5269 = vld [vmem:[%s5267 + $0x8] sm:$0xff]
  %v5270 = vld [vmem:[%s5267 + $0x10] sm:$0xff]
  %v5272 = vsel %vm1758, %v5268, 0
  %v5275 = vsel %vm1758, %v5269, 0
  %v5278 = vsel %vm1758, %v5270, 0
  %5280 = vmatpush.msra.mxu0 0.0
  %5281 = vmatpush.msra.mxu0 0.0
  %5282 = vmatpush.msra.mxu0 0.0
  %5283 = vmatpush.msra.mxu0 0.0
  %5284 = vmatpush.msra.mxu0 0.0
  %5285 = vmatpush.msra.mxu0 0.0
  %5286 = vmatpush.msra.mxu0 0.0
  %5287 = vmatpush.msra.mxu0 0.0
  %5288 = vmatpush.msra.mxu0 0.0
  %5289 = vmatpush.msra.mxu0 0.0
  %5290 = vmatpush.msra.mxu0 0.0
  %5291 = vmatpush.msra.mxu0 0.0
  %5292 = vmatpush.msra.mxu0 0.0
  %5293 = vmatpush.msra.mxu0 0.0
  %5294 = vmatpush.msra.mxu0 %v5266
  %5295 = vmatpush.msra.mxu0 %v5265
  %5296 = vmatmul.f32.gmra.mxu0 %v5272
  %v5297 = vpop.f32.mrf.mxu0
  %v5298 = vadd.f32 0.0, %v5297
  %5299 = vmatmul.f32.gmra.mxu0 %v5275
  %v5300 = vpop.f32.mrf.mxu0
  %v5301 = vadd.f32 0.0, %v5300
  %5302 = vmatmul.f32.gmra.mxu0 %v5278
  %v5303 = vpop.f32.mrf.mxu0
  %v5304 = vadd.f32 0.0, %v5303
  %5305 = vdwg.mxu0
  %v5306 = vadd.f32 %v5132, %v5298
  %v5307 = vadd.f32 %v5133, %v5301
  %v5308 = vadd.f32 %v5134, %v5304
  %v5309 = vpack.c.bf16 %v5266, %v5265
  %s5310 = scalar_lea.vmem [#allocation2], 352
  %v5311 = vld [vmem:[%s5310] sm:$0xff]
  %v5312 = vld [vmem:[%s5310 + $0x8] sm:$0xff]
  %v5314 = vsel %vm1405, %v5309, 0
  %5316 = vmatpush.bf16.msra.mxu0 0
  %5317 = vmatpush.bf16.msra.mxu0 0
  %5318 = vmatpush.bf16.msra.mxu0 0
  %5319 = vmatpush.bf16.msra.mxu0 0
  %5320 = vmatpush.bf16.msra.mxu0 %v1400
  %5321 = vmatpush.bf16.msra.mxu0 %v1399
  %5322 = vmatpush.bf16.msra.mxu0 %v1398
  %5323 = vmatpush.bf16.msra.mxu0 %v1397
  %5324 = vmatmul.bf16.gmra.mxu0 %v5314
  %v5325 = vpop.f32.mrf.mxu0
  %v5326 = vadd.f32 0.0, %v5325
  %v5327 = vpop.f32.mrf.mxu0
  %v5328 = vadd.f32 0.0, %v5327
  %5329 = vdwg.mxu0
  %v5330 = vadd.f32 %v5311, %v5326
  %v5331 = vadd.f32 %v5312, %v5328
  %v5332 = vmul.f32 %v5330, 0.666
  %v5333 = vmul.f32 %v5331, 0.666
  %v5334 = vtanh.pop %v5332
  %v5335 = vtanh.pop %v5333
  %v5336 = vmul.f32 %v5334, 1.7159
  %v5337 = vmul.f32 %v5335, 1.7159
  %v5338 = vpack.c.bf16 %v5337, %v5336
  %5339 = vmatpush.bf16.msra.mxu0 %v1499
  %5340 = vmatpush.bf16.msra.mxu0 %v1497
  %5341 = vmatpush.bf16.msra.mxu0 %v1495
  %5342 = vmatpush.bf16.msra.mxu0 %v1493
  %5343 = vmatpush.bf16.msra.mxu0 %v1491
  %5344 = vmatpush.bf16.msra.mxu0 %v1489
  %5345 = vmatpush.bf16.msra.mxu0 %v1487
  %5346 = vmatpush.bf16.msra.mxu0 %v1485
  %5347 = vmatmul.bf16.gmra.mxu0 %v5338
  %v5348 = vpop.f32.mrf.mxu0
  %v5349 = vadd.f32 %v1433, %v5348
  %v5350 = vpop.f32.mrf.mxu0
  %v5351 = vadd.f32 %v1433, %v5350
  %5352 = vdwg.mxu0
  %5353 = vmatpush.bf16.msra.mxu0 %v1500
  %5354 = vmatpush.bf16.msra.mxu0 %v1498
  %5355 = vmatpush.bf16.msra.mxu0 %v1496
  %5356 = vmatpush.bf16.msra.mxu0 %v1494
  %5357 = vmatpush.bf16.msra.mxu0 %v1492
  %5358 = vmatpush.bf16.msra.mxu0 %v1490
  %5359 = vmatpush.bf16.msra.mxu0 %v1488
  %5360 = vmatpush.bf16.msra.mxu0 %v1486
  %5361 = vmatmul.bf16.gmra.mxu0 %v5338
  %v5362 = vpop.f32.mrf.mxu0
  %v5363 = vadd.f32 %v1434, %v5362
  %v5364 = vpop.f32.mrf.mxu0
  %v5365 = vadd.f32 %v1434, %v5364
  %5366 = vdwg.mxu0
  %v5367 = vtanh.pop %v5349
  %v5368 = vtanh.pop %v5351
  %v5369 = vmul.f32 %v5363, %v1372
  %v5370 = vmul.f32 %v5365, %v1377
  %5373 = vrot.lane.b32.xlu0 %v5363, 64
  %v5374 = vpop.permute.xlu0 %5373
  %5375 = vrot.lane.b32.xlu0 %v5365, 64
  %v5376 = vpop.permute.xlu0 %5375
  %v5379 = vadd.f32 %v5369, %v5374
  %v5380 = vadd.f32 %v5370, %v5376
  %v5381 = vxor.u32 %v5379, 2147483648
  %v5382 = vxor.u32 %v5380, 2147483648
  %v5383 = vmul.f32 %v5381, 1.442695
  %v5384 = vpow.pop %v5383
  %v5385 = vmul.f32 %v5382, 1.442695
  %v5386 = vpow.pop %v5385
  %v5387 = vadd.f32 %v5384, 1.0
  %v5388 = vadd.f32 %v5386, 1.0
  %v5389 = vrcp.pop %v5387
  %v5390 = vmul.f32 %v5387, %v5389
  %v5391 = vsub.f32 1.0, %v5390
  %v5392 = vmul.f32 %v5389, %v5391
  %v5393 = vadd.f32 %v5389, %v5392
  %vm5394 = vweird.f32 %v5387
  %vm5395 = vweird.f32 %v5389
  %vm5396 = vmor %vm5394, %vm5395
  %v5397 = vsel %vm5396, %v5389, %v5393
  %v5398 = vand.u32 2147483647, %v5387
  %vm5399 = vcmp.eq.f32.partialorder %v5398, 8.507059e+37
  %v5400 = vand.u32 %v5387, 2147483648
  %v5401 = vor.u32 1.1754944e-38, %v5400
  %v5402 = vsel %vm5399, %v5401, %v5397
  %v5403 = vmul.f32 1.0, %v5402
  %v5404 = vrcp.pop %v5388
  %v5405 = vmul.f32 %v5388, %v5404
  %v5406 = vsub.f32 1.0, %v5405
  %v5407 = vmul.f32 %v5404, %v5406
  %v5408 = vadd.f32 %v5404, %v5407
  %vm5409 = vweird.f32 %v5388
  %vm5410 = vweird.f32 %v5404
  %vm5411 = vmor %vm5409, %vm5410
  %v5412 = vsel %vm5411, %v5404, %v5408
  %v5413 = vand.u32 2147483647, %v5388
  %vm5414 = vcmp.eq.f32.partialorder %v5413, 8.507059e+37
  %v5415 = vand.u32 %v5388, 2147483648
  %v5416 = vor.u32 1.1754944e-38, %v5415
  %v5417 = vsel %vm5414, %v5416, %v5412
  %v5418 = vmul.f32 1.0, %v5417
  %5421 = vrot.lane.b32.xlu0 %v5367, 64
  %v5422 = vpop.permute.xlu0 %5421
  %5423 = vrot.lane.b32.xlu0 %v5368, 64
  %v5424 = vpop.permute.xlu0 %5423
  %v5427 = vsub.f32 %v5367, %v5422
  %v5428 = vsub.f32 %v5368, %v5424
  %5431 = vrot.lane.b32.xlu0 %v5427, 64
  %v5432 = vpop.permute.xlu0 %5431
  %5433 = vrot.lane.b32.xlu0 %v5428, 64
  %v5434 = vpop.permute.xlu0 %5433
  %v5437 = vmul.f32 %v5403, %v5432
  %v5438 = vmul.f32 %v5418, %v5434
  %v5439 = vadd.f32 %v5367, %v5437
  %v5440 = vadd.f32 %v5368, %v5438
  %s5441 = scalar_lea.vmem %s9, 528
  %v5442 = vld [vmem:[%s5441] sm:$0xff]
  %v5443 = vld [vmem:[%s5441 + $0x8] sm:$0xff]
  %v5444 = vld [vmem:[%s5441 + $0x10] sm:$0xff]
  %v5446 = vsel %vm1758, %v5442, 0
  %v5449 = vsel %vm1758, %v5443, 0
  %v5452 = vsel %vm1758, %v5444, 0
  %5454 = vmatpush.msra.mxu0 0.0
  %5455 = vmatpush.msra.mxu0 0.0
  %5456 = vmatpush.msra.mxu0 0.0
  %5457 = vmatpush.msra.mxu0 0.0
  %5458 = vmatpush.msra.mxu0 0.0
  %5459 = vmatpush.msra.mxu0 0.0
  %5460 = vmatpush.msra.mxu0 0.0
  %5461 = vmatpush.msra.mxu0 0.0
  %5462 = vmatpush.msra.mxu0 0.0
  %5463 = vmatpush.msra.mxu0 0.0
  %5464 = vmatpush.msra.mxu0 0.0
  %5465 = vmatpush.msra.mxu0 0.0
  %5466 = vmatpush.msra.mxu0 0.0
  %5467 = vmatpush.msra.mxu0 0.0
  %5468 = vmatpush.msra.mxu0 %v5440
  %5469 = vmatpush.msra.mxu0 %v5439
  %5470 = vmatmul.f32.gmra.mxu0 %v5446
  %v5471 = vpop.f32.mrf.mxu0
  %v5472 = vadd.f32 0.0, %v5471
  %5473 = vmatmul.f32.gmra.mxu0 %v5449
  %v5474 = vpop.f32.mrf.mxu0
  %v5475 = vadd.f32 0.0, %v5474
  %5476 = vmatmul.f32.gmra.mxu0 %v5452
  %v5477 = vpop.f32.mrf.mxu0
  %v5478 = vadd.f32 0.0, %v5477
  %5479 = vdwg.mxu0
  %v5480 = vadd.f32 %v5306, %v5472
  %v5481 = vadd.f32 %v5307, %v5475
  %v5482 = vadd.f32 %v5308, %v5478
  %v5483 = vpack.c.bf16 %v5440, %v5439
  %s5484 = scalar_lea.vmem [#allocation2], 368
  %v5485 = vld [vmem:[%s5484] sm:$0xff]
  %v5486 = vld [vmem:[%s5484 + $0x8] sm:$0xff]
  %v5488 = vsel %vm1405, %v5483, 0
  %5490 = vmatpush.bf16.msra.mxu0 0
  %5491 = vmatpush.bf16.msra.mxu0 0
  %5492 = vmatpush.bf16.msra.mxu0 0
  %5493 = vmatpush.bf16.msra.mxu0 0
  %5494 = vmatpush.bf16.msra.mxu0 %v1400
  %5495 = vmatpush.bf16.msra.mxu0 %v1399
  %5496 = vmatpush.bf16.msra.mxu0 %v1398
  %5497 = vmatpush.bf16.msra.mxu0 %v1397
  %5498 = vmatmul.bf16.gmra.mxu0 %v5488
  %v5499 = vpop.f32.mrf.mxu0
  %v5500 = vadd.f32 0.0, %v5499
  %v5501 = vpop.f32.mrf.mxu0
  %v5502 = vadd.f32 0.0, %v5501
  %5503 = vdwg.mxu0
  %v5504 = vadd.f32 %v5485, %v5500
  %v5505 = vadd.f32 %v5486, %v5502
  %v5506 = vmul.f32 %v5504, 0.666
  %v5507 = vmul.f32 %v5505, 0.666
  %v5508 = vtanh.pop %v5506
  %v5509 = vtanh.pop %v5507
  %v5510 = vmul.f32 %v5508, 1.7159
  %v5511 = vmul.f32 %v5509, 1.7159
  %v5512 = vpack.c.bf16 %v5511, %v5510
  %5513 = vmatpush.bf16.msra.mxu0 %v1499
  %5514 = vmatpush.bf16.msra.mxu0 %v1497
  %5515 = vmatpush.bf16.msra.mxu0 %v1495
  %5516 = vmatpush.bf16.msra.mxu0 %v1493
  %5517 = vmatpush.bf16.msra.mxu0 %v1491
  %5518 = vmatpush.bf16.msra.mxu0 %v1489
  %5519 = vmatpush.bf16.msra.mxu0 %v1487
  %5520 = vmatpush.bf16.msra.mxu0 %v1485
  %5521 = vmatmul.bf16.gmra.mxu0 %v5512
  %v5522 = vpop.f32.mrf.mxu0
  %v5523 = vadd.f32 %v1433, %v5522
  %v5524 = vpop.f32.mrf.mxu0
  %v5525 = vadd.f32 %v1433, %v5524
  %5526 = vdwg.mxu0
  %5527 = vmatpush.bf16.msra.mxu0 %v1500
  %5528 = vmatpush.bf16.msra.mxu0 %v1498
  %5529 = vmatpush.bf16.msra.mxu0 %v1496
  %5530 = vmatpush.bf16.msra.mxu0 %v1494
  %5531 = vmatpush.bf16.msra.mxu0 %v1492
  %5532 = vmatpush.bf16.msra.mxu0 %v1490
  %5533 = vmatpush.bf16.msra.mxu0 %v1488
  %5534 = vmatpush.bf16.msra.mxu0 %v1486
  %5535 = vmatmul.bf16.gmra.mxu0 %v5512
  %v5536 = vpop.f32.mrf.mxu0
  %v5537 = vadd.f32 %v1434, %v5536
  %v5538 = vpop.f32.mrf.mxu0
  %v5539 = vadd.f32 %v1434, %v5538
  %5540 = vdwg.mxu0
  %v5541 = vtanh.pop %v5523
  %v5542 = vtanh.pop %v5525
  %v5543 = vmul.f32 %v5537, %v1372
  %v5544 = vmul.f32 %v5539, %v1377
  %5547 = vrot.lane.b32.xlu0 %v5537, 64
  %v5548 = vpop.permute.xlu0 %5547
  %5549 = vrot.lane.b32.xlu0 %v5539, 64
  %v5550 = vpop.permute.xlu0 %5549
  %v5553 = vadd.f32 %v5543, %v5548
  %v5554 = vadd.f32 %v5544, %v5550
  %v5555 = vxor.u32 %v5553, 2147483648
  %v5556 = vxor.u32 %v5554, 2147483648
  %v5557 = vmul.f32 %v5555, 1.442695
  %v5558 = vpow.pop %v5557
  %v5559 = vmul.f32 %v5556, 1.442695
  %v5560 = vpow.pop %v5559
  %v5561 = vadd.f32 %v5558, 1.0
  %v5562 = vadd.f32 %v5560, 1.0
  %v5563 = vrcp.pop %v5561
  %v5564 = vmul.f32 %v5561, %v5563
  %v5565 = vsub.f32 1.0, %v5564
  %v5566 = vmul.f32 %v5563, %v5565
  %v5567 = vadd.f32 %v5563, %v5566
  %vm5568 = vweird.f32 %v5561
  %vm5569 = vweird.f32 %v5563
  %vm5570 = vmor %vm5568, %vm5569
  %v5571 = vsel %vm5570, %v5563, %v5567
  %v5572 = vand.u32 2147483647, %v5561
  %vm5573 = vcmp.eq.f32.partialorder %v5572, 8.507059e+37
  %v5574 = vand.u32 %v5561, 2147483648
  %v5575 = vor.u32 1.1754944e-38, %v5574
  %v5576 = vsel %vm5573, %v5575, %v5571
  %v5577 = vmul.f32 1.0, %v5576
  %v5578 = vrcp.pop %v5562
  %v5579 = vmul.f32 %v5562, %v5578
  %v5580 = vsub.f32 1.0, %v5579
  %v5581 = vmul.f32 %v5578, %v5580
  %v5582 = vadd.f32 %v5578, %v5581
  %vm5583 = vweird.f32 %v5562
  %vm5584 = vweird.f32 %v5578
  %vm5585 = vmor %vm5583, %vm5584
  %v5586 = vsel %vm5585, %v5578, %v5582
  %v5587 = vand.u32 2147483647, %v5562
  %vm5588 = vcmp.eq.f32.partialorder %v5587, 8.507059e+37
  %v5589 = vand.u32 %v5562, 2147483648
  %v5590 = vor.u32 1.1754944e-38, %v5589
  %v5591 = vsel %vm5588, %v5590, %v5586
  %v5592 = vmul.f32 1.0, %v5591
  %5595 = vrot.lane.b32.xlu0 %v5541, 64
  %v5596 = vpop.permute.xlu0 %5595
  %5597 = vrot.lane.b32.xlu0 %v5542, 64
  %v5598 = vpop.permute.xlu0 %5597
  %v5601 = vsub.f32 %v5541, %v5596
  %v5602 = vsub.f32 %v5542, %v5598
  %5605 = vrot.lane.b32.xlu0 %v5601, 64
  %v5606 = vpop.permute.xlu0 %5605
  %5607 = vrot.lane.b32.xlu0 %v5602, 64
  %v5608 = vpop.permute.xlu0 %5607
  %v5611 = vmul.f32 %v5577, %v5606
  %v5612 = vmul.f32 %v5592, %v5608
  %v5613 = vadd.f32 %v5541, %v5611
  %v5614 = vadd.f32 %v5542, %v5612
  %s5615 = scalar_lea.vmem %s9, 552
  %v5616 = vld [vmem:[%s5615] sm:$0xff]
  %v5617 = vld [vmem:[%s5615 + $0x8] sm:$0xff]
  %v5618 = vld [vmem:[%s5615 + $0x10] sm:$0xff]
  %v5620 = vsel %vm1758, %v5616, 0
  %v5623 = vsel %vm1758, %v5617, 0
  %v5626 = vsel %vm1758, %v5618, 0
  %5628 = vmatpush.msra.mxu0 0.0
  %5629 = vmatpush.msra.mxu0 0.0
  %5630 = vmatpush.msra.mxu0 0.0
  %5631 = vmatpush.msra.mxu0 0.0
  %5632 = vmatpush.msra.mxu0 0.0
  %5633 = vmatpush.msra.mxu0 0.0
  %5634 = vmatpush.msra.mxu0 0.0
  %5635 = vmatpush.msra.mxu0 0.0
  %5636 = vmatpush.msra.mxu0 0.0
  %5637 = vmatpush.msra.mxu0 0.0
  %5638 = vmatpush.msra.mxu0 0.0
  %5639 = vmatpush.msra.mxu0 0.0
  %5640 = vmatpush.msra.mxu0 0.0
  %5641 = vmatpush.msra.mxu0 0.0
  %5642 = vmatpush.msra.mxu0 %v5614
  %5643 = vmatpush.msra.mxu0 %v5613
  %5644 = vmatmul.f32.gmra.mxu0 %v5620
  %v5645 = vpop.f32.mrf.mxu0
  %v5646 = vadd.f32 0.0, %v5645
  %5647 = vmatmul.f32.gmra.mxu0 %v5623
  %v5648 = vpop.f32.mrf.mxu0
  %v5649 = vadd.f32 0.0, %v5648
  %5650 = vmatmul.f32.gmra.mxu0 %v5626
  %v5651 = vpop.f32.mrf.mxu0
  %v5652 = vadd.f32 0.0, %v5651
  %5653 = vdwg.mxu0
  %v5654 = vadd.f32 %v5480, %v5646
  %v5655 = vadd.f32 %v5481, %v5649
  %v5656 = vadd.f32 %v5482, %v5652
  %v5657 = vld [vmem:[%s10] sm:$0xff]
  %v5658 = vld [vmem:[%s10 + $0x8] sm:$0xff]
  %v5659 = vld [vmem:[%s10 + $0x10] sm:$0xff]
  %v5660 = vld [vmem:[%s10 + $0x18] sm:$0xff]
  %v5661 = vld [vmem:[%s11] sm:$0x1]
  %v5663 = vperm.slane %v5661, 0
  %vm5665 = vcmask 261120
  %v5667 = vsel %vm5665, %v5654, 0
  %v5670 = vsel %vm5665, %v5655, 0
  %v5673 = vsel %vm5665, %v5656, 0
  %5675 = vmatpush.msra.mxu0 0.0
  %5676 = vmatpush.msra.mxu0 0.0
  %5677 = vmatpush.msra.mxu0 0.0
  %5678 = vmatpush.msra.mxu0 0.0
  %5679 = vmatpush.msra.mxu0 0.0
  %5680 = vmatpush.msra.mxu0 0.0
  %5681 = vmatpush.msra.mxu0 0.0
  %5682 = vmatpush.msra.mxu0 0.0
  %5683 = vmatpush.msra.mxu0 0.0
  %5684 = vmatpush.msra.mxu0 0.0
  %5685 = vmatpush.msra.mxu0 0.0
  %5686 = vmatpush.msra.mxu0 0.0
  %5687 = vmatpush.msra.mxu0 %v5660
  %5688 = vmatpush.msra.mxu0 %v5659
  %5689 = vmatpush.msra.mxu0 %v5658
  %5690 = vmatpush.msra.mxu0 %v5657
  %5691 = vmatmul.f32.gmra.mxu0 %v5667
  %v5692 = vpop.f32.mrf.mxu0
  %v5693 = vadd.f32 %v5663, %v5692
  %5694 = vmatmul.f32.gmra.mxu0 %v5670
  %v5695 = vpop.f32.mrf.mxu0
  %v5696 = vadd.f32 %v5663, %v5695
  %5697 = vmatmul.f32.gmra.mxu0 %v5673
  %v5698 = vpop.f32.mrf.mxu0
  %v5699 = vadd.f32 %v5663, %v5698
  %5700 = vdwg.mxu0
  %v5701 = vadd.f32 %v5693, %v111
  %v5702 = vadd.f32 %v5696, %v111
  %v5703 = vadd.f32 %v5699, %v111
  %vm5704 = vcmask 23552
  %5705 = vst.msk [vmem:[%s12] sm:$0xff] %vm5704, %v5701
  %5706 = vst.msk [vmem:[%s12 + $0x8] sm:$0xff] %vm5704, %v5702
  %5707 = vst.msk [vmem:[%s12 + $0x10] sm:$0xff] %vm5704, %v5703
  %5708 = vrot.lane.b32.xlu0 %v5654, 96
  %v5709 = vpop.permute.xlu0 %5708
  %5710 = vrot.lane.b32.xlu0 %v5655, 96
  %v5711 = vpop.permute.xlu0 %5710
  %5712 = vrot.lane.b32.xlu0 %v5656, 96
  %v5713 = vpop.permute.xlu0 %5712
  %v5714 = vsel %vm5665, %v5709, 0
  %v5716 = vsel %vm5665, %v5711, 0
  %v5718 = vsel %vm5665, %v5713, 0
  %5720 = vmatpush.msra.mxu0 0.0
  %5721 = vmatpush.msra.mxu0 0.0
  %5722 = vmatpush.msra.mxu0 0.0
  %5723 = vmatpush.msra.mxu0 0.0
  %5724 = vmatpush.msra.mxu0 0.0
  %5725 = vmatpush.msra.mxu0 0.0
  %5726 = vmatpush.msra.mxu0 0.0
  %5727 = vmatpush.msra.mxu0 0.0
  %5728 = vmatpush.msra.mxu0 0.0
  %5729 = vmatpush.msra.mxu0 0.0
  %5730 = vmatpush.msra.mxu0 0.0
  %5731 = vmatpush.msra.mxu0 0.0
  %5732 = vmatpush.msra.mxu0 %v5660
  %5733 = vmatpush.msra.mxu0 %v5659
  %5734 = vmatpush.msra.mxu0 %v5658
  %5735 = vmatpush.msra.mxu0 %v5657
  %5736 = vmatmul.f32.gmra.mxu0 %v5714
  %v5737 = vpop.f32.mrf.mxu0
  %v5738 = vadd.f32 %v5663, %v5737
  %5739 = vmatmul.f32.gmra.mxu0 %v5716
  %v5740 = vpop.f32.mrf.mxu0
  %v5741 = vadd.f32 %v5663, %v5740
  %5742 = vmatmul.f32.gmra.mxu0 %v5718
  %v5743 = vpop.f32.mrf.mxu0
  %v5744 = vadd.f32 %v5663, %v5743
  %5745 = vdwg.mxu0
  %5747 = vrot.lane.b32.xlu0 %v111, 124
  %v5748 = vpop.permute.xlu0 %5747
  %v5750 = vadd.f32 %v5738, %v5748
  %v5751 = vadd.f32 %v5741, %v5748
  %v5752 = vadd.f32 %v5744, %v5748
  %s5753 = scalar_lea.vmem %s12, 24
  %5754 = vst.msk [vmem:[%s5753] sm:$0xff] %vm5704, %v5750
  %5755 = vst.msk [vmem:[%s5753 + $0x8] sm:$0xff] %vm5704, %v5751
  %5756 = vst.msk [vmem:[%s5753 + $0x10] sm:$0xff] %vm5704, %v5752
  // Predicated region
  $region50: #{cfc_forward.1} parent=0 // pred_check
    _
  $region51: #{cfc_forward.1} parent=0 // pred_check_branch
    %5758 = sbr.rel (0) target = $region53
  $region52: #{cfc_forward.1} parent=0 // pred_region
    _
  $region53: #{cfc_forward.1} parent=0 // pred_fallthru
    _
  // Predicated region
  $region54: #{cfc_forward.1} parent=0 // pred_check
    _
  $region55: #{cfc_forward.1} parent=0 // pred_check_branch
    %5760 = sbr.rel (0) target = $region57
  $region56: #{cfc_forward.1} parent=0 // pred_region
    _
  $region57: #{cfc_forward.1} parent=0 // pred_fallthru
    _

</llo_original>
